<compile_context>
chip_gen: v6e
topology: v6e:2x2x1
jax: 0.10.0
libtpu: 0.0.40
codegen_flags: <defaults>
</compile_context>

<pallas_src>
import math

import jax
import jax.numpy as jnp
from jax import lax
from jax.experimental import pallas as pl
from jax.experimental.pallas import tpu as pltpu

EPS = 1e-5
NEG = -1e30


def _round_up(x, m):
    return (x + m - 1) // m * m


def _choose_bt(B, R):
    # Keep the Python unroll modest and leave >=2 grid steps so the single
    # "parallel" axis can shard across both v7x TensorCores.
    for bt in (4, 2):
        if B % bt == 0 and B // bt >= 2 and bt * R <= 512:
            return bt
    return 1


def make_matnet_block_kernel(bt, R, C, Cp, E, Ep, H, MS):
    S = E // H
    CDT = jnp.bfloat16  # MXU operand dtype; accumulation is always f32

    def kernel(row_ref, colt_ref, cost_ref,
               wq_ref, wkt_ref, wvt_ref, wcomb_ref,
               w1f_ref, w2f_ref, vec_ref, b1f_ref, mix_ref,
               out_ref,
               q_sc, kt_sc, vt_sc):
        # offsets into the flat SMEM mixed-score parameter vector
        off1w = 0
        off1b = 2 * H * MS
        off2w = 3 * H * MS
        off2b = 4 * H * MS

        # small broadcast vectors, hoisted once
        vecs = vec_ref[...]                    # (8, Ep) f32
        bcomb = vecs[0:1, :]
        b2f = vecs[1:2, :]
        g1 = vecs[2:3, :]
        bt1 = vecs[3:4, :]
        g2 = vecs[4:5, :]
        bt2 = vecs[5:6, :]
        b1f = b1f_ref[...]                     # (1, Fp) f32

        # column-validity mask (only needed if C was lane-padded)
        if C < Cp:
            col_valid = lax.broadcasted_iota(jnp.int32, (R, Cp), 1) < C
        else:
            col_valid = None

        # ---- Q projection batched across the bt block: one (bt*R, Ep) matmul
        row_all = row_ref[...].reshape(bt * R, Ep)           # bf16
        q_sc[...] = jnp.dot(row_all, wq_ref[...],
                            preferred_element_type=jnp.float32)

        cc_list = []
        for i in range(bt):
            # K^T / V^T produced directly in (Ep, Cp) layout from the
            # transposed col embedding: per-head slices below are sublane
            # ranges with full 128-lane width (no masked loads).
            colt_i = colt_ref[i]                              # (Ep, Cp) bf16
            kt_sc[...] = jnp.dot(wkt_ref[...], colt_i,
                                 preferred_element_type=jnp.float32)
            vt_sc[...] = jnp.dot(wvt_ref[...], colt_i,
                                 preferred_element_type=jnp.float32)

            # (R, Cp) cost tile loaded once and reused by all heads
            cost = cost_ref[i].astype(jnp.float32)

            head_outs = []
            for h in range(H):
                qh = q_sc[i * R:(i + 1) * R, h * S:(h + 1) * S].astype(CDT)
                khT = kt_sc[h * S:(h + 1) * S, :].astype(CDT)   # (S, Cp)
                vhT = vt_sc[h * S:(h + 1) * S, :].astype(CDT)   # (S, Cp)

                # raw dot-product scores; 1/sqrt(S) is folded into mix1 weights
                dp = jnp.dot(qh, khT,
                             preferred_element_type=jnp.float32)  # (R, Cp)

                # two-score MLP unrolled over ms_hidden; scalar params read
                # from SMEM; two partial accumulators break the serial chain.
                # TODO(synk): on v6e/v7x a packed-bf16 VPU path for dp/cost/hid
                # would roughly double VALU throughput here; kept f32 for v5e
                # portability and softmax-range safety.
                acc0 = jnp.zeros_like(dp)
                acc1 = jnp.zeros_like(dp)
                for m in range(MS):
                    w1a = mix_ref[off1w + (h * 2 + 0) * MS + m]   # scaled
                    w1b = mix_ref[off1w + (h * 2 + 1) * MS + m]
                    b1 = mix_ref[off1b + h * MS + m]
                    w2 = mix_ref[off2w + h * MS + m]
                    hid = jnp.maximum(dp * w1a + cost * w1b + b1, 0.0)
                    if m % 2 == 0:
                        acc0 = acc0 + hid * w2
                    else:
                        acc1 = acc1 + hid * w2
                ms2 = acc0 + acc1 + mix_ref[off2b + h]

                if col_valid is not None:
                    ms2 = jnp.where(col_valid, ms2, NEG)

                # softmax over columns; reciprocal goes to the EUP
                mx = jnp.max(ms2, axis=-1, keepdims=True)
                e = jnp.exp(ms2 - mx)
                denom = jnp.sum(e, axis=-1, keepdims=True)
                wts = e * pl.reciprocal(denom, approx=True)       # (R, Cp)

                # PV against the transposed V slice: (R,Cp) x (S,Cp)^T -> (R,S)
                out_h = lax.dot_general(wts.astype(CDT), vhT,
                                        (((1,), (1,)), ((), ())),
                                        preferred_element_type=jnp.float32)
                head_outs.append(out_h)

            if E < Ep:
                head_outs.append(jnp.zeros((R, Ep - E), jnp.float32))
            cc_list.append(jnp.concatenate(head_outs, axis=1))    # (R, Ep) f32

        # ---- single full-K multi-head-combine matmul for the whole bt block
        cc_all = jnp.concatenate(cc_list, axis=0).astype(CDT)     # (bt*R, Ep)
        mh_all = jnp.dot(cc_all, wcomb_ref[...],
                         preferred_element_type=jnp.float32) + bcomb

        # ---- norm1(residual): statistics are per batch element (over rows)
        y_list = []
        for i in range(bt):
            x = row_ref[i].astype(jnp.float32) + mh_all[i * R:(i + 1) * R]
            mean = jnp.mean(x, axis=0, keepdims=True)
            var = jnp.mean((x - mean) ** 2, axis=0, keepdims=True)
            y_list.append((x - mean) * lax.rsqrt(var + EPS) * g1 + bt1)

        # ---- FFN matmuls batched across the bt block
        y_all = jnp.concatenate(y_list, axis=0)                   # (bt*R, Ep)
        hdn = jnp.maximum(
            jnp.dot(y_all.astype(CDT), w1f_ref[...],
                    preferred_element_type=jnp.float32) + b1f, 0.0)
        f_all = jnp.dot(hdn.astype(CDT), w2f_ref[...],
                        preferred_element_type=jnp.float32) + b2f

        # ---- norm2(residual): per batch element, lane-dense f32 store
        for i in range(bt):
            z = y_list[i] + f_all[i * R:(i + 1) * R]
            mean2 = jnp.mean(z, axis=0, keepdims=True)
            var2 = jnp.mean((z - mean2) ** 2, axis=0, keepdims=True)
            out_ref[i] = (z - mean2) * lax.rsqrt(var2 + EPS) * g2 + bt2

    return kernel


def matnet_block_pallas(row_emb, col_emb, cost_mat, p, bt=None,
                        cost_in_bf16=False):
    B, R, E = row_emb.shape
    C = col_emb.shape[1]
    H, MS, F = p["H"], p["MS"], p["F"]
    S = E // H

    Ep = _round_up(E, 128)
    Cp = _round_up(C, 128)
    Fp = _round_up(F, 128)

    if bt is None:
        bt = _choose_bt(B, R)
    assert B % bt == 0

    bf16 = jnp.bfloat16

    def pad2(w, r, c):
        return jnp.pad(w, ((0, r - w.shape[0]), (0, c - w.shape[1])))

    def pad1(v, n, val=0.0):
        return jnp.pad(v, (0, n - v.shape[0]), constant_values=val)

    # lane-dense bf16 operands; the col embedding is passed transposed so that
    # K^T / V^T can be produced directly in (Ep, Cp) layout inside the kernel.
    row_p = jnp.pad(row_emb, ((0, 0), (0, 0), (0, Ep - E))).astype(bf16)
    colt_p = jnp.pad(col_emb, ((0, 0), (0, Cp - C), (0, Ep - E))
                     ).transpose(0, 2, 1).astype(bf16)              # (B,Ep,Cp)
    cost_dtype = bf16 if cost_in_bf16 else jnp.float32   # bf16 stream for v7x
    cost_p = jnp.pad(cost_mat, ((0, 0), (0, 0), (0, Cp - C))).astype(cost_dtype)

    wq = pad2(p["wq"], Ep, Ep).astype(bf16)
    wkT = pad2(p["wk"], Ep, Ep).T.astype(bf16)
    wvT = pad2(p["wv"], Ep, Ep).T.astype(bf16)
    wcomb = pad2(p["wcomb"], Ep, Ep).astype(bf16)
    w1f = pad2(p["w1f"], Ep, Fp).astype(bf16)
    w2f = pad2(p["w2f"], Fp, Ep).astype(bf16)

    # Padded-lane contract: every padded weight row/col and bias lane is 0 and
    # the norm gains are padded with 1.0, so padded lanes stay exactly 0
    # through both instance norms (0 * rsqrt(eps) * 1 + 0 == 0).
    vec_slab = jnp.stack([
        pad1(p["bcomb"], Ep),
        pad1(p["b2f"], Ep),
        pad1(p["g1"], Ep, 1.0),
        pad1(p["bt1"], Ep),
        pad1(p["g2"], Ep, 1.0),
        pad1(p["bt2"], Ep),
        jnp.zeros((Ep,), jnp.float32),
        jnp.zeros((Ep,), jnp.float32),
    ]).astype(jnp.float32)
    b1f = pad1(p["b1f"], Fp).astype(jnp.float32).reshape(1, Fp)

    # one flat SMEM vector for the mixed-score MLP params; the 1/sqrt(qkv_dim)
    # scale is folded into the dp-input weights of mix1.
    scale = 1.0 / math.sqrt(S)
    mix1_w = p["mix1_w"].astype(jnp.float32)
    mix1_w = mix1_w.at[:, 0, :].multiply(scale)
    mix_flat = jnp.concatenate([
        mix1_w.reshape(-1),
        p["mix1_b"].reshape(-1).astype(jnp.float32),
        p["mix2_w"].reshape(-1).astype(jnp.float32),
        p["mix2_b"].reshape(-1).astype(jnp.float32),
    ])

    kernel = make_matnet_block_kernel(bt, R, C, Cp, E, Ep, H, MS)

    # Explicit VMEM budget (matters on v7x's 64 MiB): double-buffered per-step
    # blocks + weights (assume worst-case double-buffered) + scratch + margin.
    blk_bytes = 2 * (bt * R * Ep * 2 + bt * Ep * Cp * 2 +
                     bt * R * Cp * cost_p.dtype.itemsize + bt * R * Ep * 4)
    w_bytes = 2 * (4 * Ep * Ep * 2 + Ep * Fp * 2 + Fp * Ep * 2 +
                   8 * Ep * 4 + Fp * 4)
    scr_bytes = bt * R * Ep * 4 + 2 * Ep * Cp * 4
    vmem_limit = int(min(max(blk_bytes + w_bytes + scr_bytes + (4 << 20),
                             32 << 20), 100 << 20))

    args = (row_p, colt_p, cost_p, wq, wkT, wvT, wcomb, w1f, w2f,
            vec_slab, b1f, mix_flat)

    def build(single_buffer_consts):
        def const2(shape):
            if single_buffer_consts:
                # grid-invariant weights: double-buffering them is pure VMEM waste
                return pl.BlockSpec(shape, lambda b: (0, 0),
                                    pipeline_mode=pl.Buffered(1))
            return pl.BlockSpec(shape, lambda b: (0, 0))

        return pl.pallas_call(
            kernel,
            out_shape=jax.ShapeDtypeStruct((B, R, Ep), jnp.float32),
            grid=(B // bt,),
            in_specs=[
                pl.BlockSpec((bt, R, Ep), lambda b: (b, 0, 0)),    # row_emb
                pl.BlockSpec((bt, Ep, Cp), lambda b: (b, 0, 0)),   # col_emb^T
                pl.BlockSpec((bt, R, Cp), lambda b: (b, 0, 0)),    # cost_mat
                const2((Ep, Ep)),                                  # Wq
                const2((Ep, Ep)), const2((Ep, Ep)),                # Wk^T, Wv^T
                const2((Ep, Ep)),                                  # Wcomb
                const2((Ep, Fp)), const2((Fp, Ep)),                # ffn W1, W2
                const2((8, Ep)),                                   # packed vectors
                const2((1, Fp)),                                   # ffn b1
                pl.BlockSpec(memory_space=pltpu.MemorySpace.SMEM), # mix params
            ],
            out_specs=pl.BlockSpec((bt, R, Ep), lambda b: (b, 0, 0)),
            scratch_shapes=[
                pltpu.VMEM((bt * R, Ep), jnp.float32),   # Q (whole bt block)
                pltpu.VMEM((Ep, Cp), jnp.float32),       # K^T (per batch elem)
                pltpu.VMEM((Ep, Cp), jnp.float32),       # V^T (per batch elem)
            ],
            compiler_params=pltpu.CompilerParams(
                dimension_semantics=("parallel",),
                vmem_limit_bytes=vmem_limit),
        )

    try:
        out = jax.block_until_ready(build(True)(*args))
    except Exception:
        # this jax build does not accept pipeline_mode on top-level BlockSpecs
        out = build(False)(*args)

    if E < Ep:
        return out[:, :, :E]
    return out   # production E is a multiple of 128 -> no pad, no extra HBM pass


def matnet_block_reference(row, col, cost, p):
    """Pure-JAX f32 mirror of the PyTorch forward pass (for verification)."""
    B, R, E = row.shape
    C = col.shape[1]
    H, MS = p["H"], p["MS"]
    S = E // H

    def heads(x):  # (B, N, E) -> (B, H, N, S)
        return x.reshape(B, x.shape[1], H, S).transpose(0, 2, 1, 3)

    q = heads(row @ p["wq"])
    k = heads(col @ p["wk"])
    v = heads(col @ p["wv"])

    dp = jnp.einsum("bhrs,bhcs->bhrc", q, k) / math.sqrt(S)          # (B,H,R,C)
    costb = jnp.broadcast_to(cost[:, None, :, :], (B, H, R, C))
    two = jnp.stack([dp, costb], axis=4)                             # (B,H,R,C,2)
    two_t = two.transpose(0, 2, 1, 3, 4)                             # (B,R,H,C,2)
    ms1 = jnp.einsum("brhcx,hxm->brhcm", two_t, p["mix1_w"])
    ms1 = ms1 + p["mix1_b"][None, None, :, None, :]
    ms1 = jnp.maximum(ms1, 0.0)
    ms2 = jnp.einsum("brhcm,hmo->brhco", ms1, p["mix2_w"])
    ms2 = ms2 + p["mix2_b"][None, None, :, None, :]
    mixed = ms2.transpose(0, 2, 1, 3, 4)[..., 0]                     # (B,H,R,C)
    wts = jax.nn.softmax(mixed, axis=3)
    out = jnp.einsum("bhrc,bhcs->bhrs", wts, v)
    out_concat = out.transpose(0, 2, 1, 3).reshape(B, R, E)
    mh = out_concat @ p["wcomb"] + p["bcomb"]

    def inorm(x, g, bt):
        mean = jnp.mean(x, axis=1, keepdims=True)
        var = jnp.mean((x - mean) ** 2, axis=1, keepdims=True)
        return (x - mean) / jnp.sqrt(var + EPS) * g + bt

    y = inorm(row + mh, p["g1"], p["bt1"])
    f = jnp.maximum(y @ p["w1f"] + p["b1f"], 0.0) @ p["w2f"] + p["b2f"]
    return inorm(y + f, p["g2"], p["bt2"])


if __name__ == "__main__":
    # small, MatNet-consistent shapes
    B, R, C = 2, 8, 16
    E, H, MS, F = 32, 4, 8, 64                # embed, heads, ms_hidden, ffn_hidden

    key = jax.random.PRNGKey(0)
    ks = jax.random.split(key, 16)

    def uni(k, shape, bound):
        return jax.random.uniform(k, shape, jnp.float32, -bound, bound)

    mix1_init = (1 / 2) ** 0.5
    mix2_init = (1 / 16) ** 0.5
    p = {
        "H": H, "MS": MS, "F": F,
        "wq": uni(ks[0], (E, E), 1 / math.sqrt(E)),
        "wk": uni(ks[1], (E, E), 1 / math.sqrt(E)),
        "wv": uni(ks[2], (E, E), 1 / math.sqrt(E)),
        "mix1_w": uni(ks[3], (H, 2, MS), mix1_init),
        "mix1_b": uni(ks[4], (H, MS), mix1_init),
        "mix2_w": uni(ks[5], (H, MS, 1), mix2_init),
        "mix2_b": uni(ks[6], (H, 1), mix2_init),
        "wcomb": uni(ks[7], (E, E), 1 / math.sqrt(E)),
        "bcomb": uni(ks[8], (E,), 1 / math.sqrt(E)),
        "w1f": uni(ks[9], (E, F), 1 / math.sqrt(E)),
        "b1f": uni(ks[10], (F,), 1 / math.sqrt(E)),
        "w2f": uni(ks[11], (F, E), 1 / math.sqrt(F)),
        "b2f": uni(ks[12], (E,), 1 / math.sqrt(F)),
        "g1": jnp.ones((E,), jnp.float32), "bt1": jnp.zeros((E,), jnp.float32),
        "g2": jnp.ones((E,), jnp.float32), "bt2": jnp.zeros((E,), jnp.float32),
    }

    row_emb = 0.5 * jax.random.normal(ks[13], (B, R, E), jnp.float32)
    col_emb = 0.5 * jax.random.normal(ks[14], (B, C, E), jnp.float32)
    cost_mat = jax.random.uniform(ks[15], (B, R, C), jnp.float32)

    out = matnet_block_pallas(row_emb, col_emb, cost_mat, p)
    out = jax.block_until_ready(out)

    ref = jax.block_until_ready(matnet_block_reference(row_emb, col_emb, cost_mat, p))
    max_err = float(jnp.max(jnp.abs(out - ref)))
    assert out.shape == (B, R, E)
    # bf16 MXU operands (and approx reciprocal) vs an all-f32 reference:
    # allow ~bf16-level end-to-end error on unit-normalized outputs.
    assert max_err < 5e-2, f"mismatch vs reference: max abs err {max_err}"

    print("KERNEL_OK")
</pallas_src>

<mosaic_0001>
module attributes {stable_mosaic.version = 11 : i64} {
  func.func @kernel(%arg0: i32, %arg1: memref<1x8x128xbf16, #tpu.memory_space<vmem>>, %arg2: memref<1x128x128xbf16, #tpu.memory_space<vmem>>, %arg3: memref<1x8x128xf32, #tpu.memory_space<vmem>>, %arg4: memref<128x128xbf16, #tpu.memory_space<vmem>>, %arg5: memref<128x128xbf16, #tpu.memory_space<vmem>>, %arg6: memref<128x128xbf16, #tpu.memory_space<vmem>>, %arg7: memref<128x128xbf16, #tpu.memory_space<vmem>>, %arg8: memref<128x128xbf16, #tpu.memory_space<vmem>>, %arg9: memref<128x128xbf16, #tpu.memory_space<vmem>>, %arg10: memref<8x128xf32, #tpu.memory_space<vmem>>, %arg11: memref<1x128xf32, #tpu.memory_space<vmem>>, %arg12: memref<132xf32, #tpu.memory_space<smem>>, %arg13: memref<1x8x128xf32, #tpu.memory_space<vmem>>, %arg14: memref<8x128xf32, #tpu.memory_space<vmem>>, %arg15: memref<128x128xf32, #tpu.memory_space<vmem>>, %arg16: memref<128x128xf32, #tpu.memory_space<vmem>>) attributes {dimension_semantics = [#tpu.dimension_semantics<parallel>], iteration_bounds = array<i64: 2>, scalar_prefetch = 0 : i64, scratch_operands = 3 : i64, tpu.core_type = #tpu.core_type<tc>, window_params = [{transform_indices = @transform_0, window_bounds = array<i64: 1, 8, 128>}, {transform_indices = @transform_1, window_bounds = array<i64: 1, 128, 128>}, {transform_indices = @transform_2, window_bounds = array<i64: 1, 8, 128>}, {pipeline_mode = #tpu.pipeline_mode<synchronous>, transform_indices = @transform_3, window_bounds = array<i64: 128, 128>}, {pipeline_mode = #tpu.pipeline_mode<synchronous>, transform_indices = @transform_4, window_bounds = array<i64: 128, 128>}, {pipeline_mode = #tpu.pipeline_mode<synchronous>, transform_indices = @transform_5, window_bounds = array<i64: 128, 128>}, {pipeline_mode = #tpu.pipeline_mode<synchronous>, transform_indices = @transform_6, window_bounds = array<i64: 128, 128>}, {pipeline_mode = #tpu.pipeline_mode<synchronous>, transform_indices = @transform_7, window_bounds = array<i64: 128, 128>}, {pipeline_mode = #tpu.pipeline_mode<synchronous>, transform_indices = @transform_8, window_bounds = array<i64: 128, 128>}, {pipeline_mode = #tpu.pipeline_mode<synchronous>, transform_indices = @transform_9, window_bounds = array<i64: 8, 128>}, {pipeline_mode = #tpu.pipeline_mode<synchronous>, transform_indices = @transform_10, window_bounds = array<i64: 1, 128>}, {transform_indices = @transform_11, window_bounds = array<i64: 132>}, {transform_indices = @transform_12, window_bounds = array<i64: 1, 8, 128>}]} {
    %c0 = arith.constant 0 : index
    %c0_0 = arith.constant 0 : index
    %0 = vector.load %arg10[%c0, %c0_0] : memref<8x128xf32, #tpu.memory_space<vmem>>, vector<8x128xf32>
    %1 = vector.extract_strided_slice %0 {offsets = [0, 0], sizes = [1, 128], strides = [1, 1]} : vector<8x128xf32> to vector<1x128xf32>
    %2 = vector.extract_strided_slice %0 {offsets = [1, 0], sizes = [1, 128], strides = [1, 1]} : vector<8x128xf32> to vector<1x128xf32>
    %3 = vector.extract_strided_slice %0 {offsets = [2, 0], sizes = [1, 128], strides = [1, 1]} : vector<8x128xf32> to vector<1x128xf32>
    %4 = vector.extract_strided_slice %0 {offsets = [3, 0], sizes = [1, 128], strides = [1, 1]} : vector<8x128xf32> to vector<1x128xf32>
    %5 = vector.extract_strided_slice %0 {offsets = [4, 0], sizes = [1, 128], strides = [1, 1]} : vector<8x128xf32> to vector<1x128xf32>
    %6 = vector.extract_strided_slice %0 {offsets = [5, 0], sizes = [1, 128], strides = [1, 1]} : vector<8x128xf32> to vector<1x128xf32>
    %c0_1 = arith.constant 0 : index
    %c0_2 = arith.constant 0 : index
    %7 = vector.load %arg11[%c0_1, %c0_2] : memref<1x128xf32, #tpu.memory_space<vmem>>, vector<1x128xf32>
    %8 = tpu.iota {dimensions = array<i32: 1>} : vector<8x128xi32>
    %c16_i32 = arith.constant 16 : i32
    %9 = vector.broadcast %c16_i32 : i32 to vector<8x128xi32>
    %10 = arith.cmpi slt, %8, %9 : vector<8x128xi32>
    %c0_3 = arith.constant 0 : index
    %c0_4 = arith.constant 0 : index
    %c0_5 = arith.constant 0 : index
    %11 = vector.load %arg1[%c0_3, %c0_4, %c0_5] : memref<1x8x128xbf16, #tpu.memory_space<vmem>>, vector<1x8x128xbf16>
    %12 = vector.shape_cast %11 : vector<1x8x128xbf16> to vector<8x128xbf16>
    %c0_6 = arith.constant 0 : index
    %c0_7 = arith.constant 0 : index
    %13 = vector.load %arg4[%c0_6, %c0_7] : memref<128x128xbf16, #tpu.memory_space<vmem>>, vector<128x128xbf16>
    %cst = arith.constant dense<0.000000e+00> : vector<8x128xf32>
    %14 = tpu.matmul %12, %13, %cst {dimension_numbers = #tpu.dot_dimension_numbers<[1], [0], [0], [1], [0, 0, 1, 1], [], []>} : vector<8x128xbf16>, vector<128x128xbf16>, vector<8x128xf32> -> vector<8x128xf32>
    %c0_8 = arith.constant 0 : index
    %c0_9 = arith.constant 0 : index
    %15 = vector.load %arg14[%c0_8, %c0_9] : memref<8x128xf32, #tpu.memory_space<vmem>>, vector<8x128xf32>
    tpu.vector_store %arg14[%c0_8, %c0_9], %14 {strides = array<i32>} : memref<8x128xf32, #tpu.memory_space<vmem>>, vector<8x128xf32>,
    %c0_10 = arith.constant 0 : index
    %c0_11 = arith.constant 0 : index
    %c0_12 = arith.constant 0 : index
    %16 = vector.load %arg2[%c0_10, %c0_11, %c0_12] : memref<1x128x128xbf16, #tpu.memory_space<vmem>>, vector<1x128x128xbf16>
    %17 = vector.shape_cast %16 : vector<1x128x128xbf16> to vector<128x128xbf16>
    %c0_13 = arith.constant 0 : index
    %c0_14 = arith.constant 0 : index
    %18 = vector.load %arg5[%c0_13, %c0_14] : memref<128x128xbf16, #tpu.memory_space<vmem>>, vector<128x128xbf16>
    %cst_15 = arith.constant dense<0.000000e+00> : vector<128x128xf32>
    %19 = tpu.matmul %18, %17, %cst_15 {dimension_numbers = #tpu.dot_dimension_numbers<[1], [0], [0], [1], [0, 0, 1, 1], [], []>} : vector<128x128xbf16>, vector<128x128xbf16>, vector<128x128xf32> -> vector<128x128xf32>
    %c0_16 = arith.constant 0 : index
    %c0_17 = arith.constant 0 : index
    %20 = vector.load %arg15[%c0_16, %c0_17] : memref<128x128xf32, #tpu.memory_space<vmem>>, vector<128x128xf32>
    tpu.vector_store %arg15[%c0_16, %c0_17], %19 {strides = array<i32>} : memref<128x128xf32, #tpu.memory_space<vmem>>, vector<128x128xf32>,
    %c0_18 = arith.constant 0 : index
    %c0_19 = arith.constant 0 : index
    %21 = vector.load %arg6[%c0_18, %c0_19] : memref<128x128xbf16, #tpu.memory_space<vmem>>, vector<128x128xbf16>
    %cst_20 = arith.constant dense<0.000000e+00> : vector<128x128xf32>
    %22 = tpu.matmul %21, %17, %cst_20 {dimension_numbers = #tpu.dot_dimension_numbers<[1], [0], [0], [1], [0, 0, 1, 1], [], []>} : vector<128x128xbf16>, vector<128x128xbf16>, vector<128x128xf32> -> vector<128x128xf32>
    %c0_21 = arith.constant 0 : index
    %c0_22 = arith.constant 0 : index
    %23 = vector.load %arg16[%c0_21, %c0_22] : memref<128x128xf32, #tpu.memory_space<vmem>>, vector<128x128xf32>
    tpu.vector_store %arg16[%c0_21, %c0_22], %22 {strides = array<i32>} : memref<128x128xf32, #tpu.memory_space<vmem>>, vector<128x128xf32>,
    %c0_23 = arith.constant 0 : index
    %c0_24 = arith.constant 0 : index
    %c0_25 = arith.constant 0 : index
    %24 = vector.load %arg3[%c0_23, %c0_24, %c0_25] : memref<1x8x128xf32, #tpu.memory_space<vmem>>, vector<1x8x128xf32>
    %25 = vector.shape_cast %24 : vector<1x8x128xf32> to vector<8x128xf32>
    %c0_26 = arith.constant 0 : index
    %c0_27 = arith.constant 0 : index
    %26 = vector.load %arg14[%c0_26, %c0_27] : memref<8x128xf32, #tpu.memory_space<vmem>>, vector<8x8xf32>
    %27 = arith.truncf %26 : vector<8x8xf32> to vector<8x8xbf16>
    %c0_28 = arith.constant 0 : index
    %c0_29 = arith.constant 0 : index
    %28 = vector.load %arg15[%c0_28, %c0_29] : memref<128x128xf32, #tpu.memory_space<vmem>>, vector<8x128xf32>
    %29 = arith.truncf %28 : vector<8x128xf32> to vector<8x128xbf16>
    %c0_30 = arith.constant 0 : index
    %c0_31 = arith.constant 0 : index
    %30 = vector.load %arg16[%c0_30, %c0_31] : memref<128x128xf32, #tpu.memory_space<vmem>>, vector<8x128xf32>
    %31 = arith.truncf %30 : vector<8x128xf32> to vector<8x128xbf16>
    %cst_32 = arith.constant dense<0.000000e+00> : vector<8x128xf32>
    %32 = tpu.matmul %27, %29, %cst_32 {dimension_numbers = #tpu.dot_dimension_numbers<[1], [0], [0], [1], [0, 0, 1, 1], [], []>} : vector<8x8xbf16>, vector<8x128xbf16>, vector<8x128xf32> -> vector<8x128xf32>
    %cst_33 = arith.constant 0.000000e+00 : f32
    %33 = vector.broadcast %cst_33 : f32 to vector<8x128xf32>
    %cst_34 = arith.constant 0.000000e+00 : f32
    %34 = vector.broadcast %cst_34 : f32 to vector<8x128xf32>
    %c0_35 = arith.constant 0 : index
    %35 = memref.load %arg12[%c0_35] : memref<132xf32, #tpu.memory_space<smem>>
    %c8 = arith.constant 8 : index
    %36 = memref.load %arg12[%c8] : memref<132xf32, #tpu.memory_space<smem>>
    %c64 = arith.constant 64 : index
    %37 = memref.load %arg12[%c64] : memref<132xf32, #tpu.memory_space<smem>>
    %c96 = arith.constant 96 : index
    %38 = memref.load %arg12[%c96] : memref<132xf32, #tpu.memory_space<smem>>
    %39 = vector.broadcast %35 : f32 to vector<8x128xf32>
    %40 = arith.mulf %32, %39 : vector<8x128xf32>
    %41 = vector.broadcast %36 : f32 to vector<8x128xf32>
    %42 = arith.mulf %25, %41 : vector<8x128xf32>
    %43 = arith.addf %40, %42 : vector<8x128xf32>
    %44 = vector.broadcast %37 : f32 to vector<8x128xf32>
    %45 = arith.addf %43, %44 : vector<8x128xf32>
    %cst_36 = arith.constant 0.000000e+00 : f32
    %46 = vector.broadcast %cst_36 : f32 to vector<8x128xf32>
    %47 = arith.maximumf %45, %46 : vector<8x128xf32>
    %48 = vector.broadcast %38 : f32 to vector<8x128xf32>
    %49 = arith.mulf %47, %48 : vector<8x128xf32>
    %50 = arith.addf %33, %49 : vector<8x128xf32>
    %c1 = arith.constant 1 : index
    %51 = memref.load %arg12[%c1] : memref<132xf32, #tpu.memory_space<smem>>
    %c9 = arith.constant 9 : index
    %52 = memref.load %arg12[%c9] : memref<132xf32, #tpu.memory_space<smem>>
    %c65 = arith.constant 65 : index
    %53 = memref.load %arg12[%c65] : memref<132xf32, #tpu.memory_space<smem>>
    %c97 = arith.constant 97 : index
    %54 = memref.load %arg12[%c97] : memref<132xf32, #tpu.memory_space<smem>>
    %55 = vector.broadcast %51 : f32 to vector<8x128xf32>
    %56 = arith.mulf %32, %55 : vector<8x128xf32>
    %57 = vector.broadcast %52 : f32 to vector<8x128xf32>
    %58 = arith.mulf %25, %57 : vector<8x128xf32>
    %59 = arith.addf %56, %58 : vector<8x128xf32>
    %60 = vector.broadcast %53 : f32 to vector<8x128xf32>
    %61 = arith.addf %59, %60 : vector<8x128xf32>
    %cst_37 = arith.constant 0.000000e+00 : f32
    %62 = vector.broadcast %cst_37 : f32 to vector<8x128xf32>
    %63 = arith.maximumf %61, %62 : vector<8x128xf32>
    %64 = vector.broadcast %54 : f32 to vector<8x128xf32>
    %65 = arith.mulf %63, %64 : vector<8x128xf32>
    %66 = arith.addf %34, %65 : vector<8x128xf32>
    %c2 = arith.constant 2 : index
    %67 = memref.load %arg12[%c2] : memref<132xf32, #tpu.memory_space<smem>>
    %c10 = arith.constant 10 : index
    %68 = memref.load %arg12[%c10] : memref<132xf32, #tpu.memory_space<smem>>
    %c66 = arith.constant 66 : index
    %69 = memref.load %arg12[%c66] : memref<132xf32, #tpu.memory_space<smem>>
    %c98 = arith.constant 98 : index
    %70 = memref.load %arg12[%c98] : memref<132xf32, #tpu.memory_space<smem>>
    %71 = vector.broadcast %67 : f32 to vector<8x128xf32>
    %72 = arith.mulf %32, %71 : vector<8x128xf32>
    %73 = vector.broadcast %68 : f32 to vector<8x128xf32>
    %74 = arith.mulf %25, %73 : vector<8x128xf32>
    %75 = arith.addf %72, %74 : vector<8x128xf32>
    %76 = vector.broadcast %69 : f32 to vector<8x128xf32>
    %77 = arith.addf %75, %76 : vector<8x128xf32>
    %cst_38 = arith.constant 0.000000e+00 : f32
    %78 = vector.broadcast %cst_38 : f32 to vector<8x128xf32>
    %79 = arith.maximumf %77, %78 : vector<8x128xf32>
    %80 = vector.broadcast %70 : f32 to vector<8x128xf32>
    %81 = arith.mulf %79, %80 : vector<8x128xf32>
    %82 = arith.addf %50, %81 : vector<8x128xf32>
    %c3 = arith.constant 3 : index
    %83 = memref.load %arg12[%c3] : memref<132xf32, #tpu.memory_space<smem>>
    %c11 = arith.constant 11 : index
    %84 = memref.load %arg12[%c11] : memref<132xf32, #tpu.memory_space<smem>>
    %c67 = arith.constant 67 : index
    %85 = memref.load %arg12[%c67] : memref<132xf32, #tpu.memory_space<smem>>
    %c99 = arith.constant 99 : index
    %86 = memref.load %arg12[%c99] : memref<132xf32, #tpu.memory_space<smem>>
    %87 = vector.broadcast %83 : f32 to vector<8x128xf32>
    %88 = arith.mulf %32, %87 : vector<8x128xf32>
    %89 = vector.broadcast %84 : f32 to vector<8x128xf32>
    %90 = arith.mulf %25, %89 : vector<8x128xf32>
    %91 = arith.addf %88, %90 : vector<8x128xf32>
    %92 = vector.broadcast %85 : f32 to vector<8x128xf32>
    %93 = arith.addf %91, %92 : vector<8x128xf32>
    %cst_39 = arith.constant 0.000000e+00 : f32
    %94 = vector.broadcast %cst_39 : f32 to vector<8x128xf32>
    %95 = arith.maximumf %93, %94 : vector<8x128xf32>
    %96 = vector.broadcast %86 : f32 to vector<8x128xf32>
    %97 = arith.mulf %95, %96 : vector<8x128xf32>
    %98 = arith.addf %66, %97 : vector<8x128xf32>
    %c4 = arith.constant 4 : index
    %99 = memref.load %arg12[%c4] : memref<132xf32, #tpu.memory_space<smem>>
    %c12 = arith.constant 12 : index
    %100 = memref.load %arg12[%c12] : memref<132xf32, #tpu.memory_space<smem>>
    %c68 = arith.constant 68 : index
    %101 = memref.load %arg12[%c68] : memref<132xf32, #tpu.memory_space<smem>>
    %c100 = arith.constant 100 : index
    %102 = memref.load %arg12[%c100] : memref<132xf32, #tpu.memory_space<smem>>
    %103 = vector.broadcast %99 : f32 to vector<8x128xf32>
    %104 = arith.mulf %32, %103 : vector<8x128xf32>
    %105 = vector.broadcast %100 : f32 to vector<8x128xf32>
    %106 = arith.mulf %25, %105 : vector<8x128xf32>
    %107 = arith.addf %104, %106 : vector<8x128xf32>
    %108 = vector.broadcast %101 : f32 to vector<8x128xf32>
    %109 = arith.addf %107, %108 : vector<8x128xf32>
    %cst_40 = arith.constant 0.000000e+00 : f32
    %110 = vector.broadcast %cst_40 : f32 to vector<8x128xf32>
    %111 = arith.maximumf %109, %110 : vector<8x128xf32>
    %112 = vector.broadcast %102 : f32 to vector<8x128xf32>
    %113 = arith.mulf %111, %112 : vector<8x128xf32>
    %114 = arith.addf %82, %113 : vector<8x128xf32>
    %c5 = arith.constant 5 : index
    %115 = memref.load %arg12[%c5] : memref<132xf32, #tpu.memory_space<smem>>
    %c13 = arith.constant 13 : index
    %116 = memref.load %arg12[%c13] : memref<132xf32, #tpu.memory_space<smem>>
    %c69 = arith.constant 69 : index
    %117 = memref.load %arg12[%c69] : memref<132xf32, #tpu.memory_space<smem>>
    %c101 = arith.constant 101 : index
    %118 = memref.load %arg12[%c101] : memref<132xf32, #tpu.memory_space<smem>>
    %119 = vector.broadcast %115 : f32 to vector<8x128xf32>
    %120 = arith.mulf %32, %119 : vector<8x128xf32>
    %121 = vector.broadcast %116 : f32 to vector<8x128xf32>
    %122 = arith.mulf %25, %121 : vector<8x128xf32>
    %123 = arith.addf %120, %122 : vector<8x128xf32>
    %124 = vector.broadcast %117 : f32 to vector<8x128xf32>
    %125 = arith.addf %123, %124 : vector<8x128xf32>
    %cst_41 = arith.constant 0.000000e+00 : f32
    %126 = vector.broadcast %cst_41 : f32 to vector<8x128xf32>
    %127 = arith.maximumf %125, %126 : vector<8x128xf32>
    %128 = vector.broadcast %118 : f32 to vector<8x128xf32>
    %129 = arith.mulf %127, %128 : vector<8x128xf32>
    %130 = arith.addf %98, %129 : vector<8x128xf32>
    %c6 = arith.constant 6 : index
    %131 = memref.load %arg12[%c6] : memref<132xf32, #tpu.memory_space<smem>>
    %c14 = arith.constant 14 : index
    %132 = memref.load %arg12[%c14] : memref<132xf32, #tpu.memory_space<smem>>
    %c70 = arith.constant 70 : index
    %133 = memref.load %arg12[%c70] : memref<132xf32, #tpu.memory_space<smem>>
    %c102 = arith.constant 102 : index
    %134 = memref.load %arg12[%c102] : memref<132xf32, #tpu.memory_space<smem>>
    %135 = vector.broadcast %131 : f32 to vector<8x128xf32>
    %136 = arith.mulf %32, %135 : vector<8x128xf32>
    %137 = vector.broadcast %132 : f32 to vector<8x128xf32>
    %138 = arith.mulf %25, %137 : vector<8x128xf32>
    %139 = arith.addf %136, %138 : vector<8x128xf32>
    %140 = vector.broadcast %133 : f32 to vector<8x128xf32>
    %141 = arith.addf %139, %140 : vector<8x128xf32>
    %cst_42 = arith.constant 0.000000e+00 : f32
    %142 = vector.broadcast %cst_42 : f32 to vector<8x128xf32>
    %143 = arith.maximumf %141, %142 : vector<8x128xf32>
    %144 = vector.broadcast %134 : f32 to vector<8x128xf32>
    %145 = arith.mulf %143, %144 : vector<8x128xf32>
    %146 = arith.addf %114, %145 : vector<8x128xf32>
    %c7 = arith.constant 7 : index
    %147 = memref.load %arg12[%c7] : memref<132xf32, #tpu.memory_space<smem>>
    %c15 = arith.constant 15 : index
    %148 = memref.load %arg12[%c15] : memref<132xf32, #tpu.memory_space<smem>>
    %c71 = arith.constant 71 : index
    %149 = memref.load %arg12[%c71] : memref<132xf32, #tpu.memory_space<smem>>
    %c103 = arith.constant 103 : index
    %150 = memref.load %arg12[%c103] : memref<132xf32, #tpu.memory_space<smem>>
    %151 = vector.broadcast %147 : f32 to vector<8x128xf32>
    %152 = arith.mulf %32, %151 : vector<8x128xf32>
    %153 = vector.broadcast %148 : f32 to vector<8x128xf32>
    %154 = arith.mulf %25, %153 : vector<8x128xf32>
    %155 = arith.addf %152, %154 : vector<8x128xf32>
    %156 = vector.broadcast %149 : f32 to vector<8x128xf32>
    %157 = arith.addf %155, %156 : vector<8x128xf32>
    %cst_43 = arith.constant 0.000000e+00 : f32
    %158 = vector.broadcast %cst_43 : f32 to vector<8x128xf32>
    %159 = arith.maximumf %157, %158 : vector<8x128xf32>
    %160 = vector.broadcast %150 : f32 to vector<8x128xf32>
    %161 = arith.mulf %159, %160 : vector<8x128xf32>
    %162 = arith.addf %130, %161 : vector<8x128xf32>
    %163 = arith.addf %146, %162 : vector<8x128xf32>
    %c128 = arith.constant 128 : index
    %164 = memref.load %arg12[%c128] : memref<132xf32, #tpu.memory_space<smem>>
    %165 = vector.broadcast %164 : f32 to vector<8x128xf32>
    %166 = arith.addf %163, %165 : vector<8x128xf32>
    %cst_44 = arith.constant -1.000000e+30 : f32
    %167 = vector.broadcast %cst_44 : f32 to vector<8x128xf32>
    %168 = arith.select %10, %166, %167 : vector<8x128xi1>, vector<8x128xf32>
    %cst_45 = arith.constant dense<0xFF800000> : vector<8xf32>
    %169 = vector.multi_reduction <maximumf>, %168, %cst_45 [1] : vector<8x128xf32> to vector<8xf32>
    %170 = vector.shape_cast %169 : vector<8xf32> to vector<8x1xf32>
    %171 = vector.broadcast %170 : vector<8x1xf32> to vector<8x128xf32>
    %172 = arith.subf %168, %171 : vector<8x128xf32>
    %173 = math.exp %172 : vector<8x128xf32>
    %cst_46 = arith.constant dense<0.000000e+00> : vector<8xf32>
    %174 = vector.multi_reduction <add>, %173, %cst_46 [1] : vector<8x128xf32> to vector<8xf32>
    %175 = vector.shape_cast %174 : vector<8xf32> to vector<8x1xf32>
    %176 = tpu.reciprocal %175 {approx = true} : vector<8x1xf32> -> vector<8x1xf32>
    %177 = vector.broadcast %176 : vector<8x1xf32> to vector<8x128xf32>
    %178 = arith.mulf %173, %177 : vector<8x128xf32>
    %179 = arith.truncf %178 : vector<8x128xf32> to vector<8x128xbf16>
    %cst_47 = arith.constant dense<0.000000e+00> : vector<8x8xf32>
    %180 = tpu.matmul %179, %31, %cst_47 {dimension_numbers = #tpu.dot_dimension_numbers<[1], [1], [0], [0], [0, 0, 1, 0], [], []>} : vector<8x128xbf16>, vector<8x128xbf16>, vector<8x8xf32> -> vector<8x8xf32>
    %c0_48 = arith.constant 0 : index
    %c8_49 = arith.constant 8 : index
    %181 = vector.load %arg14[%c0_48, %c8_49] : memref<8x128xf32, #tpu.memory_space<vmem>>, vector<8x8xf32>
    %182 = arith.truncf %181 : vector<8x8xf32> to vector<8x8xbf16>
    %c8_50 = arith.constant 8 : index
    %c0_51 = arith.constant 0 : index
    %183 = vector.load %arg15[%c8_50, %c0_51] : memref<128x128xf32, #tpu.memory_space<vmem>>, vector<8x128xf32>
    %184 = arith.truncf %183 : vector<8x128xf32> to vector<8x128xbf16>
    %c8_52 = arith.constant 8 : index
    %c0_53 = arith.constant 0 : index
    %185 = vector.load %arg16[%c8_52, %c0_53] : memref<128x128xf32, #tpu.memory_space<vmem>>, vector<8x128xf32>
    %186 = arith.truncf %185 : vector<8x128xf32> to vector<8x128xbf16>
    %cst_54 = arith.constant dense<0.000000e+00> : vector<8x128xf32>
    %187 = tpu.matmul %182, %184, %cst_54 {dimension_numbers = #tpu.dot_dimension_numbers<[1], [0], [0], [1], [0, 0, 1, 1], [], []>} : vector<8x8xbf16>, vector<8x128xbf16>, vector<8x128xf32> -> vector<8x128xf32>
    %cst_55 = arith.constant 0.000000e+00 : f32
    %188 = vector.broadcast %cst_55 : f32 to vector<8x128xf32>
    %cst_56 = arith.constant 0.000000e+00 : f32
    %189 = vector.broadcast %cst_56 : f32 to vector<8x128xf32>
    %c16 = arith.constant 16 : index
    %190 = memref.load %arg12[%c16] : memref<132xf32, #tpu.memory_space<smem>>
    %c24 = arith.constant 24 : index
    %191 = memref.load %arg12[%c24] : memref<132xf32, #tpu.memory_space<smem>>
    %c72 = arith.constant 72 : index
    %192 = memref.load %arg12[%c72] : memref<132xf32, #tpu.memory_space<smem>>
    %c104 = arith.constant 104 : index
    %193 = memref.load %arg12[%c104] : memref<132xf32, #tpu.memory_space<smem>>
    %194 = vector.broadcast %190 : f32 to vector<8x128xf32>
    %195 = arith.mulf %187, %194 : vector<8x128xf32>
    %196 = vector.broadcast %191 : f32 to vector<8x128xf32>
    %197 = arith.mulf %25, %196 : vector<8x128xf32>
    %198 = arith.addf %195, %197 : vector<8x128xf32>
    %199 = vector.broadcast %192 : f32 to vector<8x128xf32>
    %200 = arith.addf %198, %199 : vector<8x128xf32>
    %cst_57 = arith.constant 0.000000e+00 : f32
    %201 = vector.broadcast %cst_57 : f32 to vector<8x128xf32>
    %202 = arith.maximumf %200, %201 : vector<8x128xf32>
    %203 = vector.broadcast %193 : f32 to vector<8x128xf32>
    %204 = arith.mulf %202, %203 : vector<8x128xf32>
    %205 = arith.addf %188, %204 : vector<8x128xf32>
    %c17 = arith.constant 17 : index
    %206 = memref.load %arg12[%c17] : memref<132xf32, #tpu.memory_space<smem>>
    %c25 = arith.constant 25 : index
    %207 = memref.load %arg12[%c25] : memref<132xf32, #tpu.memory_space<smem>>
    %c73 = arith.constant 73 : index
    %208 = memref.load %arg12[%c73] : memref<132xf32, #tpu.memory_space<smem>>
    %c105 = arith.constant 105 : index
    %209 = memref.load %arg12[%c105] : memref<132xf32, #tpu.memory_space<smem>>
    %210 = vector.broadcast %206 : f32 to vector<8x128xf32>
    %211 = arith.mulf %187, %210 : vector<8x128xf32>
    %212 = vector.broadcast %207 : f32 to vector<8x128xf32>
    %213 = arith.mulf %25, %212 : vector<8x128xf32>
    %214 = arith.addf %211, %213 : vector<8x128xf32>
    %215 = vector.broadcast %208 : f32 to vector<8x128xf32>
    %216 = arith.addf %214, %215 : vector<8x128xf32>
    %cst_58 = arith.constant 0.000000e+00 : f32
    %217 = vector.broadcast %cst_58 : f32 to vector<8x128xf32>
    %218 = arith.maximumf %216, %217 : vector<8x128xf32>
    %219 = vector.broadcast %209 : f32 to vector<8x128xf32>
    %220 = arith.mulf %218, %219 : vector<8x128xf32>
    %221 = arith.addf %189, %220 : vector<8x128xf32>
    %c18 = arith.constant 18 : index
    %222 = memref.load %arg12[%c18] : memref<132xf32, #tpu.memory_space<smem>>
    %c26 = arith.constant 26 : index
    %223 = memref.load %arg12[%c26] : memref<132xf32, #tpu.memory_space<smem>>
    %c74 = arith.constant 74 : index
    %224 = memref.load %arg12[%c74] : memref<132xf32, #tpu.memory_space<smem>>
    %c106 = arith.constant 106 : index
    %225 = memref.load %arg12[%c106] : memref<132xf32, #tpu.memory_space<smem>>
    %226 = vector.broadcast %222 : f32 to vector<8x128xf32>
    %227 = arith.mulf %187, %226 : vector<8x128xf32>
    %228 = vector.broadcast %223 : f32 to vector<8x128xf32>
    %229 = arith.mulf %25, %228 : vector<8x128xf32>
    %230 = arith.addf %227, %229 : vector<8x128xf32>
    %231 = vector.broadcast %224 : f32 to vector<8x128xf32>
    %232 = arith.addf %230, %231 : vector<8x128xf32>
    %cst_59 = arith.constant 0.000000e+00 : f32
    %233 = vector.broadcast %cst_59 : f32 to vector<8x128xf32>
    %234 = arith.maximumf %232, %233 : vector<8x128xf32>
    %235 = vector.broadcast %225 : f32 to vector<8x128xf32>
    %236 = arith.mulf %234, %235 : vector<8x128xf32>
    %237 = arith.addf %205, %236 : vector<8x128xf32>
    %c19 = arith.constant 19 : index
    %238 = memref.load %arg12[%c19] : memref<132xf32, #tpu.memory_space<smem>>
    %c27 = arith.constant 27 : index
    %239 = memref.load %arg12[%c27] : memref<132xf32, #tpu.memory_space<smem>>
    %c75 = arith.constant 75 : index
    %240 = memref.load %arg12[%c75] : memref<132xf32, #tpu.memory_space<smem>>
    %c107 = arith.constant 107 : index
    %241 = memref.load %arg12[%c107] : memref<132xf32, #tpu.memory_space<smem>>
    %242 = vector.broadcast %238 : f32 to vector<8x128xf32>
    %243 = arith.mulf %187, %242 : vector<8x128xf32>
    %244 = vector.broadcast %239 : f32 to vector<8x128xf32>
    %245 = arith.mulf %25, %244 : vector<8x128xf32>
    %246 = arith.addf %243, %245 : vector<8x128xf32>
    %247 = vector.broadcast %240 : f32 to vector<8x128xf32>
    %248 = arith.addf %246, %247 : vector<8x128xf32>
    %cst_60 = arith.constant 0.000000e+00 : f32
    %249 = vector.broadcast %cst_60 : f32 to vector<8x128xf32>
    %250 = arith.maximumf %248, %249 : vector<8x128xf32>
    %251 = vector.broadcast %241 : f32 to vector<8x128xf32>
    %252 = arith.mulf %250, %251 : vector<8x128xf32>
    %253 = arith.addf %221, %252 : vector<8x128xf32>
    %c20 = arith.constant 20 : index
    %254 = memref.load %arg12[%c20] : memref<132xf32, #tpu.memory_space<smem>>
    %c28 = arith.constant 28 : index
    %255 = memref.load %arg12[%c28] : memref<132xf32, #tpu.memory_space<smem>>
    %c76 = arith.constant 76 : index
    %256 = memref.load %arg12[%c76] : memref<132xf32, #tpu.memory_space<smem>>
    %c108 = arith.constant 108 : index
    %257 = memref.load %arg12[%c108] : memref<132xf32, #tpu.memory_space<smem>>
    %258 = vector.broadcast %254 : f32 to vector<8x128xf32>
    %259 = arith.mulf %187, %258 : vector<8x128xf32>
    %260 = vector.broadcast %255 : f32 to vector<8x128xf32>
    %261 = arith.mulf %25, %260 : vector<8x128xf32>
    %262 = arith.addf %259, %261 : vector<8x128xf32>
    %263 = vector.broadcast %256 : f32 to vector<8x128xf32>
    %264 = arith.addf %262, %263 : vector<8x128xf32>
    %cst_61 = arith.constant 0.000000e+00 : f32
    %265 = vector.broadcast %cst_61 : f32 to vector<8x128xf32>
    %266 = arith.maximumf %264, %265 : vector<8x128xf32>
    %267 = vector.broadcast %257 : f32 to vector<8x128xf32>
    %268 = arith.mulf %266, %267 : vector<8x128xf32>
    %269 = arith.addf %237, %268 : vector<8x128xf32>
    %c21 = arith.constant 21 : index
    %270 = memref.load %arg12[%c21] : memref<132xf32, #tpu.memory_space<smem>>
    %c29 = arith.constant 29 : index
    %271 = memref.load %arg12[%c29] : memref<132xf32, #tpu.memory_space<smem>>
    %c77 = arith.constant 77 : index
    %272 = memref.load %arg12[%c77] : memref<132xf32, #tpu.memory_space<smem>>
    %c109 = arith.constant 109 : index
    %273 = memref.load %arg12[%c109] : memref<132xf32, #tpu.memory_space<smem>>
    %274 = vector.broadcast %270 : f32 to vector<8x128xf32>
    %275 = arith.mulf %187, %274 : vector<8x128xf32>
    %276 = vector.broadcast %271 : f32 to vector<8x128xf32>
    %277 = arith.mulf %25, %276 : vector<8x128xf32>
    %278 = arith.addf %275, %277 : vector<8x128xf32>
    %279 = vector.broadcast %272 : f32 to vector<8x128xf32>
    %280 = arith.addf %278, %279 : vector<8x128xf32>
    %cst_62 = arith.constant 0.000000e+00 : f32
    %281 = vector.broadcast %cst_62 : f32 to vector<8x128xf32>
    %282 = arith.maximumf %280, %281 : vector<8x128xf32>
    %283 = vector.broadcast %273 : f32 to vector<8x128xf32>
    %284 = arith.mulf %282, %283 : vector<8x128xf32>
    %285 = arith.addf %253, %284 : vector<8x128xf32>
    %c22 = arith.constant 22 : index
    %286 = memref.load %arg12[%c22] : memref<132xf32, #tpu.memory_space<smem>>
    %c30 = arith.constant 30 : index
    %287 = memref.load %arg12[%c30] : memref<132xf32, #tpu.memory_space<smem>>
    %c78 = arith.constant 78 : index
    %288 = memref.load %arg12[%c78] : memref<132xf32, #tpu.memory_space<smem>>
    %c110 = arith.constant 110 : index
    %289 = memref.load %arg12[%c110] : memref<132xf32, #tpu.memory_space<smem>>
    %290 = vector.broadcast %286 : f32 to vector<8x128xf32>
    %291 = arith.mulf %187, %290 : vector<8x128xf32>
    %292 = vector.broadcast %287 : f32 to vector<8x128xf32>
    %293 = arith.mulf %25, %292 : vector<8x128xf32>
    %294 = arith.addf %291, %293 : vector<8x128xf32>
    %295 = vector.broadcast %288 : f32 to vector<8x128xf32>
    %296 = arith.addf %294, %295 : vector<8x128xf32>
    %cst_63 = arith.constant 0.000000e+00 : f32
    %297 = vector.broadcast %cst_63 : f32 to vector<8x128xf32>
    %298 = arith.maximumf %296, %297 : vector<8x128xf32>
    %299 = vector.broadcast %289 : f32 to vector<8x128xf32>
    %300 = arith.mulf %298, %299 : vector<8x128xf32>
    %301 = arith.addf %269, %300 : vector<8x128xf32>
    %c23 = arith.constant 23 : index
    %302 = memref.load %arg12[%c23] : memref<132xf32, #tpu.memory_space<smem>>
    %c31 = arith.constant 31 : index
    %303 = memref.load %arg12[%c31] : memref<132xf32, #tpu.memory_space<smem>>
    %c79 = arith.constant 79 : index
    %304 = memref.load %arg12[%c79] : memref<132xf32, #tpu.memory_space<smem>>
    %c111 = arith.constant 111 : index
    %305 = memref.load %arg12[%c111] : memref<132xf32, #tpu.memory_space<smem>>
    %306 = vector.broadcast %302 : f32 to vector<8x128xf32>
    %307 = arith.mulf %187, %306 : vector<8x128xf32>
    %308 = vector.broadcast %303 : f32 to vector<8x128xf32>
    %309 = arith.mulf %25, %308 : vector<8x128xf32>
    %310 = arith.addf %307, %309 : vector<8x128xf32>
    %311 = vector.broadcast %304 : f32 to vector<8x128xf32>
    %312 = arith.addf %310, %311 : vector<8x128xf32>
    %cst_64 = arith.constant 0.000000e+00 : f32
    %313 = vector.broadcast %cst_64 : f32 to vector<8x128xf32>
    %314 = arith.maximumf %312, %313 : vector<8x128xf32>
    %315 = vector.broadcast %305 : f32 to vector<8x128xf32>
    %316 = arith.mulf %314, %315 : vector<8x128xf32>
    %317 = arith.addf %285, %316 : vector<8x128xf32>
    %318 = arith.addf %301, %317 : vector<8x128xf32>
    %c129 = arith.constant 129 : index
    %319 = memref.load %arg12[%c129] : memref<132xf32, #tpu.memory_space<smem>>
    %320 = vector.broadcast %319 : f32 to vector<8x128xf32>
    %321 = arith.addf %318, %320 : vector<8x128xf32>
    %cst_65 = arith.constant -1.000000e+30 : f32
    %322 = vector.broadcast %cst_65 : f32 to vector<8x128xf32>
    %323 = arith.select %10, %321, %322 : vector<8x128xi1>, vector<8x128xf32>
    %cst_66 = arith.constant dense<0xFF800000> : vector<8xf32>
    %324 = vector.multi_reduction <maximumf>, %323, %cst_66 [1] : vector<8x128xf32> to vector<8xf32>
    %325 = vector.shape_cast %324 : vector<8xf32> to vector<8x1xf32>
    %326 = vector.broadcast %325 : vector<8x1xf32> to vector<8x128xf32>
    %327 = arith.subf %323, %326 : vector<8x128xf32>
    %328 = math.exp %327 : vector<8x128xf32>
    %cst_67 = arith.constant dense<0.000000e+00> : vector<8xf32>
    %329 = vector.multi_reduction <add>, %328, %cst_67 [1] : vector<8x128xf32> to vector<8xf32>
    %330 = vector.shape_cast %329 : vector<8xf32> to vector<8x1xf32>
    %331 = tpu.reciprocal %330 {approx = true} : vector<8x1xf32> -> vector<8x1xf32>
    %332 = vector.broadcast %331 : vector<8x1xf32> to vector<8x128xf32>
    %333 = arith.mulf %328, %332 : vector<8x128xf32>
    %334 = arith.truncf %333 : vector<8x128xf32> to vector<8x128xbf16>
    %cst_68 = arith.constant dense<0.000000e+00> : vector<8x8xf32>
    %335 = tpu.matmul %334, %186, %cst_68 {dimension_numbers = #tpu.dot_dimension_numbers<[1], [1], [0], [0], [0, 0, 1, 0], [], []>} : vector<8x128xbf16>, vector<8x128xbf16>, vector<8x8xf32> -> vector<8x8xf32>
    %c0_69 = arith.constant 0 : index
    %c16_70 = arith.constant 16 : index
    %336 = vector.load %arg14[%c0_69, %c16_70] : memref<8x128xf32, #tpu.memory_space<vmem>>, vector<8x8xf32>
    %337 = arith.truncf %336 : vector<8x8xf32> to vector<8x8xbf16>
    %c16_71 = arith.constant 16 : index
    %c0_72 = arith.constant 0 : index
    %338 = vector.load %arg15[%c16_71, %c0_72] : memref<128x128xf32, #tpu.memory_space<vmem>>, vector<8x128xf32>
    %339 = arith.truncf %338 : vector<8x128xf32> to vector<8x128xbf16>
    %c16_73 = arith.constant 16 : index
    %c0_74 = arith.constant 0 : index
    %340 = vector.load %arg16[%c16_73, %c0_74] : memref<128x128xf32, #tpu.memory_space<vmem>>, vector<8x128xf32>
    %341 = arith.truncf %340 : vector<8x128xf32> to vector<8x128xbf16>
    %cst_75 = arith.constant dense<0.000000e+00> : vector<8x128xf32>
    %342 = tpu.matmul %337, %339, %cst_75 {dimension_numbers = #tpu.dot_dimension_numbers<[1], [0], [0], [1], [0, 0, 1, 1], [], []>} : vector<8x8xbf16>, vector<8x128xbf16>, vector<8x128xf32> -> vector<8x128xf32>
    %cst_76 = arith.constant 0.000000e+00 : f32
    %343 = vector.broadcast %cst_76 : f32 to vector<8x128xf32>
    %cst_77 = arith.constant 0.000000e+00 : f32
    %344 = vector.broadcast %cst_77 : f32 to vector<8x128xf32>
    %c32 = arith.constant 32 : index
    %345 = memref.load %arg12[%c32] : memref<132xf32, #tpu.memory_space<smem>>
    %c40 = arith.constant 40 : index
    %346 = memref.load %arg12[%c40] : memref<132xf32, #tpu.memory_space<smem>>
    %c80 = arith.constant 80 : index
    %347 = memref.load %arg12[%c80] : memref<132xf32, #tpu.memory_space<smem>>
    %c112 = arith.constant 112 : index
    %348 = memref.load %arg12[%c112] : memref<132xf32, #tpu.memory_space<smem>>
    %349 = vector.broadcast %345 : f32 to vector<8x128xf32>
    %350 = arith.mulf %342, %349 : vector<8x128xf32>
    %351 = vector.broadcast %346 : f32 to vector<8x128xf32>
    %352 = arith.mulf %25, %351 : vector<8x128xf32>
    %353 = arith.addf %350, %352 : vector<8x128xf32>
    %354 = vector.broadcast %347 : f32 to vector<8x128xf32>
    %355 = arith.addf %353, %354 : vector<8x128xf32>
    %cst_78 = arith.constant 0.000000e+00 : f32
    %356 = vector.broadcast %cst_78 : f32 to vector<8x128xf32>
    %357 = arith.maximumf %355, %356 : vector<8x128xf32>
    %358 = vector.broadcast %348 : f32 to vector<8x128xf32>
    %359 = arith.mulf %357, %358 : vector<8x128xf32>
    %360 = arith.addf %343, %359 : vector<8x128xf32>
    %c33 = arith.constant 33 : index
    %361 = memref.load %arg12[%c33] : memref<132xf32, #tpu.memory_space<smem>>
    %c41 = arith.constant 41 : index
    %362 = memref.load %arg12[%c41] : memref<132xf32, #tpu.memory_space<smem>>
    %c81 = arith.constant 81 : index
    %363 = memref.load %arg12[%c81] : memref<132xf32, #tpu.memory_space<smem>>
    %c113 = arith.constant 113 : index
    %364 = memref.load %arg12[%c113] : memref<132xf32, #tpu.memory_space<smem>>
    %365 = vector.broadcast %361 : f32 to vector<8x128xf32>
    %366 = arith.mulf %342, %365 : vector<8x128xf32>
    %367 = vector.broadcast %362 : f32 to vector<8x128xf32>
    %368 = arith.mulf %25, %367 : vector<8x128xf32>
    %369 = arith.addf %366, %368 : vector<8x128xf32>
    %370 = vector.broadcast %363 : f32 to vector<8x128xf32>
    %371 = arith.addf %369, %370 : vector<8x128xf32>
    %cst_79 = arith.constant 0.000000e+00 : f32
    %372 = vector.broadcast %cst_79 : f32 to vector<8x128xf32>
    %373 = arith.maximumf %371, %372 : vector<8x128xf32>
    %374 = vector.broadcast %364 : f32 to vector<8x128xf32>
    %375 = arith.mulf %373, %374 : vector<8x128xf32>
    %376 = arith.addf %344, %375 : vector<8x128xf32>
    %c34 = arith.constant 34 : index
    %377 = memref.load %arg12[%c34] : memref<132xf32, #tpu.memory_space<smem>>
    %c42 = arith.constant 42 : index
    %378 = memref.load %arg12[%c42] : memref<132xf32, #tpu.memory_space<smem>>
    %c82 = arith.constant 82 : index
    %379 = memref.load %arg12[%c82] : memref<132xf32, #tpu.memory_space<smem>>
    %c114 = arith.constant 114 : index
    %380 = memref.load %arg12[%c114] : memref<132xf32, #tpu.memory_space<smem>>
    %381 = vector.broadcast %377 : f32 to vector<8x128xf32>
    %382 = arith.mulf %342, %381 : vector<8x128xf32>
    %383 = vector.broadcast %378 : f32 to vector<8x128xf32>
    %384 = arith.mulf %25, %383 : vector<8x128xf32>
    %385 = arith.addf %382, %384 : vector<8x128xf32>
    %386 = vector.broadcast %379 : f32 to vector<8x128xf32>
    %387 = arith.addf %385, %386 : vector<8x128xf32>
    %cst_80 = arith.constant 0.000000e+00 : f32
    %388 = vector.broadcast %cst_80 : f32 to vector<8x128xf32>
    %389 = arith.maximumf %387, %388 : vector<8x128xf32>
    %390 = vector.broadcast %380 : f32 to vector<8x128xf32>
    %391 = arith.mulf %389, %390 : vector<8x128xf32>
    %392 = arith.addf %360, %391 : vector<8x128xf32>
    %c35 = arith.constant 35 : index
    %393 = memref.load %arg12[%c35] : memref<132xf32, #tpu.memory_space<smem>>
    %c43 = arith.constant 43 : index
    %394 = memref.load %arg12[%c43] : memref<132xf32, #tpu.memory_space<smem>>
    %c83 = arith.constant 83 : index
    %395 = memref.load %arg12[%c83] : memref<132xf32, #tpu.memory_space<smem>>
    %c115 = arith.constant 115 : index
    %396 = memref.load %arg12[%c115] : memref<132xf32, #tpu.memory_space<smem>>
    %397 = vector.broadcast %393 : f32 to vector<8x128xf32>
    %398 = arith.mulf %342, %397 : vector<8x128xf32>
    %399 = vector.broadcast %394 : f32 to vector<8x128xf32>
    %400 = arith.mulf %25, %399 : vector<8x128xf32>
    %401 = arith.addf %398, %400 : vector<8x128xf32>
    %402 = vector.broadcast %395 : f32 to vector<8x128xf32>
    %403 = arith.addf %401, %402 : vector<8x128xf32>
    %cst_81 = arith.constant 0.000000e+00 : f32
    %404 = vector.broadcast %cst_81 : f32 to vector<8x128xf32>
    %405 = arith.maximumf %403, %404 : vector<8x128xf32>
    %406 = vector.broadcast %396 : f32 to vector<8x128xf32>
    %407 = arith.mulf %405, %406 : vector<8x128xf32>
    %408 = arith.addf %376, %407 : vector<8x128xf32>
    %c36 = arith.constant 36 : index
    %409 = memref.load %arg12[%c36] : memref<132xf32, #tpu.memory_space<smem>>
    %c44 = arith.constant 44 : index
    %410 = memref.load %arg12[%c44] : memref<132xf32, #tpu.memory_space<smem>>
    %c84 = arith.constant 84 : index
    %411 = memref.load %arg12[%c84] : memref<132xf32, #tpu.memory_space<smem>>
    %c116 = arith.constant 116 : index
    %412 = memref.load %arg12[%c116] : memref<132xf32, #tpu.memory_space<smem>>
    %413 = vector.broadcast %409 : f32 to vector<8x128xf32>
    %414 = arith.mulf %342, %413 : vector<8x128xf32>
    %415 = vector.broadcast %410 : f32 to vector<8x128xf32>
    %416 = arith.mulf %25, %415 : vector<8x128xf32>
    %417 = arith.addf %414, %416 : vector<8x128xf32>
    %418 = vector.broadcast %411 : f32 to vector<8x128xf32>
    %419 = arith.addf %417, %418 : vector<8x128xf32>
    %cst_82 = arith.constant 0.000000e+00 : f32
    %420 = vector.broadcast %cst_82 : f32 to vector<8x128xf32>
    %421 = arith.maximumf %419, %420 : vector<8x128xf32>
    %422 = vector.broadcast %412 : f32 to vector<8x128xf32>
    %423 = arith.mulf %421, %422 : vector<8x128xf32>
    %424 = arith.addf %392, %423 : vector<8x128xf32>
    %c37 = arith.constant 37 : index
    %425 = memref.load %arg12[%c37] : memref<132xf32, #tpu.memory_space<smem>>
    %c45 = arith.constant 45 : index
    %426 = memref.load %arg12[%c45] : memref<132xf32, #tpu.memory_space<smem>>
    %c85 = arith.constant 85 : index
    %427 = memref.load %arg12[%c85] : memref<132xf32, #tpu.memory_space<smem>>
    %c117 = arith.constant 117 : index
    %428 = memref.load %arg12[%c117] : memref<132xf32, #tpu.memory_space<smem>>
    %429 = vector.broadcast %425 : f32 to vector<8x128xf32>
    %430 = arith.mulf %342, %429 : vector<8x128xf32>
    %431 = vector.broadcast %426 : f32 to vector<8x128xf32>
    %432 = arith.mulf %25, %431 : vector<8x128xf32>
    %433 = arith.addf %430, %432 : vector<8x128xf32>
    %434 = vector.broadcast %427 : f32 to vector<8x128xf32>
    %435 = arith.addf %433, %434 : vector<8x128xf32>
    %cst_83 = arith.constant 0.000000e+00 : f32
    %436 = vector.broadcast %cst_83 : f32 to vector<8x128xf32>
    %437 = arith.maximumf %435, %436 : vector<8x128xf32>
    %438 = vector.broadcast %428 : f32 to vector<8x128xf32>
    %439 = arith.mulf %437, %438 : vector<8x128xf32>
    %440 = arith.addf %408, %439 : vector<8x128xf32>
    %c38 = arith.constant 38 : index
    %441 = memref.load %arg12[%c38] : memref<132xf32, #tpu.memory_space<smem>>
    %c46 = arith.constant 46 : index
    %442 = memref.load %arg12[%c46] : memref<132xf32, #tpu.memory_space<smem>>
    %c86 = arith.constant 86 : index
    %443 = memref.load %arg12[%c86] : memref<132xf32, #tpu.memory_space<smem>>
    %c118 = arith.constant 118 : index
    %444 = memref.load %arg12[%c118] : memref<132xf32, #tpu.memory_space<smem>>
    %445 = vector.broadcast %441 : f32 to vector<8x128xf32>
    %446 = arith.mulf %342, %445 : vector<8x128xf32>
    %447 = vector.broadcast %442 : f32 to vector<8x128xf32>
    %448 = arith.mulf %25, %447 : vector<8x128xf32>
    %449 = arith.addf %446, %448 : vector<8x128xf32>
    %450 = vector.broadcast %443 : f32 to vector<8x128xf32>
    %451 = arith.addf %449, %450 : vector<8x128xf32>
    %cst_84 = arith.constant 0.000000e+00 : f32
    %452 = vector.broadcast %cst_84 : f32 to vector<8x128xf32>
    %453 = arith.maximumf %451, %452 : vector<8x128xf32>
    %454 = vector.broadcast %444 : f32 to vector<8x128xf32>
    %455 = arith.mulf %453, %454 : vector<8x128xf32>
    %456 = arith.addf %424, %455 : vector<8x128xf32>
    %c39 = arith.constant 39 : index
    %457 = memref.load %arg12[%c39] : memref<132xf32, #tpu.memory_space<smem>>
    %c47 = arith.constant 47 : index
    %458 = memref.load %arg12[%c47] : memref<132xf32, #tpu.memory_space<smem>>
    %c87 = arith.constant 87 : index
    %459 = memref.load %arg12[%c87] : memref<132xf32, #tpu.memory_space<smem>>
    %c119 = arith.constant 119 : index
    %460 = memref.load %arg12[%c119] : memref<132xf32, #tpu.memory_space<smem>>
    %461 = vector.broadcast %457 : f32 to vector<8x128xf32>
    %462 = arith.mulf %342, %461 : vector<8x128xf32>
    %463 = vector.broadcast %458 : f32 to vector<8x128xf32>
    %464 = arith.mulf %25, %463 : vector<8x128xf32>
    %465 = arith.addf %462, %464 : vector<8x128xf32>
    %466 = vector.broadcast %459 : f32 to vector<8x128xf32>
    %467 = arith.addf %465, %466 : vector<8x128xf32>
    %cst_85 = arith.constant 0.000000e+00 : f32
    %468 = vector.broadcast %cst_85 : f32 to vector<8x128xf32>
    %469 = arith.maximumf %467, %468 : vector<8x128xf32>
    %470 = vector.broadcast %460 : f32 to vector<8x128xf32>
    %471 = arith.mulf %469, %470 : vector<8x128xf32>
    %472 = arith.addf %440, %471 : vector<8x128xf32>
    %473 = arith.addf %456, %472 : vector<8x128xf32>
    %c130 = arith.constant 130 : index
    %474 = memref.load %arg12[%c130] : memref<132xf32, #tpu.memory_space<smem>>
    %475 = vector.broadcast %474 : f32 to vector<8x128xf32>
    %476 = arith.addf %473, %475 : vector<8x128xf32>
    %cst_86 = arith.constant -1.000000e+30 : f32
    %477 = vector.broadcast %cst_86 : f32 to vector<8x128xf32>
    %478 = arith.select %10, %476, %477 : vector<8x128xi1>, vector<8x128xf32>
    %cst_87 = arith.constant dense<0xFF800000> : vector<8xf32>
    %479 = vector.multi_reduction <maximumf>, %478, %cst_87 [1] : vector<8x128xf32> to vector<8xf32>
    %480 = vector.shape_cast %479 : vector<8xf32> to vector<8x1xf32>
    %481 = vector.broadcast %480 : vector<8x1xf32> to vector<8x128xf32>
    %482 = arith.subf %478, %481 : vector<8x128xf32>
    %483 = math.exp %482 : vector<8x128xf32>
    %cst_88 = arith.constant dense<0.000000e+00> : vector<8xf32>
    %484 = vector.multi_reduction <add>, %483, %cst_88 [1] : vector<8x128xf32> to vector<8xf32>
    %485 = vector.shape_cast %484 : vector<8xf32> to vector<8x1xf32>
    %486 = tpu.reciprocal %485 {approx = true} : vector<8x1xf32> -> vector<8x1xf32>
    %487 = vector.broadcast %486 : vector<8x1xf32> to vector<8x128xf32>
    %488 = arith.mulf %483, %487 : vector<8x128xf32>
    %489 = arith.truncf %488 : vector<8x128xf32> to vector<8x128xbf16>
    %cst_89 = arith.constant dense<0.000000e+00> : vector<8x8xf32>
    %490 = tpu.matmul %489, %341, %cst_89 {dimension_numbers = #tpu.dot_dimension_numbers<[1], [1], [0], [0], [0, 0, 1, 0], [], []>} : vector<8x128xbf16>, vector<8x128xbf16>, vector<8x8xf32> -> vector<8x8xf32>
    %c0_90 = arith.constant 0 : index
    %c24_91 = arith.constant 24 : index
    %491 = vector.load %arg14[%c0_90, %c24_91] : memref<8x128xf32, #tpu.memory_space<vmem>>, vector<8x8xf32>
    %492 = arith.truncf %491 : vector<8x8xf32> to vector<8x8xbf16>
    %c24_92 = arith.constant 24 : index
    %c0_93 = arith.constant 0 : index
    %493 = vector.load %arg15[%c24_92, %c0_93] : memref<128x128xf32, #tpu.memory_space<vmem>>, vector<8x128xf32>
    %494 = arith.truncf %493 : vector<8x128xf32> to vector<8x128xbf16>
    %c24_94 = arith.constant 24 : index
    %c0_95 = arith.constant 0 : index
    %495 = vector.load %arg16[%c24_94, %c0_95] : memref<128x128xf32, #tpu.memory_space<vmem>>, vector<8x128xf32>
    %496 = arith.truncf %495 : vector<8x128xf32> to vector<8x128xbf16>
    %cst_96 = arith.constant dense<0.000000e+00> : vector<8x128xf32>
    %497 = tpu.matmul %492, %494, %cst_96 {dimension_numbers = #tpu.dot_dimension_numbers<[1], [0], [0], [1], [0, 0, 1, 1], [], []>} : vector<8x8xbf16>, vector<8x128xbf16>, vector<8x128xf32> -> vector<8x128xf32>
    %cst_97 = arith.constant 0.000000e+00 : f32
    %498 = vector.broadcast %cst_97 : f32 to vector<8x128xf32>
    %cst_98 = arith.constant 0.000000e+00 : f32
    %499 = vector.broadcast %cst_98 : f32 to vector<8x128xf32>
    %c48 = arith.constant 48 : index
    %500 = memref.load %arg12[%c48] : memref<132xf32, #tpu.memory_space<smem>>
    %c56 = arith.constant 56 : index
    %501 = memref.load %arg12[%c56] : memref<132xf32, #tpu.memory_space<smem>>
    %c88 = arith.constant 88 : index
    %502 = memref.load %arg12[%c88] : memref<132xf32, #tpu.memory_space<smem>>
    %c120 = arith.constant 120 : index
    %503 = memref.load %arg12[%c120] : memref<132xf32, #tpu.memory_space<smem>>
    %504 = vector.broadcast %500 : f32 to vector<8x128xf32>
    %505 = arith.mulf %497, %504 : vector<8x128xf32>
    %506 = vector.broadcast %501 : f32 to vector<8x128xf32>
    %507 = arith.mulf %25, %506 : vector<8x128xf32>
    %508 = arith.addf %505, %507 : vector<8x128xf32>
    %509 = vector.broadcast %502 : f32 to vector<8x128xf32>
    %510 = arith.addf %508, %509 : vector<8x128xf32>
    %cst_99 = arith.constant 0.000000e+00 : f32
    %511 = vector.broadcast %cst_99 : f32 to vector<8x128xf32>
    %512 = arith.maximumf %510, %511 : vector<8x128xf32>
    %513 = vector.broadcast %503 : f32 to vector<8x128xf32>
    %514 = arith.mulf %512, %513 : vector<8x128xf32>
    %515 = arith.addf %498, %514 : vector<8x128xf32>
    %c49 = arith.constant 49 : index
    %516 = memref.load %arg12[%c49] : memref<132xf32, #tpu.memory_space<smem>>
    %c57 = arith.constant 57 : index
    %517 = memref.load %arg12[%c57] : memref<132xf32, #tpu.memory_space<smem>>
    %c89 = arith.constant 89 : index
    %518 = memref.load %arg12[%c89] : memref<132xf32, #tpu.memory_space<smem>>
    %c121 = arith.constant 121 : index
    %519 = memref.load %arg12[%c121] : memref<132xf32, #tpu.memory_space<smem>>
    %520 = vector.broadcast %516 : f32 to vector<8x128xf32>
    %521 = arith.mulf %497, %520 : vector<8x128xf32>
    %522 = vector.broadcast %517 : f32 to vector<8x128xf32>
    %523 = arith.mulf %25, %522 : vector<8x128xf32>
    %524 = arith.addf %521, %523 : vector<8x128xf32>
    %525 = vector.broadcast %518 : f32 to vector<8x128xf32>
    %526 = arith.addf %524, %525 : vector<8x128xf32>
    %cst_100 = arith.constant 0.000000e+00 : f32
    %527 = vector.broadcast %cst_100 : f32 to vector<8x128xf32>
    %528 = arith.maximumf %526, %527 : vector<8x128xf32>
    %529 = vector.broadcast %519 : f32 to vector<8x128xf32>
    %530 = arith.mulf %528, %529 : vector<8x128xf32>
    %531 = arith.addf %499, %530 : vector<8x128xf32>
    %c50 = arith.constant 50 : index
    %532 = memref.load %arg12[%c50] : memref<132xf32, #tpu.memory_space<smem>>
    %c58 = arith.constant 58 : index
    %533 = memref.load %arg12[%c58] : memref<132xf32, #tpu.memory_space<smem>>
    %c90 = arith.constant 90 : index
    %534 = memref.load %arg12[%c90] : memref<132xf32, #tpu.memory_space<smem>>
    %c122 = arith.constant 122 : index
    %535 = memref.load %arg12[%c122] : memref<132xf32, #tpu.memory_space<smem>>
    %536 = vector.broadcast %532 : f32 to vector<8x128xf32>
    %537 = arith.mulf %497, %536 : vector<8x128xf32>
    %538 = vector.broadcast %533 : f32 to vector<8x128xf32>
    %539 = arith.mulf %25, %538 : vector<8x128xf32>
    %540 = arith.addf %537, %539 : vector<8x128xf32>
    %541 = vector.broadcast %534 : f32 to vector<8x128xf32>
    %542 = arith.addf %540, %541 : vector<8x128xf32>
    %cst_101 = arith.constant 0.000000e+00 : f32
    %543 = vector.broadcast %cst_101 : f32 to vector<8x128xf32>
    %544 = arith.maximumf %542, %543 : vector<8x128xf32>
    %545 = vector.broadcast %535 : f32 to vector<8x128xf32>
    %546 = arith.mulf %544, %545 : vector<8x128xf32>
    %547 = arith.addf %515, %546 : vector<8x128xf32>
    %c51 = arith.constant 51 : index
    %548 = memref.load %arg12[%c51] : memref<132xf32, #tpu.memory_space<smem>>
    %c59 = arith.constant 59 : index
    %549 = memref.load %arg12[%c59] : memref<132xf32, #tpu.memory_space<smem>>
    %c91 = arith.constant 91 : index
    %550 = memref.load %arg12[%c91] : memref<132xf32, #tpu.memory_space<smem>>
    %c123 = arith.constant 123 : index
    %551 = memref.load %arg12[%c123] : memref<132xf32, #tpu.memory_space<smem>>
    %552 = vector.broadcast %548 : f32 to vector<8x128xf32>
    %553 = arith.mulf %497, %552 : vector<8x128xf32>
    %554 = vector.broadcast %549 : f32 to vector<8x128xf32>
    %555 = arith.mulf %25, %554 : vector<8x128xf32>
    %556 = arith.addf %553, %555 : vector<8x128xf32>
    %557 = vector.broadcast %550 : f32 to vector<8x128xf32>
    %558 = arith.addf %556, %557 : vector<8x128xf32>
    %cst_102 = arith.constant 0.000000e+00 : f32
    %559 = vector.broadcast %cst_102 : f32 to vector<8x128xf32>
    %560 = arith.maximumf %558, %559 : vector<8x128xf32>
    %561 = vector.broadcast %551 : f32 to vector<8x128xf32>
    %562 = arith.mulf %560, %561 : vector<8x128xf32>
    %563 = arith.addf %531, %562 : vector<8x128xf32>
    %c52 = arith.constant 52 : index
    %564 = memref.load %arg12[%c52] : memref<132xf32, #tpu.memory_space<smem>>
    %c60 = arith.constant 60 : index
    %565 = memref.load %arg12[%c60] : memref<132xf32, #tpu.memory_space<smem>>
    %c92 = arith.constant 92 : index
    %566 = memref.load %arg12[%c92] : memref<132xf32, #tpu.memory_space<smem>>
    %c124 = arith.constant 124 : index
    %567 = memref.load %arg12[%c124] : memref<132xf32, #tpu.memory_space<smem>>
    %568 = vector.broadcast %564 : f32 to vector<8x128xf32>
    %569 = arith.mulf %497, %568 : vector<8x128xf32>
    %570 = vector.broadcast %565 : f32 to vector<8x128xf32>
    %571 = arith.mulf %25, %570 : vector<8x128xf32>
    %572 = arith.addf %569, %571 : vector<8x128xf32>
    %573 = vector.broadcast %566 : f32 to vector<8x128xf32>
    %574 = arith.addf %572, %573 : vector<8x128xf32>
    %cst_103 = arith.constant 0.000000e+00 : f32
    %575 = vector.broadcast %cst_103 : f32 to vector<8x128xf32>
    %576 = arith.maximumf %574, %575 : vector<8x128xf32>
    %577 = vector.broadcast %567 : f32 to vector<8x128xf32>
    %578 = arith.mulf %576, %577 : vector<8x128xf32>
    %579 = arith.addf %547, %578 : vector<8x128xf32>
    %c53 = arith.constant 53 : index
    %580 = memref.load %arg12[%c53] : memref<132xf32, #tpu.memory_space<smem>>
    %c61 = arith.constant 61 : index
    %581 = memref.load %arg12[%c61] : memref<132xf32, #tpu.memory_space<smem>>
    %c93 = arith.constant 93 : index
    %582 = memref.load %arg12[%c93] : memref<132xf32, #tpu.memory_space<smem>>
    %c125 = arith.constant 125 : index
    %583 = memref.load %arg12[%c125] : memref<132xf32, #tpu.memory_space<smem>>
    %584 = vector.broadcast %580 : f32 to vector<8x128xf32>
    %585 = arith.mulf %497, %584 : vector<8x128xf32>
    %586 = vector.broadcast %581 : f32 to vector<8x128xf32>
    %587 = arith.mulf %25, %586 : vector<8x128xf32>
    %588 = arith.addf %585, %587 : vector<8x128xf32>
    %589 = vector.broadcast %582 : f32 to vector<8x128xf32>
    %590 = arith.addf %588, %589 : vector<8x128xf32>
    %cst_104 = arith.constant 0.000000e+00 : f32
    %591 = vector.broadcast %cst_104 : f32 to vector<8x128xf32>
    %592 = arith.maximumf %590, %591 : vector<8x128xf32>
    %593 = vector.broadcast %583 : f32 to vector<8x128xf32>
    %594 = arith.mulf %592, %593 : vector<8x128xf32>
    %595 = arith.addf %563, %594 : vector<8x128xf32>
    %c54 = arith.constant 54 : index
    %596 = memref.load %arg12[%c54] : memref<132xf32, #tpu.memory_space<smem>>
    %c62 = arith.constant 62 : index
    %597 = memref.load %arg12[%c62] : memref<132xf32, #tpu.memory_space<smem>>
    %c94 = arith.constant 94 : index
    %598 = memref.load %arg12[%c94] : memref<132xf32, #tpu.memory_space<smem>>
    %c126 = arith.constant 126 : index
    %599 = memref.load %arg12[%c126] : memref<132xf32, #tpu.memory_space<smem>>
    %600 = vector.broadcast %596 : f32 to vector<8x128xf32>
    %601 = arith.mulf %497, %600 : vector<8x128xf32>
    %602 = vector.broadcast %597 : f32 to vector<8x128xf32>
    %603 = arith.mulf %25, %602 : vector<8x128xf32>
    %604 = arith.addf %601, %603 : vector<8x128xf32>
    %605 = vector.broadcast %598 : f32 to vector<8x128xf32>
    %606 = arith.addf %604, %605 : vector<8x128xf32>
    %cst_105 = arith.constant 0.000000e+00 : f32
    %607 = vector.broadcast %cst_105 : f32 to vector<8x128xf32>
    %608 = arith.maximumf %606, %607 : vector<8x128xf32>
    %609 = vector.broadcast %599 : f32 to vector<8x128xf32>
    %610 = arith.mulf %608, %609 : vector<8x128xf32>
    %611 = arith.addf %579, %610 : vector<8x128xf32>
    %c55 = arith.constant 55 : index
    %612 = memref.load %arg12[%c55] : memref<132xf32, #tpu.memory_space<smem>>
    %c63 = arith.constant 63 : index
    %613 = memref.load %arg12[%c63] : memref<132xf32, #tpu.memory_space<smem>>
    %c95 = arith.constant 95 : index
    %614 = memref.load %arg12[%c95] : memref<132xf32, #tpu.memory_space<smem>>
    %c127 = arith.constant 127 : index
    %615 = memref.load %arg12[%c127] : memref<132xf32, #tpu.memory_space<smem>>
    %616 = vector.broadcast %612 : f32 to vector<8x128xf32>
    %617 = arith.mulf %497, %616 : vector<8x128xf32>
    %618 = vector.broadcast %613 : f32 to vector<8x128xf32>
    %619 = arith.mulf %25, %618 : vector<8x128xf32>
    %620 = arith.addf %617, %619 : vector<8x128xf32>
    %621 = vector.broadcast %614 : f32 to vector<8x128xf32>
    %622 = arith.addf %620, %621 : vector<8x128xf32>
    %cst_106 = arith.constant 0.000000e+00 : f32
    %623 = vector.broadcast %cst_106 : f32 to vector<8x128xf32>
    %624 = arith.maximumf %622, %623 : vector<8x128xf32>
    %625 = vector.broadcast %615 : f32 to vector<8x128xf32>
    %626 = arith.mulf %624, %625 : vector<8x128xf32>
    %627 = arith.addf %595, %626 : vector<8x128xf32>
    %628 = arith.addf %611, %627 : vector<8x128xf32>
    %c131 = arith.constant 131 : index
    %629 = memref.load %arg12[%c131] : memref<132xf32, #tpu.memory_space<smem>>
    %630 = vector.broadcast %629 : f32 to vector<8x128xf32>
    %631 = arith.addf %628, %630 : vector<8x128xf32>
    %cst_107 = arith.constant -1.000000e+30 : f32
    %632 = vector.broadcast %cst_107 : f32 to vector<8x128xf32>
    %633 = arith.select %10, %631, %632 : vector<8x128xi1>, vector<8x128xf32>
    %cst_108 = arith.constant dense<0xFF800000> : vector<8xf32>
    %634 = vector.multi_reduction <maximumf>, %633, %cst_108 [1] : vector<8x128xf32> to vector<8xf32>
    %635 = vector.shape_cast %634 : vector<8xf32> to vector<8x1xf32>
    %636 = vector.broadcast %635 : vector<8x1xf32> to vector<8x128xf32>
    %637 = arith.subf %633, %636 : vector<8x128xf32>
    %638 = math.exp %637 : vector<8x128xf32>
    %cst_109 = arith.constant dense<0.000000e+00> : vector<8xf32>
    %639 = vector.multi_reduction <add>, %638, %cst_109 [1] : vector<8x128xf32> to vector<8xf32>
    %640 = vector.shape_cast %639 : vector<8xf32> to vector<8x1xf32>
    %641 = tpu.reciprocal %640 {approx = true} : vector<8x1xf32> -> vector<8x1xf32>
    %642 = vector.broadcast %641 : vector<8x1xf32> to vector<8x128xf32>
    %643 = arith.mulf %638, %642 : vector<8x128xf32>
    %644 = arith.truncf %643 : vector<8x128xf32> to vector<8x128xbf16>
    %cst_110 = arith.constant dense<0.000000e+00> : vector<8x8xf32>
    %645 = tpu.matmul %644, %496, %cst_110 {dimension_numbers = #tpu.dot_dimension_numbers<[1], [1], [0], [0], [0, 0, 1, 0], [], []>} : vector<8x128xbf16>, vector<8x128xbf16>, vector<8x8xf32> -> vector<8x8xf32>
    %cst_111 = arith.constant 0.000000e+00 : f32
    %646 = vector.broadcast %cst_111 : f32 to vector<8x96xf32>
    %647 = tpu.concatenate %180, %335, %490, %645, %646 in 1 : vector<8x8xf32>, vector<8x8xf32>, vector<8x8xf32>, vector<8x8xf32>, vector<8x96xf32> -> vector<8x128xf32>
    %648 = arith.truncf %647 : vector<8x128xf32> to vector<8x128xbf16>
    %c0_112 = arith.constant 0 : index
    %c0_113 = arith.constant 0 : index
    %649 = vector.load %arg7[%c0_112, %c0_113] : memref<128x128xbf16, #tpu.memory_space<vmem>>, vector<128x128xbf16>
    %cst_114 = arith.constant dense<0.000000e+00> : vector<8x128xf32>
    %650 = tpu.matmul %648, %649, %cst_114 {dimension_numbers = #tpu.dot_dimension_numbers<[1], [0], [0], [1], [0, 0, 1, 1], [], []>} : vector<8x128xbf16>, vector<128x128xbf16>, vector<8x128xf32> -> vector<8x128xf32>
    %651 = vector.broadcast %1 : vector<1x128xf32> to vector<8x128xf32>
    %652 = arith.addf %650, %651 : vector<8x128xf32>
    %c0_115 = arith.constant 0 : index
    %c0_116 = arith.constant 0 : index
    %c0_117 = arith.constant 0 : index
    %653 = vector.load %arg1[%c0_115, %c0_116, %c0_117] : memref<1x8x128xbf16, #tpu.memory_space<vmem>>, vector<1x8x128xbf16>
    %654 = vector.shape_cast %653 : vector<1x8x128xbf16> to vector<8x128xbf16>
    %655 = arith.extf %654 : vector<8x128xbf16> to vector<8x128xf32>
    %656 = arith.addf %655, %652 : vector<8x128xf32>
    %cst_118 = arith.constant dense<0.000000e+00> : vector<128xf32>
    %657 = vector.multi_reduction <add>, %656, %cst_118 [0] : vector<8x128xf32> to vector<128xf32>
    %658 = vector.shape_cast %657 : vector<128xf32> to vector<1x128xf32>
    %cst_119 = arith.constant 8.000000e+00 : f32
    %659 = vector.broadcast %cst_119 : f32 to vector<1x128xf32>
    %660 = arith.divf %658, %659 : vector<1x128xf32>
    %661 = vector.broadcast %660 : vector<1x128xf32> to vector<8x128xf32>
    %662 = arith.subf %656, %661 : vector<8x128xf32>
    %663 = arith.mulf %662, %662 : vector<8x128xf32>
    %cst_120 = arith.constant dense<0.000000e+00> : vector<128xf32>
    %664 = vector.multi_reduction <add>, %663, %cst_120 [0] : vector<8x128xf32> to vector<128xf32>
    %665 = vector.shape_cast %664 : vector<128xf32> to vector<1x128xf32>
    %cst_121 = arith.constant 8.000000e+00 : f32
    %666 = vector.broadcast %cst_121 : f32 to vector<1x128xf32>
    %667 = arith.divf %665, %666 : vector<1x128xf32>
    %668 = vector.broadcast %660 : vector<1x128xf32> to vector<8x128xf32>
    %669 = arith.subf %656, %668 : vector<8x128xf32>
    %cst_122 = arith.constant 9.99999974E-6 : f32
    %670 = vector.broadcast %cst_122 : f32 to vector<1x128xf32>
    %671 = arith.addf %667, %670 : vector<1x128xf32>
    %672 = math.rsqrt %671 : vector<1x128xf32>
    %673 = vector.broadcast %672 : vector<1x128xf32> to vector<8x128xf32>
    %674 = arith.mulf %669, %673 : vector<8x128xf32>
    %675 = vector.broadcast %3 : vector<1x128xf32> to vector<8x128xf32>
    %676 = arith.mulf %674, %675 : vector<8x128xf32>
    %677 = vector.broadcast %4 : vector<1x128xf32> to vector<8x128xf32>
    %678 = arith.addf %676, %677 : vector<8x128xf32>
    %679 = arith.truncf %678 : vector<8x128xf32> to vector<8x128xbf16>
    %c0_123 = arith.constant 0 : index
    %c0_124 = arith.constant 0 : index
    %680 = vector.load %arg8[%c0_123, %c0_124] : memref<128x128xbf16, #tpu.memory_space<vmem>>, vector<128x128xbf16>
    %cst_125 = arith.constant dense<0.000000e+00> : vector<8x128xf32>
    %681 = tpu.matmul %679, %680, %cst_125 {dimension_numbers = #tpu.dot_dimension_numbers<[1], [0], [0], [1], [0, 0, 1, 1], [], []>} : vector<8x128xbf16>, vector<128x128xbf16>, vector<8x128xf32> -> vector<8x128xf32>
    %682 = vector.broadcast %7 : vector<1x128xf32> to vector<8x128xf32>
    %683 = arith.addf %681, %682 : vector<8x128xf32>
    %cst_126 = arith.constant 0.000000e+00 : f32
    %684 = vector.broadcast %cst_126 : f32 to vector<8x128xf32>
    %685 = arith.maximumf %683, %684 : vector<8x128xf32>
    %686 = arith.truncf %685 : vector<8x128xf32> to vector<8x128xbf16>
    %c0_127 = arith.constant 0 : index
    %c0_128 = arith.constant 0 : index
    %687 = vector.load %arg9[%c0_127, %c0_128] : memref<128x128xbf16, #tpu.memory_space<vmem>>, vector<128x128xbf16>
    %cst_129 = arith.constant dense<0.000000e+00> : vector<8x128xf32>
    %688 = tpu.matmul %686, %687, %cst_129 {dimension_numbers = #tpu.dot_dimension_numbers<[1], [0], [0], [1], [0, 0, 1, 1], [], []>} : vector<8x128xbf16>, vector<128x128xbf16>, vector<8x128xf32> -> vector<8x128xf32>
    %689 = vector.broadcast %2 : vector<1x128xf32> to vector<8x128xf32>
    %690 = arith.addf %688, %689 : vector<8x128xf32>
    %691 = arith.addf %678, %690 : vector<8x128xf32>
    %cst_130 = arith.constant dense<0.000000e+00> : vector<128xf32>
    %692 = vector.multi_reduction <add>, %691, %cst_130 [0] : vector<8x128xf32> to vector<128xf32>
    %693 = vector.shape_cast %692 : vector<128xf32> to vector<1x128xf32>
    %cst_131 = arith.constant 8.000000e+00 : f32
    %694 = vector.broadcast %cst_131 : f32 to vector<1x128xf32>
    %695 = arith.divf %693, %694 : vector<1x128xf32>
    %696 = vector.broadcast %695 : vector<1x128xf32> to vector<8x128xf32>
    %697 = arith.subf %691, %696 : vector<8x128xf32>
    %698 = arith.mulf %697, %697 : vector<8x128xf32>
    %cst_132 = arith.constant dense<0.000000e+00> : vector<128xf32>
    %699 = vector.multi_reduction <add>, %698, %cst_132 [0] : vector<8x128xf32> to vector<128xf32>
    %700 = vector.shape_cast %699 : vector<128xf32> to vector<1x128xf32>
    %cst_133 = arith.constant 8.000000e+00 : f32
    %701 = vector.broadcast %cst_133 : f32 to vector<1x128xf32>
    %702 = arith.divf %700, %701 : vector<1x128xf32>
    %703 = vector.broadcast %695 : vector<1x128xf32> to vector<8x128xf32>
    %704 = arith.subf %691, %703 : vector<8x128xf32>
    %cst_134 = arith.constant 9.99999974E-6 : f32
    %705 = vector.broadcast %cst_134 : f32 to vector<1x128xf32>
    %706 = arith.addf %702, %705 : vector<1x128xf32>
    %707 = math.rsqrt %706 : vector<1x128xf32>
    %708 = vector.broadcast %707 : vector<1x128xf32> to vector<8x128xf32>
    %709 = arith.mulf %704, %708 : vector<8x128xf32>
    %710 = vector.broadcast %5 : vector<1x128xf32> to vector<8x128xf32>
    %711 = arith.mulf %709, %710 : vector<8x128xf32>
    %712 = vector.broadcast %6 : vector<1x128xf32> to vector<8x128xf32>
    %713 = arith.addf %711, %712 : vector<8x128xf32>
    %c0_135 = arith.constant 0 : index
    %c0_136 = arith.constant 0 : index
    %c0_137 = arith.constant 0 : index
    %714 = vector.load %arg13[%c0_135, %c0_136, %c0_137] : memref<1x8x128xf32, #tpu.memory_space<vmem>>, vector<1x8x128xf32>
    %715 = vector.shape_cast %714 : vector<1x8x128xf32> to vector<8x128xf32>
    %716 = vector.shape_cast %713 : vector<8x128xf32> to vector<1x8x128xf32>
    tpu.vector_store %arg13[%c0_135, %c0_136, %c0_137], %716 {strides = array<i32>} : memref<1x8x128xf32, #tpu.memory_space<vmem>>, vector<1x8x128xf32>,
    return
  }
  func.func @transform_0(%arg0: i32) -> (i32, i32, i32) {
    %c0_i32 = arith.constant 0 : i32
    %c0_i32_0 = arith.constant 0 : i32
    %c0_i32_1 = arith.constant 0 : i32
    return %arg0, %c0_i32, %c0_i32_0 : i32, i32, i32
  }
  func.func @transform_1(%arg0: i32) -> (i32, i32, i32) {
    %c0_i32 = arith.constant 0 : i32
    %c0_i32_0 = arith.constant 0 : i32
    %c0_i32_1 = arith.constant 0 : i32
    return %arg0, %c0_i32, %c0_i32_0 : i32, i32, i32
  }
  func.func @transform_2(%arg0: i32) -> (i32, i32, i32) {
    %c0_i32 = arith.constant 0 : i32
    %c0_i32_0 = arith.constant 0 : i32
    %c0_i32_1 = arith.constant 0 : i32
    return %arg0, %c0_i32, %c0_i32_0 : i32, i32, i32
  }
  func.func @transform_3(%arg0: i32) -> (i32, i32) {
    %c0_i32 = arith.constant 0 : i32
    %c0_i32_0 = arith.constant 0 : i32
    %c0_i32_1 = arith.constant 0 : i32
    return %c0_i32, %c0_i32_0 : i32, i32
  }
  func.func @transform_4(%arg0: i32) -> (i32, i32) {
    %c0_i32 = arith.constant 0 : i32
    %c0_i32_0 = arith.constant 0 : i32
    %c0_i32_1 = arith.constant 0 : i32
    return %c0_i32, %c0_i32_0 : i32, i32
  }
  func.func @transform_5(%arg0: i32) -> (i32, i32) {
    %c0_i32 = arith.constant 0 : i32
    %c0_i32_0 = arith.constant 0 : i32
    %c0_i32_1 = arith.constant 0 : i32
    return %c0_i32, %c0_i32_0 : i32, i32
  }
  func.func @transform_6(%arg0: i32) -> (i32, i32) {
    %c0_i32 = arith.constant 0 : i32
    %c0_i32_0 = arith.constant 0 : i32
    %c0_i32_1 = arith.constant 0 : i32
    return %c0_i32, %c0_i32_0 : i32, i32
  }
  func.func @transform_7(%arg0: i32) -> (i32, i32) {
    %c0_i32 = arith.constant 0 : i32
    %c0_i32_0 = arith.constant 0 : i32
    %c0_i32_1 = arith.constant 0 : i32
    return %c0_i32, %c0_i32_0 : i32, i32
  }
  func.func @transform_8(%arg0: i32) -> (i32, i32) {
    %c0_i32 = arith.constant 0 : i32
    %c0_i32_0 = arith.constant 0 : i32
    %c0_i32_1 = arith.constant 0 : i32
    return %c0_i32, %c0_i32_0 : i32, i32
  }
  func.func @transform_9(%arg0: i32) -> (i32, i32) {
    %c0_i32 = arith.constant 0 : i32
    %c0_i32_0 = arith.constant 0 : i32
    %c0_i32_1 = arith.constant 0 : i32
    return %c0_i32, %c0_i32_0 : i32, i32
  }
  func.func @transform_10(%arg0: i32) -> (i32, i32) {
    %c0_i32 = arith.constant 0 : i32
    %c0_i32_0 = arith.constant 0 : i32
    %c0_i32_1 = arith.constant 0 : i32
    return %c0_i32, %c0_i32_0 : i32, i32
  }
  func.func @transform_11(%arg0: i32) -> i32 {
    %c0_i32 = arith.constant 0 : i32
    %c0_i32_0 = arith.constant 0 : i32
    return %c0_i32 : i32
  }
  func.func @transform_12(%arg0: i32) -> (i32, i32, i32) {
    %c0_i32 = arith.constant 0 : i32
    %c0_i32_0 = arith.constant 0 : i32
    %c0_i32_1 = arith.constant 0 : i32
    return %arg0, %c0_i32, %c0_i32_0 : i32, i32, i32
  }
}

module attributes {stable_mosaic.version = 11 : i64} {
  func.func @kernel(%arg0: i32, %arg1: memref<1x8x128xbf16, #tpu.memory_space<vmem>>, %arg2: memref<1x128x128xbf16, #tpu.memory_space<vmem>>, %arg3: memref<1x8x128xf32, #tpu.memory_space<vmem>>, %arg4: memref<128x128xbf16, #tpu.memory_space<vmem>>, %arg5: memref<128x128xbf16, #tpu.memory_space<vmem>>, %arg6: memref<128x128xbf16, #tpu.memory_space<vmem>>, %arg7: memref<128x128xbf16, #tpu.memory_space<vmem>>, %arg8: memref<128x128xbf16, #tpu.memory_space<vmem>>, %arg9: memref<128x128xbf16, #tpu.memory_space<vmem>>, %arg10: memref<8x128xf32, #tpu.memory_space<vmem>>, %arg11: memref<1x128xf32, #tpu.memory_space<vmem>>, %arg12: memref<132xf32, #tpu.memory_space<smem>>, %arg13: memref<1x8x128xf32, #tpu.memory_space<vmem>>, %arg14: memref<8x128xf32, #tpu.memory_space<vmem>>, %arg15: memref<128x128xf32, #tpu.memory_space<vmem>>, %arg16: memref<128x128xf32, #tpu.memory_space<vmem>>) attributes {dimension_semantics = [#tpu.dimension_semantics<parallel>], iteration_bounds = array<i64: 2>, scalar_prefetch = 0 : i64, scratch_operands = 3 : i64, tpu.core_type = #tpu.core_type<tc>, window_params = [{transform_indices = @transform_0, window_bounds = array<i64: 1, 8, 128>}, {transform_indices = @transform_1, window_bounds = array<i64: 1, 128, 128>}, {transform_indices = @transform_2, window_bounds = array<i64: 1, 8, 128>}, {pipeline_mode = #tpu.pipeline_mode<synchronous>, transform_indices = @transform_3, window_bounds = array<i64: 128, 128>}, {pipeline_mode = #tpu.pipeline_mode<synchronous>, transform_indices = @transform_4, window_bounds = array<i64: 128, 128>}, {pipeline_mode = #tpu.pipeline_mode<synchronous>, transform_indices = @transform_5, window_bounds = array<i64: 128, 128>}, {pipeline_mode = #tpu.pipeline_mode<synchronous>, transform_indices = @transform_6, window_bounds = array<i64: 128, 128>}, {pipeline_mode = #tpu.pipeline_mode<synchronous>, transform_indices = @transform_7, window_bounds = array<i64: 128, 128>}, {pipeline_mode = #tpu.pipeline_mode<synchronous>, transform_indices = @transform_8, window_bounds = array<i64: 128, 128>}, {pipeline_mode = #tpu.pipeline_mode<synchronous>, transform_indices = @transform_9, window_bounds = array<i64: 8, 128>}, {pipeline_mode = #tpu.pipeline_mode<synchronous>, transform_indices = @transform_10, window_bounds = array<i64: 1, 128>}, {transform_indices = @transform_11, window_bounds = array<i64: 132>}, {transform_indices = @transform_12, window_bounds = array<i64: 1, 8, 128>}]} {
    %c0 = arith.constant 0 : index
    %c0_0 = arith.constant 0 : index
    %0 = vector.load %arg10[%c0, %c0_0] : memref<8x128xf32, #tpu.memory_space<vmem>>, vector<8x128xf32>
    %1 = vector.extract_strided_slice %0 {offsets = [0, 0], sizes = [1, 128], strides = [1, 1]} : vector<8x128xf32> to vector<1x128xf32>
    %2 = vector.extract_strided_slice %0 {offsets = [1, 0], sizes = [1, 128], strides = [1, 1]} : vector<8x128xf32> to vector<1x128xf32>
    %3 = vector.extract_strided_slice %0 {offsets = [2, 0], sizes = [1, 128], strides = [1, 1]} : vector<8x128xf32> to vector<1x128xf32>
    %4 = vector.extract_strided_slice %0 {offsets = [3, 0], sizes = [1, 128], strides = [1, 1]} : vector<8x128xf32> to vector<1x128xf32>
    %5 = vector.extract_strided_slice %0 {offsets = [4, 0], sizes = [1, 128], strides = [1, 1]} : vector<8x128xf32> to vector<1x128xf32>
    %6 = vector.extract_strided_slice %0 {offsets = [5, 0], sizes = [1, 128], strides = [1, 1]} : vector<8x128xf32> to vector<1x128xf32>
    %c0_1 = arith.constant 0 : index
    %c0_2 = arith.constant 0 : index
    %7 = vector.load %arg11[%c0_1, %c0_2] : memref<1x128xf32, #tpu.memory_space<vmem>>, vector<1x128xf32>
    %8 = tpu.iota {dimensions = array<i32: 1>} : vector<8x128xi32>
    %c16_i32 = arith.constant 16 : i32
    %9 = vector.broadcast %c16_i32 : i32 to vector<8x128xi32>
    %10 = arith.cmpi slt, %8, %9 : vector<8x128xi32>
    %c0_3 = arith.constant 0 : index
    %c0_4 = arith.constant 0 : index
    %c0_5 = arith.constant 0 : index
    %11 = vector.load %arg1[%c0_3, %c0_4, %c0_5] : memref<1x8x128xbf16, #tpu.memory_space<vmem>>, vector<1x8x128xbf16>
    %12 = vector.shape_cast %11 : vector<1x8x128xbf16> to vector<8x128xbf16>
    %c0_6 = arith.constant 0 : index
    %c0_7 = arith.constant 0 : index
    %13 = vector.load %arg4[%c0_6, %c0_7] : memref<128x128xbf16, #tpu.memory_space<vmem>>, vector<128x128xbf16>
    %cst = arith.constant dense<0.000000e+00> : vector<8x128xf32>
    %14 = tpu.matmul %12, %13, %cst {dimension_numbers = #tpu.dot_dimension_numbers<[1], [0], [0], [1], [0, 0, 1, 1], [], []>} : vector<8x128xbf16>, vector<128x128xbf16>, vector<8x128xf32> -> vector<8x128xf32>
    %c0_8 = arith.constant 0 : index
    %c0_9 = arith.constant 0 : index
    %15 = vector.load %arg14[%c0_8, %c0_9] : memref<8x128xf32, #tpu.memory_space<vmem>>, vector<8x128xf32>
    tpu.vector_store %arg14[%c0_8, %c0_9], %14 {strides = array<i32>} : memref<8x128xf32, #tpu.memory_space<vmem>>, vector<8x128xf32>,
    %c0_10 = arith.constant 0 : index
    %c0_11 = arith.constant 0 : index
    %c0_12 = arith.constant 0 : index
    %16 = vector.load %arg2[%c0_10, %c0_11, %c0_12] : memref<1x128x128xbf16, #tpu.memory_space<vmem>>, vector<1x128x128xbf16>
    %17 = vector.shape_cast %16 : vector<1x128x128xbf16> to vector<128x128xbf16>
    %c0_13 = arith.constant 0 : index
    %c0_14 = arith.constant 0 : index
    %18 = vector.load %arg5[%c0_13, %c0_14] : memref<128x128xbf16, #tpu.memory_space<vmem>>, vector<128x128xbf16>
    %cst_15 = arith.constant dense<0.000000e+00> : vector<128x128xf32>
    %19 = tpu.matmul %18, %17, %cst_15 {dimension_numbers = #tpu.dot_dimension_numbers<[1], [0], [0], [1], [0, 0, 1, 1], [], []>} : vector<128x128xbf16>, vector<128x128xbf16>, vector<128x128xf32> -> vector<128x128xf32>
    %c0_16 = arith.constant 0 : index
    %c0_17 = arith.constant 0 : index
    %20 = vector.load %arg15[%c0_16, %c0_17] : memref<128x128xf32, #tpu.memory_space<vmem>>, vector<128x128xf32>
    tpu.vector_store %arg15[%c0_16, %c0_17], %19 {strides = array<i32>} : memref<128x128xf32, #tpu.memory_space<vmem>>, vector<128x128xf32>,
    %c0_18 = arith.constant 0 : index
    %c0_19 = arith.constant 0 : index
    %21 = vector.load %arg6[%c0_18, %c0_19] : memref<128x128xbf16, #tpu.memory_space<vmem>>, vector<128x128xbf16>
    %cst_20 = arith.constant dense<0.000000e+00> : vector<128x128xf32>
    %22 = tpu.matmul %21, %17, %cst_20 {dimension_numbers = #tpu.dot_dimension_numbers<[1], [0], [0], [1], [0, 0, 1, 1], [], []>} : vector<128x128xbf16>, vector<128x128xbf16>, vector<128x128xf32> -> vector<128x128xf32>
    %c0_21 = arith.constant 0 : index
    %c0_22 = arith.constant 0 : index
    %23 = vector.load %arg16[%c0_21, %c0_22] : memref<128x128xf32, #tpu.memory_space<vmem>>, vector<128x128xf32>
    tpu.vector_store %arg16[%c0_21, %c0_22], %22 {strides = array<i32>} : memref<128x128xf32, #tpu.memory_space<vmem>>, vector<128x128xf32>,
    %c0_23 = arith.constant 0 : index
    %c0_24 = arith.constant 0 : index
    %c0_25 = arith.constant 0 : index
    %24 = vector.load %arg3[%c0_23, %c0_24, %c0_25] : memref<1x8x128xf32, #tpu.memory_space<vmem>>, vector<1x8x128xf32>
    %25 = vector.shape_cast %24 : vector<1x8x128xf32> to vector<8x128xf32>
    %c0_26 = arith.constant 0 : index
    %c0_27 = arith.constant 0 : index
    %26 = vector.load %arg14[%c0_26, %c0_27] : memref<8x128xf32, #tpu.memory_space<vmem>>, vector<8x8xf32>
    %27 = arith.truncf %26 : vector<8x8xf32> to vector<8x8xbf16>
    %c0_28 = arith.constant 0 : index
    %c0_29 = arith.constant 0 : index
    %28 = vector.load %arg15[%c0_28, %c0_29] : memref<128x128xf32, #tpu.memory_space<vmem>>, vector<8x128xf32>
    %29 = arith.truncf %28 : vector<8x128xf32> to vector<8x128xbf16>
    %c0_30 = arith.constant 0 : index
    %c0_31 = arith.constant 0 : index
    %30 = vector.load %arg16[%c0_30, %c0_31] : memref<128x128xf32, #tpu.memory_space<vmem>>, vector<8x128xf32>
    %31 = arith.truncf %30 : vector<8x128xf32> to vector<8x128xbf16>
    %cst_32 = arith.constant dense<0.000000e+00> : vector<8x128xf32>
    %32 = tpu.matmul %27, %29, %cst_32 {dimension_numbers = #tpu.dot_dimension_numbers<[1], [0], [0], [1], [0, 0, 1, 1], [], []>} : vector<8x8xbf16>, vector<8x128xbf16>, vector<8x128xf32> -> vector<8x128xf32>
    %cst_33 = arith.constant 0.000000e+00 : f32
    %33 = vector.broadcast %cst_33 : f32 to vector<8x128xf32>
    %cst_34 = arith.constant 0.000000e+00 : f32
    %34 = vector.broadcast %cst_34 : f32 to vector<8x128xf32>
    %c0_35 = arith.constant 0 : index
    %35 = memref.load %arg12[%c0_35] : memref<132xf32, #tpu.memory_space<smem>>
    %c8 = arith.constant 8 : index
    %36 = memref.load %arg12[%c8] : memref<132xf32, #tpu.memory_space<smem>>
    %c64 = arith.constant 64 : index
    %37 = memref.load %arg12[%c64] : memref<132xf32, #tpu.memory_space<smem>>
    %c96 = arith.constant 96 : index
    %38 = memref.load %arg12[%c96] : memref<132xf32, #tpu.memory_space<smem>>
    %39 = vector.broadcast %35 : f32 to vector<8x128xf32>
    %40 = arith.mulf %32, %39 : vector<8x128xf32>
    %41 = vector.broadcast %36 : f32 to vector<8x128xf32>
    %42 = arith.mulf %25, %41 : vector<8x128xf32>
    %43 = arith.addf %40, %42 : vector<8x128xf32>
    %44 = vector.broadcast %37 : f32 to vector<8x128xf32>
    %45 = arith.addf %43, %44 : vector<8x128xf32>
    %cst_36 = arith.constant 0.000000e+00 : f32
    %46 = vector.broadcast %cst_36 : f32 to vector<8x128xf32>
    %47 = arith.maximumf %45, %46 : vector<8x128xf32>
    %48 = vector.broadcast %38 : f32 to vector<8x128xf32>
    %49 = arith.mulf %47, %48 : vector<8x128xf32>
    %50 = arith.addf %33, %49 : vector<8x128xf32>
    %c1 = arith.constant 1 : index
    %51 = memref.load %arg12[%c1] : memref<132xf32, #tpu.memory_space<smem>>
    %c9 = arith.constant 9 : index
    %52 = memref.load %arg12[%c9] : memref<132xf32, #tpu.memory_space<smem>>
    %c65 = arith.constant 65 : index
    %53 = memref.load %arg12[%c65] : memref<132xf32, #tpu.memory_space<smem>>
    %c97 = arith.constant 97 : index
    %54 = memref.load %arg12[%c97] : memref<132xf32, #tpu.memory_space<smem>>
    %55 = vector.broadcast %51 : f32 to vector<8x128xf32>
    %56 = arith.mulf %32, %55 : vector<8x128xf32>
    %57 = vector.broadcast %52 : f32 to vector<8x128xf32>
    %58 = arith.mulf %25, %57 : vector<8x128xf32>
    %59 = arith.addf %56, %58 : vector<8x128xf32>
    %60 = vector.broadcast %53 : f32 to vector<8x128xf32>
    %61 = arith.addf %59, %60 : vector<8x128xf32>
    %cst_37 = arith.constant 0.000000e+00 : f32
    %62 = vector.broadcast %cst_37 : f32 to vector<8x128xf32>
    %63 = arith.maximumf %61, %62 : vector<8x128xf32>
    %64 = vector.broadcast %54 : f32 to vector<8x128xf32>
    %65 = arith.mulf %63, %64 : vector<8x128xf32>
    %66 = arith.addf %34, %65 : vector<8x128xf32>
    %c2 = arith.constant 2 : index
    %67 = memref.load %arg12[%c2] : memref<132xf32, #tpu.memory_space<smem>>
    %c10 = arith.constant 10 : index
    %68 = memref.load %arg12[%c10] : memref<132xf32, #tpu.memory_space<smem>>
    %c66 = arith.constant 66 : index
    %69 = memref.load %arg12[%c66] : memref<132xf32, #tpu.memory_space<smem>>
    %c98 = arith.constant 98 : index
    %70 = memref.load %arg12[%c98] : memref<132xf32, #tpu.memory_space<smem>>
    %71 = vector.broadcast %67 : f32 to vector<8x128xf32>
    %72 = arith.mulf %32, %71 : vector<8x128xf32>
    %73 = vector.broadcast %68 : f32 to vector<8x128xf32>
    %74 = arith.mulf %25, %73 : vector<8x128xf32>
    %75 = arith.addf %72, %74 : vector<8x128xf32>
    %76 = vector.broadcast %69 : f32 to vector<8x128xf32>
    %77 = arith.addf %75, %76 : vector<8x128xf32>
    %cst_38 = arith.constant 0.000000e+00 : f32
    %78 = vector.broadcast %cst_38 : f32 to vector<8x128xf32>
    %79 = arith.maximumf %77, %78 : vector<8x128xf32>
    %80 = vector.broadcast %70 : f32 to vector<8x128xf32>
    %81 = arith.mulf %79, %80 : vector<8x128xf32>
    %82 = arith.addf %50, %81 : vector<8x128xf32>
    %c3 = arith.constant 3 : index
    %83 = memref.load %arg12[%c3] : memref<132xf32, #tpu.memory_space<smem>>
    %c11 = arith.constant 11 : index
    %84 = memref.load %arg12[%c11] : memref<132xf32, #tpu.memory_space<smem>>
    %c67 = arith.constant 67 : index
    %85 = memref.load %arg12[%c67] : memref<132xf32, #tpu.memory_space<smem>>
    %c99 = arith.constant 99 : index
    %86 = memref.load %arg12[%c99] : memref<132xf32, #tpu.memory_space<smem>>
    %87 = vector.broadcast %83 : f32 to vector<8x128xf32>
    %88 = arith.mulf %32, %87 : vector<8x128xf32>
    %89 = vector.broadcast %84 : f32 to vector<8x128xf32>
    %90 = arith.mulf %25, %89 : vector<8x128xf32>
    %91 = arith.addf %88, %90 : vector<8x128xf32>
    %92 = vector.broadcast %85 : f32 to vector<8x128xf32>
    %93 = arith.addf %91, %92 : vector<8x128xf32>
    %cst_39 = arith.constant 0.000000e+00 : f32
    %94 = vector.broadcast %cst_39 : f32 to vector<8x128xf32>
    %95 = arith.maximumf %93, %94 : vector<8x128xf32>
    %96 = vector.broadcast %86 : f32 to vector<8x128xf32>
    %97 = arith.mulf %95, %96 : vector<8x128xf32>
    %98 = arith.addf %66, %97 : vector<8x128xf32>
    %c4 = arith.constant 4 : index
    %99 = memref.load %arg12[%c4] : memref<132xf32, #tpu.memory_space<smem>>
    %c12 = arith.constant 12 : index
    %100 = memref.load %arg12[%c12] : memref<132xf32, #tpu.memory_space<smem>>
    %c68 = arith.constant 68 : index
    %101 = memref.load %arg12[%c68] : memref<132xf32, #tpu.memory_space<smem>>
    %c100 = arith.constant 100 : index
    %102 = memref.load %arg12[%c100] : memref<132xf32, #tpu.memory_space<smem>>
    %103 = vector.broadcast %99 : f32 to vector<8x128xf32>
    %104 = arith.mulf %32, %103 : vector<8x128xf32>
    %105 = vector.broadcast %100 : f32 to vector<8x128xf32>
    %106 = arith.mulf %25, %105 : vector<8x128xf32>
    %107 = arith.addf %104, %106 : vector<8x128xf32>
    %108 = vector.broadcast %101 : f32 to vector<8x128xf32>
    %109 = arith.addf %107, %108 : vector<8x128xf32>
    %cst_40 = arith.constant 0.000000e+00 : f32
    %110 = vector.broadcast %cst_40 : f32 to vector<8x128xf32>
    %111 = arith.maximumf %109, %110 : vector<8x128xf32>
    %112 = vector.broadcast %102 : f32 to vector<8x128xf32>
    %113 = arith.mulf %111, %112 : vector<8x128xf32>
    %114 = arith.addf %82, %113 : vector<8x128xf32>
    %c5 = arith.constant 5 : index
    %115 = memref.load %arg12[%c5] : memref<132xf32, #tpu.memory_space<smem>>
    %c13 = arith.constant 13 : index
    %116 = memref.load %arg12[%c13] : memref<132xf32, #tpu.memory_space<smem>>
    %c69 = arith.constant 69 : index
    %117 = memref.load %arg12[%c69] : memref<132xf32, #tpu.memory_space<smem>>
    %c101 = arith.constant 101 : index
    %118 = memref.load %arg12[%c101] : memref<132xf32, #tpu.memory_space<smem>>
    %119 = vector.broadcast %115 : f32 to vector<8x128xf32>
    %120 = arith.mulf %32, %119 : vector<8x128xf32>
    %121 = vector.broadcast %116 : f32 to vector<8x128xf32>
    %122 = arith.mulf %25, %121 : vector<8x128xf32>
    %123 = arith.addf %120, %122 : vector<8x128xf32>
    %124 = vector.broadcast %117 : f32 to vector<8x128xf32>
    %125 = arith.addf %123, %124 : vector<8x128xf32>
    %cst_41 = arith.constant 0.000000e+00 : f32
    %126 = vector.broadcast %cst_41 : f32 to vector<8x128xf32>
    %127 = arith.maximumf %125, %126 : vector<8x128xf32>
    %128 = vector.broadcast %118 : f32 to vector<8x128xf32>
    %129 = arith.mulf %127, %128 : vector<8x128xf32>
    %130 = arith.addf %98, %129 : vector<8x128xf32>
    %c6 = arith.constant 6 : index
    %131 = memref.load %arg12[%c6] : memref<132xf32, #tpu.memory_space<smem>>
    %c14 = arith.constant 14 : index
    %132 = memref.load %arg12[%c14] : memref<132xf32, #tpu.memory_space<smem>>
    %c70 = arith.constant 70 : index
    %133 = memref.load %arg12[%c70] : memref<132xf32, #tpu.memory_space<smem>>
    %c102 = arith.constant 102 : index
    %134 = memref.load %arg12[%c102] : memref<132xf32, #tpu.memory_space<smem>>
    %135 = vector.broadcast %131 : f32 to vector<8x128xf32>
    %136 = arith.mulf %32, %135 : vector<8x128xf32>
    %137 = vector.broadcast %132 : f32 to vector<8x128xf32>
    %138 = arith.mulf %25, %137 : vector<8x128xf32>
    %139 = arith.addf %136, %138 : vector<8x128xf32>
    %140 = vector.broadcast %133 : f32 to vector<8x128xf32>
    %141 = arith.addf %139, %140 : vector<8x128xf32>
    %cst_42 = arith.constant 0.000000e+00 : f32
    %142 = vector.broadcast %cst_42 : f32 to vector<8x128xf32>
    %143 = arith.maximumf %141, %142 : vector<8x128xf32>
    %144 = vector.broadcast %134 : f32 to vector<8x128xf32>
    %145 = arith.mulf %143, %144 : vector<8x128xf32>
    %146 = arith.addf %114, %145 : vector<8x128xf32>
    %c7 = arith.constant 7 : index
    %147 = memref.load %arg12[%c7] : memref<132xf32, #tpu.memory_space<smem>>
    %c15 = arith.constant 15 : index
    %148 = memref.load %arg12[%c15] : memref<132xf32, #tpu.memory_space<smem>>
    %c71 = arith.constant 71 : index
    %149 = memref.load %arg12[%c71] : memref<132xf32, #tpu.memory_space<smem>>
    %c103 = arith.constant 103 : index
    %150 = memref.load %arg12[%c103] : memref<132xf32, #tpu.memory_space<smem>>
    %151 = vector.broadcast %147 : f32 to vector<8x128xf32>
    %152 = arith.mulf %32, %151 : vector<8x128xf32>
    %153 = vector.broadcast %148 : f32 to vector<8x128xf32>
    %154 = arith.mulf %25, %153 : vector<8x128xf32>
    %155 = arith.addf %152, %154 : vector<8x128xf32>
    %156 = vector.broadcast %149 : f32 to vector<8x128xf32>
    %157 = arith.addf %155, %156 : vector<8x128xf32>
    %cst_43 = arith.constant 0.000000e+00 : f32
    %158 = vector.broadcast %cst_43 : f32 to vector<8x128xf32>
    %159 = arith.maximumf %157, %158 : vector<8x128xf32>
    %160 = vector.broadcast %150 : f32 to vector<8x128xf32>
    %161 = arith.mulf %159, %160 : vector<8x128xf32>
    %162 = arith.addf %130, %161 : vector<8x128xf32>
    %163 = arith.addf %146, %162 : vector<8x128xf32>
    %c128 = arith.constant 128 : index
    %164 = memref.load %arg12[%c128] : memref<132xf32, #tpu.memory_space<smem>>
    %165 = vector.broadcast %164 : f32 to vector<8x128xf32>
    %166 = arith.addf %163, %165 : vector<8x128xf32>
    %cst_44 = arith.constant -1.000000e+30 : f32
    %167 = vector.broadcast %cst_44 : f32 to vector<8x128xf32>
    %168 = arith.select %10, %166, %167 : vector<8x128xi1>, vector<8x128xf32>
    %cst_45 = arith.constant dense<0xFF800000> : vector<8xf32>
    %169 = vector.multi_reduction <maximumf>, %168, %cst_45 [1] : vector<8x128xf32> to vector<8xf32>
    %170 = vector.shape_cast %169 : vector<8xf32> to vector<8x1xf32>
    %171 = vector.broadcast %170 : vector<8x1xf32> to vector<8x128xf32>
    %172 = arith.subf %168, %171 : vector<8x128xf32>
    %173 = math.exp %172 : vector<8x128xf32>
    %cst_46 = arith.constant dense<0.000000e+00> : vector<8xf32>
    %174 = vector.multi_reduction <add>, %173, %cst_46 [1] : vector<8x128xf32> to vector<8xf32>
    %175 = vector.shape_cast %174 : vector<8xf32> to vector<8x1xf32>
    %176 = tpu.reciprocal %175 {approx = true} : vector<8x1xf32> -> vector<8x1xf32>
    %177 = vector.broadcast %176 : vector<8x1xf32> to vector<8x128xf32>
    %178 = arith.mulf %173, %177 : vector<8x128xf32>
    %179 = arith.truncf %178 : vector<8x128xf32> to vector<8x128xbf16>
    %cst_47 = arith.constant dense<0.000000e+00> : vector<8x8xf32>
    %180 = tpu.matmul %179, %31, %cst_47 {dimension_numbers = #tpu.dot_dimension_numbers<[1], [1], [0], [0], [0, 0, 1, 0], [], []>} : vector<8x128xbf16>, vector<8x128xbf16>, vector<8x8xf32> -> vector<8x8xf32>
    %c0_48 = arith.constant 0 : index
    %c8_49 = arith.constant 8 : index
    %181 = vector.load %arg14[%c0_48, %c8_49] : memref<8x128xf32, #tpu.memory_space<vmem>>, vector<8x8xf32>
    %182 = arith.truncf %181 : vector<8x8xf32> to vector<8x8xbf16>
    %c8_50 = arith.constant 8 : index
    %c0_51 = arith.constant 0 : index
    %183 = vector.load %arg15[%c8_50, %c0_51] : memref<128x128xf32, #tpu.memory_space<vmem>>, vector<8x128xf32>
    %184 = arith.truncf %183 : vector<8x128xf32> to vector<8x128xbf16>
    %c8_52 = arith.constant 8 : index
    %c0_53 = arith.constant 0 : index
    %185 = vector.load %arg16[%c8_52, %c0_53] : memref<128x128xf32, #tpu.memory_space<vmem>>, vector<8x128xf32>
    %186 = arith.truncf %185 : vector<8x128xf32> to vector<8x128xbf16>
    %cst_54 = arith.constant dense<0.000000e+00> : vector<8x128xf32>
    %187 = tpu.matmul %182, %184, %cst_54 {dimension_numbers = #tpu.dot_dimension_numbers<[1], [0], [0], [1], [0, 0, 1, 1], [], []>} : vector<8x8xbf16>, vector<8x128xbf16>, vector<8x128xf32> -> vector<8x128xf32>
    %cst_55 = arith.constant 0.000000e+00 : f32
    %188 = vector.broadcast %cst_55 : f32 to vector<8x128xf32>
    %cst_56 = arith.constant 0.000000e+00 : f32
    %189 = vector.broadcast %cst_56 : f32 to vector<8x128xf32>
    %c16 = arith.constant 16 : index
    %190 = memref.load %arg12[%c16] : memref<132xf32, #tpu.memory_space<smem>>
    %c24 = arith.constant 24 : index
    %191 = memref.load %arg12[%c24] : memref<132xf32, #tpu.memory_space<smem>>
    %c72 = arith.constant 72 : index
    %192 = memref.load %arg12[%c72] : memref<132xf32, #tpu.memory_space<smem>>
    %c104 = arith.constant 104 : index
    %193 = memref.load %arg12[%c104] : memref<132xf32, #tpu.memory_space<smem>>
    %194 = vector.broadcast %190 : f32 to vector<8x128xf32>
    %195 = arith.mulf %187, %194 : vector<8x128xf32>
    %196 = vector.broadcast %191 : f32 to vector<8x128xf32>
    %197 = arith.mulf %25, %196 : vector<8x128xf32>
    %198 = arith.addf %195, %197 : vector<8x128xf32>
    %199 = vector.broadcast %192 : f32 to vector<8x128xf32>
    %200 = arith.addf %198, %199 : vector<8x128xf32>
    %cst_57 = arith.constant 0.000000e+00 : f32
    %201 = vector.broadcast %cst_57 : f32 to vector<8x128xf32>
    %202 = arith.maximumf %200, %201 : vector<8x128xf32>
    %203 = vector.broadcast %193 : f32 to vector<8x128xf32>
    %204 = arith.mulf %202, %203 : vector<8x128xf32>
    %205 = arith.addf %188, %204 : vector<8x128xf32>
    %c17 = arith.constant 17 : index
    %206 = memref.load %arg12[%c17] : memref<132xf32, #tpu.memory_space<smem>>
    %c25 = arith.constant 25 : index
    %207 = memref.load %arg12[%c25] : memref<132xf32, #tpu.memory_space<smem>>
    %c73 = arith.constant 73 : index
    %208 = memref.load %arg12[%c73] : memref<132xf32, #tpu.memory_space<smem>>
    %c105 = arith.constant 105 : index
    %209 = memref.load %arg12[%c105] : memref<132xf32, #tpu.memory_space<smem>>
    %210 = vector.broadcast %206 : f32 to vector<8x128xf32>
    %211 = arith.mulf %187, %210 : vector<8x128xf32>
    %212 = vector.broadcast %207 : f32 to vector<8x128xf32>
    %213 = arith.mulf %25, %212 : vector<8x128xf32>
    %214 = arith.addf %211, %213 : vector<8x128xf32>
    %215 = vector.broadcast %208 : f32 to vector<8x128xf32>
    %216 = arith.addf %214, %215 : vector<8x128xf32>
    %cst_58 = arith.constant 0.000000e+00 : f32
    %217 = vector.broadcast %cst_58 : f32 to vector<8x128xf32>
    %218 = arith.maximumf %216, %217 : vector<8x128xf32>
    %219 = vector.broadcast %209 : f32 to vector<8x128xf32>
    %220 = arith.mulf %218, %219 : vector<8x128xf32>
    %221 = arith.addf %189, %220 : vector<8x128xf32>
    %c18 = arith.constant 18 : index
    %222 = memref.load %arg12[%c18] : memref<132xf32, #tpu.memory_space<smem>>
    %c26 = arith.constant 26 : index
    %223 = memref.load %arg12[%c26] : memref<132xf32, #tpu.memory_space<smem>>
    %c74 = arith.constant 74 : index
    %224 = memref.load %arg12[%c74] : memref<132xf32, #tpu.memory_space<smem>>
    %c106 = arith.constant 106 : index
    %225 = memref.load %arg12[%c106] : memref<132xf32, #tpu.memory_space<smem>>
    %226 = vector.broadcast %222 : f32 to vector<8x128xf32>
    %227 = arith.mulf %187, %226 : vector<8x128xf32>
    %228 = vector.broadcast %223 : f32 to vector<8x128xf32>
    %229 = arith.mulf %25, %228 : vector<8x128xf32>
    %230 = arith.addf %227, %229 : vector<8x128xf32>
    %231 = vector.broadcast %224 : f32 to vector<8x128xf32>
    %232 = arith.addf %230, %231 : vector<8x128xf32>
    %cst_59 = arith.constant 0.000000e+00 : f32
    %233 = vector.broadcast %cst_59 : f32 to vector<8x128xf32>
    %234 = arith.maximumf %232, %233 : vector<8x128xf32>
    %235 = vector.broadcast %225 : f32 to vector<8x128xf32>
    %236 = arith.mulf %234, %235 : vector<8x128xf32>
    %237 = arith.addf %205, %236 : vector<8x128xf32>
    %c19 = arith.constant 19 : index
    %238 = memref.load %arg12[%c19] : memref<132xf32, #tpu.memory_space<smem>>
    %c27 = arith.constant 27 : index
    %239 = memref.load %arg12[%c27] : memref<132xf32, #tpu.memory_space<smem>>
    %c75 = arith.constant 75 : index
    %240 = memref.load %arg12[%c75] : memref<132xf32, #tpu.memory_space<smem>>
    %c107 = arith.constant 107 : index
    %241 = memref.load %arg12[%c107] : memref<132xf32, #tpu.memory_space<smem>>
    %242 = vector.broadcast %238 : f32 to vector<8x128xf32>
    %243 = arith.mulf %187, %242 : vector<8x128xf32>
    %244 = vector.broadcast %239 : f32 to vector<8x128xf32>
    %245 = arith.mulf %25, %244 : vector<8x128xf32>
    %246 = arith.addf %243, %245 : vector<8x128xf32>
    %247 = vector.broadcast %240 : f32 to vector<8x128xf32>
    %248 = arith.addf %246, %247 : vector<8x128xf32>
    %cst_60 = arith.constant 0.000000e+00 : f32
    %249 = vector.broadcast %cst_60 : f32 to vector<8x128xf32>
    %250 = arith.maximumf %248, %249 : vector<8x128xf32>
    %251 = vector.broadcast %241 : f32 to vector<8x128xf32>
    %252 = arith.mulf %250, %251 : vector<8x128xf32>
    %253 = arith.addf %221, %252 : vector<8x128xf32>
    %c20 = arith.constant 20 : index
    %254 = memref.load %arg12[%c20] : memref<132xf32, #tpu.memory_space<smem>>
    %c28 = arith.constant 28 : index
    %255 = memref.load %arg12[%c28] : memref<132xf32, #tpu.memory_space<smem>>
    %c76 = arith.constant 76 : index
    %256 = memref.load %arg12[%c76] : memref<132xf32, #tpu.memory_space<smem>>
    %c108 = arith.constant 108 : index
    %257 = memref.load %arg12[%c108] : memref<132xf32, #tpu.memory_space<smem>>
    %258 = vector.broadcast %254 : f32 to vector<8x128xf32>
    %259 = arith.mulf %187, %258 : vector<8x128xf32>
    %260 = vector.broadcast %255 : f32 to vector<8x128xf32>
    %261 = arith.mulf %25, %260 : vector<8x128xf32>
    %262 = arith.addf %259, %261 : vector<8x128xf32>
    %263 = vector.broadcast %256 : f32 to vector<8x128xf32>
    %264 = arith.addf %262, %263 : vector<8x128xf32>
    %cst_61 = arith.constant 0.000000e+00 : f32
    %265 = vector.broadcast %cst_61 : f32 to vector<8x128xf32>
    %266 = arith.maximumf %264, %265 : vector<8x128xf32>
    %267 = vector.broadcast %257 : f32 to vector<8x128xf32>
    %268 = arith.mulf %266, %267 : vector<8x128xf32>
    %269 = arith.addf %237, %268 : vector<8x128xf32>
    %c21 = arith.constant 21 : index
    %270 = memref.load %arg12[%c21] : memref<132xf32, #tpu.memory_space<smem>>
    %c29 = arith.constant 29 : index
    %271 = memref.load %arg12[%c29] : memref<132xf32, #tpu.memory_space<smem>>
    %c77 = arith.constant 77 : index
    %272 = memref.load %arg12[%c77] : memref<132xf32, #tpu.memory_space<smem>>
    %c109 = arith.constant 109 : index
    %273 = memref.load %arg12[%c109] : memref<132xf32, #tpu.memory_space<smem>>
    %274 = vector.broadcast %270 : f32 to vector<8x128xf32>
    %275 = arith.mulf %187, %274 : vector<8x128xf32>
    %276 = vector.broadcast %271 : f32 to vector<8x128xf32>
    %277 = arith.mulf %25, %276 : vector<8x128xf32>
    %278 = arith.addf %275, %277 : vector<8x128xf32>
    %279 = vector.broadcast %272 : f32 to vector<8x128xf32>
    %280 = arith.addf %278, %279 : vector<8x128xf32>
    %cst_62 = arith.constant 0.000000e+00 : f32
    %281 = vector.broadcast %cst_62 : f32 to vector<8x128xf32>
    %282 = arith.maximumf %280, %281 : vector<8x128xf32>
    %283 = vector.broadcast %273 : f32 to vector<8x128xf32>
    %284 = arith.mulf %282, %283 : vector<8x128xf32>
    %285 = arith.addf %253, %284 : vector<8x128xf32>
    %c22 = arith.constant 22 : index
    %286 = memref.load %arg12[%c22] : memref<132xf32, #tpu.memory_space<smem>>
    %c30 = arith.constant 30 : index
    %287 = memref.load %arg12[%c30] : memref<132xf32, #tpu.memory_space<smem>>
    %c78 = arith.constant 78 : index
    %288 = memref.load %arg12[%c78] : memref<132xf32, #tpu.memory_space<smem>>
    %c110 = arith.constant 110 : index
    %289 = memref.load %arg12[%c110] : memref<132xf32, #tpu.memory_space<smem>>
    %290 = vector.broadcast %286 : f32 to vector<8x128xf32>
    %291 = arith.mulf %187, %290 : vector<8x128xf32>
    %292 = vector.broadcast %287 : f32 to vector<8x128xf32>
    %293 = arith.mulf %25, %292 : vector<8x128xf32>
    %294 = arith.addf %291, %293 : vector<8x128xf32>
    %295 = vector.broadcast %288 : f32 to vector<8x128xf32>
    %296 = arith.addf %294, %295 : vector<8x128xf32>
    %cst_63 = arith.constant 0.000000e+00 : f32
    %297 = vector.broadcast %cst_63 : f32 to vector<8x128xf32>
    %298 = arith.maximumf %296, %297 : vector<8x128xf32>
    %299 = vector.broadcast %289 : f32 to vector<8x128xf32>
    %300 = arith.mulf %298, %299 : vector<8x128xf32>
    %301 = arith.addf %269, %300 : vector<8x128xf32>
    %c23 = arith.constant 23 : index
    %302 = memref.load %arg12[%c23] : memref<132xf32, #tpu.memory_space<smem>>
    %c31 = arith.constant 31 : index
    %303 = memref.load %arg12[%c31] : memref<132xf32, #tpu.memory_space<smem>>
    %c79 = arith.constant 79 : index
    %304 = memref.load %arg12[%c79] : memref<132xf32, #tpu.memory_space<smem>>
    %c111 = arith.constant 111 : index
    %305 = memref.load %arg12[%c111] : memref<132xf32, #tpu.memory_space<smem>>
    %306 = vector.broadcast %302 : f32 to vector<8x128xf32>
    %307 = arith.mulf %187, %306 : vector<8x128xf32>
    %308 = vector.broadcast %303 : f32 to vector<8x128xf32>
    %309 = arith.mulf %25, %308 : vector<8x128xf32>
    %310 = arith.addf %307, %309 : vector<8x128xf32>
    %311 = vector.broadcast %304 : f32 to vector<8x128xf32>
    %312 = arith.addf %310, %311 : vector<8x128xf32>
    %cst_64 = arith.constant 0.000000e+00 : f32
    %313 = vector.broadcast %cst_64 : f32 to vector<8x128xf32>
    %314 = arith.maximumf %312, %313 : vector<8x128xf32>
    %315 = vector.broadcast %305 : f32 to vector<8x128xf32>
    %316 = arith.mulf %314, %315 : vector<8x128xf32>
    %317 = arith.addf %285, %316 : vector<8x128xf32>
    %318 = arith.addf %301, %317 : vector<8x128xf32>
    %c129 = arith.constant 129 : index
    %319 = memref.load %arg12[%c129] : memref<132xf32, #tpu.memory_space<smem>>
    %320 = vector.broadcast %319 : f32 to vector<8x128xf32>
    %321 = arith.addf %318, %320 : vector<8x128xf32>
    %cst_65 = arith.constant -1.000000e+30 : f32
    %322 = vector.broadcast %cst_65 : f32 to vector<8x128xf32>
    %323 = arith.select %10, %321, %322 : vector<8x128xi1>, vector<8x128xf32>
    %cst_66 = arith.constant dense<0xFF800000> : vector<8xf32>
    %324 = vector.multi_reduction <maximumf>, %323, %cst_66 [1] : vector<8x128xf32> to vector<8xf32>
    %325 = vector.shape_cast %324 : vector<8xf32> to vector<8x1xf32>
    %326 = vector.broadcast %325 : vector<8x1xf32> to vector<8x128xf32>
    %327 = arith.subf %323, %326 : vector<8x128xf32>
    %328 = math.exp %327 : vector<8x128xf32>
    %cst_67 = arith.constant dense<0.000000e+00> : vector<8xf32>
    %329 = vector.multi_reduction <add>, %328, %cst_67 [1] : vector<8x128xf32> to vector<8xf32>
    %330 = vector.shape_cast %329 : vector<8xf32> to vector<8x1xf32>
    %331 = tpu.reciprocal %330 {approx = true} : vector<8x1xf32> -> vector<8x1xf32>
    %332 = vector.broadcast %331 : vector<8x1xf32> to vector<8x128xf32>
    %333 = arith.mulf %328, %332 : vector<8x128xf32>
    %334 = arith.truncf %333 : vector<8x128xf32> to vector<8x128xbf16>
    %cst_68 = arith.constant dense<0.000000e+00> : vector<8x8xf32>
    %335 = tpu.matmul %334, %186, %cst_68 {dimension_numbers = #tpu.dot_dimension_numbers<[1], [1], [0], [0], [0, 0, 1, 0], [], []>} : vector<8x128xbf16>, vector<8x128xbf16>, vector<8x8xf32> -> vector<8x8xf32>
    %c0_69 = arith.constant 0 : index
    %c16_70 = arith.constant 16 : index
    %336 = vector.load %arg14[%c0_69, %c16_70] : memref<8x128xf32, #tpu.memory_space<vmem>>, vector<8x8xf32>
    %337 = arith.truncf %336 : vector<8x8xf32> to vector<8x8xbf16>
    %c16_71 = arith.constant 16 : index
    %c0_72 = arith.constant 0 : index
    %338 = vector.load %arg15[%c16_71, %c0_72] : memref<128x128xf32, #tpu.memory_space<vmem>>, vector<8x128xf32>
    %339 = arith.truncf %338 : vector<8x128xf32> to vector<8x128xbf16>
    %c16_73 = arith.constant 16 : index
    %c0_74 = arith.constant 0 : index
    %340 = vector.load %arg16[%c16_73, %c0_74] : memref<128x128xf32, #tpu.memory_space<vmem>>, vector<8x128xf32>
    %341 = arith.truncf %340 : vector<8x128xf32> to vector<8x128xbf16>
    %cst_75 = arith.constant dense<0.000000e+00> : vector<8x128xf32>
    %342 = tpu.matmul %337, %339, %cst_75 {dimension_numbers = #tpu.dot_dimension_numbers<[1], [0], [0], [1], [0, 0, 1, 1], [], []>} : vector<8x8xbf16>, vector<8x128xbf16>, vector<8x128xf32> -> vector<8x128xf32>
    %cst_76 = arith.constant 0.000000e+00 : f32
    %343 = vector.broadcast %cst_76 : f32 to vector<8x128xf32>
    %cst_77 = arith.constant 0.000000e+00 : f32
    %344 = vector.broadcast %cst_77 : f32 to vector<8x128xf32>
    %c32 = arith.constant 32 : index
    %345 = memref.load %arg12[%c32] : memref<132xf32, #tpu.memory_space<smem>>
    %c40 = arith.constant 40 : index
    %346 = memref.load %arg12[%c40] : memref<132xf32, #tpu.memory_space<smem>>
    %c80 = arith.constant 80 : index
    %347 = memref.load %arg12[%c80] : memref<132xf32, #tpu.memory_space<smem>>
    %c112 = arith.constant 112 : index
    %348 = memref.load %arg12[%c112] : memref<132xf32, #tpu.memory_space<smem>>
    %349 = vector.broadcast %345 : f32 to vector<8x128xf32>
    %350 = arith.mulf %342, %349 : vector<8x128xf32>
    %351 = vector.broadcast %346 : f32 to vector<8x128xf32>
    %352 = arith.mulf %25, %351 : vector<8x128xf32>
    %353 = arith.addf %350, %352 : vector<8x128xf32>
    %354 = vector.broadcast %347 : f32 to vector<8x128xf32>
    %355 = arith.addf %353, %354 : vector<8x128xf32>
    %cst_78 = arith.constant 0.000000e+00 : f32
    %356 = vector.broadcast %cst_78 : f32 to vector<8x128xf32>
    %357 = arith.maximumf %355, %356 : vector<8x128xf32>
    %358 = vector.broadcast %348 : f32 to vector<8x128xf32>
    %359 = arith.mulf %357, %358 : vector<8x128xf32>
    %360 = arith.addf %343, %359 : vector<8x128xf32>
    %c33 = arith.constant 33 : index
    %361 = memref.load %arg12[%c33] : memref<132xf32, #tpu.memory_space<smem>>
    %c41 = arith.constant 41 : index
    %362 = memref.load %arg12[%c41] : memref<132xf32, #tpu.memory_space<smem>>
    %c81 = arith.constant 81 : index
    %363 = memref.load %arg12[%c81] : memref<132xf32, #tpu.memory_space<smem>>
    %c113 = arith.constant 113 : index
    %364 = memref.load %arg12[%c113] : memref<132xf32, #tpu.memory_space<smem>>
    %365 = vector.broadcast %361 : f32 to vector<8x128xf32>
    %366 = arith.mulf %342, %365 : vector<8x128xf32>
    %367 = vector.broadcast %362 : f32 to vector<8x128xf32>
    %368 = arith.mulf %25, %367 : vector<8x128xf32>
    %369 = arith.addf %366, %368 : vector<8x128xf32>
    %370 = vector.broadcast %363 : f32 to vector<8x128xf32>
    %371 = arith.addf %369, %370 : vector<8x128xf32>
    %cst_79 = arith.constant 0.000000e+00 : f32
    %372 = vector.broadcast %cst_79 : f32 to vector<8x128xf32>
    %373 = arith.maximumf %371, %372 : vector<8x128xf32>
    %374 = vector.broadcast %364 : f32 to vector<8x128xf32>
    %375 = arith.mulf %373, %374 : vector<8x128xf32>
    %376 = arith.addf %344, %375 : vector<8x128xf32>
    %c34 = arith.constant 34 : index
    %377 = memref.load %arg12[%c34] : memref<132xf32, #tpu.memory_space<smem>>
    %c42 = arith.constant 42 : index
    %378 = memref.load %arg12[%c42] : memref<132xf32, #tpu.memory_space<smem>>
    %c82 = arith.constant 82 : index
    %379 = memref.load %arg12[%c82] : memref<132xf32, #tpu.memory_space<smem>>
    %c114 = arith.constant 114 : index
    %380 = memref.load %arg12[%c114] : memref<132xf32, #tpu.memory_space<smem>>
    %381 = vector.broadcast %377 : f32 to vector<8x128xf32>
    %382 = arith.mulf %342, %381 : vector<8x128xf32>
    %383 = vector.broadcast %378 : f32 to vector<8x128xf32>
    %384 = arith.mulf %25, %383 : vector<8x128xf32>
    %385 = arith.addf %382, %384 : vector<8x128xf32>
    %386 = vector.broadcast %379 : f32 to vector<8x128xf32>
    %387 = arith.addf %385, %386 : vector<8x128xf32>
    %cst_80 = arith.constant 0.000000e+00 : f32
    %388 = vector.broadcast %cst_80 : f32 to vector<8x128xf32>
    %389 = arith.maximumf %387, %388 : vector<8x128xf32>
    %390 = vector.broadcast %380 : f32 to vector<8x128xf32>
    %391 = arith.mulf %389, %390 : vector<8x128xf32>
    %392 = arith.addf %360, %391 : vector<8x128xf32>
    %c35 = arith.constant 35 : index
    %393 = memref.load %arg12[%c35] : memref<132xf32, #tpu.memory_space<smem>>
    %c43 = arith.constant 43 : index
    %394 = memref.load %arg12[%c43] : memref<132xf32, #tpu.memory_space<smem>>
    %c83 = arith.constant 83 : index
    %395 = memref.load %arg12[%c83] : memref<132xf32, #tpu.memory_space<smem>>
    %c115 = arith.constant 115 : index
    %396 = memref.load %arg12[%c115] : memref<132xf32, #tpu.memory_space<smem>>
    %397 = vector.broadcast %393 : f32 to vector<8x128xf32>
    %398 = arith.mulf %342, %397 : vector<8x128xf32>
    %399 = vector.broadcast %394 : f32 to vector<8x128xf32>
    %400 = arith.mulf %25, %399 : vector<8x128xf32>
    %401 = arith.addf %398, %400 : vector<8x128xf32>
    %402 = vector.broadcast %395 : f32 to vector<8x128xf32>
    %403 = arith.addf %401, %402 : vector<8x128xf32>
    %cst_81 = arith.constant 0.000000e+00 : f32
    %404 = vector.broadcast %cst_81 : f32 to vector<8x128xf32>
    %405 = arith.maximumf %403, %404 : vector<8x128xf32>
    %406 = vector.broadcast %396 : f32 to vector<8x128xf32>
    %407 = arith.mulf %405, %406 : vector<8x128xf32>
    %408 = arith.addf %376, %407 : vector<8x128xf32>
    %c36 = arith.constant 36 : index
    %409 = memref.load %arg12[%c36] : memref<132xf32, #tpu.memory_space<smem>>
    %c44 = arith.constant 44 : index
    %410 = memref.load %arg12[%c44] : memref<132xf32, #tpu.memory_space<smem>>
    %c84 = arith.constant 84 : index
    %411 = memref.load %arg12[%c84] : memref<132xf32, #tpu.memory_space<smem>>
    %c116 = arith.constant 116 : index
    %412 = memref.load %arg12[%c116] : memref<132xf32, #tpu.memory_space<smem>>
    %413 = vector.broadcast %409 : f32 to vector<8x128xf32>
    %414 = arith.mulf %342, %413 : vector<8x128xf32>
    %415 = vector.broadcast %410 : f32 to vector<8x128xf32>
    %416 = arith.mulf %25, %415 : vector<8x128xf32>
    %417 = arith.addf %414, %416 : vector<8x128xf32>
    %418 = vector.broadcast %411 : f32 to vector<8x128xf32>
    %419 = arith.addf %417, %418 : vector<8x128xf32>
    %cst_82 = arith.constant 0.000000e+00 : f32
    %420 = vector.broadcast %cst_82 : f32 to vector<8x128xf32>
    %421 = arith.maximumf %419, %420 : vector<8x128xf32>
    %422 = vector.broadcast %412 : f32 to vector<8x128xf32>
    %423 = arith.mulf %421, %422 : vector<8x128xf32>
    %424 = arith.addf %392, %423 : vector<8x128xf32>
    %c37 = arith.constant 37 : index
    %425 = memref.load %arg12[%c37] : memref<132xf32, #tpu.memory_space<smem>>
    %c45 = arith.constant 45 : index
    %426 = memref.load %arg12[%c45] : memref<132xf32, #tpu.memory_space<smem>>
    %c85 = arith.constant 85 : index
    %427 = memref.load %arg12[%c85] : memref<132xf32, #tpu.memory_space<smem>>
    %c117 = arith.constant 117 : index
    %428 = memref.load %arg12[%c117] : memref<132xf32, #tpu.memory_space<smem>>
    %429 = vector.broadcast %425 : f32 to vector<8x128xf32>
    %430 = arith.mulf %342, %429 : vector<8x128xf32>
    %431 = vector.broadcast %426 : f32 to vector<8x128xf32>
    %432 = arith.mulf %25, %431 : vector<8x128xf32>
    %433 = arith.addf %430, %432 : vector<8x128xf32>
    %434 = vector.broadcast %427 : f32 to vector<8x128xf32>
    %435 = arith.addf %433, %434 : vector<8x128xf32>
    %cst_83 = arith.constant 0.000000e+00 : f32
    %436 = vector.broadcast %cst_83 : f32 to vector<8x128xf32>
    %437 = arith.maximumf %435, %436 : vector<8x128xf32>
    %438 = vector.broadcast %428 : f32 to vector<8x128xf32>
    %439 = arith.mulf %437, %438 : vector<8x128xf32>
    %440 = arith.addf %408, %439 : vector<8x128xf32>
    %c38 = arith.constant 38 : index
    %441 = memref.load %arg12[%c38] : memref<132xf32, #tpu.memory_space<smem>>
    %c46 = arith.constant 46 : index
    %442 = memref.load %arg12[%c46] : memref<132xf32, #tpu.memory_space<smem>>
    %c86 = arith.constant 86 : index
    %443 = memref.load %arg12[%c86] : memref<132xf32, #tpu.memory_space<smem>>
    %c118 = arith.constant 118 : index
    %444 = memref.load %arg12[%c118] : memref<132xf32, #tpu.memory_space<smem>>
    %445 = vector.broadcast %441 : f32 to vector<8x128xf32>
    %446 = arith.mulf %342, %445 : vector<8x128xf32>
    %447 = vector.broadcast %442 : f32 to vector<8x128xf32>
    %448 = arith.mulf %25, %447 : vector<8x128xf32>
    %449 = arith.addf %446, %448 : vector<8x128xf32>
    %450 = vector.broadcast %443 : f32 to vector<8x128xf32>
    %451 = arith.addf %449, %450 : vector<8x128xf32>
    %cst_84 = arith.constant 0.000000e+00 : f32
    %452 = vector.broadcast %cst_84 : f32 to vector<8x128xf32>
    %453 = arith.maximumf %451, %452 : vector<8x128xf32>
    %454 = vector.broadcast %444 : f32 to vector<8x128xf32>
    %455 = arith.mulf %453, %454 : vector<8x128xf32>
    %456 = arith.addf %424, %455 : vector<8x128xf32>
    %c39 = arith.constant 39 : index
    %457 = memref.load %arg12[%c39] : memref<132xf32, #tpu.memory_space<smem>>
    %c47 = arith.constant 47 : index
    %458 = memref.load %arg12[%c47] : memref<132xf32, #tpu.memory_space<smem>>
    %c87 = arith.constant 87 : index
    %459 = memref.load %arg12[%c87] : memref<132xf32, #tpu.memory_space<smem>>
    %c119 = arith.constant 119 : index
    %460 = memref.load %arg12[%c119] : memref<132xf32, #tpu.memory_space<smem>>
    %461 = vector.broadcast %457 : f32 to vector<8x128xf32>
    %462 = arith.mulf %342, %461 : vector<8x128xf32>
    %463 = vector.broadcast %458 : f32 to vector<8x128xf32>
    %464 = arith.mulf %25, %463 : vector<8x128xf32>
    %465 = arith.addf %462, %464 : vector<8x128xf32>
    %466 = vector.broadcast %459 : f32 to vector<8x128xf32>
    %467 = arith.addf %465, %466 : vector<8x128xf32>
    %cst_85 = arith.constant 0.000000e+00 : f32
    %468 = vector.broadcast %cst_85 : f32 to vector<8x128xf32>
    %469 = arith.maximumf %467, %468 : vector<8x128xf32>
    %470 = vector.broadcast %460 : f32 to vector<8x128xf32>
    %471 = arith.mulf %469, %470 : vector<8x128xf32>
    %472 = arith.addf %440, %471 : vector<8x128xf32>
    %473 = arith.addf %456, %472 : vector<8x128xf32>
    %c130 = arith.constant 130 : index
    %474 = memref.load %arg12[%c130] : memref<132xf32, #tpu.memory_space<smem>>
    %475 = vector.broadcast %474 : f32 to vector<8x128xf32>
    %476 = arith.addf %473, %475 : vector<8x128xf32>
    %cst_86 = arith.constant -1.000000e+30 : f32
    %477 = vector.broadcast %cst_86 : f32 to vector<8x128xf32>
    %478 = arith.select %10, %476, %477 : vector<8x128xi1>, vector<8x128xf32>
    %cst_87 = arith.constant dense<0xFF800000> : vector<8xf32>
    %479 = vector.multi_reduction <maximumf>, %478, %cst_87 [1] : vector<8x128xf32> to vector<8xf32>
    %480 = vector.shape_cast %479 : vector<8xf32> to vector<8x1xf32>
    %481 = vector.broadcast %480 : vector<8x1xf32> to vector<8x128xf32>
    %482 = arith.subf %478, %481 : vector<8x128xf32>
    %483 = math.exp %482 : vector<8x128xf32>
    %cst_88 = arith.constant dense<0.000000e+00> : vector<8xf32>
    %484 = vector.multi_reduction <add>, %483, %cst_88 [1] : vector<8x128xf32> to vector<8xf32>
    %485 = vector.shape_cast %484 : vector<8xf32> to vector<8x1xf32>
    %486 = tpu.reciprocal %485 {approx = true} : vector<8x1xf32> -> vector<8x1xf32>
    %487 = vector.broadcast %486 : vector<8x1xf32> to vector<8x128xf32>
    %488 = arith.mulf %483, %487 : vector<8x128xf32>
    %489 = arith.truncf %488 : vector<8x128xf32> to vector<8x128xbf16>
    %cst_89 = arith.constant dense<0.000000e+00> : vector<8x8xf32>
    %490 = tpu.matmul %489, %341, %cst_89 {dimension_numbers = #tpu.dot_dimension_numbers<[1], [1], [0], [0], [0, 0, 1, 0], [], []>} : vector<8x128xbf16>, vector<8x128xbf16>, vector<8x8xf32> -> vector<8x8xf32>
    %c0_90 = arith.constant 0 : index
    %c24_91 = arith.constant 24 : index
    %491 = vector.load %arg14[%c0_90, %c24_91] : memref<8x128xf32, #tpu.memory_space<vmem>>, vector<8x8xf32>
    %492 = arith.truncf %491 : vector<8x8xf32> to vector<8x8xbf16>
    %c24_92 = arith.constant 24 : index
    %c0_93 = arith.constant 0 : index
    %493 = vector.load %arg15[%c24_92, %c0_93] : memref<128x128xf32, #tpu.memory_space<vmem>>, vector<8x128xf32>
    %494 = arith.truncf %493 : vector<8x128xf32> to vector<8x128xbf16>
    %c24_94 = arith.constant 24 : index
    %c0_95 = arith.constant 0 : index
    %495 = vector.load %arg16[%c24_94, %c0_95] : memref<128x128xf32, #tpu.memory_space<vmem>>, vector<8x128xf32>
    %496 = arith.truncf %495 : vector<8x128xf32> to vector<8x128xbf16>
    %cst_96 = arith.constant dense<0.000000e+00> : vector<8x128xf32>
    %497 = tpu.matmul %492, %494, %cst_96 {dimension_numbers = #tpu.dot_dimension_numbers<[1], [0], [0], [1], [0, 0, 1, 1], [], []>} : vector<8x8xbf16>, vector<8x128xbf16>, vector<8x128xf32> -> vector<8x128xf32>
    %cst_97 = arith.constant 0.000000e+00 : f32
    %498 = vector.broadcast %cst_97 : f32 to vector<8x128xf32>
    %cst_98 = arith.constant 0.000000e+00 : f32
    %499 = vector.broadcast %cst_98 : f32 to vector<8x128xf32>
    %c48 = arith.constant 48 : index
    %500 = memref.load %arg12[%c48] : memref<132xf32, #tpu.memory_space<smem>>
    %c56 = arith.constant 56 : index
    %501 = memref.load %arg12[%c56] : memref<132xf32, #tpu.memory_space<smem>>
    %c88 = arith.constant 88 : index
    %502 = memref.load %arg12[%c88] : memref<132xf32, #tpu.memory_space<smem>>
    %c120 = arith.constant 120 : index
    %503 = memref.load %arg12[%c120] : memref<132xf32, #tpu.memory_space<smem>>
    %504 = vector.broadcast %500 : f32 to vector<8x128xf32>
    %505 = arith.mulf %497, %504 : vector<8x128xf32>
    %506 = vector.broadcast %501 : f32 to vector<8x128xf32>
    %507 = arith.mulf %25, %506 : vector<8x128xf32>
    %508 = arith.addf %505, %507 : vector<8x128xf32>
    %509 = vector.broadcast %502 : f32 to vector<8x128xf32>
    %510 = arith.addf %508, %509 : vector<8x128xf32>
    %cst_99 = arith.constant 0.000000e+00 : f32
    %511 = vector.broadcast %cst_99 : f32 to vector<8x128xf32>
    %512 = arith.maximumf %510, %511 : vector<8x128xf32>
    %513 = vector.broadcast %503 : f32 to vector<8x128xf32>
    %514 = arith.mulf %512, %513 : vector<8x128xf32>
    %515 = arith.addf %498, %514 : vector<8x128xf32>
    %c49 = arith.constant 49 : index
    %516 = memref.load %arg12[%c49] : memref<132xf32, #tpu.memory_space<smem>>
    %c57 = arith.constant 57 : index
    %517 = memref.load %arg12[%c57] : memref<132xf32, #tpu.memory_space<smem>>
    %c89 = arith.constant 89 : index
    %518 = memref.load %arg12[%c89] : memref<132xf32, #tpu.memory_space<smem>>
    %c121 = arith.constant 121 : index
    %519 = memref.load %arg12[%c121] : memref<132xf32, #tpu.memory_space<smem>>
    %520 = vector.broadcast %516 : f32 to vector<8x128xf32>
    %521 = arith.mulf %497, %520 : vector<8x128xf32>
    %522 = vector.broadcast %517 : f32 to vector<8x128xf32>
    %523 = arith.mulf %25, %522 : vector<8x128xf32>
    %524 = arith.addf %521, %523 : vector<8x128xf32>
    %525 = vector.broadcast %518 : f32 to vector<8x128xf32>
    %526 = arith.addf %524, %525 : vector<8x128xf32>
    %cst_100 = arith.constant 0.000000e+00 : f32
    %527 = vector.broadcast %cst_100 : f32 to vector<8x128xf32>
    %528 = arith.maximumf %526, %527 : vector<8x128xf32>
    %529 = vector.broadcast %519 : f32 to vector<8x128xf32>
    %530 = arith.mulf %528, %529 : vector<8x128xf32>
    %531 = arith.addf %499, %530 : vector<8x128xf32>
    %c50 = arith.constant 50 : index
    %532 = memref.load %arg12[%c50] : memref<132xf32, #tpu.memory_space<smem>>
    %c58 = arith.constant 58 : index
    %533 = memref.load %arg12[%c58] : memref<132xf32, #tpu.memory_space<smem>>
    %c90 = arith.constant 90 : index
    %534 = memref.load %arg12[%c90] : memref<132xf32, #tpu.memory_space<smem>>
    %c122 = arith.constant 122 : index
    %535 = memref.load %arg12[%c122] : memref<132xf32, #tpu.memory_space<smem>>
    %536 = vector.broadcast %532 : f32 to vector<8x128xf32>
    %537 = arith.mulf %497, %536 : vector<8x128xf32>
    %538 = vector.broadcast %533 : f32 to vector<8x128xf32>
    %539 = arith.mulf %25, %538 : vector<8x128xf32>
    %540 = arith.addf %537, %539 : vector<8x128xf32>
    %541 = vector.broadcast %534 : f32 to vector<8x128xf32>
    %542 = arith.addf %540, %541 : vector<8x128xf32>
    %cst_101 = arith.constant 0.000000e+00 : f32
    %543 = vector.broadcast %cst_101 : f32 to vector<8x128xf32>
    %544 = arith.maximumf %542, %543 : vector<8x128xf32>
    %545 = vector.broadcast %535 : f32 to vector<8x128xf32>
    %546 = arith.mulf %544, %545 : vector<8x128xf32>
    %547 = arith.addf %515, %546 : vector<8x128xf32>
    %c51 = arith.constant 51 : index
    %548 = memref.load %arg12[%c51] : memref<132xf32, #tpu.memory_space<smem>>
    %c59 = arith.constant 59 : index
    %549 = memref.load %arg12[%c59] : memref<132xf32, #tpu.memory_space<smem>>
    %c91 = arith.constant 91 : index
    %550 = memref.load %arg12[%c91] : memref<132xf32, #tpu.memory_space<smem>>
    %c123 = arith.constant 123 : index
    %551 = memref.load %arg12[%c123] : memref<132xf32, #tpu.memory_space<smem>>
    %552 = vector.broadcast %548 : f32 to vector<8x128xf32>
    %553 = arith.mulf %497, %552 : vector<8x128xf32>
    %554 = vector.broadcast %549 : f32 to vector<8x128xf32>
    %555 = arith.mulf %25, %554 : vector<8x128xf32>
    %556 = arith.addf %553, %555 : vector<8x128xf32>
    %557 = vector.broadcast %550 : f32 to vector<8x128xf32>
    %558 = arith.addf %556, %557 : vector<8x128xf32>
    %cst_102 = arith.constant 0.000000e+00 : f32
    %559 = vector.broadcast %cst_102 : f32 to vector<8x128xf32>
    %560 = arith.maximumf %558, %559 : vector<8x128xf32>
    %561 = vector.broadcast %551 : f32 to vector<8x128xf32>
    %562 = arith.mulf %560, %561 : vector<8x128xf32>
    %563 = arith.addf %531, %562 : vector<8x128xf32>
    %c52 = arith.constant 52 : index
    %564 = memref.load %arg12[%c52] : memref<132xf32, #tpu.memory_space<smem>>
    %c60 = arith.constant 60 : index
    %565 = memref.load %arg12[%c60] : memref<132xf32, #tpu.memory_space<smem>>
    %c92 = arith.constant 92 : index
    %566 = memref.load %arg12[%c92] : memref<132xf32, #tpu.memory_space<smem>>
    %c124 = arith.constant 124 : index
    %567 = memref.load %arg12[%c124] : memref<132xf32, #tpu.memory_space<smem>>
    %568 = vector.broadcast %564 : f32 to vector<8x128xf32>
    %569 = arith.mulf %497, %568 : vector<8x128xf32>
    %570 = vector.broadcast %565 : f32 to vector<8x128xf32>
    %571 = arith.mulf %25, %570 : vector<8x128xf32>
    %572 = arith.addf %569, %571 : vector<8x128xf32>
    %573 = vector.broadcast %566 : f32 to vector<8x128xf32>
    %574 = arith.addf %572, %573 : vector<8x128xf32>
    %cst_103 = arith.constant 0.000000e+00 : f32
    %575 = vector.broadcast %cst_103 : f32 to vector<8x128xf32>
    %576 = arith.maximumf %574, %575 : vector<8x128xf32>
    %577 = vector.broadcast %567 : f32 to vector<8x128xf32>
    %578 = arith.mulf %576, %577 : vector<8x128xf32>
    %579 = arith.addf %547, %578 : vector<8x128xf32>
    %c53 = arith.constant 53 : index
    %580 = memref.load %arg12[%c53] : memref<132xf32, #tpu.memory_space<smem>>
    %c61 = arith.constant 61 : index
    %581 = memref.load %arg12[%c61] : memref<132xf32, #tpu.memory_space<smem>>
    %c93 = arith.constant 93 : index
    %582 = memref.load %arg12[%c93] : memref<132xf32, #tpu.memory_space<smem>>
    %c125 = arith.constant 125 : index
    %583 = memref.load %arg12[%c125] : memref<132xf32, #tpu.memory_space<smem>>
    %584 = vector.broadcast %580 : f32 to vector<8x128xf32>
    %585 = arith.mulf %497, %584 : vector<8x128xf32>
    %586 = vector.broadcast %581 : f32 to vector<8x128xf32>
    %587 = arith.mulf %25, %586 : vector<8x128xf32>
    %588 = arith.addf %585, %587 : vector<8x128xf32>
    %589 = vector.broadcast %582 : f32 to vector<8x128xf32>
    %590 = arith.addf %588, %589 : vector<8x128xf32>
    %cst_104 = arith.constant 0.000000e+00 : f32
    %591 = vector.broadcast %cst_104 : f32 to vector<8x128xf32>
    %592 = arith.maximumf %590, %591 : vector<8x128xf32>
    %593 = vector.broadcast %583 : f32 to vector<8x128xf32>
    %594 = arith.mulf %592, %593 : vector<8x128xf32>
    %595 = arith.addf %563, %594 : vector<8x128xf32>
    %c54 = arith.constant 54 : index
    %596 = memref.load %arg12[%c54] : memref<132xf32, #tpu.memory_space<smem>>
    %c62 = arith.constant 62 : index
    %597 = memref.load %arg12[%c62] : memref<132xf32, #tpu.memory_space<smem>>
    %c94 = arith.constant 94 : index
    %598 = memref.load %arg12[%c94] : memref<132xf32, #tpu.memory_space<smem>>
    %c126 = arith.constant 126 : index
    %599 = memref.load %arg12[%c126] : memref<132xf32, #tpu.memory_space<smem>>
    %600 = vector.broadcast %596 : f32 to vector<8x128xf32>
    %601 = arith.mulf %497, %600 : vector<8x128xf32>
    %602 = vector.broadcast %597 : f32 to vector<8x128xf32>
    %603 = arith.mulf %25, %602 : vector<8x128xf32>
    %604 = arith.addf %601, %603 : vector<8x128xf32>
    %605 = vector.broadcast %598 : f32 to vector<8x128xf32>
    %606 = arith.addf %604, %605 : vector<8x128xf32>
    %cst_105 = arith.constant 0.000000e+00 : f32
    %607 = vector.broadcast %cst_105 : f32 to vector<8x128xf32>
    %608 = arith.maximumf %606, %607 : vector<8x128xf32>
    %609 = vector.broadcast %599 : f32 to vector<8x128xf32>
    %610 = arith.mulf %608, %609 : vector<8x128xf32>
    %611 = arith.addf %579, %610 : vector<8x128xf32>
    %c55 = arith.constant 55 : index
    %612 = memref.load %arg12[%c55] : memref<132xf32, #tpu.memory_space<smem>>
    %c63 = arith.constant 63 : index
    %613 = memref.load %arg12[%c63] : memref<132xf32, #tpu.memory_space<smem>>
    %c95 = arith.constant 95 : index
    %614 = memref.load %arg12[%c95] : memref<132xf32, #tpu.memory_space<smem>>
    %c127 = arith.constant 127 : index
    %615 = memref.load %arg12[%c127] : memref<132xf32, #tpu.memory_space<smem>>
    %616 = vector.broadcast %612 : f32 to vector<8x128xf32>
    %617 = arith.mulf %497, %616 : vector<8x128xf32>
    %618 = vector.broadcast %613 : f32 to vector<8x128xf32>
    %619 = arith.mulf %25, %618 : vector<8x128xf32>
    %620 = arith.addf %617, %619 : vector<8x128xf32>
    %621 = vector.broadcast %614 : f32 to vector<8x128xf32>
    %622 = arith.addf %620, %621 : vector<8x128xf32>
    %cst_106 = arith.constant 0.000000e+00 : f32
    %623 = vector.broadcast %cst_106 : f32 to vector<8x128xf32>
    %624 = arith.maximumf %622, %623 : vector<8x128xf32>
    %625 = vector.broadcast %615 : f32 to vector<8x128xf32>
    %626 = arith.mulf %624, %625 : vector<8x128xf32>
    %627 = arith.addf %595, %626 : vector<8x128xf32>
    %628 = arith.addf %611, %627 : vector<8x128xf32>
    %c131 = arith.constant 131 : index
    %629 = memref.load %arg12[%c131] : memref<132xf32, #tpu.memory_space<smem>>
    %630 = vector.broadcast %629 : f32 to vector<8x128xf32>
    %631 = arith.addf %628, %630 : vector<8x128xf32>
    %cst_107 = arith.constant -1.000000e+30 : f32
    %632 = vector.broadcast %cst_107 : f32 to vector<8x128xf32>
    %633 = arith.select %10, %631, %632 : vector<8x128xi1>, vector<8x128xf32>
    %cst_108 = arith.constant dense<0xFF800000> : vector<8xf32>
    %634 = vector.multi_reduction <maximumf>, %633, %cst_108 [1] : vector<8x128xf32> to vector<8xf32>
    %635 = vector.shape_cast %634 : vector<8xf32> to vector<8x1xf32>
    %636 = vector.broadcast %635 : vector<8x1xf32> to vector<8x128xf32>
    %637 = arith.subf %633, %636 : vector<8x128xf32>
    %638 = math.exp %637 : vector<8x128xf32>
    %cst_109 = arith.constant dense<0.000000e+00> : vector<8xf32>
    %639 = vector.multi_reduction <add>, %638, %cst_109 [1] : vector<8x128xf32> to vector<8xf32>
    %640 = vector.shape_cast %639 : vector<8xf32> to vector<8x1xf32>
    %641 = tpu.reciprocal %640 {approx = true} : vector<8x1xf32> -> vector<8x1xf32>
    %642 = vector.broadcast %641 : vector<8x1xf32> to vector<8x128xf32>
    %643 = arith.mulf %638, %642 : vector<8x128xf32>
    %644 = arith.truncf %643 : vector<8x128xf32> to vector<8x128xbf16>
    %cst_110 = arith.constant dense<0.000000e+00> : vector<8x8xf32>
    %645 = tpu.matmul %644, %496, %cst_110 {dimension_numbers = #tpu.dot_dimension_numbers<[1], [1], [0], [0], [0, 0, 1, 0], [], []>} : vector<8x128xbf16>, vector<8x128xbf16>, vector<8x8xf32> -> vector<8x8xf32>
    %cst_111 = arith.constant 0.000000e+00 : f32
    %646 = vector.broadcast %cst_111 : f32 to vector<8x96xf32>
    %647 = tpu.concatenate %180, %335, %490, %645, %646 in 1 : vector<8x8xf32>, vector<8x8xf32>, vector<8x8xf32>, vector<8x8xf32>, vector<8x96xf32> -> vector<8x128xf32>
    %648 = arith.truncf %647 : vector<8x128xf32> to vector<8x128xbf16>
    %c0_112 = arith.constant 0 : index
    %c0_113 = arith.constant 0 : index
    %649 = vector.load %arg7[%c0_112, %c0_113] : memref<128x128xbf16, #tpu.memory_space<vmem>>, vector<128x128xbf16>
    %cst_114 = arith.constant dense<0.000000e+00> : vector<8x128xf32>
    %650 = tpu.matmul %648, %649, %cst_114 {dimension_numbers = #tpu.dot_dimension_numbers<[1], [0], [0], [1], [0, 0, 1, 1], [], []>} : vector<8x128xbf16>, vector<128x128xbf16>, vector<8x128xf32> -> vector<8x128xf32>
    %651 = vector.broadcast %1 : vector<1x128xf32> to vector<8x128xf32>
    %652 = arith.addf %650, %651 : vector<8x128xf32>
    %c0_115 = arith.constant 0 : index
    %c0_116 = arith.constant 0 : index
    %c0_117 = arith.constant 0 : index
    %653 = vector.load %arg1[%c0_115, %c0_116, %c0_117] : memref<1x8x128xbf16, #tpu.memory_space<vmem>>, vector<1x8x128xbf16>
    %654 = vector.shape_cast %653 : vector<1x8x128xbf16> to vector<8x128xbf16>
    %655 = arith.extf %654 : vector<8x128xbf16> to vector<8x128xf32>
    %656 = arith.addf %655, %652 : vector<8x128xf32>
    %cst_118 = arith.constant dense<0.000000e+00> : vector<128xf32>
    %657 = vector.multi_reduction <add>, %656, %cst_118 [0] : vector<8x128xf32> to vector<128xf32>
    %658 = vector.shape_cast %657 : vector<128xf32> to vector<1x128xf32>
    %cst_119 = arith.constant 8.000000e+00 : f32
    %659 = vector.broadcast %cst_119 : f32 to vector<1x128xf32>
    %660 = arith.divf %658, %659 : vector<1x128xf32>
    %661 = vector.broadcast %660 : vector<1x128xf32> to vector<8x128xf32>
    %662 = arith.subf %656, %661 : vector<8x128xf32>
    %663 = arith.mulf %662, %662 : vector<8x128xf32>
    %cst_120 = arith.constant dense<0.000000e+00> : vector<128xf32>
    %664 = vector.multi_reduction <add>, %663, %cst_120 [0] : vector<8x128xf32> to vector<128xf32>
    %665 = vector.shape_cast %664 : vector<128xf32> to vector<1x128xf32>
    %cst_121 = arith.constant 8.000000e+00 : f32
    %666 = vector.broadcast %cst_121 : f32 to vector<1x128xf32>
    %667 = arith.divf %665, %666 : vector<1x128xf32>
    %668 = vector.broadcast %660 : vector<1x128xf32> to vector<8x128xf32>
    %669 = arith.subf %656, %668 : vector<8x128xf32>
    %cst_122 = arith.constant 9.99999974E-6 : f32
    %670 = vector.broadcast %cst_122 : f32 to vector<1x128xf32>
    %671 = arith.addf %667, %670 : vector<1x128xf32>
    %672 = math.rsqrt %671 : vector<1x128xf32>
    %673 = vector.broadcast %672 : vector<1x128xf32> to vector<8x128xf32>
    %674 = arith.mulf %669, %673 : vector<8x128xf32>
    %675 = vector.broadcast %3 : vector<1x128xf32> to vector<8x128xf32>
    %676 = arith.mulf %674, %675 : vector<8x128xf32>
    %677 = vector.broadcast %4 : vector<1x128xf32> to vector<8x128xf32>
    %678 = arith.addf %676, %677 : vector<8x128xf32>
    %679 = arith.truncf %678 : vector<8x128xf32> to vector<8x128xbf16>
    %c0_123 = arith.constant 0 : index
    %c0_124 = arith.constant 0 : index
    %680 = vector.load %arg8[%c0_123, %c0_124] : memref<128x128xbf16, #tpu.memory_space<vmem>>, vector<128x128xbf16>
    %cst_125 = arith.constant dense<0.000000e+00> : vector<8x128xf32>
    %681 = tpu.matmul %679, %680, %cst_125 {dimension_numbers = #tpu.dot_dimension_numbers<[1], [0], [0], [1], [0, 0, 1, 1], [], []>} : vector<8x128xbf16>, vector<128x128xbf16>, vector<8x128xf32> -> vector<8x128xf32>
    %682 = vector.broadcast %7 : vector<1x128xf32> to vector<8x128xf32>
    %683 = arith.addf %681, %682 : vector<8x128xf32>
    %cst_126 = arith.constant 0.000000e+00 : f32
    %684 = vector.broadcast %cst_126 : f32 to vector<8x128xf32>
    %685 = arith.maximumf %683, %684 : vector<8x128xf32>
    %686 = arith.truncf %685 : vector<8x128xf32> to vector<8x128xbf16>
    %c0_127 = arith.constant 0 : index
    %c0_128 = arith.constant 0 : index
    %687 = vector.load %arg9[%c0_127, %c0_128] : memref<128x128xbf16, #tpu.memory_space<vmem>>, vector<128x128xbf16>
    %cst_129 = arith.constant dense<0.000000e+00> : vector<8x128xf32>
    %688 = tpu.matmul %686, %687, %cst_129 {dimension_numbers = #tpu.dot_dimension_numbers<[1], [0], [0], [1], [0, 0, 1, 1], [], []>} : vector<8x128xbf16>, vector<128x128xbf16>, vector<8x128xf32> -> vector<8x128xf32>
    %689 = vector.broadcast %2 : vector<1x128xf32> to vector<8x128xf32>
    %690 = arith.addf %688, %689 : vector<8x128xf32>
    %691 = arith.addf %678, %690 : vector<8x128xf32>
    %cst_130 = arith.constant dense<0.000000e+00> : vector<128xf32>
    %692 = vector.multi_reduction <add>, %691, %cst_130 [0] : vector<8x128xf32> to vector<128xf32>
    %693 = vector.shape_cast %692 : vector<128xf32> to vector<1x128xf32>
    %cst_131 = arith.constant 8.000000e+00 : f32
    %694 = vector.broadcast %cst_131 : f32 to vector<1x128xf32>
    %695 = arith.divf %693, %694 : vector<1x128xf32>
    %696 = vector.broadcast %695 : vector<1x128xf32> to vector<8x128xf32>
    %697 = arith.subf %691, %696 : vector<8x128xf32>
    %698 = arith.mulf %697, %697 : vector<8x128xf32>
    %cst_132 = arith.constant dense<0.000000e+00> : vector<128xf32>
    %699 = vector.multi_reduction <add>, %698, %cst_132 [0] : vector<8x128xf32> to vector<128xf32>
    %700 = vector.shape_cast %699 : vector<128xf32> to vector<1x128xf32>
    %cst_133 = arith.constant 8.000000e+00 : f32
    %701 = vector.broadcast %cst_133 : f32 to vector<1x128xf32>
    %702 = arith.divf %700, %701 : vector<1x128xf32>
    %703 = vector.broadcast %695 : vector<1x128xf32> to vector<8x128xf32>
    %704 = arith.subf %691, %703 : vector<8x128xf32>
    %cst_134 = arith.constant 9.99999974E-6 : f32
    %705 = vector.broadcast %cst_134 : f32 to vector<1x128xf32>
    %706 = arith.addf %702, %705 : vector<1x128xf32>
    %707 = math.rsqrt %706 : vector<1x128xf32>
    %708 = vector.broadcast %707 : vector<1x128xf32> to vector<8x128xf32>
    %709 = arith.mulf %704, %708 : vector<8x128xf32>
    %710 = vector.broadcast %5 : vector<1x128xf32> to vector<8x128xf32>
    %711 = arith.mulf %709, %710 : vector<8x128xf32>
    %712 = vector.broadcast %6 : vector<1x128xf32> to vector<8x128xf32>
    %713 = arith.addf %711, %712 : vector<8x128xf32>
    %c0_135 = arith.constant 0 : index
    %c0_136 = arith.constant 0 : index
    %c0_137 = arith.constant 0 : index
    %714 = vector.load %arg13[%c0_135, %c0_136, %c0_137] : memref<1x8x128xf32, #tpu.memory_space<vmem>>, vector<1x8x128xf32>
    %715 = vector.shape_cast %714 : vector<1x8x128xf32> to vector<8x128xf32>
    %716 = vector.shape_cast %713 : vector<8x128xf32> to vector<1x8x128xf32>
    tpu.vector_store %arg13[%c0_135, %c0_136, %c0_137], %716 {strides = array<i32>} : memref<1x8x128xf32, #tpu.memory_space<vmem>>, vector<1x8x128xf32>,
    return
  }
  func.func @transform_0(%arg0: i32) -> (i32, i32, i32) {
    %c0_i32 = arith.constant 0 : i32
    %c0_i32_0 = arith.constant 0 : i32
    %c0_i32_1 = arith.constant 0 : i32
    return %arg0, %c0_i32, %c0_i32_0 : i32, i32, i32
  }
  func.func @transform_1(%arg0: i32) -> (i32, i32, i32) {
    %c0_i32 = arith.constant 0 : i32
    %c0_i32_0 = arith.constant 0 : i32
    %c0_i32_1 = arith.constant 0 : i32
    return %arg0, %c0_i32, %c0_i32_0 : i32, i32, i32
  }
  func.func @transform_2(%arg0: i32) -> (i32, i32, i32) {
    %c0_i32 = arith.constant 0 : i32
    %c0_i32_0 = arith.constant 0 : i32
    %c0_i32_1 = arith.constant 0 : i32
    return %arg0, %c0_i32, %c0_i32_0 : i32, i32, i32
  }
  func.func @transform_3(%arg0: i32) -> (i32, i32) {
    %c0_i32 = arith.constant 0 : i32
    %c0_i32_0 = arith.constant 0 : i32
    %c0_i32_1 = arith.constant 0 : i32
    return %c0_i32, %c0_i32_0 : i32, i32
  }
  func.func @transform_4(%arg0: i32) -> (i32, i32) {
    %c0_i32 = arith.constant 0 : i32
    %c0_i32_0 = arith.constant 0 : i32
    %c0_i32_1 = arith.constant 0 : i32
    return %c0_i32, %c0_i32_0 : i32, i32
  }
  func.func @transform_5(%arg0: i32) -> (i32, i32) {
    %c0_i32 = arith.constant 0 : i32
    %c0_i32_0 = arith.constant 0 : i32
    %c0_i32_1 = arith.constant 0 : i32
    return %c0_i32, %c0_i32_0 : i32, i32
  }
  func.func @transform_6(%arg0: i32) -> (i32, i32) {
    %c0_i32 = arith.constant 0 : i32
    %c0_i32_0 = arith.constant 0 : i32
    %c0_i32_1 = arith.constant 0 : i32
    return %c0_i32, %c0_i32_0 : i32, i32
  }
  func.func @transform_7(%arg0: i32) -> (i32, i32) {
    %c0_i32 = arith.constant 0 : i32
    %c0_i32_0 = arith.constant 0 : i32
    %c0_i32_1 = arith.constant 0 : i32
    return %c0_i32, %c0_i32_0 : i32, i32
  }
  func.func @transform_8(%arg0: i32) -> (i32, i32) {
    %c0_i32 = arith.constant 0 : i32
    %c0_i32_0 = arith.constant 0 : i32
    %c0_i32_1 = arith.constant 0 : i32
    return %c0_i32, %c0_i32_0 : i32, i32
  }
  func.func @transform_9(%arg0: i32) -> (i32, i32) {
    %c0_i32 = arith.constant 0 : i32
    %c0_i32_0 = arith.constant 0 : i32
    %c0_i32_1 = arith.constant 0 : i32
    return %c0_i32, %c0_i32_0 : i32, i32
  }
  func.func @transform_10(%arg0: i32) -> (i32, i32) {
    %c0_i32 = arith.constant 0 : i32
    %c0_i32_0 = arith.constant 0 : i32
    %c0_i32_1 = arith.constant 0 : i32
    return %c0_i32, %c0_i32_0 : i32, i32
  }
  func.func @transform_11(%arg0: i32) -> i32 {
    %c0_i32 = arith.constant 0 : i32
    %c0_i32_0 = arith.constant 0 : i32
    return %c0_i32 : i32
  }
  func.func @transform_12(%arg0: i32) -> (i32, i32, i32) {
    %c0_i32 = arith.constant 0 : i32
    %c0_i32_0 = arith.constant 0 : i32
    %c0_i32_1 = arith.constant 0 : i32
    return %arg0, %c0_i32, %c0_i32_0 : i32, i32, i32
  }
}

</mosaic_0001>

<llo_original>
// kernel: tpu_custom_call.1
$region0: #{tpu_custom_call.1}
  #allocation0 [shape = 'u32[]', space=smem, size = 0x4, offset = 0x4, fixed_abs, tag = 'smem constant byte address 0x4 - core index']
  #allocation1 [shape = 'u32[144,128]{1,0:T(1,128)}', space=vmem, size = 0x12000, scoped, tag = 'internal scratch']
  #allocation2 [shape = 'f32[8,128]{1,0:T(8,128)}', space=vmem, size = 0x1000, scoped, tag = 'scratch operand']
  #allocation3 [shape = 'f32[128,128]{1,0:T(8,128)}', space=vmem, size = 0x10000, scoped, tag = 'scratch operand']
  #allocation4 [shape = 'f32[128,128]{1,0:T(8,128)}', space=vmem, size = 0x10000, scoped, tag = 'scratch operand']
  %s0 = inlined_call_operand.hbm [shape: bf16[2,8,128], index: 0, kind: input, shape index: {}]
  %s1 = inlined_call_operand.hbm [shape: bf16[2,128,128], index: 1, kind: input, shape index: {}]
  %s2 = inlined_call_operand.hbm [shape: f32[2,8,128], index: 2, kind: input, shape index: {}]
  %s3 = inlined_call_operand.hbm [shape: bf16[128,128], index: 3, kind: input, shape index: {}]
  %s4 = inlined_call_operand.hbm [shape: bf16[128,128], index: 4, kind: input, shape index: {}]
  %s5 = inlined_call_operand.hbm [shape: bf16[128,128], index: 5, kind: input, shape index: {}]
  %s6 = inlined_call_operand.hbm [shape: bf16[128,128], index: 6, kind: input, shape index: {}]
  %s7 = inlined_call_operand.hbm [shape: bf16[128,128], index: 7, kind: input, shape index: {}]
  %s8 = inlined_call_operand.hbm [shape: bf16[128,128], index: 8, kind: input, shape index: {}]
  %s9 = inlined_call_operand.vmem [shape: f32[8,128], index: 9, kind: input, shape index: {}]
  %s10 = inlined_call_operand.vmem [shape: f32[1,128], index: 10, kind: input, shape index: {}]
  %s11 = inlined_call_operand.vmem [shape: f32[132], index: 11, kind: input, shape index: {}]
  %s12 = inlined_call_operand.hbm [shape: f32[2,8,128], index: 12, kind: output, shape index: {}]
  %s13 = sld [smem:[#allocation0]]
  $region121: #{tpu_custom_call.1} parent=0
    _
  %s15 = ssub.s32 1, %s13
  %s16 = scalar_select 0, %s15, %s13
  $region1: #{tpu_custom_call.1} parent=0
    #allocation5 [shape = 'u8[4096]{0}', space=vmem, size = 0x1000, scoped, tag = 'input window, operand 0']
    #allocation6 [shape = 's32[2]{0}', space=sflag, size = 0x8, scoped, tag = 'scoped memory for tpu_custom_call.1']
    #allocation7 [shape = 's32[2]{0}', space=sflag, size = 0x8, scoped, tag = 'scoped memory for tpu_custom_call.1']
    #allocation8 [shape = 's32[2]{0}', space=sflag, size = 0x8, scoped, tag = 'scoped memory for tpu_custom_call.1']
    #allocation9 [shape = 'u8[65536]{0}', space=vmem, size = 0x10000, scoped, tag = 'input window, operand 1']
    #allocation10 [shape = 's32[2]{0}', space=sflag, size = 0x8, scoped, tag = 'scoped memory for tpu_custom_call.1']
    #allocation11 [shape = 'u8[8192]{0}', space=vmem, size = 0x2000, scoped, tag = 'input window, operand 2']
    #allocation12 [shape = 'u8[32768]{0}', space=vmem, size = 0x8000, scoped, tag = 'input window, operand 3, single buffered']
    #allocation13 [shape = 's32[1]{0}', space=sflag, size = 0x4, scoped, tag = 'scoped memory for tpu_custom_call.1']
    #allocation14 [shape = 'u8[32768]{0}', space=vmem, size = 0x8000, scoped, tag = 'input window, operand 4, single buffered']
    #allocation15 [shape = 'u8[32768]{0}', space=vmem, size = 0x8000, scoped, tag = 'input window, operand 5, single buffered']
    #allocation16 [shape = 's32[1]{0}', space=sflag, size = 0x4, scoped, tag = 'scoped memory for tpu_custom_call.1']
    #allocation17 [shape = 'u8[32768]{0}', space=vmem, size = 0x8000, scoped, tag = 'input window, operand 6, single buffered']
    #allocation18 [shape = 'u8[32768]{0}', space=vmem, size = 0x8000, scoped, tag = 'input window, operand 7, single buffered']
    #allocation19 [shape = 's32[1]{0}', space=sflag, size = 0x4, scoped, tag = 'scoped memory for tpu_custom_call.1']
    #allocation20 [shape = 'u8[32768]{0}', space=vmem, size = 0x8000, scoped, tag = 'input window, operand 8, single buffered']
    #allocation21 [shape = 'u8[1024]{0}', space=smem, size = 0x400, scoped, tag = 'input window, operand 11, single buffered']
    #allocation22 [shape = 'u8[8192]{0}', space=vmem, size = 0x2000, scoped, tag = 'output window, operand 0']
    %17 = vsyncpa [#allocation6], 0
    %s18 = scalar_lea.sflag [#allocation6], 1
    %19 = vsyncpa %s18, 0
    %20 = vsyncpa [#allocation10], 0
    %s21 = scalar_lea.sflag [#allocation10], 1
    %22 = vsyncpa %s21, 0
    %23 = vsyncpa [#allocation13], 0
    %24 = vsyncpa [#allocation16], 0
    %25 = vsyncpa [#allocation19], 0
    %26 = vsyncpa [#allocation8], 0
    %27 = vsyncpa [#allocation7], 0
    %s28 = scalar_lea.sflag [#allocation7], 1
    %29 = vsyncpa %s28, 0
    loop: start=0, step=1, limit=4
    $region2: #{tpu_custom_call.1} parent=1 // loop_pre_header
      _
    $region3: #{tpu_custom_call.1} parent=1 // loop_header
      %s31 = sphi 0, %s35
      %p32 = scmp.ge.s32.totalorder %s31, 4
      %s41 = sphi 0, %s43
      %s44 = sphi 0, %s41
      %s45 = sphi 0, %s44
      %s61 = sphi 0, %s45
      %s67 = sphi 0, %s69
      %s70 = sphi 0, %s67
      %s71 = sphi 0, %s70
      %s87 = sphi 0, %s71
      %s93 = sphi 0, %s95
      %s96 = sphi 0, %s93
      %s97 = sphi 0, %s96
      %s113 = sphi 0, %s97
      %s117 = sphi 0, %s117
      %s119 = sphi 0, %s117
      %s120 = sphi 0, %s119
      %s134 = sphi 0, %s120
      %s138 = sphi 0, %s138
      %s140 = sphi 0, %s138
      %s141 = sphi 0, %s140
      %s155 = sphi 0, %s141
      %s159 = sphi 0, %s159
      %s161 = sphi 0, %s159
      %s162 = sphi 0, %s161
      %s176 = sphi 0, %s162
      %s180 = sphi 0, %s180
      %s182 = sphi 0, %s180
      %s183 = sphi 0, %s182
      %s197 = sphi 0, %s183
      %s201 = sphi 0, %s201
      %s203 = sphi 0, %s201
      %s204 = sphi 0, %s203
      %s218 = sphi 0, %s204
      %s222 = sphi 0, %s222
      %s224 = sphi 0, %s222
      %s225 = sphi 0, %s224
      %s239 = sphi 0, %s225
      %s243 = sphi 0, %s243
      %s245 = sphi 0, %s243
      %s246 = sphi 0, %s245
      %s260 = sphi 0, %s246
      %s264 = sphi 0, %s264
      %s266 = sphi 0, %s264
      %s267 = sphi 0, %s266
      %s281 = sphi 0, %s267
      %s285 = sphi 0, %s285
      %s287 = sphi 0, %s285
      %s288 = sphi 0, %s287
      %s302 = sphi 0, %s288
      %s308 = sphi 0, %s310
      %s311 = sphi 0, %s308
      %s312 = sphi 0, %s311
      %s328 = sphi 0, %s312
    $region4: #{tpu_custom_call.1} parent=1 // loop_header_branch
      %34 = sbr.rel (%p32) target = $region8
    $region5: #{tpu_custom_call.1} parent=1 // loop_body
      %s36 = ssub.s32 %s31, 1
      %s37 = ssub.s32 %s31, 2
      %s38 = sadd.s32 %s31, 1
      %s39 = ssub.s32 %s31, %s38
      %p40 = scmp.eq.s32.totalorder %s39, 0
      %s42 = sadd.s32 %s41, 1
      %s43 = scalar_select %p40, %s41, %s42
      %p46 = pneg %p40
      %p47 = scmp.eq.s32.totalorder %s31, 1
      %p48 = por %p46, %p47
      %p49 = scmp.ne.s32.totalorder %s41, %s44
      %p50 = scmp.eq.s32.totalorder %s31, 0
      %p51 = por %p49, %p50
      %p52 = scmp.ne.s32.totalorder %s41, %s44
      %p53 = scmp.eq.s32.totalorder %s36, 1
      %p54 = por %p52, %p53
      %p55 = scmp.ne.s32.totalorder %s44, %s45
      %p56 = scmp.eq.s32.totalorder %s36, 0
      %p57 = por %p55, %p56
      %p58 = scmp.ne.s32.totalorder %s44, %s45
      %p59 = scmp.eq.s32.totalorder %s37, 1
      %p60 = por %p58, %p59
      %p62 = scmp.ne.s32.totalorder %s45, %s61
      %p63 = scmp.eq.s32.totalorder %s37, 0
      %p64 = por %p62, %p63
      %s65 = ssub.s32 %s31, %s38
      %p66 = scmp.eq.s32.totalorder %s65, 0
      %s68 = sadd.s32 %s67, 1
      %s69 = scalar_select %p66, %s67, %s68
      %p72 = pneg %p66
      %p73 = scmp.eq.s32.totalorder %s31, 1
      %p74 = por %p72, %p73
      %p75 = scmp.ne.s32.totalorder %s67, %s70
      %p76 = scmp.eq.s32.totalorder %s31, 0
      %p77 = por %p75, %p76
      %p78 = scmp.ne.s32.totalorder %s67, %s70
      %p79 = scmp.eq.s32.totalorder %s36, 1
      %p80 = por %p78, %p79
      %p81 = scmp.ne.s32.totalorder %s70, %s71
      %p82 = scmp.eq.s32.totalorder %s36, 0
      %p83 = por %p81, %p82
      %p84 = scmp.ne.s32.totalorder %s70, %s71
      %p85 = scmp.eq.s32.totalorder %s37, 1
      %p86 = por %p84, %p85
      %p88 = scmp.ne.s32.totalorder %s71, %s87
      %p89 = scmp.eq.s32.totalorder %s37, 0
      %p90 = por %p88, %p89
      %s91 = ssub.s32 %s31, %s38
      %p92 = scmp.eq.s32.totalorder %s91, 0
      %s94 = sadd.s32 %s93, 1
      %s95 = scalar_select %p92, %s93, %s94
      %p98 = pneg %p92
      %p99 = scmp.eq.s32.totalorder %s31, 1
      %p100 = por %p98, %p99
      %p101 = scmp.ne.s32.totalorder %s93, %s96
      %p102 = scmp.eq.s32.totalorder %s31, 0
      %p103 = por %p101, %p102
      %p104 = scmp.ne.s32.totalorder %s93, %s96
      %p105 = scmp.eq.s32.totalorder %s36, 1
      %p106 = por %p104, %p105
      %p107 = scmp.ne.s32.totalorder %s96, %s97
      %p108 = scmp.eq.s32.totalorder %s36, 0
      %p109 = por %p107, %p108
      %p110 = scmp.ne.s32.totalorder %s96, %s97
      %p111 = scmp.eq.s32.totalorder %s37, 1
      %p112 = por %p110, %p111
      %p114 = scmp.ne.s32.totalorder %s97, %s113
      %p115 = scmp.eq.s32.totalorder %s37, 0
      %p116 = por %p114, %p115
      %s118 = sadd.s32 %s117, 1
      %p121 = scmp.eq.s32.totalorder %s31, 1
      %p122 = scmp.ne.s32.totalorder %s117, %s119
      %p123 = scmp.eq.s32.totalorder %s31, 0
      %p124 = por %p122, %p123
      %p125 = scmp.ne.s32.totalorder %s117, %s119
      %p126 = scmp.eq.s32.totalorder %s36, 1
      %p127 = por %p125, %p126
      %p128 = scmp.ne.s32.totalorder %s119, %s120
      %p129 = scmp.eq.s32.totalorder %s36, 0
      %p130 = por %p128, %p129
      %p131 = scmp.ne.s32.totalorder %s119, %s120
      %p132 = scmp.eq.s32.totalorder %s37, 1
      %p133 = por %p131, %p132
      %p135 = scmp.ne.s32.totalorder %s120, %s134
      %p136 = scmp.eq.s32.totalorder %s37, 0
      %p137 = por %p135, %p136
      %s139 = sadd.s32 %s138, 1
      %p142 = scmp.eq.s32.totalorder %s31, 1
      %p143 = scmp.ne.s32.totalorder %s138, %s140
      %p144 = scmp.eq.s32.totalorder %s31, 0
      %p145 = por %p143, %p144
      %p146 = scmp.ne.s32.totalorder %s138, %s140
      %p147 = scmp.eq.s32.totalorder %s36, 1
      %p148 = por %p146, %p147
      %p149 = scmp.ne.s32.totalorder %s140, %s141
      %p150 = scmp.eq.s32.totalorder %s36, 0
      %p151 = por %p149, %p150
      %p152 = scmp.ne.s32.totalorder %s140, %s141
      %p153 = scmp.eq.s32.totalorder %s37, 1
      %p154 = por %p152, %p153
      %p156 = scmp.ne.s32.totalorder %s141, %s155
      %p157 = scmp.eq.s32.totalorder %s37, 0
      %p158 = por %p156, %p157
      %s160 = sadd.s32 %s159, 1
      %p163 = scmp.eq.s32.totalorder %s31, 1
      %p164 = scmp.ne.s32.totalorder %s159, %s161
      %p165 = scmp.eq.s32.totalorder %s31, 0
      %p166 = por %p164, %p165
      %p167 = scmp.ne.s32.totalorder %s159, %s161
      %p168 = scmp.eq.s32.totalorder %s36, 1
      %p169 = por %p167, %p168
      %p170 = scmp.ne.s32.totalorder %s161, %s162
      %p171 = scmp.eq.s32.totalorder %s36, 0
      %p172 = por %p170, %p171
      %p173 = scmp.ne.s32.totalorder %s161, %s162
      %p174 = scmp.eq.s32.totalorder %s37, 1
      %p175 = por %p173, %p174
      %p177 = scmp.ne.s32.totalorder %s162, %s176
      %p178 = scmp.eq.s32.totalorder %s37, 0
      %p179 = por %p177, %p178
      %s181 = sadd.s32 %s180, 1
      %p184 = scmp.eq.s32.totalorder %s31, 1
      %p185 = scmp.ne.s32.totalorder %s180, %s182
      %p186 = scmp.eq.s32.totalorder %s31, 0
      %p187 = por %p185, %p186
      %p188 = scmp.ne.s32.totalorder %s180, %s182
      %p189 = scmp.eq.s32.totalorder %s36, 1
      %p190 = por %p188, %p189
      %p191 = scmp.ne.s32.totalorder %s182, %s183
      %p192 = scmp.eq.s32.totalorder %s36, 0
      %p193 = por %p191, %p192
      %p194 = scmp.ne.s32.totalorder %s182, %s183
      %p195 = scmp.eq.s32.totalorder %s37, 1
      %p196 = por %p194, %p195
      %p198 = scmp.ne.s32.totalorder %s183, %s197
      %p199 = scmp.eq.s32.totalorder %s37, 0
      %p200 = por %p198, %p199
      %s202 = sadd.s32 %s201, 1
      %p205 = scmp.eq.s32.totalorder %s31, 1
      %p206 = scmp.ne.s32.totalorder %s201, %s203
      %p207 = scmp.eq.s32.totalorder %s31, 0
      %p208 = por %p206, %p207
      %p209 = scmp.ne.s32.totalorder %s201, %s203
      %p210 = scmp.eq.s32.totalorder %s36, 1
      %p211 = por %p209, %p210
      %p212 = scmp.ne.s32.totalorder %s203, %s204
      %p213 = scmp.eq.s32.totalorder %s36, 0
      %p214 = por %p212, %p213
      %p215 = scmp.ne.s32.totalorder %s203, %s204
      %p216 = scmp.eq.s32.totalorder %s37, 1
      %p217 = por %p215, %p216
      %p219 = scmp.ne.s32.totalorder %s204, %s218
      %p220 = scmp.eq.s32.totalorder %s37, 0
      %p221 = por %p219, %p220
      %s223 = sadd.s32 %s222, 1
      %p226 = scmp.eq.s32.totalorder %s31, 1
      %p227 = scmp.ne.s32.totalorder %s222, %s224
      %p228 = scmp.eq.s32.totalorder %s31, 0
      %p229 = por %p227, %p228
      %p230 = scmp.ne.s32.totalorder %s222, %s224
      %p231 = scmp.eq.s32.totalorder %s36, 1
      %p232 = por %p230, %p231
      %p233 = scmp.ne.s32.totalorder %s224, %s225
      %p234 = scmp.eq.s32.totalorder %s36, 0
      %p235 = por %p233, %p234
      %p236 = scmp.ne.s32.totalorder %s224, %s225
      %p237 = scmp.eq.s32.totalorder %s37, 1
      %p238 = por %p236, %p237
      %p240 = scmp.ne.s32.totalorder %s225, %s239
      %p241 = scmp.eq.s32.totalorder %s37, 0
      %p242 = por %p240, %p241
      %s244 = sadd.s32 %s243, 1
      %p247 = scmp.eq.s32.totalorder %s31, 1
      %p248 = scmp.ne.s32.totalorder %s243, %s245
      %p249 = scmp.eq.s32.totalorder %s31, 0
      %p250 = por %p248, %p249
      %p251 = scmp.ne.s32.totalorder %s243, %s245
      %p252 = scmp.eq.s32.totalorder %s36, 1
      %p253 = por %p251, %p252
      %p254 = scmp.ne.s32.totalorder %s245, %s246
      %p255 = scmp.eq.s32.totalorder %s36, 0
      %p256 = por %p254, %p255
      %p257 = scmp.ne.s32.totalorder %s245, %s246
      %p258 = scmp.eq.s32.totalorder %s37, 1
      %p259 = por %p257, %p258
      %p261 = scmp.ne.s32.totalorder %s246, %s260
      %p262 = scmp.eq.s32.totalorder %s37, 0
      %p263 = por %p261, %p262
      %s265 = sadd.s32 %s264, 1
      %p268 = scmp.eq.s32.totalorder %s31, 1
      %p269 = scmp.ne.s32.totalorder %s264, %s266
      %p270 = scmp.eq.s32.totalorder %s31, 0
      %p271 = por %p269, %p270
      %p272 = scmp.ne.s32.totalorder %s264, %s266
      %p273 = scmp.eq.s32.totalorder %s36, 1
      %p274 = por %p272, %p273
      %p275 = scmp.ne.s32.totalorder %s266, %s267
      %p276 = scmp.eq.s32.totalorder %s36, 0
      %p277 = por %p275, %p276
      %p278 = scmp.ne.s32.totalorder %s266, %s267
      %p279 = scmp.eq.s32.totalorder %s37, 1
      %p280 = por %p278, %p279
      %p282 = scmp.ne.s32.totalorder %s267, %s281
      %p283 = scmp.eq.s32.totalorder %s37, 0
      %p284 = por %p282, %p283
      %s286 = sadd.s32 %s285, 1
      %p289 = scmp.eq.s32.totalorder %s31, 1
      %p290 = scmp.ne.s32.totalorder %s285, %s287
      %p291 = scmp.eq.s32.totalorder %s31, 0
      %p292 = por %p290, %p291
      %p293 = scmp.ne.s32.totalorder %s285, %s287
      %p294 = scmp.eq.s32.totalorder %s36, 1
      %p295 = por %p293, %p294
      %p296 = scmp.ne.s32.totalorder %s287, %s288
      %p297 = scmp.eq.s32.totalorder %s36, 0
      %p298 = por %p296, %p297
      %p299 = scmp.ne.s32.totalorder %s287, %s288
      %p300 = scmp.eq.s32.totalorder %s37, 1
      %p301 = por %p299, %p300
      %p303 = scmp.ne.s32.totalorder %s288, %s302
      %p304 = scmp.eq.s32.totalorder %s37, 0
      %p305 = por %p303, %p304
      %s306 = ssub.s32 %s31, %s38
      %p307 = scmp.eq.s32.totalorder %s306, 0
      %s309 = sadd.s32 %s308, 1
      %s310 = scalar_select %p307, %s308, %s309
      %p313 = pneg %p307
      %p314 = scmp.eq.s32.totalorder %s31, 1
      %p315 = por %p313, %p314
      %p316 = scmp.ne.s32.totalorder %s308, %s311
      %p317 = scmp.eq.s32.totalorder %s31, 0
      %p318 = por %p316, %p317
      %p319 = scmp.ne.s32.totalorder %s308, %s311
      %p320 = scmp.eq.s32.totalorder %s36, 1
      %p321 = por %p319, %p320
      %p322 = scmp.ne.s32.totalorder %s311, %s312
      %p323 = scmp.eq.s32.totalorder %s36, 0
      %p324 = por %p322, %p323
      %p325 = scmp.ne.s32.totalorder %s311, %s312
      %p326 = scmp.eq.s32.totalorder %s37, 1
      %p327 = por %p325, %p326
      %p329 = scmp.ne.s32.totalorder %s312, %s328
      %p330 = scmp.eq.s32.totalorder %s37, 0
      %p331 = por %p329, %p330
      %p332 = scmp.le.s32.totalorder 1, %s31
      %p333 = scmp.lt.s32.totalorder %s31, 3
      %p334 = pnand %p332, %p333
      %p335 = pneg %p334
      // Predicated region
      $region9: #{tpu_custom_call.1} parent=5 // pred_check
        _
      $region10: #{tpu_custom_call.1} parent=5 // pred_check_branch
        %337 = sbr.rel (%p334) target = $region12
      $region11: #{tpu_custom_call.1} parent=5 // pred_region
        %s338 = ssub.s32 %s31, 1
        // Predicated region
        $region13: #{tpu_custom_call.1} parent=11 // pred_check
          %p339 = pneg %p130
        $region14: #{tpu_custom_call.1} parent=11 // pred_check_branch
          %341 = sbr.rel (%p339) target = $region16
        $region15: #{tpu_custom_call.1} parent=11 // pred_region
          %s343 = ssub.s32 1024, 1024
          %344 = vsyncadd [#allocation13], %s343
          %s345 = sshll.u32 [#allocation12], 4
          %s346 = int_to_ptr.vmem [resolvable:$true] %s345
          %351 = dma.hbm_to_vmem [thread:$0]  %s3, 1024, %s346, [#allocation13], 64, 64, 4
        $region16: #{tpu_custom_call.1} parent=11 // pred_fallthru
          _
        // Predicated region
        $region17: #{tpu_custom_call.1} parent=11 // pred_check
          %p352 = pneg %p151
        $region18: #{tpu_custom_call.1} parent=11 // pred_check_branch
          %354 = sbr.rel (%p352) target = $region20
        $region19: #{tpu_custom_call.1} parent=11 // pred_region
          %s356 = ssub.s32 1024, 1024
          %357 = vsyncadd [#allocation13], %s356
          %s358 = sshll.u32 [#allocation14], 4
          %s359 = int_to_ptr.vmem [resolvable:$true] %s358
          %364 = dma.hbm_to_vmem [thread:$0]  %s4, 1024, %s359, [#allocation13], 64, 64, 4
        $region20: #{tpu_custom_call.1} parent=11 // pred_fallthru
          _
        // Predicated region
        $region21: #{tpu_custom_call.1} parent=11 // pred_check
          %p365 = pneg %p172
        $region22: #{tpu_custom_call.1} parent=11 // pred_check_branch
          %367 = sbr.rel (%p365) target = $region24
        $region23: #{tpu_custom_call.1} parent=11 // pred_region
          %s369 = ssub.s32 1024, 1024
          %370 = vsyncadd [#allocation16], %s369
          %s371 = sshll.u32 [#allocation15], 4
          %s372 = int_to_ptr.vmem [resolvable:$true] %s371
          %377 = dma.hbm_to_vmem [thread:$0]  %s5, 1024, %s372, [#allocation16], 64, 64, 4
        $region24: #{tpu_custom_call.1} parent=11 // pred_fallthru
          _
        // Predicated region
        $region25: #{tpu_custom_call.1} parent=11 // pred_check
          %p378 = pneg %p193
        $region26: #{tpu_custom_call.1} parent=11 // pred_check_branch
          %380 = sbr.rel (%p378) target = $region28
        $region27: #{tpu_custom_call.1} parent=11 // pred_region
          %s382 = ssub.s32 1024, 1024
          %383 = vsyncadd [#allocation16], %s382
          %s384 = sshll.u32 [#allocation17], 4
          %s385 = int_to_ptr.vmem [resolvable:$true] %s384
          %390 = dma.hbm_to_vmem [thread:$0]  %s6, 1024, %s385, [#allocation16], 64, 64, 4
        $region28: #{tpu_custom_call.1} parent=11 // pred_fallthru
          _
        // Predicated region
        $region29: #{tpu_custom_call.1} parent=11 // pred_check
          %p391 = pneg %p214
        $region30: #{tpu_custom_call.1} parent=11 // pred_check_branch
          %393 = sbr.rel (%p391) target = $region32
        $region31: #{tpu_custom_call.1} parent=11 // pred_region
          %s395 = ssub.s32 1024, 1024
          %396 = vsyncadd [#allocation19], %s395
          %s397 = sshll.u32 [#allocation18], 4
          %s398 = int_to_ptr.vmem [resolvable:$true] %s397
          %403 = dma.hbm_to_vmem [thread:$0]  %s7, 1024, %s398, [#allocation19], 64, 64, 4
        $region32: #{tpu_custom_call.1} parent=11 // pred_fallthru
          _
        // Predicated region
        $region33: #{tpu_custom_call.1} parent=11 // pred_check
          %p404 = pneg %p235
        $region34: #{tpu_custom_call.1} parent=11 // pred_check_branch
          %406 = sbr.rel (%p404) target = $region36
        $region35: #{tpu_custom_call.1} parent=11 // pred_region
          %s408 = ssub.s32 1024, 1024
          %409 = vsyncadd [#allocation19], %s408
          %s410 = sshll.u32 [#allocation20], 4
          %s411 = int_to_ptr.vmem [resolvable:$true] %s410
          %416 = dma.hbm_to_vmem [thread:$0]  %s8, 1024, %s411, [#allocation19], 64, 64, 4
        $region36: #{tpu_custom_call.1} parent=11 // pred_fallthru
          _
        // Predicated region
        $region37: #{tpu_custom_call.1} parent=11 // pred_check
          %p417 = pneg %p256
        $region38: #{tpu_custom_call.1} parent=11 // pred_check_branch
          %419 = sbr.rel (%p417) target = $region40
        $region39: #{tpu_custom_call.1} parent=11 // pred_region
          _
        $region40: #{tpu_custom_call.1} parent=11 // pred_fallthru
          _
        // Predicated region
        $region41: #{tpu_custom_call.1} parent=11 // pred_check
          %p420 = pneg %p277
        $region42: #{tpu_custom_call.1} parent=11 // pred_check_branch
          %422 = sbr.rel (%p420) target = $region44
        $region43: #{tpu_custom_call.1} parent=11 // pred_region
          _
        $region44: #{tpu_custom_call.1} parent=11 // pred_fallthru
          _
        // Predicated region
        $region45: #{tpu_custom_call.1} parent=11 // pred_check
          %p423 = pneg %p298
        $region46: #{tpu_custom_call.1} parent=11 // pred_check_branch
          %425 = sbr.rel (%p423) target = $region48
        $region47: #{tpu_custom_call.1} parent=11 // pred_region
          %s427 = ssub.s32 32, 32
          %428 = vsyncadd [#allocation8], %s427
          %s430 = sshll.u32 %s11, 4
          %s431 = int_to_ptr.vmem [resolvable:$true] %s430
          %433 = dma.vmem_to_smem %s431, 32, [#allocation21], [#allocation8]
        $region48: #{tpu_custom_call.1} parent=11 // pred_fallthru
          _
      $region12: #{tpu_custom_call.1} parent=5 // pred_fallthru
        _
      %p434 = scmp.lt.s32.totalorder %s31, 2
      // Predicated region
      $region49: #{tpu_custom_call.1} parent=5 // pred_check
        %p435 = pneg %p434
      $region50: #{tpu_custom_call.1} parent=5 // pred_check_branch
        %437 = sbr.rel (%p435) target = $region52
      $region51: #{tpu_custom_call.1} parent=5 // pred_region
        // Predicated region
        $region53: #{tpu_custom_call.1} parent=51 // pred_check
          %p438 = pneg %p51
        $region54: #{tpu_custom_call.1} parent=51 // pred_check_branch
          %440 = sbr.rel (%p438) target = $region56
        $region55: #{tpu_custom_call.1} parent=51 // pred_region
          %s441 = sand.u32 %s41, 1
          %s442 = scalar_lea.sflag [#allocation6], %s441
          %s443 = sand.u32 %s41, 1
          %s444 = smul.addr %s443, 4
          %s445 = scalar_lea.vmem [#allocation5], %s444
          %s447 = ssub.s32 64, 64
          %448 = vsyncadd %s442, %s447
          %s449 = smul.addr %s31, 64
          %s450 = scalar_lea.hbm %s0, %s449
          %s452 = sshll.u32 %s445, 4
          %s453 = int_to_ptr.vmem [resolvable:$true] %s452
          %455 = dma.hbm_to_vmem [thread:$0]  %s450, 64, %s453, %s442
        $region56: #{tpu_custom_call.1} parent=51 // pred_fallthru
          _
        // Predicated region
        $region57: #{tpu_custom_call.1} parent=51 // pred_check
          %p456 = pneg %p77
        $region58: #{tpu_custom_call.1} parent=51 // pred_check_branch
          %458 = sbr.rel (%p456) target = $region60
        $region59: #{tpu_custom_call.1} parent=51 // pred_region
          %s459 = sand.u32 %s31, 1
          %s460 = scalar_lea.sflag [#allocation10], %s459
          %s461 = sand.u32 %s67, 1
          %s462 = smul.addr %s461, 64
          %s463 = scalar_lea.vmem [#allocation9], %s462
          %s465 = ssub.s32 1024, 1024
          %466 = vsyncadd %s460, %s465
          %s467 = smul.addr %s31, 16
          %s468 = smul.addr %s467, 64
          %s469 = scalar_lea.hbm %s1, %s468
          %s470 = sshll.u32 %s463, 4
          %s471 = int_to_ptr.vmem [resolvable:$true] %s470
          %476 = dma.hbm_to_vmem [thread:$0]  %s469, 1024, %s471, %s460, 64, 64, 4
        $region60: #{tpu_custom_call.1} parent=51 // pred_fallthru
          _
        // Predicated region
        $region61: #{tpu_custom_call.1} parent=51 // pred_check
          %p477 = pneg %p103
        $region62: #{tpu_custom_call.1} parent=51 // pred_check_branch
          %479 = sbr.rel (%p477) target = $region64
        $region63: #{tpu_custom_call.1} parent=51 // pred_region
          %s480 = sand.u32 %s31, 1
          %s481 = scalar_lea.sflag [#allocation10], %s480
          %s482 = sand.u32 %s93, 1
          %s483 = smul.addr %s482, 8
          %s484 = scalar_lea.vmem [#allocation11], %s483
          %s486 = ssub.s32 128, 128
          %487 = vsyncadd %s481, %s486
          %s488 = smul.addr %s31, 128
          %s489 = scalar_lea.hbm %s2, %s488
          %s491 = sshll.u32 %s484, 4
          %s492 = int_to_ptr.vmem [resolvable:$true] %s491
          %494 = dma.hbm_to_vmem [thread:$0]  %s489, 128, %s492, %s481
        $region64: #{tpu_custom_call.1} parent=51 // pred_fallthru
          _
      $region52: #{tpu_custom_call.1} parent=5 // pred_fallthru
        _
      %p495 = scmp.le.s32.totalorder 1, %s31
      %p496 = scmp.lt.s32.totalorder %s31, 3
      %p497 = pnand %p495, %p496
      %p498 = pneg %p497
      // Predicated region
      $region65: #{tpu_custom_call.1} parent=5 // pred_check
        _
      $region66: #{tpu_custom_call.1} parent=5 // pred_check_branch
        %500 = sbr.rel (%p497) target = $region68
      $region67: #{tpu_custom_call.1} parent=5 // pred_region
        %s501 = ssub.s32 %s31, 1
        %s502 = sand.u32 %s44, 1
        %s503 = scalar_lea.sflag [#allocation6], %s502
        %s504 = sand.u32 %s44, 1
        %s505 = smul.addr %s504, 4
        %s506 = scalar_lea.vmem [#allocation5], %s505
        // Predicated region
        $region69: #{tpu_custom_call.1} parent=67 // pred_check
          %p507 = pneg %p57
        $region70: #{tpu_custom_call.1} parent=67 // pred_check_branch
          %509 = sbr.rel (%p507) target = $region72
        $region71: #{tpu_custom_call.1} parent=67 // pred_region
          %510 = dma.done %s503, 64
        $region72: #{tpu_custom_call.1} parent=67 // pred_fallthru
          _
        %s511 = sand.u32 %s36, 1
        %s512 = scalar_lea.sflag [#allocation10], %s511
        %s513 = sand.u32 %s70, 1
        %s514 = smul.addr %s513, 64
        %s515 = scalar_lea.vmem [#allocation9], %s514
        // Predicated region
        $region73: #{tpu_custom_call.1} parent=67 // pred_check
          %p516 = pneg %p83
        $region74: #{tpu_custom_call.1} parent=67 // pred_check_branch
          %518 = sbr.rel (%p516) target = $region76
        $region75: #{tpu_custom_call.1} parent=67 // pred_region
          %519 = dma.done %s512, 1024
        $region76: #{tpu_custom_call.1} parent=67 // pred_fallthru
          _
        %s520 = sand.u32 %s36, 1
        %s521 = scalar_lea.sflag [#allocation10], %s520
        %s522 = sand.u32 %s96, 1
        %s523 = smul.addr %s522, 8
        %s524 = scalar_lea.vmem [#allocation11], %s523
        // Predicated region
        $region77: #{tpu_custom_call.1} parent=67 // pred_check
          %p525 = pneg %p109
        $region78: #{tpu_custom_call.1} parent=67 // pred_check_branch
          %527 = sbr.rel (%p525) target = $region80
        $region79: #{tpu_custom_call.1} parent=67 // pred_region
          %528 = dma.done %s521, 128
        $region80: #{tpu_custom_call.1} parent=67 // pred_fallthru
          _
        // Predicated region
        $region81: #{tpu_custom_call.1} parent=67 // pred_check
          %p529 = pneg %p130
        $region82: #{tpu_custom_call.1} parent=67 // pred_check_branch
          %531 = sbr.rel (%p529) target = $region84
        $region83: #{tpu_custom_call.1} parent=67 // pred_region
          %532 = dma.done [#allocation13], 1024
        $region84: #{tpu_custom_call.1} parent=67 // pred_fallthru
          _
        // Predicated region
        $region85: #{tpu_custom_call.1} parent=67 // pred_check
          %p533 = pneg %p151
        $region86: #{tpu_custom_call.1} parent=67 // pred_check_branch
          %535 = sbr.rel (%p533) target = $region88
        $region87: #{tpu_custom_call.1} parent=67 // pred_region
          %536 = dma.done [#allocation13], 1024
        $region88: #{tpu_custom_call.1} parent=67 // pred_fallthru
          _
        // Predicated region
        $region89: #{tpu_custom_call.1} parent=67 // pred_check
          %p537 = pneg %p172
        $region90: #{tpu_custom_call.1} parent=67 // pred_check_branch
          %539 = sbr.rel (%p537) target = $region92
        $region91: #{tpu_custom_call.1} parent=67 // pred_region
          %540 = dma.done [#allocation16], 1024
        $region92: #{tpu_custom_call.1} parent=67 // pred_fallthru
          _
        // Predicated region
        $region93: #{tpu_custom_call.1} parent=67 // pred_check
          %p541 = pneg %p193
        $region94: #{tpu_custom_call.1} parent=67 // pred_check_branch
          %543 = sbr.rel (%p541) target = $region96
        $region95: #{tpu_custom_call.1} parent=67 // pred_region
          %544 = dma.done [#allocation16], 1024
        $region96: #{tpu_custom_call.1} parent=67 // pred_fallthru
          _
        // Predicated region
        $region97: #{tpu_custom_call.1} parent=67 // pred_check
          %p545 = pneg %p214
        $region98: #{tpu_custom_call.1} parent=67 // pred_check_branch
          %547 = sbr.rel (%p545) target = $region100
        $region99: #{tpu_custom_call.1} parent=67 // pred_region
          %548 = dma.done [#allocation19], 1024
        $region100: #{tpu_custom_call.1} parent=67 // pred_fallthru
          _
        // Predicated region
        $region101: #{tpu_custom_call.1} parent=67 // pred_check
          %p549 = pneg %p235
        $region102: #{tpu_custom_call.1} parent=67 // pred_check_branch
          %551 = sbr.rel (%p549) target = $region104
        $region103: #{tpu_custom_call.1} parent=67 // pred_region
          %552 = dma.done [#allocation19], 1024
        $region104: #{tpu_custom_call.1} parent=67 // pred_fallthru
          _
        // Predicated region
        $region105: #{tpu_custom_call.1} parent=67 // pred_check
          %p553 = pneg %p298
        $region106: #{tpu_custom_call.1} parent=67 // pred_check_branch
          %555 = sbr.rel (%p553) target = $region108
        $region107: #{tpu_custom_call.1} parent=67 // pred_region
          %556 = dma.done [#allocation8], 32
        $region108: #{tpu_custom_call.1} parent=67 // pred_fallthru
          _
        %557 = sfence
        %s558 = sand.u32 %s44, 1
        %s559 = scalar_lea.sflag [#allocation6], %s558
        %s560 = sand.u32 %s44, 1
        %s561 = smul.addr %s560, 4
        %s562 = scalar_lea.vmem [#allocation5], %s561
        %p563 = pneg %p57
        %p564 = pneg %p54
        %s565 = sand.u32 %s36, 1
        %s566 = scalar_lea.sflag [#allocation10], %s565
        %s567 = sand.u32 %s70, 1
        %s568 = smul.addr %s567, 64
        %s569 = scalar_lea.vmem [#allocation9], %s568
        %p570 = pneg %p83
        %p571 = pneg %p80
        %s572 = sand.u32 %s36, 1
        %s573 = scalar_lea.sflag [#allocation10], %s572
        %s574 = sand.u32 %s96, 1
        %s575 = smul.addr %s574, 8
        %s576 = scalar_lea.vmem [#allocation11], %s575
        %p577 = pneg %p109
        %p578 = pneg %p106
        %p579 = pneg %p130
        %p580 = pneg %p127
        %p581 = pneg %p151
        %p582 = pneg %p148
        %p583 = pneg %p172
        %p584 = pneg %p169
        %p585 = pneg %p193
        %p586 = pneg %p190
        %p587 = pneg %p214
        %p588 = pneg %p211
        %p589 = pneg %p235
        %p590 = pneg %p232
        %p591 = pneg %p256
        %p592 = pneg %p253
        %p593 = pneg %p277
        %p594 = pneg %p274
        %p595 = pneg %p298
        %p596 = pneg %p295
        %p597 = pneg %p324
        %p598 = pneg %p321
        %s599 = sand.u32 %s311, 1
        %s600 = scalar_lea.sflag [#allocation7], %s599
        %s601 = sand.u32 %s311, 1
        %s602 = smul.addr %s601, 8
        %s603 = scalar_lea.vmem [#allocation22], %s602
        %v605 = vld [vmem:[%s9] sm:$0xff]
        %v606 = vld [vmem:[%s10] sm:$0x1]
        %v607 = vlaneseq
        %v608 = vand.u32 %v607, 127
        %vm609 = vcmp.lt.s32.totalorder %v608, 16
        %v610 = vld [vmem:[%s506] sm:$0xf]
        %v611 = vld [vmem:[#allocation12] sm:$0xf]
        %v612 = vld [vmem:[#allocation12 + $0x4] sm:$0xf]
        %v613 = vld [vmem:[#allocation12 + $0x8] sm:$0xf]
        %v614 = vld [vmem:[#allocation12 + $0xc] sm:$0xf]
        %v615 = vld [vmem:[#allocation12 + $0x10] sm:$0xf]
        %v616 = vld [vmem:[#allocation12 + $0x14] sm:$0xf]
        %v617 = vld [vmem:[#allocation12 + $0x18] sm:$0xf]
        %v618 = vld [vmem:[#allocation12 + $0x1c] sm:$0xf]
        %v619 = vld [vmem:[#allocation12 + $0x20] sm:$0xf]
        %v620 = vld [vmem:[#allocation12 + $0x24] sm:$0xf]
        %v621 = vld [vmem:[#allocation12 + $0x28] sm:$0xf]
        %v622 = vld [vmem:[#allocation12 + $0x2c] sm:$0xf]
        %v623 = vld [vmem:[#allocation12 + $0x30] sm:$0xf]
        %v624 = vld [vmem:[#allocation12 + $0x34] sm:$0xf]
        %v625 = vld [vmem:[#allocation12 + $0x38] sm:$0xf]
        %v626 = vld [vmem:[#allocation12 + $0x3c] sm:$0xf]
        %v643 = vunpack.c.l.b16 %v611
        %v644 = vunpack.c.l.b16 %v612
        %v645 = vunpack.c.l.b16 %v613
        %v646 = vunpack.c.l.b16 %v614
        %v647 = vunpack.c.l.b16 %v615
        %v648 = vunpack.c.l.b16 %v616
        %v649 = vunpack.c.l.b16 %v617
        %v650 = vunpack.c.l.b16 %v618
        %v651 = vunpack.c.l.b16 %v619
        %v652 = vunpack.c.l.b16 %v620
        %v653 = vunpack.c.l.b16 %v621
        %v654 = vunpack.c.l.b16 %v622
        %v655 = vunpack.c.l.b16 %v623
        %v656 = vunpack.c.l.b16 %v624
        %v657 = vunpack.c.l.b16 %v625
        %v658 = vunpack.c.l.b16 %v626
        %v659 = vpack.c.b16 %v644, %v643
        %v660 = vpack.c.b16 %v646, %v645
        %v661 = vpack.c.b16 %v648, %v647
        %v662 = vpack.c.b16 %v650, %v649
        %v663 = vpack.c.b16 %v652, %v651
        %v664 = vpack.c.b16 %v654, %v653
        %v665 = vpack.c.b16 %v656, %v655
        %v666 = vpack.c.b16 %v658, %v657
        %675 = vmatprep.subr.bf16.mxu0 0
        %676 = vmatpush1.bf16.msra.mxu0 %v666
        %677 = vmatprep.subr.bf16.mxu0 0
        %678 = vmatpush1.bf16.msra.mxu0 %v665
        %679 = vmatprep.subr.bf16.mxu0 0
        %680 = vmatpush1.bf16.msra.mxu0 %v664
        %681 = vmatprep.subr.bf16.mxu0 0
        %682 = vmatpush1.bf16.msra.mxu0 %v663
        %683 = vmatprep.subr.bf16.mxu0 0
        %684 = vmatpush1.bf16.msra.mxu0 %v662
        %685 = vmatprep.subr.bf16.mxu0 0
        %686 = vmatpush1.bf16.msra.mxu0 %v661
        %687 = vmatprep.subr.bf16.mxu0 0
        %688 = vmatpush1.bf16.msra.mxu0 %v660
        %689 = vmatprep.subr.bf16.mxu0 0
        %690 = vmatpush1.bf16.msra.mxu0 %v659
        %691 = vmatprep.subr.bf16.mxu0 0
        %692 = vmatpush2.bf16.msra.mxu0 0
        %693 = vmatprep.subr.bf16.mxu0 0
        %694 = vmatpush2.bf16.msra.mxu0 0
        %695 = vmatprep.subr.bf16.mxu0 0
        %696 = vmatpush2.bf16.msra.mxu0 0
        %697 = vmatprep.subr.bf16.mxu0 0
        %698 = vmatpush2.bf16.msra.mxu0 0
        %699 = vmatprep.subr.bf16.mxu0 0
        %700 = vmatpush2.bf16.msra.mxu0 0
        %701 = vmatprep.subr.bf16.mxu0 0
        %702 = vmatpush2.bf16.msra.mxu0 0
        %703 = vmatprep.subr.bf16.mxu0 0
        %704 = vmatpush2.bf16.msra.mxu0 0
        %705 = vmatprep.subr.bf16.mxu0 0
        %706 = vmatpush2.bf16.msra.mxu0 0
        %707 = vmatprep.mubr.bf16.mxu0 0
        %708 = vmatmul.mubr.bf16.gmra.mxu0 %v610
        %v709 = vpop.f32.mrf.mxu0
        %v710 = vadd.f32 0.0, %v709
        %v711 = vpop.f32.mrf.mxu0
        %v712 = vpop.f32.mrf.mxu0
        %v713 = vpop.f32.mrf.mxu0
        %714 = vdwg.mxu0
        %715 = vst [vmem:[#allocation2] sm:$0xff] %v710
        %v716 = vld [vmem:[%s515] sm:$0xf]
        %v717 = vld [vmem:[%s515 + $0x4] sm:$0xf]
        %v718 = vld [vmem:[%s515 + $0x8] sm:$0xf]
        %v719 = vld [vmem:[%s515 + $0xc] sm:$0xf]
        %v720 = vld [vmem:[%s515 + $0x10] sm:$0xf]
        %v721 = vld [vmem:[%s515 + $0x14] sm:$0xf]
        %v722 = vld [vmem:[%s515 + $0x18] sm:$0xf]
        %v723 = vld [vmem:[%s515 + $0x1c] sm:$0xf]
        %v724 = vld [vmem:[%s515 + $0x20] sm:$0xf]
        %v725 = vld [vmem:[%s515 + $0x24] sm:$0xf]
        %v726 = vld [vmem:[%s515 + $0x28] sm:$0xf]
        %v727 = vld [vmem:[%s515 + $0x2c] sm:$0xf]
        %v728 = vld [vmem:[%s515 + $0x30] sm:$0xf]
        %v729 = vld [vmem:[%s515 + $0x34] sm:$0xf]
        %v730 = vld [vmem:[%s515 + $0x38] sm:$0xf]
        %v731 = vld [vmem:[%s515 + $0x3c] sm:$0xf]
        %v732 = vld [vmem:[#allocation14] sm:$0xf]
        %v733 = vld [vmem:[#allocation14 + $0x4] sm:$0xf]
        %v734 = vld [vmem:[#allocation14 + $0x8] sm:$0xf]
        %v735 = vld [vmem:[#allocation14 + $0xc] sm:$0xf]
        %v736 = vld [vmem:[#allocation14 + $0x10] sm:$0xf]
        %v737 = vld [vmem:[#allocation14 + $0x14] sm:$0xf]
        %v738 = vld [vmem:[#allocation14 + $0x18] sm:$0xf]
        %v739 = vld [vmem:[#allocation14 + $0x1c] sm:$0xf]
        %v740 = vld [vmem:[#allocation14 + $0x20] sm:$0xf]
        %v741 = vld [vmem:[#allocation14 + $0x24] sm:$0xf]
        %v742 = vld [vmem:[#allocation14 + $0x28] sm:$0xf]
        %v743 = vld [vmem:[#allocation14 + $0x2c] sm:$0xf]
        %v744 = vld [vmem:[#allocation14 + $0x30] sm:$0xf]
        %v745 = vld [vmem:[#allocation14 + $0x34] sm:$0xf]
        %v746 = vld [vmem:[#allocation14 + $0x38] sm:$0xf]
        %v747 = vld [vmem:[#allocation14 + $0x3c] sm:$0xf]
        %v764 = vunpack.c.l.b16 %v732
        %v765 = vunpack.c.l.b16 %v733
        %v766 = vunpack.c.l.b16 %v734
        %v767 = vunpack.c.l.b16 %v735
        %v768 = vunpack.c.l.b16 %v736
        %v769 = vunpack.c.l.b16 %v737
        %v770 = vunpack.c.l.b16 %v738
        %v771 = vunpack.c.l.b16 %v739
        %v772 = vunpack.c.l.b16 %v740
        %v773 = vunpack.c.l.b16 %v741
        %v774 = vunpack.c.l.b16 %v742
        %v775 = vunpack.c.l.b16 %v743
        %v776 = vunpack.c.l.b16 %v744
        %v777 = vunpack.c.l.b16 %v745
        %v778 = vunpack.c.l.b16 %v746
        %v779 = vunpack.c.l.b16 %v747
        %v780 = vpack.c.b16 %v765, %v764
        %v781 = vpack.c.b16 %v767, %v766
        %v782 = vpack.c.b16 %v769, %v768
        %v783 = vpack.c.b16 %v771, %v770
        %v784 = vpack.c.b16 %v773, %v772
        %v785 = vpack.c.b16 %v775, %v774
        %v786 = vpack.c.b16 %v777, %v776
        %v787 = vpack.c.b16 %v779, %v778
        %v812 = vunpack.c.l.b16 %v716
        %v813 = vunpack.c.l.b16 %v717
        %v814 = vunpack.c.l.b16 %v718
        %v815 = vunpack.c.l.b16 %v719
        %v816 = vunpack.c.l.b16 %v720
        %v817 = vunpack.c.l.b16 %v721
        %v818 = vunpack.c.l.b16 %v722
        %v819 = vunpack.c.l.b16 %v723
        %v820 = vunpack.c.l.b16 %v724
        %v821 = vunpack.c.l.b16 %v725
        %v822 = vunpack.c.l.b16 %v726
        %v823 = vunpack.c.l.b16 %v727
        %v824 = vunpack.c.l.b16 %v728
        %v825 = vunpack.c.l.b16 %v729
        %v826 = vunpack.c.l.b16 %v730
        %v827 = vunpack.c.l.b16 %v731
        %v828 = vpack.c.b16 %v813, %v812
        %v829 = vpack.c.b16 %v815, %v814
        %v830 = vpack.c.b16 %v817, %v816
        %v831 = vpack.c.b16 %v819, %v818
        %v832 = vpack.c.b16 %v821, %v820
        %v833 = vpack.c.b16 %v823, %v822
        %v834 = vpack.c.b16 %v825, %v824
        %v835 = vpack.c.b16 %v827, %v826
        %844 = vmatprep.subr.bf16.mxu0 0
        %845 = vmatpush1.bf16.msra.mxu0 %v835
        %846 = vmatprep.subr.bf16.mxu0 0
        %847 = vmatpush1.bf16.msra.mxu0 %v834
        %848 = vmatprep.subr.bf16.mxu0 0
        %849 = vmatpush1.bf16.msra.mxu0 %v833
        %850 = vmatprep.subr.bf16.mxu0 0
        %851 = vmatpush1.bf16.msra.mxu0 %v832
        %852 = vmatprep.subr.bf16.mxu0 0
        %853 = vmatpush1.bf16.msra.mxu0 %v831
        %854 = vmatprep.subr.bf16.mxu0 0
        %855 = vmatpush1.bf16.msra.mxu0 %v830
        %856 = vmatprep.subr.bf16.mxu0 0
        %857 = vmatpush1.bf16.msra.mxu0 %v829
        %858 = vmatprep.subr.bf16.mxu0 0
        %859 = vmatpush1.bf16.msra.mxu0 %v828
        %860 = vmatprep.subr.bf16.mxu0 0
        %861 = vmatpush2.bf16.msra.mxu0 0
        %862 = vmatprep.subr.bf16.mxu0 0
        %863 = vmatpush2.bf16.msra.mxu0 0
        %864 = vmatprep.subr.bf16.mxu0 0
        %865 = vmatpush2.bf16.msra.mxu0 0
        %866 = vmatprep.subr.bf16.mxu0 0
        %867 = vmatpush2.bf16.msra.mxu0 0
        %868 = vmatprep.subr.bf16.mxu0 0
        %869 = vmatpush2.bf16.msra.mxu0 0
        %870 = vmatprep.subr.bf16.mxu0 0
        %871 = vmatpush2.bf16.msra.mxu0 0
        %872 = vmatprep.subr.bf16.mxu0 0
        %873 = vmatpush2.bf16.msra.mxu0 0
        %874 = vmatprep.subr.bf16.mxu0 0
        %875 = vmatpush2.bf16.msra.mxu0 0
        %876 = vmatprep.mubr.bf16.mxu0 0
        %877 = vmatmul.mubr.bf16.gmra.mxu0 %v780
        %v878 = vpop.f32.mrf.mxu0
        %v879 = vadd.f32 0.0, %v878
        %v880 = vpop.f32.mrf.mxu0
        %v881 = vpop.f32.mrf.mxu0
        %v882 = vadd.f32 0.0, %v881
        %v883 = vpop.f32.mrf.mxu0
        %884 = vmatprep.mubr.bf16.mxu0 0
        %885 = vmatmul.mubr.bf16.gmra.mxu0 %v781
        %v886 = vpop.f32.mrf.mxu0
        %v887 = vadd.f32 0.0, %v886
        %v888 = vpop.f32.mrf.mxu0
        %v889 = vpop.f32.mrf.mxu0
        %v890 = vadd.f32 0.0, %v889
        %v891 = vpop.f32.mrf.mxu0
        %892 = vmatprep.mubr.bf16.mxu0 0
        %893 = vmatmul.mubr.bf16.gmra.mxu0 %v782
        %v894 = vpop.f32.mrf.mxu0
        %v895 = vadd.f32 0.0, %v894
        %v896 = vpop.f32.mrf.mxu0
        %v897 = vpop.f32.mrf.mxu0
        %v898 = vadd.f32 0.0, %v897
        %v899 = vpop.f32.mrf.mxu0
        %900 = vmatprep.mubr.bf16.mxu0 0
        %901 = vmatmul.mubr.bf16.gmra.mxu0 %v783
        %v902 = vpop.f32.mrf.mxu0
        %v903 = vadd.f32 0.0, %v902
        %v904 = vpop.f32.mrf.mxu0
        %v905 = vpop.f32.mrf.mxu0
        %v906 = vadd.f32 0.0, %v905
        %v907 = vpop.f32.mrf.mxu0
        %908 = vmatprep.mubr.bf16.mxu0 0
        %909 = vmatmul.mubr.bf16.gmra.mxu0 %v784
        %v910 = vpop.f32.mrf.mxu0
        %v911 = vadd.f32 0.0, %v910
        %v912 = vpop.f32.mrf.mxu0
        %v913 = vpop.f32.mrf.mxu0
        %v914 = vadd.f32 0.0, %v913
        %v915 = vpop.f32.mrf.mxu0
        %916 = vmatprep.mubr.bf16.mxu0 0
        %917 = vmatmul.mubr.bf16.gmra.mxu0 %v785
        %v918 = vpop.f32.mrf.mxu0
        %v919 = vadd.f32 0.0, %v918
        %v920 = vpop.f32.mrf.mxu0
        %v921 = vpop.f32.mrf.mxu0
        %v922 = vadd.f32 0.0, %v921
        %v923 = vpop.f32.mrf.mxu0
        %924 = vmatprep.mubr.bf16.mxu0 0
        %925 = vmatmul.mubr.bf16.gmra.mxu0 %v786
        %v926 = vpop.f32.mrf.mxu0
        %v927 = vadd.f32 0.0, %v926
        %v928 = vpop.f32.mrf.mxu0
        %v929 = vpop.f32.mrf.mxu0
        %v930 = vadd.f32 0.0, %v929
        %v931 = vpop.f32.mrf.mxu0
        %932 = vmatprep.mubr.bf16.mxu0 0
        %933 = vmatmul.mubr.bf16.gmra.mxu0 %v787
        %v934 = vpop.f32.mrf.mxu0
        %v935 = vadd.f32 0.0, %v934
        %v936 = vpop.f32.mrf.mxu0
        %v937 = vpop.f32.mrf.mxu0
        %v938 = vadd.f32 0.0, %v937
        %v939 = vpop.f32.mrf.mxu0
        %940 = vdwg.mxu0
        %941 = vst [vmem:[#allocation3] sm:$0xff] %v879
        %942 = vst [vmem:[#allocation3 + $0x8] sm:$0xff] %v882
        %943 = vst [vmem:[#allocation3 + $0x10] sm:$0xff] %v887
        %944 = vst [vmem:[#allocation3 + $0x18] sm:$0xff] %v890
        %945 = vst [vmem:[#allocation3 + $0x20] sm:$0xff] %v895
        %946 = vst [vmem:[#allocation3 + $0x28] sm:$0xff] %v898
        %947 = vst [vmem:[#allocation3 + $0x30] sm:$0xff] %v903
        %948 = vst [vmem:[#allocation3 + $0x38] sm:$0xff] %v906
        %949 = vst [vmem:[#allocation3 + $0x40] sm:$0xff] %v911
        %950 = vst [vmem:[#allocation3 + $0x48] sm:$0xff] %v914
        %951 = vst [vmem:[#allocation3 + $0x50] sm:$0xff] %v919
        %952 = vst [vmem:[#allocation3 + $0x58] sm:$0xff] %v922
        %953 = vst [vmem:[#allocation3 + $0x60] sm:$0xff] %v927
        %954 = vst [vmem:[#allocation3 + $0x68] sm:$0xff] %v930
        %955 = vst [vmem:[#allocation3 + $0x70] sm:$0xff] %v935
        %956 = vst [vmem:[#allocation3 + $0x78] sm:$0xff] %v938
        %v957 = vld [vmem:[#allocation15] sm:$0xf]
        %v958 = vld [vmem:[#allocation15 + $0x4] sm:$0xf]
        %v959 = vld [vmem:[#allocation15 + $0x8] sm:$0xf]
        %v960 = vld [vmem:[#allocation15 + $0xc] sm:$0xf]
        %v961 = vld [vmem:[#allocation15 + $0x10] sm:$0xf]
        %v962 = vld [vmem:[#allocation15 + $0x14] sm:$0xf]
        %v963 = vld [vmem:[#allocation15 + $0x18] sm:$0xf]
        %v964 = vld [vmem:[#allocation15 + $0x1c] sm:$0xf]
        %v965 = vld [vmem:[#allocation15 + $0x20] sm:$0xf]
        %v966 = vld [vmem:[#allocation15 + $0x24] sm:$0xf]
        %v967 = vld [vmem:[#allocation15 + $0x28] sm:$0xf]
        %v968 = vld [vmem:[#allocation15 + $0x2c] sm:$0xf]
        %v969 = vld [vmem:[#allocation15 + $0x30] sm:$0xf]
        %v970 = vld [vmem:[#allocation15 + $0x34] sm:$0xf]
        %v971 = vld [vmem:[#allocation15 + $0x38] sm:$0xf]
        %v972 = vld [vmem:[#allocation15 + $0x3c] sm:$0xf]
        %v989 = vunpack.c.l.b16 %v957
        %v990 = vunpack.c.l.b16 %v958
        %v991 = vunpack.c.l.b16 %v959
        %v992 = vunpack.c.l.b16 %v960
        %v993 = vunpack.c.l.b16 %v961
        %v994 = vunpack.c.l.b16 %v962
        %v995 = vunpack.c.l.b16 %v963
        %v996 = vunpack.c.l.b16 %v964
        %v997 = vunpack.c.l.b16 %v965
        %v998 = vunpack.c.l.b16 %v966
        %v999 = vunpack.c.l.b16 %v967
        %v1000 = vunpack.c.l.b16 %v968
        %v1001 = vunpack.c.l.b16 %v969
        %v1002 = vunpack.c.l.b16 %v970
        %v1003 = vunpack.c.l.b16 %v971
        %v1004 = vunpack.c.l.b16 %v972
        %v1005 = vpack.c.b16 %v990, %v989
        %v1006 = vpack.c.b16 %v992, %v991
        %v1007 = vpack.c.b16 %v994, %v993
        %v1008 = vpack.c.b16 %v996, %v995
        %v1009 = vpack.c.b16 %v998, %v997
        %v1010 = vpack.c.b16 %v1000, %v999
        %v1011 = vpack.c.b16 %v1002, %v1001
        %v1012 = vpack.c.b16 %v1004, %v1003
        %1021 = vmatprep.subr.bf16.mxu0 0
        %1022 = vmatpush1.bf16.msra.mxu0 %v835
        %1023 = vmatprep.subr.bf16.mxu0 0
        %1024 = vmatpush1.bf16.msra.mxu0 %v834
        %1025 = vmatprep.subr.bf16.mxu0 0
        %1026 = vmatpush1.bf16.msra.mxu0 %v833
        %1027 = vmatprep.subr.bf16.mxu0 0
        %1028 = vmatpush1.bf16.msra.mxu0 %v832
        %1029 = vmatprep.subr.bf16.mxu0 0
        %1030 = vmatpush1.bf16.msra.mxu0 %v831
        %1031 = vmatprep.subr.bf16.mxu0 0
        %1032 = vmatpush1.bf16.msra.mxu0 %v830
        %1033 = vmatprep.subr.bf16.mxu0 0
        %1034 = vmatpush1.bf16.msra.mxu0 %v829
        %1035 = vmatprep.subr.bf16.mxu0 0
        %1036 = vmatpush1.bf16.msra.mxu0 %v828
        %1037 = vmatprep.subr.bf16.mxu0 0
        %1038 = vmatpush2.bf16.msra.mxu0 0
        %1039 = vmatprep.subr.bf16.mxu0 0
        %1040 = vmatpush2.bf16.msra.mxu0 0
        %1041 = vmatprep.subr.bf16.mxu0 0
        %1042 = vmatpush2.bf16.msra.mxu0 0
        %1043 = vmatprep.subr.bf16.mxu0 0
        %1044 = vmatpush2.bf16.msra.mxu0 0
        %1045 = vmatprep.subr.bf16.mxu0 0
        %1046 = vmatpush2.bf16.msra.mxu0 0
        %1047 = vmatprep.subr.bf16.mxu0 0
        %1048 = vmatpush2.bf16.msra.mxu0 0
        %1049 = vmatprep.subr.bf16.mxu0 0
        %1050 = vmatpush2.bf16.msra.mxu0 0
        %1051 = vmatprep.subr.bf16.mxu0 0
        %1052 = vmatpush2.bf16.msra.mxu0 0
        %1053 = vmatprep.mubr.bf16.mxu0 0
        %1054 = vmatmul.mubr.bf16.gmra.mxu0 %v1005
        %v1055 = vpop.f32.mrf.mxu0
        %v1056 = vadd.f32 0.0, %v1055
        %v1057 = vpop.f32.mrf.mxu0
        %v1058 = vpop.f32.mrf.mxu0
        %v1059 = vadd.f32 0.0, %v1058
        %v1060 = vpop.f32.mrf.mxu0
        %1061 = vmatprep.mubr.bf16.mxu0 0
        %1062 = vmatmul.mubr.bf16.gmra.mxu0 %v1006
        %v1063 = vpop.f32.mrf.mxu0
        %v1064 = vadd.f32 0.0, %v1063
        %v1065 = vpop.f32.mrf.mxu0
        %v1066 = vpop.f32.mrf.mxu0
        %v1067 = vadd.f32 0.0, %v1066
        %v1068 = vpop.f32.mrf.mxu0
        %1069 = vmatprep.mubr.bf16.mxu0 0
        %1070 = vmatmul.mubr.bf16.gmra.mxu0 %v1007
        %v1071 = vpop.f32.mrf.mxu0
        %v1072 = vadd.f32 0.0, %v1071
        %v1073 = vpop.f32.mrf.mxu0
        %v1074 = vpop.f32.mrf.mxu0
        %v1075 = vadd.f32 0.0, %v1074
        %v1076 = vpop.f32.mrf.mxu0
        %1077 = vmatprep.mubr.bf16.mxu0 0
        %1078 = vmatmul.mubr.bf16.gmra.mxu0 %v1008
        %v1079 = vpop.f32.mrf.mxu0
        %v1080 = vadd.f32 0.0, %v1079
        %v1081 = vpop.f32.mrf.mxu0
        %v1082 = vpop.f32.mrf.mxu0
        %v1083 = vadd.f32 0.0, %v1082
        %v1084 = vpop.f32.mrf.mxu0
        %1085 = vmatprep.mubr.bf16.mxu0 0
        %1086 = vmatmul.mubr.bf16.gmra.mxu0 %v1009
        %v1087 = vpop.f32.mrf.mxu0
        %v1088 = vadd.f32 0.0, %v1087
        %v1089 = vpop.f32.mrf.mxu0
        %v1090 = vpop.f32.mrf.mxu0
        %v1091 = vadd.f32 0.0, %v1090
        %v1092 = vpop.f32.mrf.mxu0
        %1093 = vmatprep.mubr.bf16.mxu0 0
        %1094 = vmatmul.mubr.bf16.gmra.mxu0 %v1010
        %v1095 = vpop.f32.mrf.mxu0
        %v1096 = vadd.f32 0.0, %v1095
        %v1097 = vpop.f32.mrf.mxu0
        %v1098 = vpop.f32.mrf.mxu0
        %v1099 = vadd.f32 0.0, %v1098
        %v1100 = vpop.f32.mrf.mxu0
        %1101 = vmatprep.mubr.bf16.mxu0 0
        %1102 = vmatmul.mubr.bf16.gmra.mxu0 %v1011
        %v1103 = vpop.f32.mrf.mxu0
        %v1104 = vadd.f32 0.0, %v1103
        %v1105 = vpop.f32.mrf.mxu0
        %v1106 = vpop.f32.mrf.mxu0
        %v1107 = vadd.f32 0.0, %v1106
        %v1108 = vpop.f32.mrf.mxu0
        %1109 = vmatprep.mubr.bf16.mxu0 0
        %1110 = vmatmul.mubr.bf16.gmra.mxu0 %v1012
        %v1111 = vpop.f32.mrf.mxu0
        %v1112 = vadd.f32 0.0, %v1111
        %v1113 = vpop.f32.mrf.mxu0
        %v1114 = vpop.f32.mrf.mxu0
        %v1115 = vadd.f32 0.0, %v1114
        %v1116 = vpop.f32.mrf.mxu0
        %1117 = vdwg.mxu0
        %1118 = vst [vmem:[#allocation4] sm:$0xff] %v1056
        %1119 = vst [vmem:[#allocation4 + $0x8] sm:$0xff] %v1059
        %1120 = vst [vmem:[#allocation4 + $0x10] sm:$0xff] %v1064
        %1121 = vst [vmem:[#allocation4 + $0x18] sm:$0xff] %v1067
        %1122 = vst [vmem:[#allocation4 + $0x20] sm:$0xff] %v1072
        %1123 = vst [vmem:[#allocation4 + $0x28] sm:$0xff] %v1075
        %1124 = vst [vmem:[#allocation4 + $0x30] sm:$0xff] %v1080
        %1125 = vst [vmem:[#allocation4 + $0x38] sm:$0xff] %v1083
        %1126 = vst [vmem:[#allocation4 + $0x40] sm:$0xff] %v1088
        %1127 = vst [vmem:[#allocation4 + $0x48] sm:$0xff] %v1091
        %1128 = vst [vmem:[#allocation4 + $0x50] sm:$0xff] %v1096
        %1129 = vst [vmem:[#allocation4 + $0x58] sm:$0xff] %v1099
        %1130 = vst [vmem:[#allocation4 + $0x60] sm:$0xff] %v1104
        %1131 = vst [vmem:[#allocation4 + $0x68] sm:$0xff] %v1107
        %1132 = vst [vmem:[#allocation4 + $0x70] sm:$0xff] %v1112
        %1133 = vst [vmem:[#allocation4 + $0x78] sm:$0xff] %v1115
        %v1134 = vld [vmem:[%s524] sm:$0xff]
        %v1135 = vld [vmem:[#allocation2] sm:$0xff]
        %v1136 = vpack.c.bf16 %v1135, %v1135
        %v1137 = vld [vmem:[#allocation3] sm:$0xff]
        %v1138 = vpack.c.bf16 %v1137, %v1137
        %v1139 = vld [vmem:[#allocation4] sm:$0xff]
        %v1140 = vpack.c.bf16 %v1139, %v1139
        %vm1141 = vcmask 64512
        %v1143 = vsel %vm1141, %v1136, 0
        %vm1145 = vcmask 1043456
        %v1147 = vsel %vm1145, %v1138, 0
        %1149 = vmatprep.subr.bf16.mxu0 0
        %1150 = vmatpush1.bf16.msra.mxu0 0
        %1151 = vmatprep.subr.bf16.mxu0 0
        %1152 = vmatpush1.bf16.msra.mxu0 0
        %1153 = vmatprep.subr.bf16.mxu0 0
        %1154 = vmatpush1.bf16.msra.mxu0 0
        %1155 = vmatprep.subr.bf16.mxu0 0
        %1156 = vmatpush1.bf16.msra.mxu0 0
        %1157 = vmatprep.subr.bf16.mxu0 0
        %1158 = vmatpush1.bf16.msra.mxu0 0
        %1159 = vmatprep.subr.bf16.mxu0 0
        %1160 = vmatpush1.bf16.msra.mxu0 0
        %1161 = vmatprep.subr.bf16.mxu0 0
        %1162 = vmatpush1.bf16.msra.mxu0 0
        %1163 = vmatprep.subr.bf16.mxu0 0
        %1164 = vmatpush1.bf16.msra.mxu0 %v1147
        %1165 = vmatprep.subr.bf16.mxu0 0
        %1166 = vmatpush2.bf16.msra.mxu0 0
        %1167 = vmatprep.subr.bf16.mxu0 0
        %1168 = vmatpush2.bf16.msra.mxu0 0
        %1169 = vmatprep.subr.bf16.mxu0 0
        %1170 = vmatpush2.bf16.msra.mxu0 0
        %1171 = vmatprep.subr.bf16.mxu0 0
        %1172 = vmatpush2.bf16.msra.mxu0 0
        %1173 = vmatprep.subr.bf16.mxu0 0
        %1174 = vmatpush2.bf16.msra.mxu0 0
        %1175 = vmatprep.subr.bf16.mxu0 0
        %1176 = vmatpush2.bf16.msra.mxu0 0
        %1177 = vmatprep.subr.bf16.mxu0 0
        %1178 = vmatpush2.bf16.msra.mxu0 0
        %1179 = vmatprep.subr.bf16.mxu0 0
        %1180 = vmatpush2.bf16.msra.mxu0 0
        %1181 = vmatprep.mubr.bf16.mxu0 0
        %1182 = vmatmul.mubr.bf16.gmra.mxu0 %v1143
        %v1183 = vpop.f32.mrf.mxu0
        %v1184 = vadd.f32 0.0, %v1183
        %v1185 = vpop.f32.mrf.mxu0
        %v1186 = vpop.f32.mrf.mxu0
        %v1187 = vpop.f32.mrf.mxu0
        %1188 = vdwg.mxu0
        %s1189 = sld [smem:[#allocation21]]
        %s1190 = sld [smem:[#allocation21 + $0x8]]
        %s1191 = sld [smem:[#allocation21 + $0x40]]
        %s1192 = sld [smem:[#allocation21 + $0x60]]
        %v1193 = vstv %s1189
        %v1194 = vmul.f32 %v1184, %v1193
        %v1195 = vstv %s1190
        %v1196 = vmul.f32 %v1134, %v1195
        %v1197 = vadd.f32 %v1194, %v1196
        %v1198 = vstv %s1191
        %v1199 = vadd.f32 %v1197, %v1198
        %v1200 = vmax.f32 %v1199, 0.0
        %v1201 = vstv %s1192
        %v1202 = vmul.f32 %v1200, %v1201
        %v1203 = vadd.f32 %v1202, 0.0
        %s1204 = sld [smem:[#allocation21 + $0x1]]
        %s1205 = sld [smem:[#allocation21 + $0x9]]
        %s1206 = sld [smem:[#allocation21 + $0x41]]
        %s1207 = sld [smem:[#allocation21 + $0x61]]
        %v1208 = vstv %s1204
        %v1209 = vmul.f32 %v1184, %v1208
        %v1210 = vstv %s1205
        %v1211 = vmul.f32 %v1134, %v1210
        %v1212 = vadd.f32 %v1209, %v1211
        %v1213 = vstv %s1206
        %v1214 = vadd.f32 %v1212, %v1213
        %v1215 = vmax.f32 %v1214, 0.0
        %v1216 = vstv %s1207
        %v1217 = vmul.f32 %v1215, %v1216
        %v1218 = vadd.f32 %v1217, 0.0
        %s1219 = sld [smem:[#allocation21 + $0x2]]
        %s1220 = sld [smem:[#allocation21 + $0xa]]
        %s1221 = sld [smem:[#allocation21 + $0x42]]
        %s1222 = sld [smem:[#allocation21 + $0x62]]
        %v1223 = vstv %s1219
        %v1224 = vmul.f32 %v1184, %v1223
        %v1225 = vstv %s1220
        %v1226 = vmul.f32 %v1134, %v1225
        %v1227 = vadd.f32 %v1224, %v1226
        %v1228 = vstv %s1221
        %v1229 = vadd.f32 %v1227, %v1228
        %v1230 = vmax.f32 %v1229, 0.0
        %v1231 = vstv %s1222
        %v1232 = vmul.f32 %v1230, %v1231
        %v1233 = vadd.f32 %v1203, %v1232
        %s1234 = sld [smem:[#allocation21 + $0x3]]
        %s1235 = sld [smem:[#allocation21 + $0xb]]
        %s1236 = sld [smem:[#allocation21 + $0x43]]
        %s1237 = sld [smem:[#allocation21 + $0x63]]
        %v1238 = vstv %s1234
        %v1239 = vmul.f32 %v1184, %v1238
        %v1240 = vstv %s1235
        %v1241 = vmul.f32 %v1134, %v1240
        %v1242 = vadd.f32 %v1239, %v1241
        %v1243 = vstv %s1236
        %v1244 = vadd.f32 %v1242, %v1243
        %v1245 = vmax.f32 %v1244, 0.0
        %v1246 = vstv %s1237
        %v1247 = vmul.f32 %v1245, %v1246
        %v1248 = vadd.f32 %v1218, %v1247
        %s1249 = sld [smem:[#allocation21 + $0x4]]
        %s1250 = sld [smem:[#allocation21 + $0xc]]
        %s1251 = sld [smem:[#allocation21 + $0x44]]
        %s1252 = sld [smem:[#allocation21 + $0x64]]
        %v1253 = vstv %s1249
        %v1254 = vmul.f32 %v1184, %v1253
        %v1255 = vstv %s1250
        %v1256 = vmul.f32 %v1134, %v1255
        %v1257 = vadd.f32 %v1254, %v1256
        %v1258 = vstv %s1251
        %v1259 = vadd.f32 %v1257, %v1258
        %v1260 = vmax.f32 %v1259, 0.0
        %v1261 = vstv %s1252
        %v1262 = vmul.f32 %v1260, %v1261
        %v1263 = vadd.f32 %v1233, %v1262
        %s1264 = sld [smem:[#allocation21 + $0x5]]
        %s1265 = sld [smem:[#allocation21 + $0xd]]
        %s1266 = sld [smem:[#allocation21 + $0x45]]
        %s1267 = sld [smem:[#allocation21 + $0x65]]
        %v1268 = vstv %s1264
        %v1269 = vmul.f32 %v1184, %v1268
        %v1270 = vstv %s1265
        %v1271 = vmul.f32 %v1134, %v1270
        %v1272 = vadd.f32 %v1269, %v1271
        %v1273 = vstv %s1266
        %v1274 = vadd.f32 %v1272, %v1273
        %v1275 = vmax.f32 %v1274, 0.0
        %v1276 = vstv %s1267
        %v1277 = vmul.f32 %v1275, %v1276
        %v1278 = vadd.f32 %v1248, %v1277
        %s1279 = sld [smem:[#allocation21 + $0x6]]
        %s1280 = sld [smem:[#allocation21 + $0xe]]
        %s1281 = sld [smem:[#allocation21 + $0x46]]
        %s1282 = sld [smem:[#allocation21 + $0x66]]
        %v1283 = vstv %s1279
        %v1284 = vmul.f32 %v1184, %v1283
        %v1285 = vstv %s1280
        %v1286 = vmul.f32 %v1134, %v1285
        %v1287 = vadd.f32 %v1284, %v1286
        %v1288 = vstv %s1281
        %v1289 = vadd.f32 %v1287, %v1288
        %v1290 = vmax.f32 %v1289, 0.0
        %v1291 = vstv %s1282
        %v1292 = vmul.f32 %v1290, %v1291
        %v1293 = vadd.f32 %v1263, %v1292
        %s1294 = sld [smem:[#allocation21 + $0x7]]
        %s1295 = sld [smem:[#allocation21 + $0xf]]
        %s1296 = sld [smem:[#allocation21 + $0x47]]
        %s1297 = sld [smem:[#allocation21 + $0x67]]
        %v1298 = vstv %s1294
        %v1299 = vmul.f32 %v1184, %v1298
        %v1300 = vstv %s1295
        %v1301 = vmul.f32 %v1134, %v1300
        %v1302 = vadd.f32 %v1299, %v1301
        %v1303 = vstv %s1296
        %v1304 = vadd.f32 %v1302, %v1303
        %v1305 = vmax.f32 %v1304, 0.0
        %v1306 = vstv %s1297
        %v1307 = vmul.f32 %v1305, %v1306
        %v1308 = vadd.f32 %v1278, %v1307
        %v1309 = vadd.f32 %v1293, %v1308
        %s1310 = sld [smem:[#allocation21 + $0x80]]
        %v1311 = vstv %s1310
        %v1312 = vadd.f32 %v1309, %v1311
        %v1313 = vsel %vm609, %v1312, -1e+30
        %1314 = vmax.xlane.f32.xlu0 %v1313
        %v1315 = vpop.xlane.xlu0 %1314
        %v1316 = vsub.f32 %v1313, %v1315
        %v1317 = vmul.f32 %v1316, 1.442695
        %v1318 = vpow.pop %v1317
        %1319 = vadd.xlane.f32.xlu0 %v1318
        %v1320 = vpop.xlane.xlu0 %1319
        %v1321 = vrcp.pop %v1320
        %v1322 = vmul.f32 %v1318, %v1321
        %v1323 = vpack.c.bf16 %v1322, %v1322
        %1324 = vmatprep.subr.bf16.mxu0 0
        %1325 = vmatpush1.bf16.xpose.msra.mxu0 0
        %1326 = vmatprep.subr.bf16.mxu0 0
        %1327 = vmatpush1.bf16.xpose.msra.mxu0 0
        %1328 = vmatprep.subr.bf16.mxu0 0
        %1329 = vmatpush1.bf16.xpose.msra.mxu0 0
        %1330 = vmatprep.subr.bf16.mxu0 0
        %1331 = vmatpush1.bf16.xpose.msra.mxu0 0
        %1332 = vmatprep.subr.bf16.mxu0 0
        %1333 = vmatpush1.bf16.xpose.msra.mxu0 0
        %1334 = vmatprep.subr.bf16.mxu0 0
        %1335 = vmatpush1.bf16.xpose.msra.mxu0 0
        %1336 = vmatprep.subr.bf16.mxu0 0
        %1337 = vmatpush1.bf16.xpose.msra.mxu0 0
        %1338 = vmatprep.subr.bf16.mxu0 0
        %1339 = vmatpush1.bf16.xpose.msra.mxu0 %v1140
        %1340 = vmatprep.subr.bf16.mxu0 0
        %1341 = vmatpush2.bf16.xpose.msra.mxu0 0
        %1342 = vmatprep.subr.bf16.mxu0 0
        %1343 = vmatpush2.bf16.xpose.msra.mxu0 0
        %1344 = vmatprep.subr.bf16.mxu0 0
        %1345 = vmatpush2.bf16.xpose.msra.mxu0 0
        %1346 = vmatprep.subr.bf16.mxu0 0
        %1347 = vmatpush2.bf16.xpose.msra.mxu0 0
        %1348 = vmatprep.subr.bf16.mxu0 0
        %1349 = vmatpush2.bf16.xpose.msra.mxu0 0
        %1350 = vmatprep.subr.bf16.mxu0 0
        %1351 = vmatpush2.bf16.xpose.msra.mxu0 0
        %1352 = vmatprep.subr.bf16.mxu0 0
        %1353 = vmatpush2.bf16.xpose.msra.mxu0 0
        %1354 = vmatprep.subr.bf16.mxu0 0
        %1355 = vmatpush2.bf16.xpose.msra.mxu0 0
        %1356 = vmatprep.mubr.bf16.mxu0 0
        %1357 = vmatmul.mubr.bf16.gmra.mxu0 %v1323
        %v1358 = vpop.f32.mrf.mxu0
        %v1359 = vadd.f32 0.0, %v1358
        %v1360 = vpop.f32.mrf.mxu0
        %v1361 = vpop.f32.mrf.mxu0
        %v1362 = vpop.f32.mrf.mxu0
        %1363 = vdwg.mxu0
        %v1364 = vld [vmem:[#allocation3 + $0x8] sm:$0xff]
        %v1365 = vpack.c.bf16 %v1364, %v1364
        %v1366 = vld [vmem:[#allocation4 + $0x8] sm:$0xff]
        %v1367 = vpack.c.bf16 %v1366, %v1366
        %1369 = vrot.lane.b32.xlu0 %v1136, 120
        %v1370 = vpop.permute.xlu0 %1369
        %v1372 = vsel %vm1141, %v1370, 0
        %v1375 = vsel %vm1145, %v1365, 0
        %1377 = vmatprep.subr.bf16.mxu0 0
        %1378 = vmatpush1.bf16.msra.mxu0 0
        %1379 = vmatprep.subr.bf16.mxu0 0
        %1380 = vmatpush1.bf16.msra.mxu0 0
        %1381 = vmatprep.subr.bf16.mxu0 0
        %1382 = vmatpush1.bf16.msra.mxu0 0
        %1383 = vmatprep.subr.bf16.mxu0 0
        %1384 = vmatpush1.bf16.msra.mxu0 0
        %1385 = vmatprep.subr.bf16.mxu0 0
        %1386 = vmatpush1.bf16.msra.mxu0 0
        %1387 = vmatprep.subr.bf16.mxu0 0
        %1388 = vmatpush1.bf16.msra.mxu0 0
        %1389 = vmatprep.subr.bf16.mxu0 0
        %1390 = vmatpush1.bf16.msra.mxu0 0
        %1391 = vmatprep.subr.bf16.mxu0 0
        %1392 = vmatpush1.bf16.msra.mxu0 %v1375
        %1393 = vmatprep.subr.bf16.mxu0 0
        %1394 = vmatpush2.bf16.msra.mxu0 0
        %1395 = vmatprep.subr.bf16.mxu0 0
        %1396 = vmatpush2.bf16.msra.mxu0 0
        %1397 = vmatprep.subr.bf16.mxu0 0
        %1398 = vmatpush2.bf16.msra.mxu0 0
        %1399 = vmatprep.subr.bf16.mxu0 0
        %1400 = vmatpush2.bf16.msra.mxu0 0
        %1401 = vmatprep.subr.bf16.mxu0 0
        %1402 = vmatpush2.bf16.msra.mxu0 0
        %1403 = vmatprep.subr.bf16.mxu0 0
        %1404 = vmatpush2.bf16.msra.mxu0 0
        %1405 = vmatprep.subr.bf16.mxu0 0
        %1406 = vmatpush2.bf16.msra.mxu0 0
        %1407 = vmatprep.subr.bf16.mxu0 0
        %1408 = vmatpush2.bf16.msra.mxu0 0
        %1409 = vmatprep.mubr.bf16.mxu0 0
        %1410 = vmatmul.mubr.bf16.gmra.mxu0 %v1372
        %v1411 = vpop.f32.mrf.mxu0
        %v1412 = vadd.f32 0.0, %v1411
        %v1413 = vpop.f32.mrf.mxu0
        %v1414 = vpop.f32.mrf.mxu0
        %v1415 = vpop.f32.mrf.mxu0
        %1416 = vdwg.mxu0
        %s1417 = sld [smem:[#allocation21 + $0x10]]
        %s1418 = sld [smem:[#allocation21 + $0x18]]
        %s1419 = sld [smem:[#allocation21 + $0x48]]
        %s1420 = sld [smem:[#allocation21 + $0x68]]
        %v1421 = vstv %s1417
        %v1422 = vmul.f32 %v1412, %v1421
        %v1423 = vstv %s1418
        %v1424 = vmul.f32 %v1134, %v1423
        %v1425 = vadd.f32 %v1422, %v1424
        %v1426 = vstv %s1419
        %v1427 = vadd.f32 %v1425, %v1426
        %v1428 = vmax.f32 %v1427, 0.0
        %v1429 = vstv %s1420
        %v1430 = vmul.f32 %v1428, %v1429
        %v1431 = vadd.f32 %v1430, 0.0
        %s1432 = sld [smem:[#allocation21 + $0x11]]
        %s1433 = sld [smem:[#allocation21 + $0x19]]
        %s1434 = sld [smem:[#allocation21 + $0x49]]
        %s1435 = sld [smem:[#allocation21 + $0x69]]
        %v1436 = vstv %s1432
        %v1437 = vmul.f32 %v1412, %v1436
        %v1438 = vstv %s1433
        %v1439 = vmul.f32 %v1134, %v1438
        %v1440 = vadd.f32 %v1437, %v1439
        %v1441 = vstv %s1434
        %v1442 = vadd.f32 %v1440, %v1441
        %v1443 = vmax.f32 %v1442, 0.0
        %v1444 = vstv %s1435
        %v1445 = vmul.f32 %v1443, %v1444
        %v1446 = vadd.f32 %v1445, 0.0
        %s1447 = sld [smem:[#allocation21 + $0x12]]
        %s1448 = sld [smem:[#allocation21 + $0x1a]]
        %s1449 = sld [smem:[#allocation21 + $0x4a]]
        %s1450 = sld [smem:[#allocation21 + $0x6a]]
        %v1451 = vstv %s1447
        %v1452 = vmul.f32 %v1412, %v1451
        %v1453 = vstv %s1448
        %v1454 = vmul.f32 %v1134, %v1453
        %v1455 = vadd.f32 %v1452, %v1454
        %v1456 = vstv %s1449
        %v1457 = vadd.f32 %v1455, %v1456
        %v1458 = vmax.f32 %v1457, 0.0
        %v1459 = vstv %s1450
        %v1460 = vmul.f32 %v1458, %v1459
        %v1461 = vadd.f32 %v1431, %v1460
        %s1462 = sld [smem:[#allocation21 + $0x13]]
        %s1463 = sld [smem:[#allocation21 + $0x1b]]
        %s1464 = sld [smem:[#allocation21 + $0x4b]]
        %s1465 = sld [smem:[#allocation21 + $0x6b]]
        %v1466 = vstv %s1462
        %v1467 = vmul.f32 %v1412, %v1466
        %v1468 = vstv %s1463
        %v1469 = vmul.f32 %v1134, %v1468
        %v1470 = vadd.f32 %v1467, %v1469
        %v1471 = vstv %s1464
        %v1472 = vadd.f32 %v1470, %v1471
        %v1473 = vmax.f32 %v1472, 0.0
        %v1474 = vstv %s1465
        %v1475 = vmul.f32 %v1473, %v1474
        %v1476 = vadd.f32 %v1446, %v1475
        %s1477 = sld [smem:[#allocation21 + $0x14]]
        %s1478 = sld [smem:[#allocation21 + $0x1c]]
        %s1479 = sld [smem:[#allocation21 + $0x4c]]
        %s1480 = sld [smem:[#allocation21 + $0x6c]]
        %v1481 = vstv %s1477
        %v1482 = vmul.f32 %v1412, %v1481
        %v1483 = vstv %s1478
        %v1484 = vmul.f32 %v1134, %v1483
        %v1485 = vadd.f32 %v1482, %v1484
        %v1486 = vstv %s1479
        %v1487 = vadd.f32 %v1485, %v1486
        %v1488 = vmax.f32 %v1487, 0.0
        %v1489 = vstv %s1480
        %v1490 = vmul.f32 %v1488, %v1489
        %v1491 = vadd.f32 %v1461, %v1490
        %s1492 = sld [smem:[#allocation21 + $0x15]]
        %s1493 = sld [smem:[#allocation21 + $0x1d]]
        %s1494 = sld [smem:[#allocation21 + $0x4d]]
        %s1495 = sld [smem:[#allocation21 + $0x6d]]
        %v1496 = vstv %s1492
        %v1497 = vmul.f32 %v1412, %v1496
        %v1498 = vstv %s1493
        %v1499 = vmul.f32 %v1134, %v1498
        %v1500 = vadd.f32 %v1497, %v1499
        %v1501 = vstv %s1494
        %v1502 = vadd.f32 %v1500, %v1501
        %v1503 = vmax.f32 %v1502, 0.0
        %v1504 = vstv %s1495
        %v1505 = vmul.f32 %v1503, %v1504
        %v1506 = vadd.f32 %v1476, %v1505
        %s1507 = sld [smem:[#allocation21 + $0x16]]
        %s1508 = sld [smem:[#allocation21 + $0x1e]]
        %s1509 = sld [smem:[#allocation21 + $0x4e]]
        %s1510 = sld [smem:[#allocation21 + $0x6e]]
        %v1511 = vstv %s1507
        %v1512 = vmul.f32 %v1412, %v1511
        %v1513 = vstv %s1508
        %v1514 = vmul.f32 %v1134, %v1513
        %v1515 = vadd.f32 %v1512, %v1514
        %v1516 = vstv %s1509
        %v1517 = vadd.f32 %v1515, %v1516
        %v1518 = vmax.f32 %v1517, 0.0
        %v1519 = vstv %s1510
        %v1520 = vmul.f32 %v1518, %v1519
        %v1521 = vadd.f32 %v1491, %v1520
        %s1522 = sld [smem:[#allocation21 + $0x17]]
        %s1523 = sld [smem:[#allocation21 + $0x1f]]
        %s1524 = sld [smem:[#allocation21 + $0x4f]]
        %s1525 = sld [smem:[#allocation21 + $0x6f]]
        %v1526 = vstv %s1522
        %v1527 = vmul.f32 %v1412, %v1526
        %v1528 = vstv %s1523
        %v1529 = vmul.f32 %v1134, %v1528
        %v1530 = vadd.f32 %v1527, %v1529
        %v1531 = vstv %s1524
        %v1532 = vadd.f32 %v1530, %v1531
        %v1533 = vmax.f32 %v1532, 0.0
        %v1534 = vstv %s1525
        %v1535 = vmul.f32 %v1533, %v1534
        %v1536 = vadd.f32 %v1506, %v1535
        %v1537 = vadd.f32 %v1521, %v1536
        %s1538 = sld [smem:[#allocation21 + $0x81]]
        %v1539 = vstv %s1538
        %v1540 = vadd.f32 %v1537, %v1539
        %v1541 = vsel %vm609, %v1540, -1e+30
        %1542 = vmax.xlane.f32.xlu0 %v1541
        %v1543 = vpop.xlane.xlu0 %1542
        %v1544 = vsub.f32 %v1541, %v1543
        %v1545 = vmul.f32 %v1544, 1.442695
        %v1546 = vpow.pop %v1545
        %1547 = vadd.xlane.f32.xlu0 %v1546
        %v1548 = vpop.xlane.xlu0 %1547
        %v1549 = vrcp.pop %v1548
        %v1550 = vmul.f32 %v1546, %v1549
        %v1551 = vpack.c.bf16 %v1550, %v1550
        %1552 = vmatprep.subr.bf16.mxu0 0
        %1553 = vmatpush1.bf16.xpose.msra.mxu0 0
        %1554 = vmatprep.subr.bf16.mxu0 0
        %1555 = vmatpush1.bf16.xpose.msra.mxu0 0
        %1556 = vmatprep.subr.bf16.mxu0 0
        %1557 = vmatpush1.bf16.xpose.msra.mxu0 0
        %1558 = vmatprep.subr.bf16.mxu0 0
        %1559 = vmatpush1.bf16.xpose.msra.mxu0 0
        %1560 = vmatprep.subr.bf16.mxu0 0
        %1561 = vmatpush1.bf16.xpose.msra.mxu0 0
        %1562 = vmatprep.subr.bf16.mxu0 0
        %1563 = vmatpush1.bf16.xpose.msra.mxu0 0
        %1564 = vmatprep.subr.bf16.mxu0 0
        %1565 = vmatpush1.bf16.xpose.msra.mxu0 0
        %1566 = vmatprep.subr.bf16.mxu0 0
        %1567 = vmatpush1.bf16.xpose.msra.mxu0 %v1367
        %1568 = vmatprep.subr.bf16.mxu0 0
        %1569 = vmatpush2.bf16.xpose.msra.mxu0 0
        %1570 = vmatprep.subr.bf16.mxu0 0
        %1571 = vmatpush2.bf16.xpose.msra.mxu0 0
        %1572 = vmatprep.subr.bf16.mxu0 0
        %1573 = vmatpush2.bf16.xpose.msra.mxu0 0
        %1574 = vmatprep.subr.bf16.mxu0 0
        %1575 = vmatpush2.bf16.xpose.msra.mxu0 0
        %1576 = vmatprep.subr.bf16.mxu0 0
        %1577 = vmatpush2.bf16.xpose.msra.mxu0 0
        %1578 = vmatprep.subr.bf16.mxu0 0
        %1579 = vmatpush2.bf16.xpose.msra.mxu0 0
        %1580 = vmatprep.subr.bf16.mxu0 0
        %1581 = vmatpush2.bf16.xpose.msra.mxu0 0
        %1582 = vmatprep.subr.bf16.mxu0 0
        %1583 = vmatpush2.bf16.xpose.msra.mxu0 0
        %1584 = vmatprep.mubr.bf16.mxu0 0
        %1585 = vmatmul.mubr.bf16.gmra.mxu0 %v1551
        %v1586 = vpop.f32.mrf.mxu0
        %v1587 = vadd.f32 0.0, %v1586
        %v1588 = vpop.f32.mrf.mxu0
        %v1589 = vpop.f32.mrf.mxu0
        %v1590 = vpop.f32.mrf.mxu0
        %1591 = vdwg.mxu0
        %v1592 = vld [vmem:[#allocation3 + $0x10] sm:$0xff]
        %v1593 = vpack.c.bf16 %v1592, %v1592
        %v1594 = vld [vmem:[#allocation4 + $0x10] sm:$0xff]
        %v1595 = vpack.c.bf16 %v1594, %v1594
        %1596 = vrot.lane.b32.xlu0 %v1136, 112
        %v1597 = vpop.permute.xlu0 %1596
        %v1599 = vsel %vm1141, %v1597, 0
        %v1602 = vsel %vm1145, %v1593, 0
        %1604 = vmatprep.subr.bf16.mxu0 0
        %1605 = vmatpush1.bf16.msra.mxu0 0
        %1606 = vmatprep.subr.bf16.mxu0 0
        %1607 = vmatpush1.bf16.msra.mxu0 0
        %1608 = vmatprep.subr.bf16.mxu0 0
        %1609 = vmatpush1.bf16.msra.mxu0 0
        %1610 = vmatprep.subr.bf16.mxu0 0
        %1611 = vmatpush1.bf16.msra.mxu0 0
        %1612 = vmatprep.subr.bf16.mxu0 0
        %1613 = vmatpush1.bf16.msra.mxu0 0
        %1614 = vmatprep.subr.bf16.mxu0 0
        %1615 = vmatpush1.bf16.msra.mxu0 0
        %1616 = vmatprep.subr.bf16.mxu0 0
        %1617 = vmatpush1.bf16.msra.mxu0 0
        %1618 = vmatprep.subr.bf16.mxu0 0
        %1619 = vmatpush1.bf16.msra.mxu0 %v1602
        %1620 = vmatprep.subr.bf16.mxu0 0
        %1621 = vmatpush2.bf16.msra.mxu0 0
        %1622 = vmatprep.subr.bf16.mxu0 0
        %1623 = vmatpush2.bf16.msra.mxu0 0
        %1624 = vmatprep.subr.bf16.mxu0 0
        %1625 = vmatpush2.bf16.msra.mxu0 0
        %1626 = vmatprep.subr.bf16.mxu0 0
        %1627 = vmatpush2.bf16.msra.mxu0 0
        %1628 = vmatprep.subr.bf16.mxu0 0
        %1629 = vmatpush2.bf16.msra.mxu0 0
        %1630 = vmatprep.subr.bf16.mxu0 0
        %1631 = vmatpush2.bf16.msra.mxu0 0
        %1632 = vmatprep.subr.bf16.mxu0 0
        %1633 = vmatpush2.bf16.msra.mxu0 0
        %1634 = vmatprep.subr.bf16.mxu0 0
        %1635 = vmatpush2.bf16.msra.mxu0 0
        %1636 = vmatprep.mubr.bf16.mxu0 0
        %1637 = vmatmul.mubr.bf16.gmra.mxu0 %v1599
        %v1638 = vpop.f32.mrf.mxu0
        %v1639 = vadd.f32 0.0, %v1638
        %v1640 = vpop.f32.mrf.mxu0
        %v1641 = vpop.f32.mrf.mxu0
        %v1642 = vpop.f32.mrf.mxu0
        %1643 = vdwg.mxu0
        %s1644 = sld [smem:[#allocation21 + $0x20]]
        %s1645 = sld [smem:[#allocation21 + $0x28]]
        %s1646 = sld [smem:[#allocation21 + $0x50]]
        %s1647 = sld [smem:[#allocation21 + $0x70]]
        %v1648 = vstv %s1644
        %v1649 = vmul.f32 %v1639, %v1648
        %v1650 = vstv %s1645
        %v1651 = vmul.f32 %v1134, %v1650
        %v1652 = vadd.f32 %v1649, %v1651
        %v1653 = vstv %s1646
        %v1654 = vadd.f32 %v1652, %v1653
        %v1655 = vmax.f32 %v1654, 0.0
        %v1656 = vstv %s1647
        %v1657 = vmul.f32 %v1655, %v1656
        %v1658 = vadd.f32 %v1657, 0.0
        %s1659 = sld [smem:[#allocation21 + $0x21]]
        %s1660 = sld [smem:[#allocation21 + $0x29]]
        %s1661 = sld [smem:[#allocation21 + $0x51]]
        %s1662 = sld [smem:[#allocation21 + $0x71]]
        %v1663 = vstv %s1659
        %v1664 = vmul.f32 %v1639, %v1663
        %v1665 = vstv %s1660
        %v1666 = vmul.f32 %v1134, %v1665
        %v1667 = vadd.f32 %v1664, %v1666
        %v1668 = vstv %s1661
        %v1669 = vadd.f32 %v1667, %v1668
        %v1670 = vmax.f32 %v1669, 0.0
        %v1671 = vstv %s1662
        %v1672 = vmul.f32 %v1670, %v1671
        %v1673 = vadd.f32 %v1672, 0.0
        %s1674 = sld [smem:[#allocation21 + $0x22]]
        %s1675 = sld [smem:[#allocation21 + $0x2a]]
        %s1676 = sld [smem:[#allocation21 + $0x52]]
        %s1677 = sld [smem:[#allocation21 + $0x72]]
        %v1678 = vstv %s1674
        %v1679 = vmul.f32 %v1639, %v1678
        %v1680 = vstv %s1675
        %v1681 = vmul.f32 %v1134, %v1680
        %v1682 = vadd.f32 %v1679, %v1681
        %v1683 = vstv %s1676
        %v1684 = vadd.f32 %v1682, %v1683
        %v1685 = vmax.f32 %v1684, 0.0
        %v1686 = vstv %s1677
        %v1687 = vmul.f32 %v1685, %v1686
        %v1688 = vadd.f32 %v1658, %v1687
        %s1689 = sld [smem:[#allocation21 + $0x23]]
        %s1690 = sld [smem:[#allocation21 + $0x2b]]
        %s1691 = sld [smem:[#allocation21 + $0x53]]
        %s1692 = sld [smem:[#allocation21 + $0x73]]
        %v1693 = vstv %s1689
        %v1694 = vmul.f32 %v1639, %v1693
        %v1695 = vstv %s1690
        %v1696 = vmul.f32 %v1134, %v1695
        %v1697 = vadd.f32 %v1694, %v1696
        %v1698 = vstv %s1691
        %v1699 = vadd.f32 %v1697, %v1698
        %v1700 = vmax.f32 %v1699, 0.0
        %v1701 = vstv %s1692
        %v1702 = vmul.f32 %v1700, %v1701
        %v1703 = vadd.f32 %v1673, %v1702
        %s1704 = sld [smem:[#allocation21 + $0x24]]
        %s1705 = sld [smem:[#allocation21 + $0x2c]]
        %s1706 = sld [smem:[#allocation21 + $0x54]]
        %s1707 = sld [smem:[#allocation21 + $0x74]]
        %v1708 = vstv %s1704
        %v1709 = vmul.f32 %v1639, %v1708
        %v1710 = vstv %s1705
        %v1711 = vmul.f32 %v1134, %v1710
        %v1712 = vadd.f32 %v1709, %v1711
        %v1713 = vstv %s1706
        %v1714 = vadd.f32 %v1712, %v1713
        %v1715 = vmax.f32 %v1714, 0.0
        %v1716 = vstv %s1707
        %v1717 = vmul.f32 %v1715, %v1716
        %v1718 = vadd.f32 %v1688, %v1717
        %s1719 = sld [smem:[#allocation21 + $0x25]]
        %s1720 = sld [smem:[#allocation21 + $0x2d]]
        %s1721 = sld [smem:[#allocation21 + $0x55]]
        %s1722 = sld [smem:[#allocation21 + $0x75]]
        %v1723 = vstv %s1719
        %v1724 = vmul.f32 %v1639, %v1723
        %v1725 = vstv %s1720
        %v1726 = vmul.f32 %v1134, %v1725
        %v1727 = vadd.f32 %v1724, %v1726
        %v1728 = vstv %s1721
        %v1729 = vadd.f32 %v1727, %v1728
        %v1730 = vmax.f32 %v1729, 0.0
        %v1731 = vstv %s1722
        %v1732 = vmul.f32 %v1730, %v1731
        %v1733 = vadd.f32 %v1703, %v1732
        %s1734 = sld [smem:[#allocation21 + $0x26]]
        %s1735 = sld [smem:[#allocation21 + $0x2e]]
        %s1736 = sld [smem:[#allocation21 + $0x56]]
        %s1737 = sld [smem:[#allocation21 + $0x76]]
        %v1738 = vstv %s1734
        %v1739 = vmul.f32 %v1639, %v1738
        %v1740 = vstv %s1735
        %v1741 = vmul.f32 %v1134, %v1740
        %v1742 = vadd.f32 %v1739, %v1741
        %v1743 = vstv %s1736
        %v1744 = vadd.f32 %v1742, %v1743
        %v1745 = vmax.f32 %v1744, 0.0
        %v1746 = vstv %s1737
        %v1747 = vmul.f32 %v1745, %v1746
        %v1748 = vadd.f32 %v1718, %v1747
        %s1749 = sld [smem:[#allocation21 + $0x27]]
        %s1750 = sld [smem:[#allocation21 + $0x2f]]
        %s1751 = sld [smem:[#allocation21 + $0x57]]
        %s1752 = sld [smem:[#allocation21 + $0x77]]
        %v1753 = vstv %s1749
        %v1754 = vmul.f32 %v1639, %v1753
        %v1755 = vstv %s1750
        %v1756 = vmul.f32 %v1134, %v1755
        %v1757 = vadd.f32 %v1754, %v1756
        %v1758 = vstv %s1751
        %v1759 = vadd.f32 %v1757, %v1758
        %v1760 = vmax.f32 %v1759, 0.0
        %v1761 = vstv %s1752
        %v1762 = vmul.f32 %v1760, %v1761
        %v1763 = vadd.f32 %v1733, %v1762
        %v1764 = vadd.f32 %v1748, %v1763
        %s1765 = sld [smem:[#allocation21 + $0x82]]
        %v1766 = vstv %s1765
        %v1767 = vadd.f32 %v1764, %v1766
        %v1768 = vsel %vm609, %v1767, -1e+30
        %1769 = vmax.xlane.f32.xlu0 %v1768
        %v1770 = vpop.xlane.xlu0 %1769
        %v1771 = vsub.f32 %v1768, %v1770
        %v1772 = vmul.f32 %v1771, 1.442695
        %v1773 = vpow.pop %v1772
        %1774 = vadd.xlane.f32.xlu0 %v1773
        %v1775 = vpop.xlane.xlu0 %1774
        %v1776 = vrcp.pop %v1775
        %v1777 = vmul.f32 %v1773, %v1776
        %v1778 = vpack.c.bf16 %v1777, %v1777
        %1779 = vmatprep.subr.bf16.mxu0 0
        %1780 = vmatpush1.bf16.xpose.msra.mxu0 0
        %1781 = vmatprep.subr.bf16.mxu0 0
        %1782 = vmatpush1.bf16.xpose.msra.mxu0 0
        %1783 = vmatprep.subr.bf16.mxu0 0
        %1784 = vmatpush1.bf16.xpose.msra.mxu0 0
        %1785 = vmatprep.subr.bf16.mxu0 0
        %1786 = vmatpush1.bf16.xpose.msra.mxu0 0
        %1787 = vmatprep.subr.bf16.mxu0 0
        %1788 = vmatpush1.bf16.xpose.msra.mxu0 0
        %1789 = vmatprep.subr.bf16.mxu0 0
        %1790 = vmatpush1.bf16.xpose.msra.mxu0 0
        %1791 = vmatprep.subr.bf16.mxu0 0
        %1792 = vmatpush1.bf16.xpose.msra.mxu0 0
        %1793 = vmatprep.subr.bf16.mxu0 0
        %1794 = vmatpush1.bf16.xpose.msra.mxu0 %v1595
        %1795 = vmatprep.subr.bf16.mxu0 0
        %1796 = vmatpush2.bf16.xpose.msra.mxu0 0
        %1797 = vmatprep.subr.bf16.mxu0 0
        %1798 = vmatpush2.bf16.xpose.msra.mxu0 0
        %1799 = vmatprep.subr.bf16.mxu0 0
        %1800 = vmatpush2.bf16.xpose.msra.mxu0 0
        %1801 = vmatprep.subr.bf16.mxu0 0
        %1802 = vmatpush2.bf16.xpose.msra.mxu0 0
        %1803 = vmatprep.subr.bf16.mxu0 0
        %1804 = vmatpush2.bf16.xpose.msra.mxu0 0
        %1805 = vmatprep.subr.bf16.mxu0 0
        %1806 = vmatpush2.bf16.xpose.msra.mxu0 0
        %1807 = vmatprep.subr.bf16.mxu0 0
        %1808 = vmatpush2.bf16.xpose.msra.mxu0 0
        %1809 = vmatprep.subr.bf16.mxu0 0
        %1810 = vmatpush2.bf16.xpose.msra.mxu0 0
        %1811 = vmatprep.mubr.bf16.mxu0 0
        %1812 = vmatmul.mubr.bf16.gmra.mxu0 %v1778
        %v1813 = vpop.f32.mrf.mxu0
        %v1814 = vadd.f32 0.0, %v1813
        %v1815 = vpop.f32.mrf.mxu0
        %v1816 = vpop.f32.mrf.mxu0
        %v1817 = vpop.f32.mrf.mxu0
        %1818 = vdwg.mxu0
        %v1819 = vld [vmem:[#allocation3 + $0x18] sm:$0xff]
        %v1820 = vpack.c.bf16 %v1819, %v1819
        %v1821 = vld [vmem:[#allocation4 + $0x18] sm:$0xff]
        %v1822 = vpack.c.bf16 %v1821, %v1821
        %1823 = vrot.lane.b32.xlu0 %v1136, 104
        %v1824 = vpop.permute.xlu0 %1823
        %v1826 = vsel %vm1141, %v1824, 0
        %v1829 = vsel %vm1145, %v1820, 0
        %1831 = vmatprep.subr.bf16.mxu0 0
        %1832 = vmatpush1.bf16.msra.mxu0 0
        %1833 = vmatprep.subr.bf16.mxu0 0
        %1834 = vmatpush1.bf16.msra.mxu0 0
        %1835 = vmatprep.subr.bf16.mxu0 0
        %1836 = vmatpush1.bf16.msra.mxu0 0
        %1837 = vmatprep.subr.bf16.mxu0 0
        %1838 = vmatpush1.bf16.msra.mxu0 0
        %1839 = vmatprep.subr.bf16.mxu0 0
        %1840 = vmatpush1.bf16.msra.mxu0 0
        %1841 = vmatprep.subr.bf16.mxu0 0
        %1842 = vmatpush1.bf16.msra.mxu0 0
        %1843 = vmatprep.subr.bf16.mxu0 0
        %1844 = vmatpush1.bf16.msra.mxu0 0
        %1845 = vmatprep.subr.bf16.mxu0 0
        %1846 = vmatpush1.bf16.msra.mxu0 %v1829
        %1847 = vmatprep.subr.bf16.mxu0 0
        %1848 = vmatpush2.bf16.msra.mxu0 0
        %1849 = vmatprep.subr.bf16.mxu0 0
        %1850 = vmatpush2.bf16.msra.mxu0 0
        %1851 = vmatprep.subr.bf16.mxu0 0
        %1852 = vmatpush2.bf16.msra.mxu0 0
        %1853 = vmatprep.subr.bf16.mxu0 0
        %1854 = vmatpush2.bf16.msra.mxu0 0
        %1855 = vmatprep.subr.bf16.mxu0 0
        %1856 = vmatpush2.bf16.msra.mxu0 0
        %1857 = vmatprep.subr.bf16.mxu0 0
        %1858 = vmatpush2.bf16.msra.mxu0 0
        %1859 = vmatprep.subr.bf16.mxu0 0
        %1860 = vmatpush2.bf16.msra.mxu0 0
        %1861 = vmatprep.subr.bf16.mxu0 0
        %1862 = vmatpush2.bf16.msra.mxu0 0
        %1863 = vmatprep.mubr.bf16.mxu0 0
        %1864 = vmatmul.mubr.bf16.gmra.mxu0 %v1826
        %v1865 = vpop.f32.mrf.mxu0
        %v1866 = vadd.f32 0.0, %v1865
        %v1867 = vpop.f32.mrf.mxu0
        %v1868 = vpop.f32.mrf.mxu0
        %v1869 = vpop.f32.mrf.mxu0
        %1870 = vdwg.mxu0
        %s1871 = sld [smem:[#allocation21 + $0x30]]
        %s1872 = sld [smem:[#allocation21 + $0x38]]
        %s1873 = sld [smem:[#allocation21 + $0x58]]
        %s1874 = sld [smem:[#allocation21 + $0x78]]
        %v1875 = vstv %s1871
        %v1876 = vmul.f32 %v1866, %v1875
        %v1877 = vstv %s1872
        %v1878 = vmul.f32 %v1134, %v1877
        %v1879 = vadd.f32 %v1876, %v1878
        %v1880 = vstv %s1873
        %v1881 = vadd.f32 %v1879, %v1880
        %v1882 = vmax.f32 %v1881, 0.0
        %v1883 = vstv %s1874
        %v1884 = vmul.f32 %v1882, %v1883
        %v1885 = vadd.f32 %v1884, 0.0
        %s1886 = sld [smem:[#allocation21 + $0x31]]
        %s1887 = sld [smem:[#allocation21 + $0x39]]
        %s1888 = sld [smem:[#allocation21 + $0x59]]
        %s1889 = sld [smem:[#allocation21 + $0x79]]
        %v1890 = vstv %s1886
        %v1891 = vmul.f32 %v1866, %v1890
        %v1892 = vstv %s1887
        %v1893 = vmul.f32 %v1134, %v1892
        %v1894 = vadd.f32 %v1891, %v1893
        %v1895 = vstv %s1888
        %v1896 = vadd.f32 %v1894, %v1895
        %v1897 = vmax.f32 %v1896, 0.0
        %v1898 = vstv %s1889
        %v1899 = vmul.f32 %v1897, %v1898
        %v1900 = vadd.f32 %v1899, 0.0
        %s1901 = sld [smem:[#allocation21 + $0x32]]
        %s1902 = sld [smem:[#allocation21 + $0x3a]]
        %s1903 = sld [smem:[#allocation21 + $0x5a]]
        %s1904 = sld [smem:[#allocation21 + $0x7a]]
        %v1905 = vstv %s1901
        %v1906 = vmul.f32 %v1866, %v1905
        %v1907 = vstv %s1902
        %v1908 = vmul.f32 %v1134, %v1907
        %v1909 = vadd.f32 %v1906, %v1908
        %v1910 = vstv %s1903
        %v1911 = vadd.f32 %v1909, %v1910
        %v1912 = vmax.f32 %v1911, 0.0
        %v1913 = vstv %s1904
        %v1914 = vmul.f32 %v1912, %v1913
        %v1915 = vadd.f32 %v1885, %v1914
        %s1916 = sld [smem:[#allocation21 + $0x33]]
        %s1917 = sld [smem:[#allocation21 + $0x3b]]
        %s1918 = sld [smem:[#allocation21 + $0x5b]]
        %s1919 = sld [smem:[#allocation21 + $0x7b]]
        %v1920 = vstv %s1916
        %v1921 = vmul.f32 %v1866, %v1920
        %v1922 = vstv %s1917
        %v1923 = vmul.f32 %v1134, %v1922
        %v1924 = vadd.f32 %v1921, %v1923
        %v1925 = vstv %s1918
        %v1926 = vadd.f32 %v1924, %v1925
        %v1927 = vmax.f32 %v1926, 0.0
        %v1928 = vstv %s1919
        %v1929 = vmul.f32 %v1927, %v1928
        %v1930 = vadd.f32 %v1900, %v1929
        %s1931 = sld [smem:[#allocation21 + $0x34]]
        %s1932 = sld [smem:[#allocation21 + $0x3c]]
        %s1933 = sld [smem:[#allocation21 + $0x5c]]
        %s1934 = sld [smem:[#allocation21 + $0x7c]]
        %v1935 = vstv %s1931
        %v1936 = vmul.f32 %v1866, %v1935
        %v1937 = vstv %s1932
        %v1938 = vmul.f32 %v1134, %v1937
        %v1939 = vadd.f32 %v1936, %v1938
        %v1940 = vstv %s1933
        %v1941 = vadd.f32 %v1939, %v1940
        %v1942 = vmax.f32 %v1941, 0.0
        %v1943 = vstv %s1934
        %v1944 = vmul.f32 %v1942, %v1943
        %v1945 = vadd.f32 %v1915, %v1944
        %s1946 = sld [smem:[#allocation21 + $0x35]]
        %s1947 = sld [smem:[#allocation21 + $0x3d]]
        %s1948 = sld [smem:[#allocation21 + $0x5d]]
        %s1949 = sld [smem:[#allocation21 + $0x7d]]
        %v1950 = vstv %s1946
        %v1951 = vmul.f32 %v1866, %v1950
        %v1952 = vstv %s1947
        %v1953 = vmul.f32 %v1134, %v1952
        %v1954 = vadd.f32 %v1951, %v1953
        %v1955 = vstv %s1948
        %v1956 = vadd.f32 %v1954, %v1955
        %v1957 = vmax.f32 %v1956, 0.0
        %v1958 = vstv %s1949
        %v1959 = vmul.f32 %v1957, %v1958
        %v1960 = vadd.f32 %v1930, %v1959
        %s1961 = sld [smem:[#allocation21 + $0x36]]
        %s1962 = sld [smem:[#allocation21 + $0x3e]]
        %s1963 = sld [smem:[#allocation21 + $0x5e]]
        %s1964 = sld [smem:[#allocation21 + $0x7e]]
        %v1965 = vstv %s1961
        %v1966 = vmul.f32 %v1866, %v1965
        %v1967 = vstv %s1962
        %v1968 = vmul.f32 %v1134, %v1967
        %v1969 = vadd.f32 %v1966, %v1968
        %v1970 = vstv %s1963
        %v1971 = vadd.f32 %v1969, %v1970
        %v1972 = vmax.f32 %v1971, 0.0
        %v1973 = vstv %s1964
        %v1974 = vmul.f32 %v1972, %v1973
        %v1975 = vadd.f32 %v1945, %v1974
        %s1976 = sld [smem:[#allocation21 + $0x37]]
        %s1977 = sld [smem:[#allocation21 + $0x3f]]
        %s1978 = sld [smem:[#allocation21 + $0x5f]]
        %s1979 = sld [smem:[#allocation21 + $0x7f]]
        %v1980 = vstv %s1976
        %v1981 = vmul.f32 %v1866, %v1980
        %v1982 = vstv %s1977
        %v1983 = vmul.f32 %v1134, %v1982
        %v1984 = vadd.f32 %v1981, %v1983
        %v1985 = vstv %s1978
        %v1986 = vadd.f32 %v1984, %v1985
        %v1987 = vmax.f32 %v1986, 0.0
        %v1988 = vstv %s1979
        %v1989 = vmul.f32 %v1987, %v1988
        %v1990 = vadd.f32 %v1960, %v1989
        %v1991 = vadd.f32 %v1975, %v1990
        %s1992 = sld [smem:[#allocation21 + $0x83]]
        %v1993 = vstv %s1992
        %v1994 = vadd.f32 %v1991, %v1993
        %v1995 = vsel %vm609, %v1994, -1e+30
        %1996 = vmax.xlane.f32.xlu0 %v1995
        %v1997 = vpop.xlane.xlu0 %1996
        %v1998 = vsub.f32 %v1995, %v1997
        %v1999 = vmul.f32 %v1998, 1.442695
        %v2000 = vpow.pop %v1999
        %2001 = vadd.xlane.f32.xlu0 %v2000
        %v2002 = vpop.xlane.xlu0 %2001
        %v2003 = vrcp.pop %v2002
        %v2004 = vmul.f32 %v2000, %v2003
        %v2005 = vpack.c.bf16 %v2004, %v2004
        %2006 = vmatprep.subr.bf16.mxu0 0
        %2007 = vmatpush1.bf16.xpose.msra.mxu0 0
        %2008 = vmatprep.subr.bf16.mxu0 0
        %2009 = vmatpush1.bf16.xpose.msra.mxu0 0
        %2010 = vmatprep.subr.bf16.mxu0 0
        %2011 = vmatpush1.bf16.xpose.msra.mxu0 0
        %2012 = vmatprep.subr.bf16.mxu0 0
        %2013 = vmatpush1.bf16.xpose.msra.mxu0 0
        %2014 = vmatprep.subr.bf16.mxu0 0
        %2015 = vmatpush1.bf16.xpose.msra.mxu0 0
        %2016 = vmatprep.subr.bf16.mxu0 0
        %2017 = vmatpush1.bf16.xpose.msra.mxu0 0
        %2018 = vmatprep.subr.bf16.mxu0 0
        %2019 = vmatpush1.bf16.xpose.msra.mxu0 0
        %2020 = vmatprep.subr.bf16.mxu0 0
        %2021 = vmatpush1.bf16.xpose.msra.mxu0 %v1822
        %2022 = vmatprep.subr.bf16.mxu0 0
        %2023 = vmatpush2.bf16.xpose.msra.mxu0 0
        %2024 = vmatprep.subr.bf16.mxu0 0
        %2025 = vmatpush2.bf16.xpose.msra.mxu0 0
        %2026 = vmatprep.subr.bf16.mxu0 0
        %2027 = vmatpush2.bf16.xpose.msra.mxu0 0
        %2028 = vmatprep.subr.bf16.mxu0 0
        %2029 = vmatpush2.bf16.xpose.msra.mxu0 0
        %2030 = vmatprep.subr.bf16.mxu0 0
        %2031 = vmatpush2.bf16.xpose.msra.mxu0 0
        %2032 = vmatprep.subr.bf16.mxu0 0
        %2033 = vmatpush2.bf16.xpose.msra.mxu0 0
        %2034 = vmatprep.subr.bf16.mxu0 0
        %2035 = vmatpush2.bf16.xpose.msra.mxu0 0
        %2036 = vmatprep.subr.bf16.mxu0 0
        %2037 = vmatpush2.bf16.xpose.msra.mxu0 0
        %2038 = vmatprep.mubr.bf16.mxu0 0
        %2039 = vmatmul.mubr.bf16.gmra.mxu0 %v2005
        %v2040 = vpop.f32.mrf.mxu0
        %v2041 = vadd.f32 0.0, %v2040
        %v2042 = vpop.f32.mrf.mxu0
        %v2043 = vpop.f32.mrf.mxu0
        %v2044 = vpop.f32.mrf.mxu0
        %2045 = vdwg.mxu0
        %2047 = vrot.lane.b32.xlu0 %v1587, 8
        %v2048 = vpop.permute.xlu0 %2047
        %2051 = vrot.lane.b32.xlu0 %v1814, 16
        %v2052 = vpop.permute.xlu0 %2051
        %2055 = vrot.lane.b32.xlu0 %v2041, 24
        %v2056 = vpop.permute.xlu0 %2055
        %v2058 = vsel %vm1141, %v1359, %v2048
        %vm2059 = vcmask 130048
        %v2060 = vsel %vm2059, %v2058, %v2052
        %vm2061 = vcmask 195584
        %v2062 = vsel %vm2061, %v2060, %v2056
        %vm2063 = vcmask 261120
        %v2064 = vsel %vm2063, %v2062, 0.0
        %v2065 = vpack.c.bf16 %v2064, %v2064
        %v2066 = vld [vmem:[#allocation17] sm:$0xf]
        %v2067 = vld [vmem:[#allocation17 + $0x4] sm:$0xf]
        %v2068 = vld [vmem:[#allocation17 + $0x8] sm:$0xf]
        %v2069 = vld [vmem:[#allocation17 + $0xc] sm:$0xf]
        %v2070 = vld [vmem:[#allocation17 + $0x10] sm:$0xf]
        %v2071 = vld [vmem:[#allocation17 + $0x14] sm:$0xf]
        %v2072 = vld [vmem:[#allocation17 + $0x18] sm:$0xf]
        %v2073 = vld [vmem:[#allocation17 + $0x1c] sm:$0xf]
        %v2074 = vld [vmem:[#allocation17 + $0x20] sm:$0xf]
        %v2075 = vld [vmem:[#allocation17 + $0x24] sm:$0xf]
        %v2076 = vld [vmem:[#allocation17 + $0x28] sm:$0xf]
        %v2077 = vld [vmem:[#allocation17 + $0x2c] sm:$0xf]
        %v2078 = vld [vmem:[#allocation17 + $0x30] sm:$0xf]
        %v2079 = vld [vmem:[#allocation17 + $0x34] sm:$0xf]
        %v2080 = vld [vmem:[#allocation17 + $0x38] sm:$0xf]
        %v2081 = vld [vmem:[#allocation17 + $0x3c] sm:$0xf]
        %v2082 = vlaneseq
        %v2083 = vshrl.u32 %v2082, 7
        %v2084 = vsub.s32 0, %v2083
        %v2085 = vrot.slane %v605, %v2084
        %v2102 = vunpack.c.l.b16 %v2066
        %v2103 = vunpack.c.l.b16 %v2067
        %v2104 = vunpack.c.l.b16 %v2068
        %v2105 = vunpack.c.l.b16 %v2069
        %v2106 = vunpack.c.l.b16 %v2070
        %v2107 = vunpack.c.l.b16 %v2071
        %v2108 = vunpack.c.l.b16 %v2072
        %v2109 = vunpack.c.l.b16 %v2073
        %v2110 = vunpack.c.l.b16 %v2074
        %v2111 = vunpack.c.l.b16 %v2075
        %v2112 = vunpack.c.l.b16 %v2076
        %v2113 = vunpack.c.l.b16 %v2077
        %v2114 = vunpack.c.l.b16 %v2078
        %v2115 = vunpack.c.l.b16 %v2079
        %v2116 = vunpack.c.l.b16 %v2080
        %v2117 = vunpack.c.l.b16 %v2081
        %v2118 = vpack.c.b16 %v2103, %v2102
        %v2119 = vpack.c.b16 %v2105, %v2104
        %v2120 = vpack.c.b16 %v2107, %v2106
        %v2121 = vpack.c.b16 %v2109, %v2108
        %v2122 = vpack.c.b16 %v2111, %v2110
        %v2123 = vpack.c.b16 %v2113, %v2112
        %v2124 = vpack.c.b16 %v2115, %v2114
        %v2125 = vpack.c.b16 %v2117, %v2116
        %2134 = vmatprep.subr.bf16.mxu0 0
        %2135 = vmatpush1.bf16.msra.mxu0 %v2125
        %2136 = vmatprep.subr.bf16.mxu0 0
        %2137 = vmatpush1.bf16.msra.mxu0 %v2124
        %2138 = vmatprep.subr.bf16.mxu0 0
        %2139 = vmatpush1.bf16.msra.mxu0 %v2123
        %2140 = vmatprep.subr.bf16.mxu0 0
        %2141 = vmatpush1.bf16.msra.mxu0 %v2122
        %2142 = vmatprep.subr.bf16.mxu0 0
        %2143 = vmatpush1.bf16.msra.mxu0 %v2121
        %2144 = vmatprep.subr.bf16.mxu0 0
        %2145 = vmatpush1.bf16.msra.mxu0 %v2120
        %2146 = vmatprep.subr.bf16.mxu0 0
        %2147 = vmatpush1.bf16.msra.mxu0 %v2119
        %2148 = vmatprep.subr.bf16.mxu0 0
        %2149 = vmatpush1.bf16.msra.mxu0 %v2118
        %2150 = vmatprep.subr.bf16.mxu0 0
        %2151 = vmatpush2.bf16.msra.mxu0 0
        %2152 = vmatprep.subr.bf16.mxu0 0
        %2153 = vmatpush2.bf16.msra.mxu0 0
        %2154 = vmatprep.subr.bf16.mxu0 0
        %2155 = vmatpush2.bf16.msra.mxu0 0
        %2156 = vmatprep.subr.bf16.mxu0 0
        %2157 = vmatpush2.bf16.msra.mxu0 0
        %2158 = vmatprep.subr.bf16.mxu0 0
        %2159 = vmatpush2.bf16.msra.mxu0 0
        %2160 = vmatprep.subr.bf16.mxu0 0
        %2161 = vmatpush2.bf16.msra.mxu0 0
        %2162 = vmatprep.subr.bf16.mxu0 0
        %2163 = vmatpush2.bf16.msra.mxu0 0
        %2164 = vmatprep.subr.bf16.mxu0 0
        %2165 = vmatpush2.bf16.msra.mxu0 0
        %2166 = vmatprep.mubr.bf16.mxu0 0
        %2167 = vmatmul.mubr.bf16.gmra.mxu0 %v2065
        %v2168 = vpop.f32.mrf.mxu0
        %v2169 = vadd.f32 %v2085, %v2168
        %v2170 = vpop.f32.mrf.mxu0
        %v2171 = vpop.f32.mrf.mxu0
        %v2172 = vpop.f32.mrf.mxu0
        %2173 = vdwg.mxu0
        %v2174 = vld [vmem:[%s506] sm:$0xf]
        %v2175 = vunpack.c.l.bf16 %v2174
        %v2176 = vadd.f32 %v2175, %v2169
        %v2177 = vrot.slane %v2176, 4
        %v2178 = vadd.f32 %v2176, %v2177
        %v2179 = vrot.slane %v2178, 2
        %v2180 = vadd.f32 %v2178, %v2179
        %v2181 = vrot.slane %v2180, 1
        %v2182 = vadd.f32 %v2180, %v2181
        %v2183 = vrcp.pop 8.0
        %v2184 = vmul.f32 %v2182, %v2183
        %v2185 = vsub.f32 %v2176, %v2184
        %v2186 = vmul.f32 %v2185, %v2185
        %v2187 = vrot.slane %v2186, 4
        %v2188 = vadd.f32 %v2186, %v2187
        %v2189 = vrot.slane %v2188, 2
        %v2190 = vadd.f32 %v2188, %v2189
        %v2191 = vrot.slane %v2190, 1
        %v2192 = vadd.f32 %v2190, %v2191
        %v2193 = vmul.f32 %v2192, %v2183
        %v2194 = vadd.f32 %v2193, 1e-05
        %v2195 = vrsqrt.pop %v2194
        %v2196 = vmul.f32 %v2185, %v2195
        %v2197 = vlaneseq
        %v2198 = vshrl.u32 %v2197, 7
        %v2199 = vsub.s32 2, %v2198
        %v2200 = vrot.slane %v605, %v2199
        %v2201 = vmul.f32 %v2196, %v2200
        %v2202 = vlaneseq
        %v2203 = vshrl.u32 %v2202, 7
        %v2204 = vsub.s32 3, %v2203
        %v2205 = vrot.slane %v605, %v2204
        %v2206 = vadd.f32 %v2201, %v2205
        %v2207 = vpack.c.bf16 %v2206, %v2206
        %v2208 = vld [vmem:[#allocation18] sm:$0xf]
        %v2209 = vld [vmem:[#allocation18 + $0x4] sm:$0xf]
        %v2210 = vld [vmem:[#allocation18 + $0x8] sm:$0xf]
        %v2211 = vld [vmem:[#allocation18 + $0xc] sm:$0xf]
        %v2212 = vld [vmem:[#allocation18 + $0x10] sm:$0xf]
        %v2213 = vld [vmem:[#allocation18 + $0x14] sm:$0xf]
        %v2214 = vld [vmem:[#allocation18 + $0x18] sm:$0xf]
        %v2215 = vld [vmem:[#allocation18 + $0x1c] sm:$0xf]
        %v2216 = vld [vmem:[#allocation18 + $0x20] sm:$0xf]
        %v2217 = vld [vmem:[#allocation18 + $0x24] sm:$0xf]
        %v2218 = vld [vmem:[#allocation18 + $0x28] sm:$0xf]
        %v2219 = vld [vmem:[#allocation18 + $0x2c] sm:$0xf]
        %v2220 = vld [vmem:[#allocation18 + $0x30] sm:$0xf]
        %v2221 = vld [vmem:[#allocation18 + $0x34] sm:$0xf]
        %v2222 = vld [vmem:[#allocation18 + $0x38] sm:$0xf]
        %v2223 = vld [vmem:[#allocation18 + $0x3c] sm:$0xf]
        %v2225 = vlaneseq
        %v2226 = vshrl.u32 %v2225, 7
        %v2227 = vsub.s32 0, %v2226
        %v2228 = vrot.slane %v606, %v2227
        %v2246 = vunpack.c.l.b16 %v2208
        %v2247 = vunpack.c.l.b16 %v2209
        %v2248 = vunpack.c.l.b16 %v2210
        %v2249 = vunpack.c.l.b16 %v2211
        %v2250 = vunpack.c.l.b16 %v2212
        %v2251 = vunpack.c.l.b16 %v2213
        %v2252 = vunpack.c.l.b16 %v2214
        %v2253 = vunpack.c.l.b16 %v2215
        %v2254 = vunpack.c.l.b16 %v2216
        %v2255 = vunpack.c.l.b16 %v2217
        %v2256 = vunpack.c.l.b16 %v2218
        %v2257 = vunpack.c.l.b16 %v2219
        %v2258 = vunpack.c.l.b16 %v2220
        %v2259 = vunpack.c.l.b16 %v2221
        %v2260 = vunpack.c.l.b16 %v2222
        %v2261 = vunpack.c.l.b16 %v2223
        %v2262 = vpack.c.b16 %v2247, %v2246
        %v2263 = vpack.c.b16 %v2249, %v2248
        %v2264 = vpack.c.b16 %v2251, %v2250
        %v2265 = vpack.c.b16 %v2253, %v2252
        %v2266 = vpack.c.b16 %v2255, %v2254
        %v2267 = vpack.c.b16 %v2257, %v2256
        %v2268 = vpack.c.b16 %v2259, %v2258
        %v2269 = vpack.c.b16 %v2261, %v2260
        %2278 = vmatprep.subr.bf16.mxu0 0
        %2279 = vmatpush1.bf16.msra.mxu0 %v2269
        %2280 = vmatprep.subr.bf16.mxu0 0
        %2281 = vmatpush1.bf16.msra.mxu0 %v2268
        %2282 = vmatprep.subr.bf16.mxu0 0
        %2283 = vmatpush1.bf16.msra.mxu0 %v2267
        %2284 = vmatprep.subr.bf16.mxu0 0
        %2285 = vmatpush1.bf16.msra.mxu0 %v2266
        %2286 = vmatprep.subr.bf16.mxu0 0
        %2287 = vmatpush1.bf16.msra.mxu0 %v2265
        %2288 = vmatprep.subr.bf16.mxu0 0
        %2289 = vmatpush1.bf16.msra.mxu0 %v2264
        %2290 = vmatprep.subr.bf16.mxu0 0
        %2291 = vmatpush1.bf16.msra.mxu0 %v2263
        %2292 = vmatprep.subr.bf16.mxu0 0
        %2293 = vmatpush1.bf16.msra.mxu0 %v2262
        %2294 = vmatprep.subr.bf16.mxu0 0
        %2295 = vmatpush2.bf16.msra.mxu0 0
        %2296 = vmatprep.subr.bf16.mxu0 0
        %2297 = vmatpush2.bf16.msra.mxu0 0
        %2298 = vmatprep.subr.bf16.mxu0 0
        %2299 = vmatpush2.bf16.msra.mxu0 0
        %2300 = vmatprep.subr.bf16.mxu0 0
        %2301 = vmatpush2.bf16.msra.mxu0 0
        %2302 = vmatprep.subr.bf16.mxu0 0
        %2303 = vmatpush2.bf16.msra.mxu0 0
        %2304 = vmatprep.subr.bf16.mxu0 0
        %2305 = vmatpush2.bf16.msra.mxu0 0
        %2306 = vmatprep.subr.bf16.mxu0 0
        %2307 = vmatpush2.bf16.msra.mxu0 0
        %2308 = vmatprep.subr.bf16.mxu0 0
        %2309 = vmatpush2.bf16.msra.mxu0 0
        %2310 = vmatprep.mubr.bf16.mxu0 0
        %2311 = vmatmul.mubr.bf16.gmra.mxu0 %v2207
        %v2312 = vpop.f32.mrf.mxu0
        %v2313 = vadd.f32 %v2228, %v2312
        %v2314 = vpop.f32.mrf.mxu0
        %v2315 = vpop.f32.mrf.mxu0
        %v2316 = vpop.f32.mrf.mxu0
        %2317 = vdwg.mxu0
        %v2318 = vmax.f32 %v2313, 0.0
        %v2319 = vpack.c.bf16 %v2318, %v2318
        %v2320 = vld [vmem:[#allocation20] sm:$0xf]
        %v2321 = vld [vmem:[#allocation20 + $0x4] sm:$0xf]
        %v2322 = vld [vmem:[#allocation20 + $0x8] sm:$0xf]
        %v2323 = vld [vmem:[#allocation20 + $0xc] sm:$0xf]
        %v2324 = vld [vmem:[#allocation20 + $0x10] sm:$0xf]
        %v2325 = vld [vmem:[#allocation20 + $0x14] sm:$0xf]
        %v2326 = vld [vmem:[#allocation20 + $0x18] sm:$0xf]
        %v2327 = vld [vmem:[#allocation20 + $0x1c] sm:$0xf]
        %v2328 = vld [vmem:[#allocation20 + $0x20] sm:$0xf]
        %v2329 = vld [vmem:[#allocation20 + $0x24] sm:$0xf]
        %v2330 = vld [vmem:[#allocation20 + $0x28] sm:$0xf]
        %v2331 = vld [vmem:[#allocation20 + $0x2c] sm:$0xf]
        %v2332 = vld [vmem:[#allocation20 + $0x30] sm:$0xf]
        %v2333 = vld [vmem:[#allocation20 + $0x34] sm:$0xf]
        %v2334 = vld [vmem:[#allocation20 + $0x38] sm:$0xf]
        %v2335 = vld [vmem:[#allocation20 + $0x3c] sm:$0xf]
        %v2336 = vlaneseq
        %v2337 = vshrl.u32 %v2336, 7
        %v2338 = vsub.s32 1, %v2337
        %v2339 = vrot.slane %v605, %v2338
        %v2356 = vunpack.c.l.b16 %v2320
        %v2357 = vunpack.c.l.b16 %v2321
        %v2358 = vunpack.c.l.b16 %v2322
        %v2359 = vunpack.c.l.b16 %v2323
        %v2360 = vunpack.c.l.b16 %v2324
        %v2361 = vunpack.c.l.b16 %v2325
        %v2362 = vunpack.c.l.b16 %v2326
        %v2363 = vunpack.c.l.b16 %v2327
        %v2364 = vunpack.c.l.b16 %v2328
        %v2365 = vunpack.c.l.b16 %v2329
        %v2366 = vunpack.c.l.b16 %v2330
        %v2367 = vunpack.c.l.b16 %v2331
        %v2368 = vunpack.c.l.b16 %v2332
        %v2369 = vunpack.c.l.b16 %v2333
        %v2370 = vunpack.c.l.b16 %v2334
        %v2371 = vunpack.c.l.b16 %v2335
        %v2372 = vpack.c.b16 %v2357, %v2356
        %v2373 = vpack.c.b16 %v2359, %v2358
        %v2374 = vpack.c.b16 %v2361, %v2360
        %v2375 = vpack.c.b16 %v2363, %v2362
        %v2376 = vpack.c.b16 %v2365, %v2364
        %v2377 = vpack.c.b16 %v2367, %v2366
        %v2378 = vpack.c.b16 %v2369, %v2368
        %v2379 = vpack.c.b16 %v2371, %v2370
        %2388 = vmatprep.subr.bf16.mxu0 0
        %2389 = vmatpush1.bf16.msra.mxu0 %v2379
        %2390 = vmatprep.subr.bf16.mxu0 0
        %2391 = vmatpush1.bf16.msra.mxu0 %v2378
        %2392 = vmatprep.subr.bf16.mxu0 0
        %2393 = vmatpush1.bf16.msra.mxu0 %v2377
        %2394 = vmatprep.subr.bf16.mxu0 0
        %2395 = vmatpush1.bf16.msra.mxu0 %v2376
        %2396 = vmatprep.subr.bf16.mxu0 0
        %2397 = vmatpush1.bf16.msra.mxu0 %v2375
        %2398 = vmatprep.subr.bf16.mxu0 0
        %2399 = vmatpush1.bf16.msra.mxu0 %v2374
        %2400 = vmatprep.subr.bf16.mxu0 0
        %2401 = vmatpush1.bf16.msra.mxu0 %v2373
        %2402 = vmatprep.subr.bf16.mxu0 0
        %2403 = vmatpush1.bf16.msra.mxu0 %v2372
        %2404 = vmatprep.subr.bf16.mxu0 0
        %2405 = vmatpush2.bf16.msra.mxu0 0
        %2406 = vmatprep.subr.bf16.mxu0 0
        %2407 = vmatpush2.bf16.msra.mxu0 0
        %2408 = vmatprep.subr.bf16.mxu0 0
        %2409 = vmatpush2.bf16.msra.mxu0 0
        %2410 = vmatprep.subr.bf16.mxu0 0
        %2411 = vmatpush2.bf16.msra.mxu0 0
        %2412 = vmatprep.subr.bf16.mxu0 0
        %2413 = vmatpush2.bf16.msra.mxu0 0
        %2414 = vmatprep.subr.bf16.mxu0 0
        %2415 = vmatpush2.bf16.msra.mxu0 0
        %2416 = vmatprep.subr.bf16.mxu0 0
        %2417 = vmatpush2.bf16.msra.mxu0 0
        %2418 = vmatprep.subr.bf16.mxu0 0
        %2419 = vmatpush2.bf16.msra.mxu0 0
        %2420 = vmatprep.mubr.bf16.mxu0 0
        %2421 = vmatmul.mubr.bf16.gmra.mxu0 %v2319
        %v2422 = vpop.f32.mrf.mxu0
        %v2423 = vadd.f32 %v2339, %v2422
        %v2424 = vpop.f32.mrf.mxu0
        %v2425 = vpop.f32.mrf.mxu0
        %v2426 = vpop.f32.mrf.mxu0
        %2427 = vdwg.mxu0
        %v2428 = vadd.f32 %v2206, %v2423
        %v2429 = vrot.slane %v2428, 4
        %v2430 = vadd.f32 %v2428, %v2429
        %v2431 = vrot.slane %v2430, 2
        %v2432 = vadd.f32 %v2430, %v2431
        %v2433 = vrot.slane %v2432, 1
        %v2434 = vadd.f32 %v2432, %v2433
        %v2435 = vmul.f32 %v2434, %v2183
        %v2436 = vsub.f32 %v2428, %v2435
        %v2437 = vmul.f32 %v2436, %v2436
        %v2438 = vrot.slane %v2437, 4
        %v2439 = vadd.f32 %v2437, %v2438
        %v2440 = vrot.slane %v2439, 2
        %v2441 = vadd.f32 %v2439, %v2440
        %v2442 = vrot.slane %v2441, 1
        %v2443 = vadd.f32 %v2441, %v2442
        %v2444 = vmul.f32 %v2443, %v2183
        %v2445 = vadd.f32 %v2444, 1e-05
        %v2446 = vrsqrt.pop %v2445
        %v2447 = vmul.f32 %v2436, %v2446
        %v2448 = vlaneseq
        %v2449 = vshrl.u32 %v2448, 7
        %v2450 = vsub.s32 4, %v2449
        %v2451 = vrot.slane %v605, %v2450
        %v2452 = vmul.f32 %v2447, %v2451
        %v2453 = vlaneseq
        %v2454 = vshrl.u32 %v2453, 7
        %v2455 = vsub.s32 5, %v2454
        %v2456 = vrot.slane %v605, %v2455
        %v2457 = vadd.f32 %v2452, %v2456
        %2458 = vst [vmem:[%s603] sm:$0xff] %v2457
        %s2459 = sand.u32 %s311, 1
        %s2460 = scalar_lea.sflag [#allocation7], %s2459
        %s2461 = sand.u32 %s311, 1
        %s2462 = smul.addr %s2461, 8
        %s2463 = scalar_lea.vmem [#allocation22], %s2462
        // Predicated region
        $region109: #{tpu_custom_call.1} parent=67 // pred_check
          %p2464 = pneg %p321
        $region110: #{tpu_custom_call.1} parent=67 // pred_check_branch
          %2466 = sbr.rel (%p2464) target = $region112
        $region111: #{tpu_custom_call.1} parent=67 // pred_region
          %s2468 = ssub.s32 128, 128
          %2469 = vsyncadd %s2460, %s2468
          %s2470 = smul.addr %s36, 128
          %s2471 = scalar_lea.hbm %s12, %s2470
          %s2473 = sshll.u32 %s2463, 4
          %s2474 = int_to_ptr.vmem [resolvable:$true] %s2473
          %2476 = dma.vmem_to_hbm [thread:$0]  %s2474, 128, %s2471, %s2460
        $region112: #{tpu_custom_call.1} parent=67 // pred_fallthru
          _
      $region68: #{tpu_custom_call.1} parent=5 // pred_fallthru
        _
      %p2477 = scmp.le.s32.totalorder 2, %s31
      // Predicated region
      $region113: #{tpu_custom_call.1} parent=5 // pred_check
        %p2478 = pneg %p2477
      $region114: #{tpu_custom_call.1} parent=5 // pred_check_branch
        %2480 = sbr.rel (%p2478) target = $region116
      $region115: #{tpu_custom_call.1} parent=5 // pred_region
        %s2481 = ssub.s32 %s31, 2
        // Predicated region
        $region117: #{tpu_custom_call.1} parent=115 // pred_check
          %p2482 = pneg %p327
        $region118: #{tpu_custom_call.1} parent=115 // pred_check_branch
          %2484 = sbr.rel (%p2482) target = $region120
        $region119: #{tpu_custom_call.1} parent=115 // pred_region
          %s2485 = sand.u32 %s312, 1
          %s2486 = scalar_lea.sflag [#allocation7], %s2485
          %s2487 = sand.u32 %s312, 1
          %s2488 = smul.addr %s2487, 8
          %s2489 = scalar_lea.vmem [#allocation22], %s2488
          %2490 = dma.done %s2486, 128
        $region120: #{tpu_custom_call.1} parent=115 // pred_fallthru
          _
      $region116: #{tpu_custom_call.1} parent=5 // pred_fallthru
        _
    $region6: #{tpu_custom_call.1} parent=1 // loop_footer
      %s35 = sadd.s32 1, %s31
    $region7: #{tpu_custom_call.1} parent=1 // loop_footer_branch
      %30 = sbr.rel target = $region3
    $region8: #{tpu_custom_call.1} parent=1 // loop_exit
      _
    %2491 = vsyncpa [#allocation6], 1
    %s2492 = scalar_lea.sflag [#allocation6], 1
    %2493 = vsyncpa %s2492, 1
    %2494 = vsyncpa [#allocation10], 1
    %s2495 = scalar_lea.sflag [#allocation10], 1
    %2496 = vsyncpa %s2495, 1
    %2497 = vsyncpa [#allocation13], 1
    %2498 = vsyncpa [#allocation16], 1
    %2499 = vsyncpa [#allocation19], 1
    %2500 = vsyncpa [#allocation7], 1
    %s2501 = scalar_lea.sflag [#allocation7], 1
    %2502 = vsyncpa %s2501, 1
    %2503 = vsyncpa [#allocation8], 1
    %s2504 = scalar_lea.sflag [#allocation8], 1
    %2505 = vsyncpa %s2504, 1

// kernel: tpu_custom_call.1
$region0: #{tpu_custom_call.1}
  #allocation0 [shape = 'u32[]', space=smem, size = 0x4, offset = 0x4, fixed_abs, tag = 'smem constant byte address 0x4 - core index']
  #allocation1 [shape = 'u32[144,128]{1,0:T(1,128)}', space=vmem, size = 0x12000, scoped, tag = 'internal scratch']
  #allocation2 [shape = 'f32[8,128]{1,0:T(8,128)}', space=vmem, size = 0x1000, scoped, tag = 'scratch operand']
  #allocation3 [shape = 'f32[128,128]{1,0:T(8,128)}', space=vmem, size = 0x10000, scoped, tag = 'scratch operand']
  #allocation4 [shape = 'f32[128,128]{1,0:T(8,128)}', space=vmem, size = 0x10000, scoped, tag = 'scratch operand']
  %s0 = inlined_call_operand.hbm [shape: bf16[2,8,128], index: 0, kind: input, shape index: {}]
  %s1 = inlined_call_operand.hbm [shape: bf16[2,128,128], index: 1, kind: input, shape index: {}]
  %s2 = inlined_call_operand.hbm [shape: f32[2,8,128], index: 2, kind: input, shape index: {}]
  %s3 = inlined_call_operand.hbm [shape: bf16[128,128], index: 3, kind: input, shape index: {}]
  %s4 = inlined_call_operand.hbm [shape: bf16[128,128], index: 4, kind: input, shape index: {}]
  %s5 = inlined_call_operand.hbm [shape: bf16[128,128], index: 5, kind: input, shape index: {}]
  %s6 = inlined_call_operand.hbm [shape: bf16[128,128], index: 6, kind: input, shape index: {}]
  %s7 = inlined_call_operand.hbm [shape: bf16[128,128], index: 7, kind: input, shape index: {}]
  %s8 = inlined_call_operand.hbm [shape: bf16[128,128], index: 8, kind: input, shape index: {}]
  %s9 = inlined_call_operand.vmem [shape: f32[8,128], index: 9, kind: input, shape index: {}]
  %s10 = inlined_call_operand.vmem [shape: f32[1,128], index: 10, kind: input, shape index: {}]
  %s11 = inlined_call_operand.vmem [shape: f32[132], index: 11, kind: input, shape index: {}]
  %s12 = inlined_call_operand.hbm [shape: f32[2,8,128], index: 12, kind: output, shape index: {}]
  %s13 = sld [smem:[#allocation0]]
  $region121: #{tpu_custom_call.1} parent=0
    _
  %s15 = ssub.s32 1, %s13
  %s16 = scalar_select 0, %s15, %s13
  $region1: #{tpu_custom_call.1} parent=0
    #allocation5 [shape = 'u8[4096]{0}', space=vmem, size = 0x1000, scoped, tag = 'input window, operand 0']
    #allocation6 [shape = 's32[2]{0}', space=sflag, size = 0x8, scoped, tag = 'scoped memory for tpu_custom_call.1']
    #allocation7 [shape = 's32[2]{0}', space=sflag, size = 0x8, scoped, tag = 'scoped memory for tpu_custom_call.1']
    #allocation8 [shape = 's32[2]{0}', space=sflag, size = 0x8, scoped, tag = 'scoped memory for tpu_custom_call.1']
    #allocation9 [shape = 'u8[65536]{0}', space=vmem, size = 0x10000, scoped, tag = 'input window, operand 1']
    #allocation10 [shape = 's32[2]{0}', space=sflag, size = 0x8, scoped, tag = 'scoped memory for tpu_custom_call.1']
    #allocation11 [shape = 'u8[8192]{0}', space=vmem, size = 0x2000, scoped, tag = 'input window, operand 2']
    #allocation12 [shape = 'u8[32768]{0}', space=vmem, size = 0x8000, scoped, tag = 'input window, operand 3, single buffered']
    #allocation13 [shape = 's32[1]{0}', space=sflag, size = 0x4, scoped, tag = 'scoped memory for tpu_custom_call.1']
    #allocation14 [shape = 'u8[32768]{0}', space=vmem, size = 0x8000, scoped, tag = 'input window, operand 4, single buffered']
    #allocation15 [shape = 'u8[32768]{0}', space=vmem, size = 0x8000, scoped, tag = 'input window, operand 5, single buffered']
    #allocation16 [shape = 's32[1]{0}', space=sflag, size = 0x4, scoped, tag = 'scoped memory for tpu_custom_call.1']
    #allocation17 [shape = 'u8[32768]{0}', space=vmem, size = 0x8000, scoped, tag = 'input window, operand 6, single buffered']
    #allocation18 [shape = 'u8[32768]{0}', space=vmem, size = 0x8000, scoped, tag = 'input window, operand 7, single buffered']
    #allocation19 [shape = 's32[1]{0}', space=sflag, size = 0x4, scoped, tag = 'scoped memory for tpu_custom_call.1']
    #allocation20 [shape = 'u8[32768]{0}', space=vmem, size = 0x8000, scoped, tag = 'input window, operand 8, single buffered']
    #allocation21 [shape = 'u8[1024]{0}', space=smem, size = 0x400, scoped, tag = 'input window, operand 11, single buffered']
    #allocation22 [shape = 'u8[8192]{0}', space=vmem, size = 0x2000, scoped, tag = 'output window, operand 0']
    %17 = vsyncpa [#allocation6], 0
    %s18 = scalar_lea.sflag [#allocation6], 1
    %19 = vsyncpa %s18, 0
    %20 = vsyncpa [#allocation10], 0
    %s21 = scalar_lea.sflag [#allocation10], 1
    %22 = vsyncpa %s21, 0
    %23 = vsyncpa [#allocation13], 0
    %24 = vsyncpa [#allocation16], 0
    %25 = vsyncpa [#allocation19], 0
    %26 = vsyncpa [#allocation8], 0
    %27 = vsyncpa [#allocation7], 0
    %s28 = scalar_lea.sflag [#allocation7], 1
    %29 = vsyncpa %s28, 0
    loop: start=0, step=1, limit=4
    $region2: #{tpu_custom_call.1} parent=1 // loop_pre_header
      _
    $region3: #{tpu_custom_call.1} parent=1 // loop_header
      %s31 = sphi 0, %s35
      %p32 = scmp.ge.s32.totalorder %s31, 4
      %s41 = sphi 0, %s43
      %s44 = sphi 0, %s41
      %s45 = sphi 0, %s44
      %s61 = sphi 0, %s45
      %s67 = sphi 0, %s69
      %s70 = sphi 0, %s67
      %s71 = sphi 0, %s70
      %s87 = sphi 0, %s71
      %s93 = sphi 0, %s95
      %s96 = sphi 0, %s93
      %s97 = sphi 0, %s96
      %s113 = sphi 0, %s97
      %s117 = sphi 0, %s117
      %s119 = sphi 0, %s117
      %s120 = sphi 0, %s119
      %s134 = sphi 0, %s120
      %s138 = sphi 0, %s138
      %s140 = sphi 0, %s138
      %s141 = sphi 0, %s140
      %s155 = sphi 0, %s141
      %s159 = sphi 0, %s159
      %s161 = sphi 0, %s159
      %s162 = sphi 0, %s161
      %s176 = sphi 0, %s162
      %s180 = sphi 0, %s180
      %s182 = sphi 0, %s180
      %s183 = sphi 0, %s182
      %s197 = sphi 0, %s183
      %s201 = sphi 0, %s201
      %s203 = sphi 0, %s201
      %s204 = sphi 0, %s203
      %s218 = sphi 0, %s204
      %s222 = sphi 0, %s222
      %s224 = sphi 0, %s222
      %s225 = sphi 0, %s224
      %s239 = sphi 0, %s225
      %s243 = sphi 0, %s243
      %s245 = sphi 0, %s243
      %s246 = sphi 0, %s245
      %s260 = sphi 0, %s246
      %s264 = sphi 0, %s264
      %s266 = sphi 0, %s264
      %s267 = sphi 0, %s266
      %s281 = sphi 0, %s267
      %s285 = sphi 0, %s285
      %s287 = sphi 0, %s285
      %s288 = sphi 0, %s287
      %s302 = sphi 0, %s288
      %s308 = sphi 0, %s310
      %s311 = sphi 0, %s308
      %s312 = sphi 0, %s311
      %s328 = sphi 0, %s312
    $region4: #{tpu_custom_call.1} parent=1 // loop_header_branch
      %34 = sbr.rel (%p32) target = $region8
    $region5: #{tpu_custom_call.1} parent=1 // loop_body
      %s36 = ssub.s32 %s31, 1
      %s37 = ssub.s32 %s31, 2
      %s38 = sadd.s32 %s31, 1
      %s39 = ssub.s32 %s31, %s38
      %p40 = scmp.eq.s32.totalorder %s39, 0
      %s42 = sadd.s32 %s41, 1
      %s43 = scalar_select %p40, %s41, %s42
      %p46 = pneg %p40
      %p47 = scmp.eq.s32.totalorder %s31, 1
      %p48 = por %p46, %p47
      %p49 = scmp.ne.s32.totalorder %s41, %s44
      %p50 = scmp.eq.s32.totalorder %s31, 0
      %p51 = por %p49, %p50
      %p52 = scmp.ne.s32.totalorder %s41, %s44
      %p53 = scmp.eq.s32.totalorder %s36, 1
      %p54 = por %p52, %p53
      %p55 = scmp.ne.s32.totalorder %s44, %s45
      %p56 = scmp.eq.s32.totalorder %s36, 0
      %p57 = por %p55, %p56
      %p58 = scmp.ne.s32.totalorder %s44, %s45
      %p59 = scmp.eq.s32.totalorder %s37, 1
      %p60 = por %p58, %p59
      %p62 = scmp.ne.s32.totalorder %s45, %s61
      %p63 = scmp.eq.s32.totalorder %s37, 0
      %p64 = por %p62, %p63
      %s65 = ssub.s32 %s31, %s38
      %p66 = scmp.eq.s32.totalorder %s65, 0
      %s68 = sadd.s32 %s67, 1
      %s69 = scalar_select %p66, %s67, %s68
      %p72 = pneg %p66
      %p73 = scmp.eq.s32.totalorder %s31, 1
      %p74 = por %p72, %p73
      %p75 = scmp.ne.s32.totalorder %s67, %s70
      %p76 = scmp.eq.s32.totalorder %s31, 0
      %p77 = por %p75, %p76
      %p78 = scmp.ne.s32.totalorder %s67, %s70
      %p79 = scmp.eq.s32.totalorder %s36, 1
      %p80 = por %p78, %p79
      %p81 = scmp.ne.s32.totalorder %s70, %s71
      %p82 = scmp.eq.s32.totalorder %s36, 0
      %p83 = por %p81, %p82
      %p84 = scmp.ne.s32.totalorder %s70, %s71
      %p85 = scmp.eq.s32.totalorder %s37, 1
      %p86 = por %p84, %p85
      %p88 = scmp.ne.s32.totalorder %s71, %s87
      %p89 = scmp.eq.s32.totalorder %s37, 0
      %p90 = por %p88, %p89
      %s91 = ssub.s32 %s31, %s38
      %p92 = scmp.eq.s32.totalorder %s91, 0
      %s94 = sadd.s32 %s93, 1
      %s95 = scalar_select %p92, %s93, %s94
      %p98 = pneg %p92
      %p99 = scmp.eq.s32.totalorder %s31, 1
      %p100 = por %p98, %p99
      %p101 = scmp.ne.s32.totalorder %s93, %s96
      %p102 = scmp.eq.s32.totalorder %s31, 0
      %p103 = por %p101, %p102
      %p104 = scmp.ne.s32.totalorder %s93, %s96
      %p105 = scmp.eq.s32.totalorder %s36, 1
      %p106 = por %p104, %p105
      %p107 = scmp.ne.s32.totalorder %s96, %s97
      %p108 = scmp.eq.s32.totalorder %s36, 0
      %p109 = por %p107, %p108
      %p110 = scmp.ne.s32.totalorder %s96, %s97
      %p111 = scmp.eq.s32.totalorder %s37, 1
      %p112 = por %p110, %p111
      %p114 = scmp.ne.s32.totalorder %s97, %s113
      %p115 = scmp.eq.s32.totalorder %s37, 0
      %p116 = por %p114, %p115
      %s118 = sadd.s32 %s117, 1
      %p121 = scmp.eq.s32.totalorder %s31, 1
      %p122 = scmp.ne.s32.totalorder %s117, %s119
      %p123 = scmp.eq.s32.totalorder %s31, 0
      %p124 = por %p122, %p123
      %p125 = scmp.ne.s32.totalorder %s117, %s119
      %p126 = scmp.eq.s32.totalorder %s36, 1
      %p127 = por %p125, %p126
      %p128 = scmp.ne.s32.totalorder %s119, %s120
      %p129 = scmp.eq.s32.totalorder %s36, 0
      %p130 = por %p128, %p129
      %p131 = scmp.ne.s32.totalorder %s119, %s120
      %p132 = scmp.eq.s32.totalorder %s37, 1
      %p133 = por %p131, %p132
      %p135 = scmp.ne.s32.totalorder %s120, %s134
      %p136 = scmp.eq.s32.totalorder %s37, 0
      %p137 = por %p135, %p136
      %s139 = sadd.s32 %s138, 1
      %p142 = scmp.eq.s32.totalorder %s31, 1
      %p143 = scmp.ne.s32.totalorder %s138, %s140
      %p144 = scmp.eq.s32.totalorder %s31, 0
      %p145 = por %p143, %p144
      %p146 = scmp.ne.s32.totalorder %s138, %s140
      %p147 = scmp.eq.s32.totalorder %s36, 1
      %p148 = por %p146, %p147
      %p149 = scmp.ne.s32.totalorder %s140, %s141
      %p150 = scmp.eq.s32.totalorder %s36, 0
      %p151 = por %p149, %p150
      %p152 = scmp.ne.s32.totalorder %s140, %s141
      %p153 = scmp.eq.s32.totalorder %s37, 1
      %p154 = por %p152, %p153
      %p156 = scmp.ne.s32.totalorder %s141, %s155
      %p157 = scmp.eq.s32.totalorder %s37, 0
      %p158 = por %p156, %p157
      %s160 = sadd.s32 %s159, 1
      %p163 = scmp.eq.s32.totalorder %s31, 1
      %p164 = scmp.ne.s32.totalorder %s159, %s161
      %p165 = scmp.eq.s32.totalorder %s31, 0
      %p166 = por %p164, %p165
      %p167 = scmp.ne.s32.totalorder %s159, %s161
      %p168 = scmp.eq.s32.totalorder %s36, 1
      %p169 = por %p167, %p168
      %p170 = scmp.ne.s32.totalorder %s161, %s162
      %p171 = scmp.eq.s32.totalorder %s36, 0
      %p172 = por %p170, %p171
      %p173 = scmp.ne.s32.totalorder %s161, %s162
      %p174 = scmp.eq.s32.totalorder %s37, 1
      %p175 = por %p173, %p174
      %p177 = scmp.ne.s32.totalorder %s162, %s176
      %p178 = scmp.eq.s32.totalorder %s37, 0
      %p179 = por %p177, %p178
      %s181 = sadd.s32 %s180, 1
      %p184 = scmp.eq.s32.totalorder %s31, 1
      %p185 = scmp.ne.s32.totalorder %s180, %s182
      %p186 = scmp.eq.s32.totalorder %s31, 0
      %p187 = por %p185, %p186
      %p188 = scmp.ne.s32.totalorder %s180, %s182
      %p189 = scmp.eq.s32.totalorder %s36, 1
      %p190 = por %p188, %p189
      %p191 = scmp.ne.s32.totalorder %s182, %s183
      %p192 = scmp.eq.s32.totalorder %s36, 0
      %p193 = por %p191, %p192
      %p194 = scmp.ne.s32.totalorder %s182, %s183
      %p195 = scmp.eq.s32.totalorder %s37, 1
      %p196 = por %p194, %p195
      %p198 = scmp.ne.s32.totalorder %s183, %s197
      %p199 = scmp.eq.s32.totalorder %s37, 0
      %p200 = por %p198, %p199
      %s202 = sadd.s32 %s201, 1
      %p205 = scmp.eq.s32.totalorder %s31, 1
      %p206 = scmp.ne.s32.totalorder %s201, %s203
      %p207 = scmp.eq.s32.totalorder %s31, 0
      %p208 = por %p206, %p207
      %p209 = scmp.ne.s32.totalorder %s201, %s203
      %p210 = scmp.eq.s32.totalorder %s36, 1
      %p211 = por %p209, %p210
      %p212 = scmp.ne.s32.totalorder %s203, %s204
      %p213 = scmp.eq.s32.totalorder %s36, 0
      %p214 = por %p212, %p213
      %p215 = scmp.ne.s32.totalorder %s203, %s204
      %p216 = scmp.eq.s32.totalorder %s37, 1
      %p217 = por %p215, %p216
      %p219 = scmp.ne.s32.totalorder %s204, %s218
      %p220 = scmp.eq.s32.totalorder %s37, 0
      %p221 = por %p219, %p220
      %s223 = sadd.s32 %s222, 1
      %p226 = scmp.eq.s32.totalorder %s31, 1
      %p227 = scmp.ne.s32.totalorder %s222, %s224
      %p228 = scmp.eq.s32.totalorder %s31, 0
      %p229 = por %p227, %p228
      %p230 = scmp.ne.s32.totalorder %s222, %s224
      %p231 = scmp.eq.s32.totalorder %s36, 1
      %p232 = por %p230, %p231
      %p233 = scmp.ne.s32.totalorder %s224, %s225
      %p234 = scmp.eq.s32.totalorder %s36, 0
      %p235 = por %p233, %p234
      %p236 = scmp.ne.s32.totalorder %s224, %s225
      %p237 = scmp.eq.s32.totalorder %s37, 1
      %p238 = por %p236, %p237
      %p240 = scmp.ne.s32.totalorder %s225, %s239
      %p241 = scmp.eq.s32.totalorder %s37, 0
      %p242 = por %p240, %p241
      %s244 = sadd.s32 %s243, 1
      %p247 = scmp.eq.s32.totalorder %s31, 1
      %p248 = scmp.ne.s32.totalorder %s243, %s245
      %p249 = scmp.eq.s32.totalorder %s31, 0
      %p250 = por %p248, %p249
      %p251 = scmp.ne.s32.totalorder %s243, %s245
      %p252 = scmp.eq.s32.totalorder %s36, 1
      %p253 = por %p251, %p252
      %p254 = scmp.ne.s32.totalorder %s245, %s246
      %p255 = scmp.eq.s32.totalorder %s36, 0
      %p256 = por %p254, %p255
      %p257 = scmp.ne.s32.totalorder %s245, %s246
      %p258 = scmp.eq.s32.totalorder %s37, 1
      %p259 = por %p257, %p258
      %p261 = scmp.ne.s32.totalorder %s246, %s260
      %p262 = scmp.eq.s32.totalorder %s37, 0
      %p263 = por %p261, %p262
      %s265 = sadd.s32 %s264, 1
      %p268 = scmp.eq.s32.totalorder %s31, 1
      %p269 = scmp.ne.s32.totalorder %s264, %s266
      %p270 = scmp.eq.s32.totalorder %s31, 0
      %p271 = por %p269, %p270
      %p272 = scmp.ne.s32.totalorder %s264, %s266
      %p273 = scmp.eq.s32.totalorder %s36, 1
      %p274 = por %p272, %p273
      %p275 = scmp.ne.s32.totalorder %s266, %s267
      %p276 = scmp.eq.s32.totalorder %s36, 0
      %p277 = por %p275, %p276
      %p278 = scmp.ne.s32.totalorder %s266, %s267
      %p279 = scmp.eq.s32.totalorder %s37, 1
      %p280 = por %p278, %p279
      %p282 = scmp.ne.s32.totalorder %s267, %s281
      %p283 = scmp.eq.s32.totalorder %s37, 0
      %p284 = por %p282, %p283
      %s286 = sadd.s32 %s285, 1
      %p289 = scmp.eq.s32.totalorder %s31, 1
      %p290 = scmp.ne.s32.totalorder %s285, %s287
      %p291 = scmp.eq.s32.totalorder %s31, 0
      %p292 = por %p290, %p291
      %p293 = scmp.ne.s32.totalorder %s285, %s287
      %p294 = scmp.eq.s32.totalorder %s36, 1
      %p295 = por %p293, %p294
      %p296 = scmp.ne.s32.totalorder %s287, %s288
      %p297 = scmp.eq.s32.totalorder %s36, 0
      %p298 = por %p296, %p297
      %p299 = scmp.ne.s32.totalorder %s287, %s288
      %p300 = scmp.eq.s32.totalorder %s37, 1
      %p301 = por %p299, %p300
      %p303 = scmp.ne.s32.totalorder %s288, %s302
      %p304 = scmp.eq.s32.totalorder %s37, 0
      %p305 = por %p303, %p304
      %s306 = ssub.s32 %s31, %s38
      %p307 = scmp.eq.s32.totalorder %s306, 0
      %s309 = sadd.s32 %s308, 1
      %s310 = scalar_select %p307, %s308, %s309
      %p313 = pneg %p307
      %p314 = scmp.eq.s32.totalorder %s31, 1
      %p315 = por %p313, %p314
      %p316 = scmp.ne.s32.totalorder %s308, %s311
      %p317 = scmp.eq.s32.totalorder %s31, 0
      %p318 = por %p316, %p317
      %p319 = scmp.ne.s32.totalorder %s308, %s311
      %p320 = scmp.eq.s32.totalorder %s36, 1
      %p321 = por %p319, %p320
      %p322 = scmp.ne.s32.totalorder %s311, %s312
      %p323 = scmp.eq.s32.totalorder %s36, 0
      %p324 = por %p322, %p323
      %p325 = scmp.ne.s32.totalorder %s311, %s312
      %p326 = scmp.eq.s32.totalorder %s37, 1
      %p327 = por %p325, %p326
      %p329 = scmp.ne.s32.totalorder %s312, %s328
      %p330 = scmp.eq.s32.totalorder %s37, 0
      %p331 = por %p329, %p330
      %p332 = scmp.le.s32.totalorder 1, %s31
      %p333 = scmp.lt.s32.totalorder %s31, 3
      %p334 = pnand %p332, %p333
      %p335 = pneg %p334
      // Predicated region
      $region9: #{tpu_custom_call.1} parent=5 // pred_check
        _
      $region10: #{tpu_custom_call.1} parent=5 // pred_check_branch
        %337 = sbr.rel (%p334) target = $region12
      $region11: #{tpu_custom_call.1} parent=5 // pred_region
        %s338 = ssub.s32 %s31, 1
        // Predicated region
        $region13: #{tpu_custom_call.1} parent=11 // pred_check
          %p339 = pneg %p130
        $region14: #{tpu_custom_call.1} parent=11 // pred_check_branch
          %341 = sbr.rel (%p339) target = $region16
        $region15: #{tpu_custom_call.1} parent=11 // pred_region
          %s343 = ssub.s32 1024, 1024
          %344 = vsyncadd [#allocation13], %s343
          %s345 = sshll.u32 [#allocation12], 4
          %s346 = int_to_ptr.vmem [resolvable:$true] %s345
          %351 = dma.hbm_to_vmem [thread:$0]  %s3, 1024, %s346, [#allocation13], 64, 64, 4
        $region16: #{tpu_custom_call.1} parent=11 // pred_fallthru
          _
        // Predicated region
        $region17: #{tpu_custom_call.1} parent=11 // pred_check
          %p352 = pneg %p151
        $region18: #{tpu_custom_call.1} parent=11 // pred_check_branch
          %354 = sbr.rel (%p352) target = $region20
        $region19: #{tpu_custom_call.1} parent=11 // pred_region
          %s356 = ssub.s32 1024, 1024
          %357 = vsyncadd [#allocation13], %s356
          %s358 = sshll.u32 [#allocation14], 4
          %s359 = int_to_ptr.vmem [resolvable:$true] %s358
          %364 = dma.hbm_to_vmem [thread:$0]  %s4, 1024, %s359, [#allocation13], 64, 64, 4
        $region20: #{tpu_custom_call.1} parent=11 // pred_fallthru
          _
        // Predicated region
        $region21: #{tpu_custom_call.1} parent=11 // pred_check
          %p365 = pneg %p172
        $region22: #{tpu_custom_call.1} parent=11 // pred_check_branch
          %367 = sbr.rel (%p365) target = $region24
        $region23: #{tpu_custom_call.1} parent=11 // pred_region
          %s369 = ssub.s32 1024, 1024
          %370 = vsyncadd [#allocation16], %s369
          %s371 = sshll.u32 [#allocation15], 4
          %s372 = int_to_ptr.vmem [resolvable:$true] %s371
          %377 = dma.hbm_to_vmem [thread:$0]  %s5, 1024, %s372, [#allocation16], 64, 64, 4
        $region24: #{tpu_custom_call.1} parent=11 // pred_fallthru
          _
        // Predicated region
        $region25: #{tpu_custom_call.1} parent=11 // pred_check
          %p378 = pneg %p193
        $region26: #{tpu_custom_call.1} parent=11 // pred_check_branch
          %380 = sbr.rel (%p378) target = $region28
        $region27: #{tpu_custom_call.1} parent=11 // pred_region
          %s382 = ssub.s32 1024, 1024
          %383 = vsyncadd [#allocation16], %s382
          %s384 = sshll.u32 [#allocation17], 4
          %s385 = int_to_ptr.vmem [resolvable:$true] %s384
          %390 = dma.hbm_to_vmem [thread:$0]  %s6, 1024, %s385, [#allocation16], 64, 64, 4
        $region28: #{tpu_custom_call.1} parent=11 // pred_fallthru
          _
        // Predicated region
        $region29: #{tpu_custom_call.1} parent=11 // pred_check
          %p391 = pneg %p214
        $region30: #{tpu_custom_call.1} parent=11 // pred_check_branch
          %393 = sbr.rel (%p391) target = $region32
        $region31: #{tpu_custom_call.1} parent=11 // pred_region
          %s395 = ssub.s32 1024, 1024
          %396 = vsyncadd [#allocation19], %s395
          %s397 = sshll.u32 [#allocation18], 4
          %s398 = int_to_ptr.vmem [resolvable:$true] %s397
          %403 = dma.hbm_to_vmem [thread:$0]  %s7, 1024, %s398, [#allocation19], 64, 64, 4
        $region32: #{tpu_custom_call.1} parent=11 // pred_fallthru
          _
        // Predicated region
        $region33: #{tpu_custom_call.1} parent=11 // pred_check
          %p404 = pneg %p235
        $region34: #{tpu_custom_call.1} parent=11 // pred_check_branch
          %406 = sbr.rel (%p404) target = $region36
        $region35: #{tpu_custom_call.1} parent=11 // pred_region
          %s408 = ssub.s32 1024, 1024
          %409 = vsyncadd [#allocation19], %s408
          %s410 = sshll.u32 [#allocation20], 4
          %s411 = int_to_ptr.vmem [resolvable:$true] %s410
          %416 = dma.hbm_to_vmem [thread:$0]  %s8, 1024, %s411, [#allocation19], 64, 64, 4
        $region36: #{tpu_custom_call.1} parent=11 // pred_fallthru
          _
        // Predicated region
        $region37: #{tpu_custom_call.1} parent=11 // pred_check
          %p417 = pneg %p256
        $region38: #{tpu_custom_call.1} parent=11 // pred_check_branch
          %419 = sbr.rel (%p417) target = $region40
        $region39: #{tpu_custom_call.1} parent=11 // pred_region
          _
        $region40: #{tpu_custom_call.1} parent=11 // pred_fallthru
          _
        // Predicated region
        $region41: #{tpu_custom_call.1} parent=11 // pred_check
          %p420 = pneg %p277
        $region42: #{tpu_custom_call.1} parent=11 // pred_check_branch
          %422 = sbr.rel (%p420) target = $region44
        $region43: #{tpu_custom_call.1} parent=11 // pred_region
          _
        $region44: #{tpu_custom_call.1} parent=11 // pred_fallthru
          _
        // Predicated region
        $region45: #{tpu_custom_call.1} parent=11 // pred_check
          %p423 = pneg %p298
        $region46: #{tpu_custom_call.1} parent=11 // pred_check_branch
          %425 = sbr.rel (%p423) target = $region48
        $region47: #{tpu_custom_call.1} parent=11 // pred_region
          %s427 = ssub.s32 32, 32
          %428 = vsyncadd [#allocation8], %s427
          %s430 = sshll.u32 %s11, 4
          %s431 = int_to_ptr.vmem [resolvable:$true] %s430
          %433 = dma.vmem_to_smem %s431, 32, [#allocation21], [#allocation8]
        $region48: #{tpu_custom_call.1} parent=11 // pred_fallthru
          _
      $region12: #{tpu_custom_call.1} parent=5 // pred_fallthru
        _
      %p434 = scmp.lt.s32.totalorder %s31, 2
      // Predicated region
      $region49: #{tpu_custom_call.1} parent=5 // pred_check
        %p435 = pneg %p434
      $region50: #{tpu_custom_call.1} parent=5 // pred_check_branch
        %437 = sbr.rel (%p435) target = $region52
      $region51: #{tpu_custom_call.1} parent=5 // pred_region
        // Predicated region
        $region53: #{tpu_custom_call.1} parent=51 // pred_check
          %p438 = pneg %p51
        $region54: #{tpu_custom_call.1} parent=51 // pred_check_branch
          %440 = sbr.rel (%p438) target = $region56
        $region55: #{tpu_custom_call.1} parent=51 // pred_region
          %s441 = sand.u32 %s41, 1
          %s442 = scalar_lea.sflag [#allocation6], %s441
          %s443 = sand.u32 %s41, 1
          %s444 = smul.addr %s443, 4
          %s445 = scalar_lea.vmem [#allocation5], %s444
          %s447 = ssub.s32 64, 64
          %448 = vsyncadd %s442, %s447
          %s449 = smul.addr %s31, 64
          %s450 = scalar_lea.hbm %s0, %s449
          %s452 = sshll.u32 %s445, 4
          %s453 = int_to_ptr.vmem [resolvable:$true] %s452
          %455 = dma.hbm_to_vmem [thread:$0]  %s450, 64, %s453, %s442
        $region56: #{tpu_custom_call.1} parent=51 // pred_fallthru
          _
        // Predicated region
        $region57: #{tpu_custom_call.1} parent=51 // pred_check
          %p456 = pneg %p77
        $region58: #{tpu_custom_call.1} parent=51 // pred_check_branch
          %458 = sbr.rel (%p456) target = $region60
        $region59: #{tpu_custom_call.1} parent=51 // pred_region
          %s459 = sand.u32 %s31, 1
          %s460 = scalar_lea.sflag [#allocation10], %s459
          %s461 = sand.u32 %s67, 1
          %s462 = smul.addr %s461, 64
          %s463 = scalar_lea.vmem [#allocation9], %s462
          %s465 = ssub.s32 1024, 1024
          %466 = vsyncadd %s460, %s465
          %s467 = smul.addr %s31, 16
          %s468 = smul.addr %s467, 64
          %s469 = scalar_lea.hbm %s1, %s468
          %s470 = sshll.u32 %s463, 4
          %s471 = int_to_ptr.vmem [resolvable:$true] %s470
          %476 = dma.hbm_to_vmem [thread:$0]  %s469, 1024, %s471, %s460, 64, 64, 4
        $region60: #{tpu_custom_call.1} parent=51 // pred_fallthru
          _
        // Predicated region
        $region61: #{tpu_custom_call.1} parent=51 // pred_check
          %p477 = pneg %p103
        $region62: #{tpu_custom_call.1} parent=51 // pred_check_branch
          %479 = sbr.rel (%p477) target = $region64
        $region63: #{tpu_custom_call.1} parent=51 // pred_region
          %s480 = sand.u32 %s31, 1
          %s481 = scalar_lea.sflag [#allocation10], %s480
          %s482 = sand.u32 %s93, 1
          %s483 = smul.addr %s482, 8
          %s484 = scalar_lea.vmem [#allocation11], %s483
          %s486 = ssub.s32 128, 128
          %487 = vsyncadd %s481, %s486
          %s488 = smul.addr %s31, 128
          %s489 = scalar_lea.hbm %s2, %s488
          %s491 = sshll.u32 %s484, 4
          %s492 = int_to_ptr.vmem [resolvable:$true] %s491
          %494 = dma.hbm_to_vmem [thread:$0]  %s489, 128, %s492, %s481
        $region64: #{tpu_custom_call.1} parent=51 // pred_fallthru
          _
      $region52: #{tpu_custom_call.1} parent=5 // pred_fallthru
        _
      %p495 = scmp.le.s32.totalorder 1, %s31
      %p496 = scmp.lt.s32.totalorder %s31, 3
      %p497 = pnand %p495, %p496
      %p498 = pneg %p497
      // Predicated region
      $region65: #{tpu_custom_call.1} parent=5 // pred_check
        _
      $region66: #{tpu_custom_call.1} parent=5 // pred_check_branch
        %500 = sbr.rel (%p497) target = $region68
      $region67: #{tpu_custom_call.1} parent=5 // pred_region
        %s501 = ssub.s32 %s31, 1
        %s502 = sand.u32 %s44, 1
        %s503 = scalar_lea.sflag [#allocation6], %s502
        %s504 = sand.u32 %s44, 1
        %s505 = smul.addr %s504, 4
        %s506 = scalar_lea.vmem [#allocation5], %s505
        // Predicated region
        $region69: #{tpu_custom_call.1} parent=67 // pred_check
          %p507 = pneg %p57
        $region70: #{tpu_custom_call.1} parent=67 // pred_check_branch
          %509 = sbr.rel (%p507) target = $region72
        $region71: #{tpu_custom_call.1} parent=67 // pred_region
          %510 = dma.done %s503, 64
        $region72: #{tpu_custom_call.1} parent=67 // pred_fallthru
          _
        %s511 = sand.u32 %s36, 1
        %s512 = scalar_lea.sflag [#allocation10], %s511
        %s513 = sand.u32 %s70, 1
        %s514 = smul.addr %s513, 64
        %s515 = scalar_lea.vmem [#allocation9], %s514
        // Predicated region
        $region73: #{tpu_custom_call.1} parent=67 // pred_check
          %p516 = pneg %p83
        $region74: #{tpu_custom_call.1} parent=67 // pred_check_branch
          %518 = sbr.rel (%p516) target = $region76
        $region75: #{tpu_custom_call.1} parent=67 // pred_region
          %519 = dma.done %s512, 1024
        $region76: #{tpu_custom_call.1} parent=67 // pred_fallthru
          _
        %s520 = sand.u32 %s36, 1
        %s521 = scalar_lea.sflag [#allocation10], %s520
        %s522 = sand.u32 %s96, 1
        %s523 = smul.addr %s522, 8
        %s524 = scalar_lea.vmem [#allocation11], %s523
        // Predicated region
        $region77: #{tpu_custom_call.1} parent=67 // pred_check
          %p525 = pneg %p109
        $region78: #{tpu_custom_call.1} parent=67 // pred_check_branch
          %527 = sbr.rel (%p525) target = $region80
        $region79: #{tpu_custom_call.1} parent=67 // pred_region
          %528 = dma.done %s521, 128
        $region80: #{tpu_custom_call.1} parent=67 // pred_fallthru
          _
        // Predicated region
        $region81: #{tpu_custom_call.1} parent=67 // pred_check
          %p529 = pneg %p130
        $region82: #{tpu_custom_call.1} parent=67 // pred_check_branch
          %531 = sbr.rel (%p529) target = $region84
        $region83: #{tpu_custom_call.1} parent=67 // pred_region
          %532 = dma.done [#allocation13], 1024
        $region84: #{tpu_custom_call.1} parent=67 // pred_fallthru
          _
        // Predicated region
        $region85: #{tpu_custom_call.1} parent=67 // pred_check
          %p533 = pneg %p151
        $region86: #{tpu_custom_call.1} parent=67 // pred_check_branch
          %535 = sbr.rel (%p533) target = $region88
        $region87: #{tpu_custom_call.1} parent=67 // pred_region
          %536 = dma.done [#allocation13], 1024
        $region88: #{tpu_custom_call.1} parent=67 // pred_fallthru
          _
        // Predicated region
        $region89: #{tpu_custom_call.1} parent=67 // pred_check
          %p537 = pneg %p172
        $region90: #{tpu_custom_call.1} parent=67 // pred_check_branch
          %539 = sbr.rel (%p537) target = $region92
        $region91: #{tpu_custom_call.1} parent=67 // pred_region
          %540 = dma.done [#allocation16], 1024
        $region92: #{tpu_custom_call.1} parent=67 // pred_fallthru
          _
        // Predicated region
        $region93: #{tpu_custom_call.1} parent=67 // pred_check
          %p541 = pneg %p193
        $region94: #{tpu_custom_call.1} parent=67 // pred_check_branch
          %543 = sbr.rel (%p541) target = $region96
        $region95: #{tpu_custom_call.1} parent=67 // pred_region
          %544 = dma.done [#allocation16], 1024
        $region96: #{tpu_custom_call.1} parent=67 // pred_fallthru
          _
        // Predicated region
        $region97: #{tpu_custom_call.1} parent=67 // pred_check
          %p545 = pneg %p214
        $region98: #{tpu_custom_call.1} parent=67 // pred_check_branch
          %547 = sbr.rel (%p545) target = $region100
        $region99: #{tpu_custom_call.1} parent=67 // pred_region
          %548 = dma.done [#allocation19], 1024
        $region100: #{tpu_custom_call.1} parent=67 // pred_fallthru
          _
        // Predicated region
        $region101: #{tpu_custom_call.1} parent=67 // pred_check
          %p549 = pneg %p235
        $region102: #{tpu_custom_call.1} parent=67 // pred_check_branch
          %551 = sbr.rel (%p549) target = $region104
        $region103: #{tpu_custom_call.1} parent=67 // pred_region
          %552 = dma.done [#allocation19], 1024
        $region104: #{tpu_custom_call.1} parent=67 // pred_fallthru
          _
        // Predicated region
        $region105: #{tpu_custom_call.1} parent=67 // pred_check
          %p553 = pneg %p298
        $region106: #{tpu_custom_call.1} parent=67 // pred_check_branch
          %555 = sbr.rel (%p553) target = $region108
        $region107: #{tpu_custom_call.1} parent=67 // pred_region
          %556 = dma.done [#allocation8], 32
        $region108: #{tpu_custom_call.1} parent=67 // pred_fallthru
          _
        %557 = sfence
        %s558 = sand.u32 %s44, 1
        %s559 = scalar_lea.sflag [#allocation6], %s558
        %s560 = sand.u32 %s44, 1
        %s561 = smul.addr %s560, 4
        %s562 = scalar_lea.vmem [#allocation5], %s561
        %p563 = pneg %p57
        %p564 = pneg %p54
        %s565 = sand.u32 %s36, 1
        %s566 = scalar_lea.sflag [#allocation10], %s565
        %s567 = sand.u32 %s70, 1
        %s568 = smul.addr %s567, 64
        %s569 = scalar_lea.vmem [#allocation9], %s568
        %p570 = pneg %p83
        %p571 = pneg %p80
        %s572 = sand.u32 %s36, 1
        %s573 = scalar_lea.sflag [#allocation10], %s572
        %s574 = sand.u32 %s96, 1
        %s575 = smul.addr %s574, 8
        %s576 = scalar_lea.vmem [#allocation11], %s575
        %p577 = pneg %p109
        %p578 = pneg %p106
        %p579 = pneg %p130
        %p580 = pneg %p127
        %p581 = pneg %p151
        %p582 = pneg %p148
        %p583 = pneg %p172
        %p584 = pneg %p169
        %p585 = pneg %p193
        %p586 = pneg %p190
        %p587 = pneg %p214
        %p588 = pneg %p211
        %p589 = pneg %p235
        %p590 = pneg %p232
        %p591 = pneg %p256
        %p592 = pneg %p253
        %p593 = pneg %p277
        %p594 = pneg %p274
        %p595 = pneg %p298
        %p596 = pneg %p295
        %p597 = pneg %p324
        %p598 = pneg %p321
        %s599 = sand.u32 %s311, 1
        %s600 = scalar_lea.sflag [#allocation7], %s599
        %s601 = sand.u32 %s311, 1
        %s602 = smul.addr %s601, 8
        %s603 = scalar_lea.vmem [#allocation22], %s602
        %v605 = vld [vmem:[%s9] sm:$0xff]
        %v606 = vld [vmem:[%s10] sm:$0x1]
        %v607 = vlaneseq
        %v608 = vand.u32 %v607, 127
        %vm609 = vcmp.lt.s32.totalorder %v608, 16
        %v610 = vld [vmem:[%s506] sm:$0xf]
        %v611 = vld [vmem:[#allocation12] sm:$0xf]
        %v612 = vld [vmem:[#allocation12 + $0x4] sm:$0xf]
        %v613 = vld [vmem:[#allocation12 + $0x8] sm:$0xf]
        %v614 = vld [vmem:[#allocation12 + $0xc] sm:$0xf]
        %v615 = vld [vmem:[#allocation12 + $0x10] sm:$0xf]
        %v616 = vld [vmem:[#allocation12 + $0x14] sm:$0xf]
        %v617 = vld [vmem:[#allocation12 + $0x18] sm:$0xf]
        %v618 = vld [vmem:[#allocation12 + $0x1c] sm:$0xf]
        %v619 = vld [vmem:[#allocation12 + $0x20] sm:$0xf]
        %v620 = vld [vmem:[#allocation12 + $0x24] sm:$0xf]
        %v621 = vld [vmem:[#allocation12 + $0x28] sm:$0xf]
        %v622 = vld [vmem:[#allocation12 + $0x2c] sm:$0xf]
        %v623 = vld [vmem:[#allocation12 + $0x30] sm:$0xf]
        %v624 = vld [vmem:[#allocation12 + $0x34] sm:$0xf]
        %v625 = vld [vmem:[#allocation12 + $0x38] sm:$0xf]
        %v626 = vld [vmem:[#allocation12 + $0x3c] sm:$0xf]
        %v643 = vunpack.c.l.b16 %v611
        %v644 = vunpack.c.l.b16 %v612
        %v645 = vunpack.c.l.b16 %v613
        %v646 = vunpack.c.l.b16 %v614
        %v647 = vunpack.c.l.b16 %v615
        %v648 = vunpack.c.l.b16 %v616
        %v649 = vunpack.c.l.b16 %v617
        %v650 = vunpack.c.l.b16 %v618
        %v651 = vunpack.c.l.b16 %v619
        %v652 = vunpack.c.l.b16 %v620
        %v653 = vunpack.c.l.b16 %v621
        %v654 = vunpack.c.l.b16 %v622
        %v655 = vunpack.c.l.b16 %v623
        %v656 = vunpack.c.l.b16 %v624
        %v657 = vunpack.c.l.b16 %v625
        %v658 = vunpack.c.l.b16 %v626
        %v659 = vpack.c.b16 %v644, %v643
        %v660 = vpack.c.b16 %v646, %v645
        %v661 = vpack.c.b16 %v648, %v647
        %v662 = vpack.c.b16 %v650, %v649
        %v663 = vpack.c.b16 %v652, %v651
        %v664 = vpack.c.b16 %v654, %v653
        %v665 = vpack.c.b16 %v656, %v655
        %v666 = vpack.c.b16 %v658, %v657
        %675 = vmatprep.subr.bf16.mxu0 0
        %676 = vmatpush1.bf16.msra.mxu0 %v666
        %677 = vmatprep.subr.bf16.mxu0 0
        %678 = vmatpush1.bf16.msra.mxu0 %v665
        %679 = vmatprep.subr.bf16.mxu0 0
        %680 = vmatpush1.bf16.msra.mxu0 %v664
        %681 = vmatprep.subr.bf16.mxu0 0
        %682 = vmatpush1.bf16.msra.mxu0 %v663
        %683 = vmatprep.subr.bf16.mxu0 0
        %684 = vmatpush1.bf16.msra.mxu0 %v662
        %685 = vmatprep.subr.bf16.mxu0 0
        %686 = vmatpush1.bf16.msra.mxu0 %v661
        %687 = vmatprep.subr.bf16.mxu0 0
        %688 = vmatpush1.bf16.msra.mxu0 %v660
        %689 = vmatprep.subr.bf16.mxu0 0
        %690 = vmatpush1.bf16.msra.mxu0 %v659
        %691 = vmatprep.subr.bf16.mxu0 0
        %692 = vmatpush2.bf16.msra.mxu0 0
        %693 = vmatprep.subr.bf16.mxu0 0
        %694 = vmatpush2.bf16.msra.mxu0 0
        %695 = vmatprep.subr.bf16.mxu0 0
        %696 = vmatpush2.bf16.msra.mxu0 0
        %697 = vmatprep.subr.bf16.mxu0 0
        %698 = vmatpush2.bf16.msra.mxu0 0
        %699 = vmatprep.subr.bf16.mxu0 0
        %700 = vmatpush2.bf16.msra.mxu0 0
        %701 = vmatprep.subr.bf16.mxu0 0
        %702 = vmatpush2.bf16.msra.mxu0 0
        %703 = vmatprep.subr.bf16.mxu0 0
        %704 = vmatpush2.bf16.msra.mxu0 0
        %705 = vmatprep.subr.bf16.mxu0 0
        %706 = vmatpush2.bf16.msra.mxu0 0
        %707 = vmatprep.mubr.bf16.mxu0 0
        %708 = vmatmul.mubr.bf16.gmra.mxu0 %v610
        %v709 = vpop.f32.mrf.mxu0
        %v710 = vadd.f32 0.0, %v709
        %v711 = vpop.f32.mrf.mxu0
        %v712 = vpop.f32.mrf.mxu0
        %v713 = vpop.f32.mrf.mxu0
        %714 = vdwg.mxu0
        %715 = vst [vmem:[#allocation2] sm:$0xff] %v710
        %v716 = vld [vmem:[%s515] sm:$0xf]
        %v717 = vld [vmem:[%s515 + $0x4] sm:$0xf]
        %v718 = vld [vmem:[%s515 + $0x8] sm:$0xf]
        %v719 = vld [vmem:[%s515 + $0xc] sm:$0xf]
        %v720 = vld [vmem:[%s515 + $0x10] sm:$0xf]
        %v721 = vld [vmem:[%s515 + $0x14] sm:$0xf]
        %v722 = vld [vmem:[%s515 + $0x18] sm:$0xf]
        %v723 = vld [vmem:[%s515 + $0x1c] sm:$0xf]
        %v724 = vld [vmem:[%s515 + $0x20] sm:$0xf]
        %v725 = vld [vmem:[%s515 + $0x24] sm:$0xf]
        %v726 = vld [vmem:[%s515 + $0x28] sm:$0xf]
        %v727 = vld [vmem:[%s515 + $0x2c] sm:$0xf]
        %v728 = vld [vmem:[%s515 + $0x30] sm:$0xf]
        %v729 = vld [vmem:[%s515 + $0x34] sm:$0xf]
        %v730 = vld [vmem:[%s515 + $0x38] sm:$0xf]
        %v731 = vld [vmem:[%s515 + $0x3c] sm:$0xf]
        %v732 = vld [vmem:[#allocation14] sm:$0xf]
        %v733 = vld [vmem:[#allocation14 + $0x4] sm:$0xf]
        %v734 = vld [vmem:[#allocation14 + $0x8] sm:$0xf]
        %v735 = vld [vmem:[#allocation14 + $0xc] sm:$0xf]
        %v736 = vld [vmem:[#allocation14 + $0x10] sm:$0xf]
        %v737 = vld [vmem:[#allocation14 + $0x14] sm:$0xf]
        %v738 = vld [vmem:[#allocation14 + $0x18] sm:$0xf]
        %v739 = vld [vmem:[#allocation14 + $0x1c] sm:$0xf]
        %v740 = vld [vmem:[#allocation14 + $0x20] sm:$0xf]
        %v741 = vld [vmem:[#allocation14 + $0x24] sm:$0xf]
        %v742 = vld [vmem:[#allocation14 + $0x28] sm:$0xf]
        %v743 = vld [vmem:[#allocation14 + $0x2c] sm:$0xf]
        %v744 = vld [vmem:[#allocation14 + $0x30] sm:$0xf]
        %v745 = vld [vmem:[#allocation14 + $0x34] sm:$0xf]
        %v746 = vld [vmem:[#allocation14 + $0x38] sm:$0xf]
        %v747 = vld [vmem:[#allocation14 + $0x3c] sm:$0xf]
        %v764 = vunpack.c.l.b16 %v732
        %v765 = vunpack.c.l.b16 %v733
        %v766 = vunpack.c.l.b16 %v734
        %v767 = vunpack.c.l.b16 %v735
        %v768 = vunpack.c.l.b16 %v736
        %v769 = vunpack.c.l.b16 %v737
        %v770 = vunpack.c.l.b16 %v738
        %v771 = vunpack.c.l.b16 %v739
        %v772 = vunpack.c.l.b16 %v740
        %v773 = vunpack.c.l.b16 %v741
        %v774 = vunpack.c.l.b16 %v742
        %v775 = vunpack.c.l.b16 %v743
        %v776 = vunpack.c.l.b16 %v744
        %v777 = vunpack.c.l.b16 %v745
        %v778 = vunpack.c.l.b16 %v746
        %v779 = vunpack.c.l.b16 %v747
        %v780 = vpack.c.b16 %v765, %v764
        %v781 = vpack.c.b16 %v767, %v766
        %v782 = vpack.c.b16 %v769, %v768
        %v783 = vpack.c.b16 %v771, %v770
        %v784 = vpack.c.b16 %v773, %v772
        %v785 = vpack.c.b16 %v775, %v774
        %v786 = vpack.c.b16 %v777, %v776
        %v787 = vpack.c.b16 %v779, %v778
        %v812 = vunpack.c.l.b16 %v716
        %v813 = vunpack.c.l.b16 %v717
        %v814 = vunpack.c.l.b16 %v718
        %v815 = vunpack.c.l.b16 %v719
        %v816 = vunpack.c.l.b16 %v720
        %v817 = vunpack.c.l.b16 %v721
        %v818 = vunpack.c.l.b16 %v722
        %v819 = vunpack.c.l.b16 %v723
        %v820 = vunpack.c.l.b16 %v724
        %v821 = vunpack.c.l.b16 %v725
        %v822 = vunpack.c.l.b16 %v726
        %v823 = vunpack.c.l.b16 %v727
        %v824 = vunpack.c.l.b16 %v728
        %v825 = vunpack.c.l.b16 %v729
        %v826 = vunpack.c.l.b16 %v730
        %v827 = vunpack.c.l.b16 %v731
        %v828 = vpack.c.b16 %v813, %v812
        %v829 = vpack.c.b16 %v815, %v814
        %v830 = vpack.c.b16 %v817, %v816
        %v831 = vpack.c.b16 %v819, %v818
        %v832 = vpack.c.b16 %v821, %v820
        %v833 = vpack.c.b16 %v823, %v822
        %v834 = vpack.c.b16 %v825, %v824
        %v835 = vpack.c.b16 %v827, %v826
        %844 = vmatprep.subr.bf16.mxu0 0
        %845 = vmatpush1.bf16.msra.mxu0 %v835
        %846 = vmatprep.subr.bf16.mxu0 0
        %847 = vmatpush1.bf16.msra.mxu0 %v834
        %848 = vmatprep.subr.bf16.mxu0 0
        %849 = vmatpush1.bf16.msra.mxu0 %v833
        %850 = vmatprep.subr.bf16.mxu0 0
        %851 = vmatpush1.bf16.msra.mxu0 %v832
        %852 = vmatprep.subr.bf16.mxu0 0
        %853 = vmatpush1.bf16.msra.mxu0 %v831
        %854 = vmatprep.subr.bf16.mxu0 0
        %855 = vmatpush1.bf16.msra.mxu0 %v830
        %856 = vmatprep.subr.bf16.mxu0 0
        %857 = vmatpush1.bf16.msra.mxu0 %v829
        %858 = vmatprep.subr.bf16.mxu0 0
        %859 = vmatpush1.bf16.msra.mxu0 %v828
        %860 = vmatprep.subr.bf16.mxu0 0
        %861 = vmatpush2.bf16.msra.mxu0 0
        %862 = vmatprep.subr.bf16.mxu0 0
        %863 = vmatpush2.bf16.msra.mxu0 0
        %864 = vmatprep.subr.bf16.mxu0 0
        %865 = vmatpush2.bf16.msra.mxu0 0
        %866 = vmatprep.subr.bf16.mxu0 0
        %867 = vmatpush2.bf16.msra.mxu0 0
        %868 = vmatprep.subr.bf16.mxu0 0
        %869 = vmatpush2.bf16.msra.mxu0 0
        %870 = vmatprep.subr.bf16.mxu0 0
        %871 = vmatpush2.bf16.msra.mxu0 0
        %872 = vmatprep.subr.bf16.mxu0 0
        %873 = vmatpush2.bf16.msra.mxu0 0
        %874 = vmatprep.subr.bf16.mxu0 0
        %875 = vmatpush2.bf16.msra.mxu0 0
        %876 = vmatprep.mubr.bf16.mxu0 0
        %877 = vmatmul.mubr.bf16.gmra.mxu0 %v780
        %v878 = vpop.f32.mrf.mxu0
        %v879 = vadd.f32 0.0, %v878
        %v880 = vpop.f32.mrf.mxu0
        %v881 = vpop.f32.mrf.mxu0
        %v882 = vadd.f32 0.0, %v881
        %v883 = vpop.f32.mrf.mxu0
        %884 = vmatprep.mubr.bf16.mxu0 0
        %885 = vmatmul.mubr.bf16.gmra.mxu0 %v781
        %v886 = vpop.f32.mrf.mxu0
        %v887 = vadd.f32 0.0, %v886
        %v888 = vpop.f32.mrf.mxu0
        %v889 = vpop.f32.mrf.mxu0
        %v890 = vadd.f32 0.0, %v889
        %v891 = vpop.f32.mrf.mxu0
        %892 = vmatprep.mubr.bf16.mxu0 0
        %893 = vmatmul.mubr.bf16.gmra.mxu0 %v782
        %v894 = vpop.f32.mrf.mxu0
        %v895 = vadd.f32 0.0, %v894
        %v896 = vpop.f32.mrf.mxu0
        %v897 = vpop.f32.mrf.mxu0
        %v898 = vadd.f32 0.0, %v897
        %v899 = vpop.f32.mrf.mxu0
        %900 = vmatprep.mubr.bf16.mxu0 0
        %901 = vmatmul.mubr.bf16.gmra.mxu0 %v783
        %v902 = vpop.f32.mrf.mxu0
        %v903 = vadd.f32 0.0, %v902
        %v904 = vpop.f32.mrf.mxu0
        %v905 = vpop.f32.mrf.mxu0
        %v906 = vadd.f32 0.0, %v905
        %v907 = vpop.f32.mrf.mxu0
        %908 = vmatprep.mubr.bf16.mxu0 0
        %909 = vmatmul.mubr.bf16.gmra.mxu0 %v784
        %v910 = vpop.f32.mrf.mxu0
        %v911 = vadd.f32 0.0, %v910
        %v912 = vpop.f32.mrf.mxu0
        %v913 = vpop.f32.mrf.mxu0
        %v914 = vadd.f32 0.0, %v913
        %v915 = vpop.f32.mrf.mxu0
        %916 = vmatprep.mubr.bf16.mxu0 0
        %917 = vmatmul.mubr.bf16.gmra.mxu0 %v785
        %v918 = vpop.f32.mrf.mxu0
        %v919 = vadd.f32 0.0, %v918
        %v920 = vpop.f32.mrf.mxu0
        %v921 = vpop.f32.mrf.mxu0
        %v922 = vadd.f32 0.0, %v921
        %v923 = vpop.f32.mrf.mxu0
        %924 = vmatprep.mubr.bf16.mxu0 0
        %925 = vmatmul.mubr.bf16.gmra.mxu0 %v786
        %v926 = vpop.f32.mrf.mxu0
        %v927 = vadd.f32 0.0, %v926
        %v928 = vpop.f32.mrf.mxu0
        %v929 = vpop.f32.mrf.mxu0
        %v930 = vadd.f32 0.0, %v929
        %v931 = vpop.f32.mrf.mxu0
        %932 = vmatprep.mubr.bf16.mxu0 0
        %933 = vmatmul.mubr.bf16.gmra.mxu0 %v787
        %v934 = vpop.f32.mrf.mxu0
        %v935 = vadd.f32 0.0, %v934
        %v936 = vpop.f32.mrf.mxu0
        %v937 = vpop.f32.mrf.mxu0
        %v938 = vadd.f32 0.0, %v937
        %v939 = vpop.f32.mrf.mxu0
        %940 = vdwg.mxu0
        %941 = vst [vmem:[#allocation3] sm:$0xff] %v879
        %942 = vst [vmem:[#allocation3 + $0x8] sm:$0xff] %v882
        %943 = vst [vmem:[#allocation3 + $0x10] sm:$0xff] %v887
        %944 = vst [vmem:[#allocation3 + $0x18] sm:$0xff] %v890
        %945 = vst [vmem:[#allocation3 + $0x20] sm:$0xff] %v895
        %946 = vst [vmem:[#allocation3 + $0x28] sm:$0xff] %v898
        %947 = vst [vmem:[#allocation3 + $0x30] sm:$0xff] %v903
        %948 = vst [vmem:[#allocation3 + $0x38] sm:$0xff] %v906
        %949 = vst [vmem:[#allocation3 + $0x40] sm:$0xff] %v911
        %950 = vst [vmem:[#allocation3 + $0x48] sm:$0xff] %v914
        %951 = vst [vmem:[#allocation3 + $0x50] sm:$0xff] %v919
        %952 = vst [vmem:[#allocation3 + $0x58] sm:$0xff] %v922
        %953 = vst [vmem:[#allocation3 + $0x60] sm:$0xff] %v927
        %954 = vst [vmem:[#allocation3 + $0x68] sm:$0xff] %v930
        %955 = vst [vmem:[#allocation3 + $0x70] sm:$0xff] %v935
        %956 = vst [vmem:[#allocation3 + $0x78] sm:$0xff] %v938
        %v957 = vld [vmem:[#allocation15] sm:$0xf]
        %v958 = vld [vmem:[#allocation15 + $0x4] sm:$0xf]
        %v959 = vld [vmem:[#allocation15 + $0x8] sm:$0xf]
        %v960 = vld [vmem:[#allocation15 + $0xc] sm:$0xf]
        %v961 = vld [vmem:[#allocation15 + $0x10] sm:$0xf]
        %v962 = vld [vmem:[#allocation15 + $0x14] sm:$0xf]
        %v963 = vld [vmem:[#allocation15 + $0x18] sm:$0xf]
        %v964 = vld [vmem:[#allocation15 + $0x1c] sm:$0xf]
        %v965 = vld [vmem:[#allocation15 + $0x20] sm:$0xf]
        %v966 = vld [vmem:[#allocation15 + $0x24] sm:$0xf]
        %v967 = vld [vmem:[#allocation15 + $0x28] sm:$0xf]
        %v968 = vld [vmem:[#allocation15 + $0x2c] sm:$0xf]
        %v969 = vld [vmem:[#allocation15 + $0x30] sm:$0xf]
        %v970 = vld [vmem:[#allocation15 + $0x34] sm:$0xf]
        %v971 = vld [vmem:[#allocation15 + $0x38] sm:$0xf]
        %v972 = vld [vmem:[#allocation15 + $0x3c] sm:$0xf]
        %v989 = vunpack.c.l.b16 %v957
        %v990 = vunpack.c.l.b16 %v958
        %v991 = vunpack.c.l.b16 %v959
        %v992 = vunpack.c.l.b16 %v960
        %v993 = vunpack.c.l.b16 %v961
        %v994 = vunpack.c.l.b16 %v962
        %v995 = vunpack.c.l.b16 %v963
        %v996 = vunpack.c.l.b16 %v964
        %v997 = vunpack.c.l.b16 %v965
        %v998 = vunpack.c.l.b16 %v966
        %v999 = vunpack.c.l.b16 %v967
        %v1000 = vunpack.c.l.b16 %v968
        %v1001 = vunpack.c.l.b16 %v969
        %v1002 = vunpack.c.l.b16 %v970
        %v1003 = vunpack.c.l.b16 %v971
        %v1004 = vunpack.c.l.b16 %v972
        %v1005 = vpack.c.b16 %v990, %v989
        %v1006 = vpack.c.b16 %v992, %v991
        %v1007 = vpack.c.b16 %v994, %v993
        %v1008 = vpack.c.b16 %v996, %v995
        %v1009 = vpack.c.b16 %v998, %v997
        %v1010 = vpack.c.b16 %v1000, %v999
        %v1011 = vpack.c.b16 %v1002, %v1001
        %v1012 = vpack.c.b16 %v1004, %v1003
        %1021 = vmatprep.subr.bf16.mxu0 0
        %1022 = vmatpush1.bf16.msra.mxu0 %v835
        %1023 = vmatprep.subr.bf16.mxu0 0
        %1024 = vmatpush1.bf16.msra.mxu0 %v834
        %1025 = vmatprep.subr.bf16.mxu0 0
        %1026 = vmatpush1.bf16.msra.mxu0 %v833
        %1027 = vmatprep.subr.bf16.mxu0 0
        %1028 = vmatpush1.bf16.msra.mxu0 %v832
        %1029 = vmatprep.subr.bf16.mxu0 0
        %1030 = vmatpush1.bf16.msra.mxu0 %v831
        %1031 = vmatprep.subr.bf16.mxu0 0
        %1032 = vmatpush1.bf16.msra.mxu0 %v830
        %1033 = vmatprep.subr.bf16.mxu0 0
        %1034 = vmatpush1.bf16.msra.mxu0 %v829
        %1035 = vmatprep.subr.bf16.mxu0 0
        %1036 = vmatpush1.bf16.msra.mxu0 %v828
        %1037 = vmatprep.subr.bf16.mxu0 0
        %1038 = vmatpush2.bf16.msra.mxu0 0
        %1039 = vmatprep.subr.bf16.mxu0 0
        %1040 = vmatpush2.bf16.msra.mxu0 0
        %1041 = vmatprep.subr.bf16.mxu0 0
        %1042 = vmatpush2.bf16.msra.mxu0 0
        %1043 = vmatprep.subr.bf16.mxu0 0
        %1044 = vmatpush2.bf16.msra.mxu0 0
        %1045 = vmatprep.subr.bf16.mxu0 0
        %1046 = vmatpush2.bf16.msra.mxu0 0
        %1047 = vmatprep.subr.bf16.mxu0 0
        %1048 = vmatpush2.bf16.msra.mxu0 0
        %1049 = vmatprep.subr.bf16.mxu0 0
        %1050 = vmatpush2.bf16.msra.mxu0 0
        %1051 = vmatprep.subr.bf16.mxu0 0
        %1052 = vmatpush2.bf16.msra.mxu0 0
        %1053 = vmatprep.mubr.bf16.mxu0 0
        %1054 = vmatmul.mubr.bf16.gmra.mxu0 %v1005
        %v1055 = vpop.f32.mrf.mxu0
        %v1056 = vadd.f32 0.0, %v1055
        %v1057 = vpop.f32.mrf.mxu0
        %v1058 = vpop.f32.mrf.mxu0
        %v1059 = vadd.f32 0.0, %v1058
        %v1060 = vpop.f32.mrf.mxu0
        %1061 = vmatprep.mubr.bf16.mxu0 0
        %1062 = vmatmul.mubr.bf16.gmra.mxu0 %v1006
        %v1063 = vpop.f32.mrf.mxu0
        %v1064 = vadd.f32 0.0, %v1063
        %v1065 = vpop.f32.mrf.mxu0
        %v1066 = vpop.f32.mrf.mxu0
        %v1067 = vadd.f32 0.0, %v1066
        %v1068 = vpop.f32.mrf.mxu0
        %1069 = vmatprep.mubr.bf16.mxu0 0
        %1070 = vmatmul.mubr.bf16.gmra.mxu0 %v1007
        %v1071 = vpop.f32.mrf.mxu0
        %v1072 = vadd.f32 0.0, %v1071
        %v1073 = vpop.f32.mrf.mxu0
        %v1074 = vpop.f32.mrf.mxu0
        %v1075 = vadd.f32 0.0, %v1074
        %v1076 = vpop.f32.mrf.mxu0
        %1077 = vmatprep.mubr.bf16.mxu0 0
        %1078 = vmatmul.mubr.bf16.gmra.mxu0 %v1008
        %v1079 = vpop.f32.mrf.mxu0
        %v1080 = vadd.f32 0.0, %v1079
        %v1081 = vpop.f32.mrf.mxu0
        %v1082 = vpop.f32.mrf.mxu0
        %v1083 = vadd.f32 0.0, %v1082
        %v1084 = vpop.f32.mrf.mxu0
        %1085 = vmatprep.mubr.bf16.mxu0 0
        %1086 = vmatmul.mubr.bf16.gmra.mxu0 %v1009
        %v1087 = vpop.f32.mrf.mxu0
        %v1088 = vadd.f32 0.0, %v1087
        %v1089 = vpop.f32.mrf.mxu0
        %v1090 = vpop.f32.mrf.mxu0
        %v1091 = vadd.f32 0.0, %v1090
        %v1092 = vpop.f32.mrf.mxu0
        %1093 = vmatprep.mubr.bf16.mxu0 0
        %1094 = vmatmul.mubr.bf16.gmra.mxu0 %v1010
        %v1095 = vpop.f32.mrf.mxu0
        %v1096 = vadd.f32 0.0, %v1095
        %v1097 = vpop.f32.mrf.mxu0
        %v1098 = vpop.f32.mrf.mxu0
        %v1099 = vadd.f32 0.0, %v1098
        %v1100 = vpop.f32.mrf.mxu0
        %1101 = vmatprep.mubr.bf16.mxu0 0
        %1102 = vmatmul.mubr.bf16.gmra.mxu0 %v1011
        %v1103 = vpop.f32.mrf.mxu0
        %v1104 = vadd.f32 0.0, %v1103
        %v1105 = vpop.f32.mrf.mxu0
        %v1106 = vpop.f32.mrf.mxu0
        %v1107 = vadd.f32 0.0, %v1106
        %v1108 = vpop.f32.mrf.mxu0
        %1109 = vmatprep.mubr.bf16.mxu0 0
        %1110 = vmatmul.mubr.bf16.gmra.mxu0 %v1012
        %v1111 = vpop.f32.mrf.mxu0
        %v1112 = vadd.f32 0.0, %v1111
        %v1113 = vpop.f32.mrf.mxu0
        %v1114 = vpop.f32.mrf.mxu0
        %v1115 = vadd.f32 0.0, %v1114
        %v1116 = vpop.f32.mrf.mxu0
        %1117 = vdwg.mxu0
        %1118 = vst [vmem:[#allocation4] sm:$0xff] %v1056
        %1119 = vst [vmem:[#allocation4 + $0x8] sm:$0xff] %v1059
        %1120 = vst [vmem:[#allocation4 + $0x10] sm:$0xff] %v1064
        %1121 = vst [vmem:[#allocation4 + $0x18] sm:$0xff] %v1067
        %1122 = vst [vmem:[#allocation4 + $0x20] sm:$0xff] %v1072
        %1123 = vst [vmem:[#allocation4 + $0x28] sm:$0xff] %v1075
        %1124 = vst [vmem:[#allocation4 + $0x30] sm:$0xff] %v1080
        %1125 = vst [vmem:[#allocation4 + $0x38] sm:$0xff] %v1083
        %1126 = vst [vmem:[#allocation4 + $0x40] sm:$0xff] %v1088
        %1127 = vst [vmem:[#allocation4 + $0x48] sm:$0xff] %v1091
        %1128 = vst [vmem:[#allocation4 + $0x50] sm:$0xff] %v1096
        %1129 = vst [vmem:[#allocation4 + $0x58] sm:$0xff] %v1099
        %1130 = vst [vmem:[#allocation4 + $0x60] sm:$0xff] %v1104
        %1131 = vst [vmem:[#allocation4 + $0x68] sm:$0xff] %v1107
        %1132 = vst [vmem:[#allocation4 + $0x70] sm:$0xff] %v1112
        %1133 = vst [vmem:[#allocation4 + $0x78] sm:$0xff] %v1115
        %v1134 = vld [vmem:[%s524] sm:$0xff]
        %v1135 = vld [vmem:[#allocation2] sm:$0xff]
        %v1136 = vpack.c.bf16 %v1135, %v1135
        %v1137 = vld [vmem:[#allocation3] sm:$0xff]
        %v1138 = vpack.c.bf16 %v1137, %v1137
        %v1139 = vld [vmem:[#allocation4] sm:$0xff]
        %v1140 = vpack.c.bf16 %v1139, %v1139
        %vm1141 = vcmask 64512
        %v1143 = vsel %vm1141, %v1136, 0
        %vm1145 = vcmask 1043456
        %v1147 = vsel %vm1145, %v1138, 0
        %1149 = vmatprep.subr.bf16.mxu0 0
        %1150 = vmatpush1.bf16.msra.mxu0 0
        %1151 = vmatprep.subr.bf16.mxu0 0
        %1152 = vmatpush1.bf16.msra.mxu0 0
        %1153 = vmatprep.subr.bf16.mxu0 0
        %1154 = vmatpush1.bf16.msra.mxu0 0
        %1155 = vmatprep.subr.bf16.mxu0 0
        %1156 = vmatpush1.bf16.msra.mxu0 0
        %1157 = vmatprep.subr.bf16.mxu0 0
        %1158 = vmatpush1.bf16.msra.mxu0 0
        %1159 = vmatprep.subr.bf16.mxu0 0
        %1160 = vmatpush1.bf16.msra.mxu0 0
        %1161 = vmatprep.subr.bf16.mxu0 0
        %1162 = vmatpush1.bf16.msra.mxu0 0
        %1163 = vmatprep.subr.bf16.mxu0 0
        %1164 = vmatpush1.bf16.msra.mxu0 %v1147
        %1165 = vmatprep.subr.bf16.mxu0 0
        %1166 = vmatpush2.bf16.msra.mxu0 0
        %1167 = vmatprep.subr.bf16.mxu0 0
        %1168 = vmatpush2.bf16.msra.mxu0 0
        %1169 = vmatprep.subr.bf16.mxu0 0
        %1170 = vmatpush2.bf16.msra.mxu0 0
        %1171 = vmatprep.subr.bf16.mxu0 0
        %1172 = vmatpush2.bf16.msra.mxu0 0
        %1173 = vmatprep.subr.bf16.mxu0 0
        %1174 = vmatpush2.bf16.msra.mxu0 0
        %1175 = vmatprep.subr.bf16.mxu0 0
        %1176 = vmatpush2.bf16.msra.mxu0 0
        %1177 = vmatprep.subr.bf16.mxu0 0
        %1178 = vmatpush2.bf16.msra.mxu0 0
        %1179 = vmatprep.subr.bf16.mxu0 0
        %1180 = vmatpush2.bf16.msra.mxu0 0
        %1181 = vmatprep.mubr.bf16.mxu0 0
        %1182 = vmatmul.mubr.bf16.gmra.mxu0 %v1143
        %v1183 = vpop.f32.mrf.mxu0
        %v1184 = vadd.f32 0.0, %v1183
        %v1185 = vpop.f32.mrf.mxu0
        %v1186 = vpop.f32.mrf.mxu0
        %v1187 = vpop.f32.mrf.mxu0
        %1188 = vdwg.mxu0
        %s1189 = sld [smem:[#allocation21]]
        %s1190 = sld [smem:[#allocation21 + $0x8]]
        %s1191 = sld [smem:[#allocation21 + $0x40]]
        %s1192 = sld [smem:[#allocation21 + $0x60]]
        %v1193 = vstv %s1189
        %v1194 = vmul.f32 %v1184, %v1193
        %v1195 = vstv %s1190
        %v1196 = vmul.f32 %v1134, %v1195
        %v1197 = vadd.f32 %v1194, %v1196
        %v1198 = vstv %s1191
        %v1199 = vadd.f32 %v1197, %v1198
        %v1200 = vmax.f32 %v1199, 0.0
        %v1201 = vstv %s1192
        %v1202 = vmul.f32 %v1200, %v1201
        %v1203 = vadd.f32 %v1202, 0.0
        %s1204 = sld [smem:[#allocation21 + $0x1]]
        %s1205 = sld [smem:[#allocation21 + $0x9]]
        %s1206 = sld [smem:[#allocation21 + $0x41]]
        %s1207 = sld [smem:[#allocation21 + $0x61]]
        %v1208 = vstv %s1204
        %v1209 = vmul.f32 %v1184, %v1208
        %v1210 = vstv %s1205
        %v1211 = vmul.f32 %v1134, %v1210
        %v1212 = vadd.f32 %v1209, %v1211
        %v1213 = vstv %s1206
        %v1214 = vadd.f32 %v1212, %v1213
        %v1215 = vmax.f32 %v1214, 0.0
        %v1216 = vstv %s1207
        %v1217 = vmul.f32 %v1215, %v1216
        %v1218 = vadd.f32 %v1217, 0.0
        %s1219 = sld [smem:[#allocation21 + $0x2]]
        %s1220 = sld [smem:[#allocation21 + $0xa]]
        %s1221 = sld [smem:[#allocation21 + $0x42]]
        %s1222 = sld [smem:[#allocation21 + $0x62]]
        %v1223 = vstv %s1219
        %v1224 = vmul.f32 %v1184, %v1223
        %v1225 = vstv %s1220
        %v1226 = vmul.f32 %v1134, %v1225
        %v1227 = vadd.f32 %v1224, %v1226
        %v1228 = vstv %s1221
        %v1229 = vadd.f32 %v1227, %v1228
        %v1230 = vmax.f32 %v1229, 0.0
        %v1231 = vstv %s1222
        %v1232 = vmul.f32 %v1230, %v1231
        %v1233 = vadd.f32 %v1203, %v1232
        %s1234 = sld [smem:[#allocation21 + $0x3]]
        %s1235 = sld [smem:[#allocation21 + $0xb]]
        %s1236 = sld [smem:[#allocation21 + $0x43]]
        %s1237 = sld [smem:[#allocation21 + $0x63]]
        %v1238 = vstv %s1234
        %v1239 = vmul.f32 %v1184, %v1238
        %v1240 = vstv %s1235
        %v1241 = vmul.f32 %v1134, %v1240
        %v1242 = vadd.f32 %v1239, %v1241
        %v1243 = vstv %s1236
        %v1244 = vadd.f32 %v1242, %v1243
        %v1245 = vmax.f32 %v1244, 0.0
        %v1246 = vstv %s1237
        %v1247 = vmul.f32 %v1245, %v1246
        %v1248 = vadd.f32 %v1218, %v1247
        %s1249 = sld [smem:[#allocation21 + $0x4]]
        %s1250 = sld [smem:[#allocation21 + $0xc]]
        %s1251 = sld [smem:[#allocation21 + $0x44]]
        %s1252 = sld [smem:[#allocation21 + $0x64]]
        %v1253 = vstv %s1249
        %v1254 = vmul.f32 %v1184, %v1253
        %v1255 = vstv %s1250
        %v1256 = vmul.f32 %v1134, %v1255
        %v1257 = vadd.f32 %v1254, %v1256
        %v1258 = vstv %s1251
        %v1259 = vadd.f32 %v1257, %v1258
        %v1260 = vmax.f32 %v1259, 0.0
        %v1261 = vstv %s1252
        %v1262 = vmul.f32 %v1260, %v1261
        %v1263 = vadd.f32 %v1233, %v1262
        %s1264 = sld [smem:[#allocation21 + $0x5]]
        %s1265 = sld [smem:[#allocation21 + $0xd]]
        %s1266 = sld [smem:[#allocation21 + $0x45]]
        %s1267 = sld [smem:[#allocation21 + $0x65]]
        %v1268 = vstv %s1264
        %v1269 = vmul.f32 %v1184, %v1268
        %v1270 = vstv %s1265
        %v1271 = vmul.f32 %v1134, %v1270
        %v1272 = vadd.f32 %v1269, %v1271
        %v1273 = vstv %s1266
        %v1274 = vadd.f32 %v1272, %v1273
        %v1275 = vmax.f32 %v1274, 0.0
        %v1276 = vstv %s1267
        %v1277 = vmul.f32 %v1275, %v1276
        %v1278 = vadd.f32 %v1248, %v1277
        %s1279 = sld [smem:[#allocation21 + $0x6]]
        %s1280 = sld [smem:[#allocation21 + $0xe]]
        %s1281 = sld [smem:[#allocation21 + $0x46]]
        %s1282 = sld [smem:[#allocation21 + $0x66]]
        %v1283 = vstv %s1279
        %v1284 = vmul.f32 %v1184, %v1283
        %v1285 = vstv %s1280
        %v1286 = vmul.f32 %v1134, %v1285
        %v1287 = vadd.f32 %v1284, %v1286
        %v1288 = vstv %s1281
        %v1289 = vadd.f32 %v1287, %v1288
        %v1290 = vmax.f32 %v1289, 0.0
        %v1291 = vstv %s1282
        %v1292 = vmul.f32 %v1290, %v1291
        %v1293 = vadd.f32 %v1263, %v1292
        %s1294 = sld [smem:[#allocation21 + $0x7]]
        %s1295 = sld [smem:[#allocation21 + $0xf]]
        %s1296 = sld [smem:[#allocation21 + $0x47]]
        %s1297 = sld [smem:[#allocation21 + $0x67]]
        %v1298 = vstv %s1294
        %v1299 = vmul.f32 %v1184, %v1298
        %v1300 = vstv %s1295
        %v1301 = vmul.f32 %v1134, %v1300
        %v1302 = vadd.f32 %v1299, %v1301
        %v1303 = vstv %s1296
        %v1304 = vadd.f32 %v1302, %v1303
        %v1305 = vmax.f32 %v1304, 0.0
        %v1306 = vstv %s1297
        %v1307 = vmul.f32 %v1305, %v1306
        %v1308 = vadd.f32 %v1278, %v1307
        %v1309 = vadd.f32 %v1293, %v1308
        %s1310 = sld [smem:[#allocation21 + $0x80]]
        %v1311 = vstv %s1310
        %v1312 = vadd.f32 %v1309, %v1311
        %v1313 = vsel %vm609, %v1312, -1e+30
        %1314 = vmax.xlane.f32.xlu0 %v1313
        %v1315 = vpop.xlane.xlu0 %1314
        %v1316 = vsub.f32 %v1313, %v1315
        %v1317 = vmul.f32 %v1316, 1.442695
        %v1318 = vpow.pop %v1317
        %1319 = vadd.xlane.f32.xlu0 %v1318
        %v1320 = vpop.xlane.xlu0 %1319
        %v1321 = vrcp.pop %v1320
        %v1322 = vmul.f32 %v1318, %v1321
        %v1323 = vpack.c.bf16 %v1322, %v1322
        %1324 = vmatprep.subr.bf16.mxu0 0
        %1325 = vmatpush1.bf16.xpose.msra.mxu0 0
        %1326 = vmatprep.subr.bf16.mxu0 0
        %1327 = vmatpush1.bf16.xpose.msra.mxu0 0
        %1328 = vmatprep.subr.bf16.mxu0 0
        %1329 = vmatpush1.bf16.xpose.msra.mxu0 0
        %1330 = vmatprep.subr.bf16.mxu0 0
        %1331 = vmatpush1.bf16.xpose.msra.mxu0 0
        %1332 = vmatprep.subr.bf16.mxu0 0
        %1333 = vmatpush1.bf16.xpose.msra.mxu0 0
        %1334 = vmatprep.subr.bf16.mxu0 0
        %1335 = vmatpush1.bf16.xpose.msra.mxu0 0
        %1336 = vmatprep.subr.bf16.mxu0 0
        %1337 = vmatpush1.bf16.xpose.msra.mxu0 0
        %1338 = vmatprep.subr.bf16.mxu0 0
        %1339 = vmatpush1.bf16.xpose.msra.mxu0 %v1140
        %1340 = vmatprep.subr.bf16.mxu0 0
        %1341 = vmatpush2.bf16.xpose.msra.mxu0 0
        %1342 = vmatprep.subr.bf16.mxu0 0
        %1343 = vmatpush2.bf16.xpose.msra.mxu0 0
        %1344 = vmatprep.subr.bf16.mxu0 0
        %1345 = vmatpush2.bf16.xpose.msra.mxu0 0
        %1346 = vmatprep.subr.bf16.mxu0 0
        %1347 = vmatpush2.bf16.xpose.msra.mxu0 0
        %1348 = vmatprep.subr.bf16.mxu0 0
        %1349 = vmatpush2.bf16.xpose.msra.mxu0 0
        %1350 = vmatprep.subr.bf16.mxu0 0
        %1351 = vmatpush2.bf16.xpose.msra.mxu0 0
        %1352 = vmatprep.subr.bf16.mxu0 0
        %1353 = vmatpush2.bf16.xpose.msra.mxu0 0
        %1354 = vmatprep.subr.bf16.mxu0 0
        %1355 = vmatpush2.bf16.xpose.msra.mxu0 0
        %1356 = vmatprep.mubr.bf16.mxu0 0
        %1357 = vmatmul.mubr.bf16.gmra.mxu0 %v1323
        %v1358 = vpop.f32.mrf.mxu0
        %v1359 = vadd.f32 0.0, %v1358
        %v1360 = vpop.f32.mrf.mxu0
        %v1361 = vpop.f32.mrf.mxu0
        %v1362 = vpop.f32.mrf.mxu0
        %1363 = vdwg.mxu0
        %v1364 = vld [vmem:[#allocation3 + $0x8] sm:$0xff]
        %v1365 = vpack.c.bf16 %v1364, %v1364
        %v1366 = vld [vmem:[#allocation4 + $0x8] sm:$0xff]
        %v1367 = vpack.c.bf16 %v1366, %v1366
        %1369 = vrot.lane.b32.xlu0 %v1136, 120
        %v1370 = vpop.permute.xlu0 %1369
        %v1372 = vsel %vm1141, %v1370, 0
        %v1375 = vsel %vm1145, %v1365, 0
        %1377 = vmatprep.subr.bf16.mxu0 0
        %1378 = vmatpush1.bf16.msra.mxu0 0
        %1379 = vmatprep.subr.bf16.mxu0 0
        %1380 = vmatpush1.bf16.msra.mxu0 0
        %1381 = vmatprep.subr.bf16.mxu0 0
        %1382 = vmatpush1.bf16.msra.mxu0 0
        %1383 = vmatprep.subr.bf16.mxu0 0
        %1384 = vmatpush1.bf16.msra.mxu0 0
        %1385 = vmatprep.subr.bf16.mxu0 0
        %1386 = vmatpush1.bf16.msra.mxu0 0
        %1387 = vmatprep.subr.bf16.mxu0 0
        %1388 = vmatpush1.bf16.msra.mxu0 0
        %1389 = vmatprep.subr.bf16.mxu0 0
        %1390 = vmatpush1.bf16.msra.mxu0 0
        %1391 = vmatprep.subr.bf16.mxu0 0
        %1392 = vmatpush1.bf16.msra.mxu0 %v1375
        %1393 = vmatprep.subr.bf16.mxu0 0
        %1394 = vmatpush2.bf16.msra.mxu0 0
        %1395 = vmatprep.subr.bf16.mxu0 0
        %1396 = vmatpush2.bf16.msra.mxu0 0
        %1397 = vmatprep.subr.bf16.mxu0 0
        %1398 = vmatpush2.bf16.msra.mxu0 0
        %1399 = vmatprep.subr.bf16.mxu0 0
        %1400 = vmatpush2.bf16.msra.mxu0 0
        %1401 = vmatprep.subr.bf16.mxu0 0
        %1402 = vmatpush2.bf16.msra.mxu0 0
        %1403 = vmatprep.subr.bf16.mxu0 0
        %1404 = vmatpush2.bf16.msra.mxu0 0
        %1405 = vmatprep.subr.bf16.mxu0 0
        %1406 = vmatpush2.bf16.msra.mxu0 0
        %1407 = vmatprep.subr.bf16.mxu0 0
        %1408 = vmatpush2.bf16.msra.mxu0 0
        %1409 = vmatprep.mubr.bf16.mxu0 0
        %1410 = vmatmul.mubr.bf16.gmra.mxu0 %v1372
        %v1411 = vpop.f32.mrf.mxu0
        %v1412 = vadd.f32 0.0, %v1411
        %v1413 = vpop.f32.mrf.mxu0
        %v1414 = vpop.f32.mrf.mxu0
        %v1415 = vpop.f32.mrf.mxu0
        %1416 = vdwg.mxu0
        %s1417 = sld [smem:[#allocation21 + $0x10]]
        %s1418 = sld [smem:[#allocation21 + $0x18]]
        %s1419 = sld [smem:[#allocation21 + $0x48]]
        %s1420 = sld [smem:[#allocation21 + $0x68]]
        %v1421 = vstv %s1417
        %v1422 = vmul.f32 %v1412, %v1421
        %v1423 = vstv %s1418
        %v1424 = vmul.f32 %v1134, %v1423
        %v1425 = vadd.f32 %v1422, %v1424
        %v1426 = vstv %s1419
        %v1427 = vadd.f32 %v1425, %v1426
        %v1428 = vmax.f32 %v1427, 0.0
        %v1429 = vstv %s1420
        %v1430 = vmul.f32 %v1428, %v1429
        %v1431 = vadd.f32 %v1430, 0.0
        %s1432 = sld [smem:[#allocation21 + $0x11]]
        %s1433 = sld [smem:[#allocation21 + $0x19]]
        %s1434 = sld [smem:[#allocation21 + $0x49]]
        %s1435 = sld [smem:[#allocation21 + $0x69]]
        %v1436 = vstv %s1432
        %v1437 = vmul.f32 %v1412, %v1436
        %v1438 = vstv %s1433
        %v1439 = vmul.f32 %v1134, %v1438
        %v1440 = vadd.f32 %v1437, %v1439
        %v1441 = vstv %s1434
        %v1442 = vadd.f32 %v1440, %v1441
        %v1443 = vmax.f32 %v1442, 0.0
        %v1444 = vstv %s1435
        %v1445 = vmul.f32 %v1443, %v1444
        %v1446 = vadd.f32 %v1445, 0.0
        %s1447 = sld [smem:[#allocation21 + $0x12]]
        %s1448 = sld [smem:[#allocation21 + $0x1a]]
        %s1449 = sld [smem:[#allocation21 + $0x4a]]
        %s1450 = sld [smem:[#allocation21 + $0x6a]]
        %v1451 = vstv %s1447
        %v1452 = vmul.f32 %v1412, %v1451
        %v1453 = vstv %s1448
        %v1454 = vmul.f32 %v1134, %v1453
        %v1455 = vadd.f32 %v1452, %v1454
        %v1456 = vstv %s1449
        %v1457 = vadd.f32 %v1455, %v1456
        %v1458 = vmax.f32 %v1457, 0.0
        %v1459 = vstv %s1450
        %v1460 = vmul.f32 %v1458, %v1459
        %v1461 = vadd.f32 %v1431, %v1460
        %s1462 = sld [smem:[#allocation21 + $0x13]]
        %s1463 = sld [smem:[#allocation21 + $0x1b]]
        %s1464 = sld [smem:[#allocation21 + $0x4b]]
        %s1465 = sld [smem:[#allocation21 + $0x6b]]
        %v1466 = vstv %s1462
        %v1467 = vmul.f32 %v1412, %v1466
        %v1468 = vstv %s1463
        %v1469 = vmul.f32 %v1134, %v1468
        %v1470 = vadd.f32 %v1467, %v1469
        %v1471 = vstv %s1464
        %v1472 = vadd.f32 %v1470, %v1471
        %v1473 = vmax.f32 %v1472, 0.0
        %v1474 = vstv %s1465
        %v1475 = vmul.f32 %v1473, %v1474
        %v1476 = vadd.f32 %v1446, %v1475
        %s1477 = sld [smem:[#allocation21 + $0x14]]
        %s1478 = sld [smem:[#allocation21 + $0x1c]]
        %s1479 = sld [smem:[#allocation21 + $0x4c]]
        %s1480 = sld [smem:[#allocation21 + $0x6c]]
        %v1481 = vstv %s1477
        %v1482 = vmul.f32 %v1412, %v1481
        %v1483 = vstv %s1478
        %v1484 = vmul.f32 %v1134, %v1483
        %v1485 = vadd.f32 %v1482, %v1484
        %v1486 = vstv %s1479
        %v1487 = vadd.f32 %v1485, %v1486
        %v1488 = vmax.f32 %v1487, 0.0
        %v1489 = vstv %s1480
        %v1490 = vmul.f32 %v1488, %v1489
        %v1491 = vadd.f32 %v1461, %v1490
        %s1492 = sld [smem:[#allocation21 + $0x15]]
        %s1493 = sld [smem:[#allocation21 + $0x1d]]
        %s1494 = sld [smem:[#allocation21 + $0x4d]]
        %s1495 = sld [smem:[#allocation21 + $0x6d]]
        %v1496 = vstv %s1492
        %v1497 = vmul.f32 %v1412, %v1496
        %v1498 = vstv %s1493
        %v1499 = vmul.f32 %v1134, %v1498
        %v1500 = vadd.f32 %v1497, %v1499
        %v1501 = vstv %s1494
        %v1502 = vadd.f32 %v1500, %v1501
        %v1503 = vmax.f32 %v1502, 0.0
        %v1504 = vstv %s1495
        %v1505 = vmul.f32 %v1503, %v1504
        %v1506 = vadd.f32 %v1476, %v1505
        %s1507 = sld [smem:[#allocation21 + $0x16]]
        %s1508 = sld [smem:[#allocation21 + $0x1e]]
        %s1509 = sld [smem:[#allocation21 + $0x4e]]
        %s1510 = sld [smem:[#allocation21 + $0x6e]]
        %v1511 = vstv %s1507
        %v1512 = vmul.f32 %v1412, %v1511
        %v1513 = vstv %s1508
        %v1514 = vmul.f32 %v1134, %v1513
        %v1515 = vadd.f32 %v1512, %v1514
        %v1516 = vstv %s1509
        %v1517 = vadd.f32 %v1515, %v1516
        %v1518 = vmax.f32 %v1517, 0.0
        %v1519 = vstv %s1510
        %v1520 = vmul.f32 %v1518, %v1519
        %v1521 = vadd.f32 %v1491, %v1520
        %s1522 = sld [smem:[#allocation21 + $0x17]]
        %s1523 = sld [smem:[#allocation21 + $0x1f]]
        %s1524 = sld [smem:[#allocation21 + $0x4f]]
        %s1525 = sld [smem:[#allocation21 + $0x6f]]
        %v1526 = vstv %s1522
        %v1527 = vmul.f32 %v1412, %v1526
        %v1528 = vstv %s1523
        %v1529 = vmul.f32 %v1134, %v1528
        %v1530 = vadd.f32 %v1527, %v1529
        %v1531 = vstv %s1524
        %v1532 = vadd.f32 %v1530, %v1531
        %v1533 = vmax.f32 %v1532, 0.0
        %v1534 = vstv %s1525
        %v1535 = vmul.f32 %v1533, %v1534
        %v1536 = vadd.f32 %v1506, %v1535
        %v1537 = vadd.f32 %v1521, %v1536
        %s1538 = sld [smem:[#allocation21 + $0x81]]
        %v1539 = vstv %s1538
        %v1540 = vadd.f32 %v1537, %v1539
        %v1541 = vsel %vm609, %v1540, -1e+30
        %1542 = vmax.xlane.f32.xlu0 %v1541
        %v1543 = vpop.xlane.xlu0 %1542
        %v1544 = vsub.f32 %v1541, %v1543
        %v1545 = vmul.f32 %v1544, 1.442695
        %v1546 = vpow.pop %v1545
        %1547 = vadd.xlane.f32.xlu0 %v1546
        %v1548 = vpop.xlane.xlu0 %1547
        %v1549 = vrcp.pop %v1548
        %v1550 = vmul.f32 %v1546, %v1549
        %v1551 = vpack.c.bf16 %v1550, %v1550
        %1552 = vmatprep.subr.bf16.mxu0 0
        %1553 = vmatpush1.bf16.xpose.msra.mxu0 0
        %1554 = vmatprep.subr.bf16.mxu0 0
        %1555 = vmatpush1.bf16.xpose.msra.mxu0 0
        %1556 = vmatprep.subr.bf16.mxu0 0
        %1557 = vmatpush1.bf16.xpose.msra.mxu0 0
        %1558 = vmatprep.subr.bf16.mxu0 0
        %1559 = vmatpush1.bf16.xpose.msra.mxu0 0
        %1560 = vmatprep.subr.bf16.mxu0 0
        %1561 = vmatpush1.bf16.xpose.msra.mxu0 0
        %1562 = vmatprep.subr.bf16.mxu0 0
        %1563 = vmatpush1.bf16.xpose.msra.mxu0 0
        %1564 = vmatprep.subr.bf16.mxu0 0
        %1565 = vmatpush1.bf16.xpose.msra.mxu0 0
        %1566 = vmatprep.subr.bf16.mxu0 0
        %1567 = vmatpush1.bf16.xpose.msra.mxu0 %v1367
        %1568 = vmatprep.subr.bf16.mxu0 0
        %1569 = vmatpush2.bf16.xpose.msra.mxu0 0
        %1570 = vmatprep.subr.bf16.mxu0 0
        %1571 = vmatpush2.bf16.xpose.msra.mxu0 0
        %1572 = vmatprep.subr.bf16.mxu0 0
        %1573 = vmatpush2.bf16.xpose.msra.mxu0 0
        %1574 = vmatprep.subr.bf16.mxu0 0
        %1575 = vmatpush2.bf16.xpose.msra.mxu0 0
        %1576 = vmatprep.subr.bf16.mxu0 0
        %1577 = vmatpush2.bf16.xpose.msra.mxu0 0
        %1578 = vmatprep.subr.bf16.mxu0 0
        %1579 = vmatpush2.bf16.xpose.msra.mxu0 0
        %1580 = vmatprep.subr.bf16.mxu0 0
        %1581 = vmatpush2.bf16.xpose.msra.mxu0 0
        %1582 = vmatprep.subr.bf16.mxu0 0
        %1583 = vmatpush2.bf16.xpose.msra.mxu0 0
        %1584 = vmatprep.mubr.bf16.mxu0 0
        %1585 = vmatmul.mubr.bf16.gmra.mxu0 %v1551
        %v1586 = vpop.f32.mrf.mxu0
        %v1587 = vadd.f32 0.0, %v1586
        %v1588 = vpop.f32.mrf.mxu0
        %v1589 = vpop.f32.mrf.mxu0
        %v1590 = vpop.f32.mrf.mxu0
        %1591 = vdwg.mxu0
        %v1592 = vld [vmem:[#allocation3 + $0x10] sm:$0xff]
        %v1593 = vpack.c.bf16 %v1592, %v1592
        %v1594 = vld [vmem:[#allocation4 + $0x10] sm:$0xff]
        %v1595 = vpack.c.bf16 %v1594, %v1594
        %1596 = vrot.lane.b32.xlu0 %v1136, 112
        %v1597 = vpop.permute.xlu0 %1596
        %v1599 = vsel %vm1141, %v1597, 0
        %v1602 = vsel %vm1145, %v1593, 0
        %1604 = vmatprep.subr.bf16.mxu0 0
        %1605 = vmatpush1.bf16.msra.mxu0 0
        %1606 = vmatprep.subr.bf16.mxu0 0
        %1607 = vmatpush1.bf16.msra.mxu0 0
        %1608 = vmatprep.subr.bf16.mxu0 0
        %1609 = vmatpush1.bf16.msra.mxu0 0
        %1610 = vmatprep.subr.bf16.mxu0 0
        %1611 = vmatpush1.bf16.msra.mxu0 0
        %1612 = vmatprep.subr.bf16.mxu0 0
        %1613 = vmatpush1.bf16.msra.mxu0 0
        %1614 = vmatprep.subr.bf16.mxu0 0
        %1615 = vmatpush1.bf16.msra.mxu0 0
        %1616 = vmatprep.subr.bf16.mxu0 0
        %1617 = vmatpush1.bf16.msra.mxu0 0
        %1618 = vmatprep.subr.bf16.mxu0 0
        %1619 = vmatpush1.bf16.msra.mxu0 %v1602
        %1620 = vmatprep.subr.bf16.mxu0 0
        %1621 = vmatpush2.bf16.msra.mxu0 0
        %1622 = vmatprep.subr.bf16.mxu0 0
        %1623 = vmatpush2.bf16.msra.mxu0 0
        %1624 = vmatprep.subr.bf16.mxu0 0
        %1625 = vmatpush2.bf16.msra.mxu0 0
        %1626 = vmatprep.subr.bf16.mxu0 0
        %1627 = vmatpush2.bf16.msra.mxu0 0
        %1628 = vmatprep.subr.bf16.mxu0 0
        %1629 = vmatpush2.bf16.msra.mxu0 0
        %1630 = vmatprep.subr.bf16.mxu0 0
        %1631 = vmatpush2.bf16.msra.mxu0 0
        %1632 = vmatprep.subr.bf16.mxu0 0
        %1633 = vmatpush2.bf16.msra.mxu0 0
        %1634 = vmatprep.subr.bf16.mxu0 0
        %1635 = vmatpush2.bf16.msra.mxu0 0
        %1636 = vmatprep.mubr.bf16.mxu0 0
        %1637 = vmatmul.mubr.bf16.gmra.mxu0 %v1599
        %v1638 = vpop.f32.mrf.mxu0
        %v1639 = vadd.f32 0.0, %v1638
        %v1640 = vpop.f32.mrf.mxu0
        %v1641 = vpop.f32.mrf.mxu0
        %v1642 = vpop.f32.mrf.mxu0
        %1643 = vdwg.mxu0
        %s1644 = sld [smem:[#allocation21 + $0x20]]
        %s1645 = sld [smem:[#allocation21 + $0x28]]
        %s1646 = sld [smem:[#allocation21 + $0x50]]
        %s1647 = sld [smem:[#allocation21 + $0x70]]
        %v1648 = vstv %s1644
        %v1649 = vmul.f32 %v1639, %v1648
        %v1650 = vstv %s1645
        %v1651 = vmul.f32 %v1134, %v1650
        %v1652 = vadd.f32 %v1649, %v1651
        %v1653 = vstv %s1646
        %v1654 = vadd.f32 %v1652, %v1653
        %v1655 = vmax.f32 %v1654, 0.0
        %v1656 = vstv %s1647
        %v1657 = vmul.f32 %v1655, %v1656
        %v1658 = vadd.f32 %v1657, 0.0
        %s1659 = sld [smem:[#allocation21 + $0x21]]
        %s1660 = sld [smem:[#allocation21 + $0x29]]
        %s1661 = sld [smem:[#allocation21 + $0x51]]
        %s1662 = sld [smem:[#allocation21 + $0x71]]
        %v1663 = vstv %s1659
        %v1664 = vmul.f32 %v1639, %v1663
        %v1665 = vstv %s1660
        %v1666 = vmul.f32 %v1134, %v1665
        %v1667 = vadd.f32 %v1664, %v1666
        %v1668 = vstv %s1661
        %v1669 = vadd.f32 %v1667, %v1668
        %v1670 = vmax.f32 %v1669, 0.0
        %v1671 = vstv %s1662
        %v1672 = vmul.f32 %v1670, %v1671
        %v1673 = vadd.f32 %v1672, 0.0
        %s1674 = sld [smem:[#allocation21 + $0x22]]
        %s1675 = sld [smem:[#allocation21 + $0x2a]]
        %s1676 = sld [smem:[#allocation21 + $0x52]]
        %s1677 = sld [smem:[#allocation21 + $0x72]]
        %v1678 = vstv %s1674
        %v1679 = vmul.f32 %v1639, %v1678
        %v1680 = vstv %s1675
        %v1681 = vmul.f32 %v1134, %v1680
        %v1682 = vadd.f32 %v1679, %v1681
        %v1683 = vstv %s1676
        %v1684 = vadd.f32 %v1682, %v1683
        %v1685 = vmax.f32 %v1684, 0.0
        %v1686 = vstv %s1677
        %v1687 = vmul.f32 %v1685, %v1686
        %v1688 = vadd.f32 %v1658, %v1687
        %s1689 = sld [smem:[#allocation21 + $0x23]]
        %s1690 = sld [smem:[#allocation21 + $0x2b]]
        %s1691 = sld [smem:[#allocation21 + $0x53]]
        %s1692 = sld [smem:[#allocation21 + $0x73]]
        %v1693 = vstv %s1689
        %v1694 = vmul.f32 %v1639, %v1693
        %v1695 = vstv %s1690
        %v1696 = vmul.f32 %v1134, %v1695
        %v1697 = vadd.f32 %v1694, %v1696
        %v1698 = vstv %s1691
        %v1699 = vadd.f32 %v1697, %v1698
        %v1700 = vmax.f32 %v1699, 0.0
        %v1701 = vstv %s1692
        %v1702 = vmul.f32 %v1700, %v1701
        %v1703 = vadd.f32 %v1673, %v1702
        %s1704 = sld [smem:[#allocation21 + $0x24]]
        %s1705 = sld [smem:[#allocation21 + $0x2c]]
        %s1706 = sld [smem:[#allocation21 + $0x54]]
        %s1707 = sld [smem:[#allocation21 + $0x74]]
        %v1708 = vstv %s1704
        %v1709 = vmul.f32 %v1639, %v1708
        %v1710 = vstv %s1705
        %v1711 = vmul.f32 %v1134, %v1710
        %v1712 = vadd.f32 %v1709, %v1711
        %v1713 = vstv %s1706
        %v1714 = vadd.f32 %v1712, %v1713
        %v1715 = vmax.f32 %v1714, 0.0
        %v1716 = vstv %s1707
        %v1717 = vmul.f32 %v1715, %v1716
        %v1718 = vadd.f32 %v1688, %v1717
        %s1719 = sld [smem:[#allocation21 + $0x25]]
        %s1720 = sld [smem:[#allocation21 + $0x2d]]
        %s1721 = sld [smem:[#allocation21 + $0x55]]
        %s1722 = sld [smem:[#allocation21 + $0x75]]
        %v1723 = vstv %s1719
        %v1724 = vmul.f32 %v1639, %v1723
        %v1725 = vstv %s1720
        %v1726 = vmul.f32 %v1134, %v1725
        %v1727 = vadd.f32 %v1724, %v1726
        %v1728 = vstv %s1721
        %v1729 = vadd.f32 %v1727, %v1728
        %v1730 = vmax.f32 %v1729, 0.0
        %v1731 = vstv %s1722
        %v1732 = vmul.f32 %v1730, %v1731
        %v1733 = vadd.f32 %v1703, %v1732
        %s1734 = sld [smem:[#allocation21 + $0x26]]
        %s1735 = sld [smem:[#allocation21 + $0x2e]]
        %s1736 = sld [smem:[#allocation21 + $0x56]]
        %s1737 = sld [smem:[#allocation21 + $0x76]]
        %v1738 = vstv %s1734
        %v1739 = vmul.f32 %v1639, %v1738
        %v1740 = vstv %s1735
        %v1741 = vmul.f32 %v1134, %v1740
        %v1742 = vadd.f32 %v1739, %v1741
        %v1743 = vstv %s1736
        %v1744 = vadd.f32 %v1742, %v1743
        %v1745 = vmax.f32 %v1744, 0.0
        %v1746 = vstv %s1737
        %v1747 = vmul.f32 %v1745, %v1746
        %v1748 = vadd.f32 %v1718, %v1747
        %s1749 = sld [smem:[#allocation21 + $0x27]]
        %s1750 = sld [smem:[#allocation21 + $0x2f]]
        %s1751 = sld [smem:[#allocation21 + $0x57]]
        %s1752 = sld [smem:[#allocation21 + $0x77]]
        %v1753 = vstv %s1749
        %v1754 = vmul.f32 %v1639, %v1753
        %v1755 = vstv %s1750
        %v1756 = vmul.f32 %v1134, %v1755
        %v1757 = vadd.f32 %v1754, %v1756
        %v1758 = vstv %s1751
        %v1759 = vadd.f32 %v1757, %v1758
        %v1760 = vmax.f32 %v1759, 0.0
        %v1761 = vstv %s1752
        %v1762 = vmul.f32 %v1760, %v1761
        %v1763 = vadd.f32 %v1733, %v1762
        %v1764 = vadd.f32 %v1748, %v1763
        %s1765 = sld [smem:[#allocation21 + $0x82]]
        %v1766 = vstv %s1765
        %v1767 = vadd.f32 %v1764, %v1766
        %v1768 = vsel %vm609, %v1767, -1e+30
        %1769 = vmax.xlane.f32.xlu0 %v1768
        %v1770 = vpop.xlane.xlu0 %1769
        %v1771 = vsub.f32 %v1768, %v1770
        %v1772 = vmul.f32 %v1771, 1.442695
        %v1773 = vpow.pop %v1772
        %1774 = vadd.xlane.f32.xlu0 %v1773
        %v1775 = vpop.xlane.xlu0 %1774
        %v1776 = vrcp.pop %v1775
        %v1777 = vmul.f32 %v1773, %v1776
        %v1778 = vpack.c.bf16 %v1777, %v1777
        %1779 = vmatprep.subr.bf16.mxu0 0
        %1780 = vmatpush1.bf16.xpose.msra.mxu0 0
        %1781 = vmatprep.subr.bf16.mxu0 0
        %1782 = vmatpush1.bf16.xpose.msra.mxu0 0
        %1783 = vmatprep.subr.bf16.mxu0 0
        %1784 = vmatpush1.bf16.xpose.msra.mxu0 0
        %1785 = vmatprep.subr.bf16.mxu0 0
        %1786 = vmatpush1.bf16.xpose.msra.mxu0 0
        %1787 = vmatprep.subr.bf16.mxu0 0
        %1788 = vmatpush1.bf16.xpose.msra.mxu0 0
        %1789 = vmatprep.subr.bf16.mxu0 0
        %1790 = vmatpush1.bf16.xpose.msra.mxu0 0
        %1791 = vmatprep.subr.bf16.mxu0 0
        %1792 = vmatpush1.bf16.xpose.msra.mxu0 0
        %1793 = vmatprep.subr.bf16.mxu0 0
        %1794 = vmatpush1.bf16.xpose.msra.mxu0 %v1595
        %1795 = vmatprep.subr.bf16.mxu0 0
        %1796 = vmatpush2.bf16.xpose.msra.mxu0 0
        %1797 = vmatprep.subr.bf16.mxu0 0
        %1798 = vmatpush2.bf16.xpose.msra.mxu0 0
        %1799 = vmatprep.subr.bf16.mxu0 0
        %1800 = vmatpush2.bf16.xpose.msra.mxu0 0
        %1801 = vmatprep.subr.bf16.mxu0 0
        %1802 = vmatpush2.bf16.xpose.msra.mxu0 0
        %1803 = vmatprep.subr.bf16.mxu0 0
        %1804 = vmatpush2.bf16.xpose.msra.mxu0 0
        %1805 = vmatprep.subr.bf16.mxu0 0
        %1806 = vmatpush2.bf16.xpose.msra.mxu0 0
        %1807 = vmatprep.subr.bf16.mxu0 0
        %1808 = vmatpush2.bf16.xpose.msra.mxu0 0
        %1809 = vmatprep.subr.bf16.mxu0 0
        %1810 = vmatpush2.bf16.xpose.msra.mxu0 0
        %1811 = vmatprep.mubr.bf16.mxu0 0
        %1812 = vmatmul.mubr.bf16.gmra.mxu0 %v1778
        %v1813 = vpop.f32.mrf.mxu0
        %v1814 = vadd.f32 0.0, %v1813
        %v1815 = vpop.f32.mrf.mxu0
        %v1816 = vpop.f32.mrf.mxu0
        %v1817 = vpop.f32.mrf.mxu0
        %1818 = vdwg.mxu0
        %v1819 = vld [vmem:[#allocation3 + $0x18] sm:$0xff]
        %v1820 = vpack.c.bf16 %v1819, %v1819
        %v1821 = vld [vmem:[#allocation4 + $0x18] sm:$0xff]
        %v1822 = vpack.c.bf16 %v1821, %v1821
        %1823 = vrot.lane.b32.xlu0 %v1136, 104
        %v1824 = vpop.permute.xlu0 %1823
        %v1826 = vsel %vm1141, %v1824, 0
        %v1829 = vsel %vm1145, %v1820, 0
        %1831 = vmatprep.subr.bf16.mxu0 0
        %1832 = vmatpush1.bf16.msra.mxu0 0
        %1833 = vmatprep.subr.bf16.mxu0 0
        %1834 = vmatpush1.bf16.msra.mxu0 0
        %1835 = vmatprep.subr.bf16.mxu0 0
        %1836 = vmatpush1.bf16.msra.mxu0 0
        %1837 = vmatprep.subr.bf16.mxu0 0
        %1838 = vmatpush1.bf16.msra.mxu0 0
        %1839 = vmatprep.subr.bf16.mxu0 0
        %1840 = vmatpush1.bf16.msra.mxu0 0
        %1841 = vmatprep.subr.bf16.mxu0 0
        %1842 = vmatpush1.bf16.msra.mxu0 0
        %1843 = vmatprep.subr.bf16.mxu0 0
        %1844 = vmatpush1.bf16.msra.mxu0 0
        %1845 = vmatprep.subr.bf16.mxu0 0
        %1846 = vmatpush1.bf16.msra.mxu0 %v1829
        %1847 = vmatprep.subr.bf16.mxu0 0
        %1848 = vmatpush2.bf16.msra.mxu0 0
        %1849 = vmatprep.subr.bf16.mxu0 0
        %1850 = vmatpush2.bf16.msra.mxu0 0
        %1851 = vmatprep.subr.bf16.mxu0 0
        %1852 = vmatpush2.bf16.msra.mxu0 0
        %1853 = vmatprep.subr.bf16.mxu0 0
        %1854 = vmatpush2.bf16.msra.mxu0 0
        %1855 = vmatprep.subr.bf16.mxu0 0
        %1856 = vmatpush2.bf16.msra.mxu0 0
        %1857 = vmatprep.subr.bf16.mxu0 0
        %1858 = vmatpush2.bf16.msra.mxu0 0
        %1859 = vmatprep.subr.bf16.mxu0 0
        %1860 = vmatpush2.bf16.msra.mxu0 0
        %1861 = vmatprep.subr.bf16.mxu0 0
        %1862 = vmatpush2.bf16.msra.mxu0 0
        %1863 = vmatprep.mubr.bf16.mxu0 0
        %1864 = vmatmul.mubr.bf16.gmra.mxu0 %v1826
        %v1865 = vpop.f32.mrf.mxu0
        %v1866 = vadd.f32 0.0, %v1865
        %v1867 = vpop.f32.mrf.mxu0
        %v1868 = vpop.f32.mrf.mxu0
        %v1869 = vpop.f32.mrf.mxu0
        %1870 = vdwg.mxu0
        %s1871 = sld [smem:[#allocation21 + $0x30]]
        %s1872 = sld [smem:[#allocation21 + $0x38]]
        %s1873 = sld [smem:[#allocation21 + $0x58]]
        %s1874 = sld [smem:[#allocation21 + $0x78]]
        %v1875 = vstv %s1871
        %v1876 = vmul.f32 %v1866, %v1875
        %v1877 = vstv %s1872
        %v1878 = vmul.f32 %v1134, %v1877
        %v1879 = vadd.f32 %v1876, %v1878
        %v1880 = vstv %s1873
        %v1881 = vadd.f32 %v1879, %v1880
        %v1882 = vmax.f32 %v1881, 0.0
        %v1883 = vstv %s1874
        %v1884 = vmul.f32 %v1882, %v1883
        %v1885 = vadd.f32 %v1884, 0.0
        %s1886 = sld [smem:[#allocation21 + $0x31]]
        %s1887 = sld [smem:[#allocation21 + $0x39]]
        %s1888 = sld [smem:[#allocation21 + $0x59]]
        %s1889 = sld [smem:[#allocation21 + $0x79]]
        %v1890 = vstv %s1886
        %v1891 = vmul.f32 %v1866, %v1890
        %v1892 = vstv %s1887
        %v1893 = vmul.f32 %v1134, %v1892
        %v1894 = vadd.f32 %v1891, %v1893
        %v1895 = vstv %s1888
        %v1896 = vadd.f32 %v1894, %v1895
        %v1897 = vmax.f32 %v1896, 0.0
        %v1898 = vstv %s1889
        %v1899 = vmul.f32 %v1897, %v1898
        %v1900 = vadd.f32 %v1899, 0.0
        %s1901 = sld [smem:[#allocation21 + $0x32]]
        %s1902 = sld [smem:[#allocation21 + $0x3a]]
        %s1903 = sld [smem:[#allocation21 + $0x5a]]
        %s1904 = sld [smem:[#allocation21 + $0x7a]]
        %v1905 = vstv %s1901
        %v1906 = vmul.f32 %v1866, %v1905
        %v1907 = vstv %s1902
        %v1908 = vmul.f32 %v1134, %v1907
        %v1909 = vadd.f32 %v1906, %v1908
        %v1910 = vstv %s1903
        %v1911 = vadd.f32 %v1909, %v1910
        %v1912 = vmax.f32 %v1911, 0.0
        %v1913 = vstv %s1904
        %v1914 = vmul.f32 %v1912, %v1913
        %v1915 = vadd.f32 %v1885, %v1914
        %s1916 = sld [smem:[#allocation21 + $0x33]]
        %s1917 = sld [smem:[#allocation21 + $0x3b]]
        %s1918 = sld [smem:[#allocation21 + $0x5b]]
        %s1919 = sld [smem:[#allocation21 + $0x7b]]
        %v1920 = vstv %s1916
        %v1921 = vmul.f32 %v1866, %v1920
        %v1922 = vstv %s1917
        %v1923 = vmul.f32 %v1134, %v1922
        %v1924 = vadd.f32 %v1921, %v1923
        %v1925 = vstv %s1918
        %v1926 = vadd.f32 %v1924, %v1925
        %v1927 = vmax.f32 %v1926, 0.0
        %v1928 = vstv %s1919
        %v1929 = vmul.f32 %v1927, %v1928
        %v1930 = vadd.f32 %v1900, %v1929
        %s1931 = sld [smem:[#allocation21 + $0x34]]
        %s1932 = sld [smem:[#allocation21 + $0x3c]]
        %s1933 = sld [smem:[#allocation21 + $0x5c]]
        %s1934 = sld [smem:[#allocation21 + $0x7c]]
        %v1935 = vstv %s1931
        %v1936 = vmul.f32 %v1866, %v1935
        %v1937 = vstv %s1932
        %v1938 = vmul.f32 %v1134, %v1937
        %v1939 = vadd.f32 %v1936, %v1938
        %v1940 = vstv %s1933
        %v1941 = vadd.f32 %v1939, %v1940
        %v1942 = vmax.f32 %v1941, 0.0
        %v1943 = vstv %s1934
        %v1944 = vmul.f32 %v1942, %v1943
        %v1945 = vadd.f32 %v1915, %v1944
        %s1946 = sld [smem:[#allocation21 + $0x35]]
        %s1947 = sld [smem:[#allocation21 + $0x3d]]
        %s1948 = sld [smem:[#allocation21 + $0x5d]]
        %s1949 = sld [smem:[#allocation21 + $0x7d]]
        %v1950 = vstv %s1946
        %v1951 = vmul.f32 %v1866, %v1950
        %v1952 = vstv %s1947
        %v1953 = vmul.f32 %v1134, %v1952
        %v1954 = vadd.f32 %v1951, %v1953
        %v1955 = vstv %s1948
        %v1956 = vadd.f32 %v1954, %v1955
        %v1957 = vmax.f32 %v1956, 0.0
        %v1958 = vstv %s1949
        %v1959 = vmul.f32 %v1957, %v1958
        %v1960 = vadd.f32 %v1930, %v1959
        %s1961 = sld [smem:[#allocation21 + $0x36]]
        %s1962 = sld [smem:[#allocation21 + $0x3e]]
        %s1963 = sld [smem:[#allocation21 + $0x5e]]
        %s1964 = sld [smem:[#allocation21 + $0x7e]]
        %v1965 = vstv %s1961
        %v1966 = vmul.f32 %v1866, %v1965
        %v1967 = vstv %s1962
        %v1968 = vmul.f32 %v1134, %v1967
        %v1969 = vadd.f32 %v1966, %v1968
        %v1970 = vstv %s1963
        %v1971 = vadd.f32 %v1969, %v1970
        %v1972 = vmax.f32 %v1971, 0.0
        %v1973 = vstv %s1964
        %v1974 = vmul.f32 %v1972, %v1973
        %v1975 = vadd.f32 %v1945, %v1974
        %s1976 = sld [smem:[#allocation21 + $0x37]]
        %s1977 = sld [smem:[#allocation21 + $0x3f]]
        %s1978 = sld [smem:[#allocation21 + $0x5f]]
        %s1979 = sld [smem:[#allocation21 + $0x7f]]
        %v1980 = vstv %s1976
        %v1981 = vmul.f32 %v1866, %v1980
        %v1982 = vstv %s1977
        %v1983 = vmul.f32 %v1134, %v1982
        %v1984 = vadd.f32 %v1981, %v1983
        %v1985 = vstv %s1978
        %v1986 = vadd.f32 %v1984, %v1985
        %v1987 = vmax.f32 %v1986, 0.0
        %v1988 = vstv %s1979
        %v1989 = vmul.f32 %v1987, %v1988
        %v1990 = vadd.f32 %v1960, %v1989
        %v1991 = vadd.f32 %v1975, %v1990
        %s1992 = sld [smem:[#allocation21 + $0x83]]
        %v1993 = vstv %s1992
        %v1994 = vadd.f32 %v1991, %v1993
        %v1995 = vsel %vm609, %v1994, -1e+30
        %1996 = vmax.xlane.f32.xlu0 %v1995
        %v1997 = vpop.xlane.xlu0 %1996
        %v1998 = vsub.f32 %v1995, %v1997
        %v1999 = vmul.f32 %v1998, 1.442695
        %v2000 = vpow.pop %v1999
        %2001 = vadd.xlane.f32.xlu0 %v2000
        %v2002 = vpop.xlane.xlu0 %2001
        %v2003 = vrcp.pop %v2002
        %v2004 = vmul.f32 %v2000, %v2003
        %v2005 = vpack.c.bf16 %v2004, %v2004
        %2006 = vmatprep.subr.bf16.mxu0 0
        %2007 = vmatpush1.bf16.xpose.msra.mxu0 0
        %2008 = vmatprep.subr.bf16.mxu0 0
        %2009 = vmatpush1.bf16.xpose.msra.mxu0 0
        %2010 = vmatprep.subr.bf16.mxu0 0
        %2011 = vmatpush1.bf16.xpose.msra.mxu0 0
        %2012 = vmatprep.subr.bf16.mxu0 0
        %2013 = vmatpush1.bf16.xpose.msra.mxu0 0
        %2014 = vmatprep.subr.bf16.mxu0 0
        %2015 = vmatpush1.bf16.xpose.msra.mxu0 0
        %2016 = vmatprep.subr.bf16.mxu0 0
        %2017 = vmatpush1.bf16.xpose.msra.mxu0 0
        %2018 = vmatprep.subr.bf16.mxu0 0
        %2019 = vmatpush1.bf16.xpose.msra.mxu0 0
        %2020 = vmatprep.subr.bf16.mxu0 0
        %2021 = vmatpush1.bf16.xpose.msra.mxu0 %v1822
        %2022 = vmatprep.subr.bf16.mxu0 0
        %2023 = vmatpush2.bf16.xpose.msra.mxu0 0
        %2024 = vmatprep.subr.bf16.mxu0 0
        %2025 = vmatpush2.bf16.xpose.msra.mxu0 0
        %2026 = vmatprep.subr.bf16.mxu0 0
        %2027 = vmatpush2.bf16.xpose.msra.mxu0 0
        %2028 = vmatprep.subr.bf16.mxu0 0
        %2029 = vmatpush2.bf16.xpose.msra.mxu0 0
        %2030 = vmatprep.subr.bf16.mxu0 0
        %2031 = vmatpush2.bf16.xpose.msra.mxu0 0
        %2032 = vmatprep.subr.bf16.mxu0 0
        %2033 = vmatpush2.bf16.xpose.msra.mxu0 0
        %2034 = vmatprep.subr.bf16.mxu0 0
        %2035 = vmatpush2.bf16.xpose.msra.mxu0 0
        %2036 = vmatprep.subr.bf16.mxu0 0
        %2037 = vmatpush2.bf16.xpose.msra.mxu0 0
        %2038 = vmatprep.mubr.bf16.mxu0 0
        %2039 = vmatmul.mubr.bf16.gmra.mxu0 %v2005
        %v2040 = vpop.f32.mrf.mxu0
        %v2041 = vadd.f32 0.0, %v2040
        %v2042 = vpop.f32.mrf.mxu0
        %v2043 = vpop.f32.mrf.mxu0
        %v2044 = vpop.f32.mrf.mxu0
        %2045 = vdwg.mxu0
        %2047 = vrot.lane.b32.xlu0 %v1587, 8
        %v2048 = vpop.permute.xlu0 %2047
        %2051 = vrot.lane.b32.xlu0 %v1814, 16
        %v2052 = vpop.permute.xlu0 %2051
        %2055 = vrot.lane.b32.xlu0 %v2041, 24
        %v2056 = vpop.permute.xlu0 %2055
        %v2058 = vsel %vm1141, %v1359, %v2048
        %vm2059 = vcmask 130048
        %v2060 = vsel %vm2059, %v2058, %v2052
        %vm2061 = vcmask 195584
        %v2062 = vsel %vm2061, %v2060, %v2056
        %vm2063 = vcmask 261120
        %v2064 = vsel %vm2063, %v2062, 0.0
        %v2065 = vpack.c.bf16 %v2064, %v2064
        %v2066 = vld [vmem:[#allocation17] sm:$0xf]
        %v2067 = vld [vmem:[#allocation17 + $0x4] sm:$0xf]
        %v2068 = vld [vmem:[#allocation17 + $0x8] sm:$0xf]
        %v2069 = vld [vmem:[#allocation17 + $0xc] sm:$0xf]
        %v2070 = vld [vmem:[#allocation17 + $0x10] sm:$0xf]
        %v2071 = vld [vmem:[#allocation17 + $0x14] sm:$0xf]
        %v2072 = vld [vmem:[#allocation17 + $0x18] sm:$0xf]
        %v2073 = vld [vmem:[#allocation17 + $0x1c] sm:$0xf]
        %v2074 = vld [vmem:[#allocation17 + $0x20] sm:$0xf]
        %v2075 = vld [vmem:[#allocation17 + $0x24] sm:$0xf]
        %v2076 = vld [vmem:[#allocation17 + $0x28] sm:$0xf]
        %v2077 = vld [vmem:[#allocation17 + $0x2c] sm:$0xf]
        %v2078 = vld [vmem:[#allocation17 + $0x30] sm:$0xf]
        %v2079 = vld [vmem:[#allocation17 + $0x34] sm:$0xf]
        %v2080 = vld [vmem:[#allocation17 + $0x38] sm:$0xf]
        %v2081 = vld [vmem:[#allocation17 + $0x3c] sm:$0xf]
        %v2082 = vlaneseq
        %v2083 = vshrl.u32 %v2082, 7
        %v2084 = vsub.s32 0, %v2083
        %v2085 = vrot.slane %v605, %v2084
        %v2102 = vunpack.c.l.b16 %v2066
        %v2103 = vunpack.c.l.b16 %v2067
        %v2104 = vunpack.c.l.b16 %v2068
        %v2105 = vunpack.c.l.b16 %v2069
        %v2106 = vunpack.c.l.b16 %v2070
        %v2107 = vunpack.c.l.b16 %v2071
        %v2108 = vunpack.c.l.b16 %v2072
        %v2109 = vunpack.c.l.b16 %v2073
        %v2110 = vunpack.c.l.b16 %v2074
        %v2111 = vunpack.c.l.b16 %v2075
        %v2112 = vunpack.c.l.b16 %v2076
        %v2113 = vunpack.c.l.b16 %v2077
        %v2114 = vunpack.c.l.b16 %v2078
        %v2115 = vunpack.c.l.b16 %v2079
        %v2116 = vunpack.c.l.b16 %v2080
        %v2117 = vunpack.c.l.b16 %v2081
        %v2118 = vpack.c.b16 %v2103, %v2102
        %v2119 = vpack.c.b16 %v2105, %v2104
        %v2120 = vpack.c.b16 %v2107, %v2106
        %v2121 = vpack.c.b16 %v2109, %v2108
        %v2122 = vpack.c.b16 %v2111, %v2110
        %v2123 = vpack.c.b16 %v2113, %v2112
        %v2124 = vpack.c.b16 %v2115, %v2114
        %v2125 = vpack.c.b16 %v2117, %v2116
        %2134 = vmatprep.subr.bf16.mxu0 0
        %2135 = vmatpush1.bf16.msra.mxu0 %v2125
        %2136 = vmatprep.subr.bf16.mxu0 0
        %2137 = vmatpush1.bf16.msra.mxu0 %v2124
        %2138 = vmatprep.subr.bf16.mxu0 0
        %2139 = vmatpush1.bf16.msra.mxu0 %v2123
        %2140 = vmatprep.subr.bf16.mxu0 0
        %2141 = vmatpush1.bf16.msra.mxu0 %v2122
        %2142 = vmatprep.subr.bf16.mxu0 0
        %2143 = vmatpush1.bf16.msra.mxu0 %v2121
        %2144 = vmatprep.subr.bf16.mxu0 0
        %2145 = vmatpush1.bf16.msra.mxu0 %v2120
        %2146 = vmatprep.subr.bf16.mxu0 0
        %2147 = vmatpush1.bf16.msra.mxu0 %v2119
        %2148 = vmatprep.subr.bf16.mxu0 0
        %2149 = vmatpush1.bf16.msra.mxu0 %v2118
        %2150 = vmatprep.subr.bf16.mxu0 0
        %2151 = vmatpush2.bf16.msra.mxu0 0
        %2152 = vmatprep.subr.bf16.mxu0 0
        %2153 = vmatpush2.bf16.msra.mxu0 0
        %2154 = vmatprep.subr.bf16.mxu0 0
        %2155 = vmatpush2.bf16.msra.mxu0 0
        %2156 = vmatprep.subr.bf16.mxu0 0
        %2157 = vmatpush2.bf16.msra.mxu0 0
        %2158 = vmatprep.subr.bf16.mxu0 0
        %2159 = vmatpush2.bf16.msra.mxu0 0
        %2160 = vmatprep.subr.bf16.mxu0 0
        %2161 = vmatpush2.bf16.msra.mxu0 0
        %2162 = vmatprep.subr.bf16.mxu0 0
        %2163 = vmatpush2.bf16.msra.mxu0 0
        %2164 = vmatprep.subr.bf16.mxu0 0
        %2165 = vmatpush2.bf16.msra.mxu0 0
        %2166 = vmatprep.mubr.bf16.mxu0 0
        %2167 = vmatmul.mubr.bf16.gmra.mxu0 %v2065
        %v2168 = vpop.f32.mrf.mxu0
        %v2169 = vadd.f32 %v2085, %v2168
        %v2170 = vpop.f32.mrf.mxu0
        %v2171 = vpop.f32.mrf.mxu0
        %v2172 = vpop.f32.mrf.mxu0
        %2173 = vdwg.mxu0
        %v2174 = vld [vmem:[%s506] sm:$0xf]
        %v2175 = vunpack.c.l.bf16 %v2174
        %v2176 = vadd.f32 %v2175, %v2169
        %v2177 = vrot.slane %v2176, 4
        %v2178 = vadd.f32 %v2176, %v2177
        %v2179 = vrot.slane %v2178, 2
        %v2180 = vadd.f32 %v2178, %v2179
        %v2181 = vrot.slane %v2180, 1
        %v2182 = vadd.f32 %v2180, %v2181
        %v2183 = vrcp.pop 8.0
        %v2184 = vmul.f32 %v2182, %v2183
        %v2185 = vsub.f32 %v2176, %v2184
        %v2186 = vmul.f32 %v2185, %v2185
        %v2187 = vrot.slane %v2186, 4
        %v2188 = vadd.f32 %v2186, %v2187
        %v2189 = vrot.slane %v2188, 2
        %v2190 = vadd.f32 %v2188, %v2189
        %v2191 = vrot.slane %v2190, 1
        %v2192 = vadd.f32 %v2190, %v2191
        %v2193 = vmul.f32 %v2192, %v2183
        %v2194 = vadd.f32 %v2193, 1e-05
        %v2195 = vrsqrt.pop %v2194
        %v2196 = vmul.f32 %v2185, %v2195
        %v2197 = vlaneseq
        %v2198 = vshrl.u32 %v2197, 7
        %v2199 = vsub.s32 2, %v2198
        %v2200 = vrot.slane %v605, %v2199
        %v2201 = vmul.f32 %v2196, %v2200
        %v2202 = vlaneseq
        %v2203 = vshrl.u32 %v2202, 7
        %v2204 = vsub.s32 3, %v2203
        %v2205 = vrot.slane %v605, %v2204
        %v2206 = vadd.f32 %v2201, %v2205
        %v2207 = vpack.c.bf16 %v2206, %v2206
        %v2208 = vld [vmem:[#allocation18] sm:$0xf]
        %v2209 = vld [vmem:[#allocation18 + $0x4] sm:$0xf]
        %v2210 = vld [vmem:[#allocation18 + $0x8] sm:$0xf]
        %v2211 = vld [vmem:[#allocation18 + $0xc] sm:$0xf]
        %v2212 = vld [vmem:[#allocation18 + $0x10] sm:$0xf]
        %v2213 = vld [vmem:[#allocation18 + $0x14] sm:$0xf]
        %v2214 = vld [vmem:[#allocation18 + $0x18] sm:$0xf]
        %v2215 = vld [vmem:[#allocation18 + $0x1c] sm:$0xf]
        %v2216 = vld [vmem:[#allocation18 + $0x20] sm:$0xf]
        %v2217 = vld [vmem:[#allocation18 + $0x24] sm:$0xf]
        %v2218 = vld [vmem:[#allocation18 + $0x28] sm:$0xf]
        %v2219 = vld [vmem:[#allocation18 + $0x2c] sm:$0xf]
        %v2220 = vld [vmem:[#allocation18 + $0x30] sm:$0xf]
        %v2221 = vld [vmem:[#allocation18 + $0x34] sm:$0xf]
        %v2222 = vld [vmem:[#allocation18 + $0x38] sm:$0xf]
        %v2223 = vld [vmem:[#allocation18 + $0x3c] sm:$0xf]
        %v2225 = vlaneseq
        %v2226 = vshrl.u32 %v2225, 7
        %v2227 = vsub.s32 0, %v2226
        %v2228 = vrot.slane %v606, %v2227
        %v2246 = vunpack.c.l.b16 %v2208
        %v2247 = vunpack.c.l.b16 %v2209
        %v2248 = vunpack.c.l.b16 %v2210
        %v2249 = vunpack.c.l.b16 %v2211
        %v2250 = vunpack.c.l.b16 %v2212
        %v2251 = vunpack.c.l.b16 %v2213
        %v2252 = vunpack.c.l.b16 %v2214
        %v2253 = vunpack.c.l.b16 %v2215
        %v2254 = vunpack.c.l.b16 %v2216
        %v2255 = vunpack.c.l.b16 %v2217
        %v2256 = vunpack.c.l.b16 %v2218
        %v2257 = vunpack.c.l.b16 %v2219
        %v2258 = vunpack.c.l.b16 %v2220
        %v2259 = vunpack.c.l.b16 %v2221
        %v2260 = vunpack.c.l.b16 %v2222
        %v2261 = vunpack.c.l.b16 %v2223
        %v2262 = vpack.c.b16 %v2247, %v2246
        %v2263 = vpack.c.b16 %v2249, %v2248
        %v2264 = vpack.c.b16 %v2251, %v2250
        %v2265 = vpack.c.b16 %v2253, %v2252
        %v2266 = vpack.c.b16 %v2255, %v2254
        %v2267 = vpack.c.b16 %v2257, %v2256
        %v2268 = vpack.c.b16 %v2259, %v2258
        %v2269 = vpack.c.b16 %v2261, %v2260
        %2278 = vmatprep.subr.bf16.mxu0 0
        %2279 = vmatpush1.bf16.msra.mxu0 %v2269
        %2280 = vmatprep.subr.bf16.mxu0 0
        %2281 = vmatpush1.bf16.msra.mxu0 %v2268
        %2282 = vmatprep.subr.bf16.mxu0 0
        %2283 = vmatpush1.bf16.msra.mxu0 %v2267
        %2284 = vmatprep.subr.bf16.mxu0 0
        %2285 = vmatpush1.bf16.msra.mxu0 %v2266
        %2286 = vmatprep.subr.bf16.mxu0 0
        %2287 = vmatpush1.bf16.msra.mxu0 %v2265
        %2288 = vmatprep.subr.bf16.mxu0 0
        %2289 = vmatpush1.bf16.msra.mxu0 %v2264
        %2290 = vmatprep.subr.bf16.mxu0 0
        %2291 = vmatpush1.bf16.msra.mxu0 %v2263
        %2292 = vmatprep.subr.bf16.mxu0 0
        %2293 = vmatpush1.bf16.msra.mxu0 %v2262
        %2294 = vmatprep.subr.bf16.mxu0 0
        %2295 = vmatpush2.bf16.msra.mxu0 0
        %2296 = vmatprep.subr.bf16.mxu0 0
        %2297 = vmatpush2.bf16.msra.mxu0 0
        %2298 = vmatprep.subr.bf16.mxu0 0
        %2299 = vmatpush2.bf16.msra.mxu0 0
        %2300 = vmatprep.subr.bf16.mxu0 0
        %2301 = vmatpush2.bf16.msra.mxu0 0
        %2302 = vmatprep.subr.bf16.mxu0 0
        %2303 = vmatpush2.bf16.msra.mxu0 0
        %2304 = vmatprep.subr.bf16.mxu0 0
        %2305 = vmatpush2.bf16.msra.mxu0 0
        %2306 = vmatprep.subr.bf16.mxu0 0
        %2307 = vmatpush2.bf16.msra.mxu0 0
        %2308 = vmatprep.subr.bf16.mxu0 0
        %2309 = vmatpush2.bf16.msra.mxu0 0
        %2310 = vmatprep.mubr.bf16.mxu0 0
        %2311 = vmatmul.mubr.bf16.gmra.mxu0 %v2207
        %v2312 = vpop.f32.mrf.mxu0
        %v2313 = vadd.f32 %v2228, %v2312
        %v2314 = vpop.f32.mrf.mxu0
        %v2315 = vpop.f32.mrf.mxu0
        %v2316 = vpop.f32.mrf.mxu0
        %2317 = vdwg.mxu0
        %v2318 = vmax.f32 %v2313, 0.0
        %v2319 = vpack.c.bf16 %v2318, %v2318
        %v2320 = vld [vmem:[#allocation20] sm:$0xf]
        %v2321 = vld [vmem:[#allocation20 + $0x4] sm:$0xf]
        %v2322 = vld [vmem:[#allocation20 + $0x8] sm:$0xf]
        %v2323 = vld [vmem:[#allocation20 + $0xc] sm:$0xf]
        %v2324 = vld [vmem:[#allocation20 + $0x10] sm:$0xf]
        %v2325 = vld [vmem:[#allocation20 + $0x14] sm:$0xf]
        %v2326 = vld [vmem:[#allocation20 + $0x18] sm:$0xf]
        %v2327 = vld [vmem:[#allocation20 + $0x1c] sm:$0xf]
        %v2328 = vld [vmem:[#allocation20 + $0x20] sm:$0xf]
        %v2329 = vld [vmem:[#allocation20 + $0x24] sm:$0xf]
        %v2330 = vld [vmem:[#allocation20 + $0x28] sm:$0xf]
        %v2331 = vld [vmem:[#allocation20 + $0x2c] sm:$0xf]
        %v2332 = vld [vmem:[#allocation20 + $0x30] sm:$0xf]
        %v2333 = vld [vmem:[#allocation20 + $0x34] sm:$0xf]
        %v2334 = vld [vmem:[#allocation20 + $0x38] sm:$0xf]
        %v2335 = vld [vmem:[#allocation20 + $0x3c] sm:$0xf]
        %v2336 = vlaneseq
        %v2337 = vshrl.u32 %v2336, 7
        %v2338 = vsub.s32 1, %v2337
        %v2339 = vrot.slane %v605, %v2338
        %v2356 = vunpack.c.l.b16 %v2320
        %v2357 = vunpack.c.l.b16 %v2321
        %v2358 = vunpack.c.l.b16 %v2322
        %v2359 = vunpack.c.l.b16 %v2323
        %v2360 = vunpack.c.l.b16 %v2324
        %v2361 = vunpack.c.l.b16 %v2325
        %v2362 = vunpack.c.l.b16 %v2326
        %v2363 = vunpack.c.l.b16 %v2327
        %v2364 = vunpack.c.l.b16 %v2328
        %v2365 = vunpack.c.l.b16 %v2329
        %v2366 = vunpack.c.l.b16 %v2330
        %v2367 = vunpack.c.l.b16 %v2331
        %v2368 = vunpack.c.l.b16 %v2332
        %v2369 = vunpack.c.l.b16 %v2333
        %v2370 = vunpack.c.l.b16 %v2334
        %v2371 = vunpack.c.l.b16 %v2335
        %v2372 = vpack.c.b16 %v2357, %v2356
        %v2373 = vpack.c.b16 %v2359, %v2358
        %v2374 = vpack.c.b16 %v2361, %v2360
        %v2375 = vpack.c.b16 %v2363, %v2362
        %v2376 = vpack.c.b16 %v2365, %v2364
        %v2377 = vpack.c.b16 %v2367, %v2366
        %v2378 = vpack.c.b16 %v2369, %v2368
        %v2379 = vpack.c.b16 %v2371, %v2370
        %2388 = vmatprep.subr.bf16.mxu0 0
        %2389 = vmatpush1.bf16.msra.mxu0 %v2379
        %2390 = vmatprep.subr.bf16.mxu0 0
        %2391 = vmatpush1.bf16.msra.mxu0 %v2378
        %2392 = vmatprep.subr.bf16.mxu0 0
        %2393 = vmatpush1.bf16.msra.mxu0 %v2377
        %2394 = vmatprep.subr.bf16.mxu0 0
        %2395 = vmatpush1.bf16.msra.mxu0 %v2376
        %2396 = vmatprep.subr.bf16.mxu0 0
        %2397 = vmatpush1.bf16.msra.mxu0 %v2375
        %2398 = vmatprep.subr.bf16.mxu0 0
        %2399 = vmatpush1.bf16.msra.mxu0 %v2374
        %2400 = vmatprep.subr.bf16.mxu0 0
        %2401 = vmatpush1.bf16.msra.mxu0 %v2373
        %2402 = vmatprep.subr.bf16.mxu0 0
        %2403 = vmatpush1.bf16.msra.mxu0 %v2372
        %2404 = vmatprep.subr.bf16.mxu0 0
        %2405 = vmatpush2.bf16.msra.mxu0 0
        %2406 = vmatprep.subr.bf16.mxu0 0
        %2407 = vmatpush2.bf16.msra.mxu0 0
        %2408 = vmatprep.subr.bf16.mxu0 0
        %2409 = vmatpush2.bf16.msra.mxu0 0
        %2410 = vmatprep.subr.bf16.mxu0 0
        %2411 = vmatpush2.bf16.msra.mxu0 0
        %2412 = vmatprep.subr.bf16.mxu0 0
        %2413 = vmatpush2.bf16.msra.mxu0 0
        %2414 = vmatprep.subr.bf16.mxu0 0
        %2415 = vmatpush2.bf16.msra.mxu0 0
        %2416 = vmatprep.subr.bf16.mxu0 0
        %2417 = vmatpush2.bf16.msra.mxu0 0
        %2418 = vmatprep.subr.bf16.mxu0 0
        %2419 = vmatpush2.bf16.msra.mxu0 0
        %2420 = vmatprep.mubr.bf16.mxu0 0
        %2421 = vmatmul.mubr.bf16.gmra.mxu0 %v2319
        %v2422 = vpop.f32.mrf.mxu0
        %v2423 = vadd.f32 %v2339, %v2422
        %v2424 = vpop.f32.mrf.mxu0
        %v2425 = vpop.f32.mrf.mxu0
        %v2426 = vpop.f32.mrf.mxu0
        %2427 = vdwg.mxu0
        %v2428 = vadd.f32 %v2206, %v2423
        %v2429 = vrot.slane %v2428, 4
        %v2430 = vadd.f32 %v2428, %v2429
        %v2431 = vrot.slane %v2430, 2
        %v2432 = vadd.f32 %v2430, %v2431
        %v2433 = vrot.slane %v2432, 1
        %v2434 = vadd.f32 %v2432, %v2433
        %v2435 = vmul.f32 %v2434, %v2183
        %v2436 = vsub.f32 %v2428, %v2435
        %v2437 = vmul.f32 %v2436, %v2436
        %v2438 = vrot.slane %v2437, 4
        %v2439 = vadd.f32 %v2437, %v2438
        %v2440 = vrot.slane %v2439, 2
        %v2441 = vadd.f32 %v2439, %v2440
        %v2442 = vrot.slane %v2441, 1
        %v2443 = vadd.f32 %v2441, %v2442
        %v2444 = vmul.f32 %v2443, %v2183
        %v2445 = vadd.f32 %v2444, 1e-05
        %v2446 = vrsqrt.pop %v2445
        %v2447 = vmul.f32 %v2436, %v2446
        %v2448 = vlaneseq
        %v2449 = vshrl.u32 %v2448, 7
        %v2450 = vsub.s32 4, %v2449
        %v2451 = vrot.slane %v605, %v2450
        %v2452 = vmul.f32 %v2447, %v2451
        %v2453 = vlaneseq
        %v2454 = vshrl.u32 %v2453, 7
        %v2455 = vsub.s32 5, %v2454
        %v2456 = vrot.slane %v605, %v2455
        %v2457 = vadd.f32 %v2452, %v2456
        %2458 = vst [vmem:[%s603] sm:$0xff] %v2457
        %s2459 = sand.u32 %s311, 1
        %s2460 = scalar_lea.sflag [#allocation7], %s2459
        %s2461 = sand.u32 %s311, 1
        %s2462 = smul.addr %s2461, 8
        %s2463 = scalar_lea.vmem [#allocation22], %s2462
        // Predicated region
        $region109: #{tpu_custom_call.1} parent=67 // pred_check
          %p2464 = pneg %p321
        $region110: #{tpu_custom_call.1} parent=67 // pred_check_branch
          %2466 = sbr.rel (%p2464) target = $region112
        $region111: #{tpu_custom_call.1} parent=67 // pred_region
          %s2468 = ssub.s32 128, 128
          %2469 = vsyncadd %s2460, %s2468
          %s2470 = smul.addr %s36, 128
          %s2471 = scalar_lea.hbm %s12, %s2470
          %s2473 = sshll.u32 %s2463, 4
          %s2474 = int_to_ptr.vmem [resolvable:$true] %s2473
          %2476 = dma.vmem_to_hbm [thread:$0]  %s2474, 128, %s2471, %s2460
        $region112: #{tpu_custom_call.1} parent=67 // pred_fallthru
          _
      $region68: #{tpu_custom_call.1} parent=5 // pred_fallthru
        _
      %p2477 = scmp.le.s32.totalorder 2, %s31
      // Predicated region
      $region113: #{tpu_custom_call.1} parent=5 // pred_check
        %p2478 = pneg %p2477
      $region114: #{tpu_custom_call.1} parent=5 // pred_check_branch
        %2480 = sbr.rel (%p2478) target = $region116
      $region115: #{tpu_custom_call.1} parent=5 // pred_region
        %s2481 = ssub.s32 %s31, 2
        // Predicated region
        $region117: #{tpu_custom_call.1} parent=115 // pred_check
          %p2482 = pneg %p327
        $region118: #{tpu_custom_call.1} parent=115 // pred_check_branch
          %2484 = sbr.rel (%p2482) target = $region120
        $region119: #{tpu_custom_call.1} parent=115 // pred_region
          %s2485 = sand.u32 %s312, 1
          %s2486 = scalar_lea.sflag [#allocation7], %s2485
          %s2487 = sand.u32 %s312, 1
          %s2488 = smul.addr %s2487, 8
          %s2489 = scalar_lea.vmem [#allocation22], %s2488
          %2490 = dma.done %s2486, 128
        $region120: #{tpu_custom_call.1} parent=115 // pred_fallthru
          _
      $region116: #{tpu_custom_call.1} parent=5 // pred_fallthru
        _
    $region6: #{tpu_custom_call.1} parent=1 // loop_footer
      %s35 = sadd.s32 1, %s31
    $region7: #{tpu_custom_call.1} parent=1 // loop_footer_branch
      %30 = sbr.rel target = $region3
    $region8: #{tpu_custom_call.1} parent=1 // loop_exit
      _
    %2491 = vsyncpa [#allocation6], 1
    %s2492 = scalar_lea.sflag [#allocation6], 1
    %2493 = vsyncpa %s2492, 1
    %2494 = vsyncpa [#allocation10], 1
    %s2495 = scalar_lea.sflag [#allocation10], 1
    %2496 = vsyncpa %s2495, 1
    %2497 = vsyncpa [#allocation13], 1
    %2498 = vsyncpa [#allocation16], 1
    %2499 = vsyncpa [#allocation19], 1
    %2500 = vsyncpa [#allocation7], 1
    %s2501 = scalar_lea.sflag [#allocation7], 1
    %2502 = vsyncpa %s2501, 1
    %2503 = vsyncpa [#allocation8], 1
    %s2504 = scalar_lea.sflag [#allocation8], 1
    %2505 = vsyncpa %s2504, 1

</llo_original>
